<compile_context>
chip_gen: v6e
topology: v6e:2x2x1
jax: 0.10.0
libtpu: 0.0.40
codegen_flags: <defaults>
</compile_context>

<pallas_src>
import functools
import math

import jax
import jax.numpy as jnp
from jax import lax
from jax.experimental import pallas as pl
from jax.experimental.pallas import tpu as pltpu


def _round_up(a, b):
    return ((a + b - 1) // b) * b


def _conv_kernel(xa_ref, xb_ref, w_ref, b_ref, o_ref, xwin_ref, lhs_ref, *,
                 shifts, halo):
    """One (M-tile, Cout-tile) of the flattened conv.

    xa_ref  : [TM, Cin]          bf16  rows [t*TM, (t+1)*TM) of the flat input
    xb_ref  : [halo, Cin]        bf16  first `halo` rows of the next tile
    w_ref   : [KH*KW*Cin, TN]    bf16  taps folded into the contraction dim
    b_ref   : [1, TN]            f32
    o_ref   : [TM, TN]           bf16
    xwin_ref: [TM+halo, Cin]     bf16 scratch (persists across Cout tiles)
    lhs_ref : [TM, KH*KW*Cin]    bf16 scratch (persists across Cout tiles)
    """
    tm = o_ref.shape[0]
    cin = xa_ref.shape[1]

    # Assemble the folded-K LHS once per M tile.  The Cout grid axis is the
    # innermost, "arbitrary" axis, so for a fixed t it runs c = 0..C-1 in
    # order on the same core and the scratch contents stay valid.
    @pl.when(pl.program_id(1) == 0)
    def _():
        xwin_ref[pl.ds(0, tm), :] = xa_ref[...]
        xwin_ref[pl.ds(tm, halo), :] = xb_ref[...]
        for idx, d in enumerate(shifts):          # d = i*Wp + j  (static ints)
            lhs_ref[:, idx * cin:(idx + 1) * cin] = xwin_ref[pl.ds(d, tm), :]

    # Single MXU matmul with K = KH*KW*Cin; f32 accumulate + bias; bf16 store.
    o_ref[...] = (
        jnp.dot(lhs_ref[...], w_ref[...], preferred_element_type=jnp.float32)
        + b_ref[...]
    ).astype(o_ref.dtype)


def init_conv2d_params(key, in_channels, out_channels, kernel_size=(3, 3)):
    """Deterministic init mimicking PyTorch's default Conv2d init."""
    kh, kw = kernel_size
    fan_in = in_channels * kh * kw
    bound = 1.0 / math.sqrt(fan_in)
    k_w, k_b = jax.random.split(key)
    weight = jax.random.uniform(
        k_w, (out_channels, in_channels, kh, kw), jnp.float32, -bound, bound)
    bias = jax.random.uniform(k_b, (out_channels,), jnp.float32, -bound, bound)
    return weight, bias


def conv2d_pallas(x, weight, bias, stride=(1, 1), padding=(1, 0),
                  block_m=1024, block_n=None):
    """y = Conv2d(x) with kernel (KH,KW), stride (1,1), padding (ph,pw).

    x: [N, Cin, H, W] (NCHW f32), weight: [Cout, Cin, KH, KW], bias: [Cout]
    returns [N, Cout, OH, OW] (NCHW f32).
    """
    N, Cin, H, W = x.shape
    Cout, _, KH, KW = weight.shape
    sh, sw = stride
    ph, pw = padding
    assert (sh, sw) == (1, 1), "kernel specialised to stride (1, 1)"
    # TODO(synk): stride != (1,1) would need a strided row-gather of the
    # flattened output; the module only ever uses stride=(1,1).

    OH = (H + 2 * ph - KH) // sh + 1
    OW = (W + 2 * pw - KW) // sw + 1
    Hp, Wp = H + 2 * ph, W + 2 * pw

    # ---- layout-only glue: NCHW -> NHWC, pad, flatten spatially ----
    xh = jnp.transpose(x, (0, 2, 3, 1))                      # [N, H, W, Cin]
    xp = jnp.pad(xh, ((0, 0), (ph, ph), (pw, pw), (0, 0)))   # [N, Hp, Wp, Cin]
    xf = xp.reshape(N * Hp * Wp, Cin).astype(jnp.bfloat16)   # [M, Cin]
    M = N * Hp * Wp

    # Tap (i,j) of the 3x3 kernel is a constant flat-row shift of i*Wp + j.
    shifts = tuple(i * Wp + j for i in range(KH) for j in range(KW))
    maxd = (KH - 1) * Wp + (KW - 1)
    halo = _round_up(max(maxd, 1), 16)        # 16: bf16 sublane packing

    # block_m: multiple of halo (exact halo BlockSpec index map), clamped for
    # small problems.
    block_m = max(block_m, halo)
    block_m = min(block_m, _round_up(M, halo))
    block_m = _round_up(block_m, halo)
    halo_blocks_per_tile = block_m // halo
    num_tiles = pl.cdiv(M, block_m)
    m_grid = num_tiles * block_m
    # +1 block of zero rows: halo source for the last tile (never feeds a
    # valid output position — those rows are cropped below).
    rows_padded = (num_tiles + 1) * block_m
    xf = jnp.pad(xf, ((0, rows_padded - M), (0, 0)))

    # ---- weights / bias: [Cout,Cin,KH,KW] -> [KH*KW*Cin, cout_pad] ----
    if Cout > 128:
        cout_pad = _round_up(Cout, 256)
        bn = 256 if block_n is None else block_n
    else:
        cout_pad = 128
        bn = 128 if block_n is None else block_n
    bn = min(bn, cout_pad)
    assert cout_pad % bn == 0
    num_ctiles = cout_pad // bn

    # w_mat[(i*KW + j)*Cin + c, o] = weight[o, c, i, j]
    w_mat = jnp.transpose(weight, (2, 3, 1, 0)).reshape(KH * KW * Cin, Cout)
    w_mat = jnp.pad(w_mat, ((0, 0), (0, cout_pad - Cout))).astype(jnp.bfloat16)
    b_mat = jnp.pad(bias, (0, cout_pad - Cout)).reshape(1, cout_pad)
    b_mat = b_mat.astype(jnp.float32)

    cost = pl.CostEstimate(
        flops=int(2 * m_grid * cout_pad * KH * KW * Cin),
        transcendentals=0,
        bytes_accessed=int((m_grid + num_tiles * halo) * Cin * 2   # input+halo
                           + w_mat.size * 2                        # weights
                           + m_grid * cout_pad * 2),               # bf16 out
    )

    out_flat = pl.pallas_call(
        functools.partial(_conv_kernel, shifts=shifts, halo=halo),
        out_shape=jax.ShapeDtypeStruct((m_grid, cout_pad), jnp.bfloat16),
        grid_spec=pltpu.PrefetchScalarGridSpec(
            num_scalar_prefetch=0,
            grid=(num_tiles, num_ctiles),
            in_specs=[
                # tile t of the flat input
                pl.BlockSpec((block_m, Cin), lambda t, c: (t, 0)),
                # only `halo` rows of the next tile (dedup'd halo DMA)
                pl.BlockSpec((halo, Cin),
                             lambda t, c: ((t + 1) * halo_blocks_per_tile, 0)),
                # folded-K weights, tiled over Cout
                pl.BlockSpec((KH * KW * Cin, bn), lambda t, c: (0, c)),
                pl.BlockSpec((1, bn), lambda t, c: (0, c)),
            ],
            out_specs=pl.BlockSpec((block_m, bn), lambda t, c: (t, c)),
            scratch_shapes=[
                pltpu.VMEM((block_m + halo, Cin), jnp.bfloat16),      # window
                pltpu.VMEM((block_m, KH * KW * Cin), jnp.bfloat16),   # LHS
            ],
        ),
        compiler_params=pltpu.CompilerParams(
            # M tiles shard across TCs; Cout axis sequential so the LHS
            # scratch assembled at c==0 stays valid for c>0.
            dimension_semantics=("parallel", "arbitrary"),
            vmem_limit_bytes=32 * 1024 * 1024,   # safe on v5e/v6e/v7x
        ),
        cost_estimate=cost,
    )(xf, xf, w_mat, b_mat)

    # flat [M, Cout_pad] bf16 -> NHWC crop -> single trailing NCHW transpose
    # (fused with the f32 upcast by XLA).
    out = out_flat[:M].reshape(N, Hp, Wp, cout_pad)[:, :OH, :OW, :Cout]
    return jnp.transpose(out, (0, 3, 1, 2)).astype(jnp.float32)


if __name__ == "__main__":
    key = jax.random.PRNGKey(0)
    k_x, k_p = jax.random.split(key)

    N, Cin, H, W = 2, 4, 16, 16
    Cout = 8

    x = jax.random.normal(k_x, (N, Cin, H, W), jnp.float32)
    weight, bias = init_conv2d_params(k_p, Cin, Cout, kernel_size=(3, 3))

    y = conv2d_pallas(x, weight, bias, stride=(1, 1), padding=(1, 0))
    y = jax.block_until_ready(y)

    # Reference (same semantics as torch Conv2d with padding=(1,0)).
    y_ref = lax.conv_general_dilated(
        x, weight,
        window_strides=(1, 1),
        padding=((1, 1), (0, 0)),
        dimension_numbers=("NCHW", "OIHW", "NCHW"),
    ) + bias.reshape(1, Cout, 1, 1)

    assert y.shape == (N, Cout, H, W - 2), y.shape
    max_err = float(jnp.max(jnp.abs(y - y_ref)))
    # bf16 operands + bf16 output with f32 accumulation -> loosened tolerance.
    assert jnp.allclose(y, y_ref, atol=6e-2, rtol=6e-2), max_err
    print("KERNEL_OK")
</pallas_src>

<mosaic_0001>
module attributes {stable_mosaic.version = 11 : i64} {
  func.func @_conv_kernel(%arg0: i32, %arg1: i32, %arg2: memref<576x4xbf16, #tpu.memory_space<vmem>>, %arg3: memref<48x4xbf16, #tpu.memory_space<vmem>>, %arg4: memref<36x128xbf16, #tpu.memory_space<vmem>>, %arg5: memref<1x128xf32, #tpu.memory_space<vmem>>, %arg6: memref<576x128xbf16, #tpu.memory_space<vmem>>, %arg7: memref<624x4xbf16, #tpu.memory_space<vmem>>, %arg8: memref<576x36xbf16, #tpu.memory_space<vmem>>) attributes {dimension_semantics = [#tpu.dimension_semantics<parallel>, #tpu.dimension_semantics<arbitrary>], iteration_bounds = array<i64: 1, 1>, scalar_prefetch = 0 : i64, scratch_operands = 2 : i64, tpu.core_type = #tpu.core_type<tc>, window_params = [{transform_indices = @transform_0, window_bounds = array<i64: 576, 4>}, {transform_indices = @transform_1, window_bounds = array<i64: 48, 4>}, {transform_indices = @transform_2, window_bounds = array<i64: 36, 128>}, {transform_indices = @transform_3, window_bounds = array<i64: 1, 128>}, {transform_indices = @transform_4, window_bounds = array<i64: 576, 128>}]} {
    %c0_i32 = arith.constant 0 : i32
    %0 = arith.cmpi eq, %arg1, %c0_i32 : i32
    %1 = arith.extui %0 : i1 to i32
    %c0_i32_0 = arith.constant 0 : i32
    %2 = arith.cmpi ne, %1, %c0_i32_0 : i32
    scf.if %2 {
      %c0_8 = arith.constant 0 : index
      %c0_9 = arith.constant 0 : index
      %11 = vector.load %arg2[%c0_8, %c0_9] : memref<576x4xbf16, #tpu.memory_space<vmem>>, vector<576x4xbf16>
      %c0_10 = arith.constant 0 : index
      %c0_11 = arith.constant 0 : index
      %12 = vector.load %arg7[%c0_10, %c0_11] : memref<624x4xbf16, #tpu.memory_space<vmem>>, vector<576x4xbf16>
      tpu.vector_store %arg7[%c0_10, %c0_11], %11 {strides = array<i32>} : memref<624x4xbf16, #tpu.memory_space<vmem>>, vector<576x4xbf16>,
      %c0_12 = arith.constant 0 : index
      %c0_13 = arith.constant 0 : index
      %13 = vector.load %arg3[%c0_12, %c0_13] : memref<48x4xbf16, #tpu.memory_space<vmem>>, vector<48x4xbf16>
      %c576 = arith.constant 576 : index
      %c0_14 = arith.constant 0 : index
      %14 = vector.load %arg7[%c576, %c0_14] : memref<624x4xbf16, #tpu.memory_space<vmem>>, vector<48x4xbf16>
      tpu.vector_store %arg7[%c576, %c0_14], %13 {strides = array<i32>} : memref<624x4xbf16, #tpu.memory_space<vmem>>, vector<48x4xbf16>,
      %c0_15 = arith.constant 0 : index
      %c0_16 = arith.constant 0 : index
      %15 = vector.load %arg7[%c0_15, %c0_16] : memref<624x4xbf16, #tpu.memory_space<vmem>>, vector<576x4xbf16>
      %c0_17 = arith.constant 0 : index
      %c0_18 = arith.constant 0 : index
      %16 = vector.load %arg8[%c0_17, %c0_18] : memref<576x36xbf16, #tpu.memory_space<vmem>>, vector<576x4xbf16>
      tpu.vector_store %arg8[%c0_17, %c0_18], %15 {strides = array<i32>} : memref<576x36xbf16, #tpu.memory_space<vmem>>, vector<576x4xbf16>,
      %c1 = arith.constant 1 : index
      %c0_19 = arith.constant 0 : index
      %17 = vector.load %arg7[%c1, %c0_19] : memref<624x4xbf16, #tpu.memory_space<vmem>>, vector<576x4xbf16>
      %c0_20 = arith.constant 0 : index
      %c4 = arith.constant 4 : index
      %18 = vector.load %arg8[%c0_20, %c4] : memref<576x36xbf16, #tpu.memory_space<vmem>>, vector<576x4xbf16>
      tpu.vector_store %arg8[%c0_20, %c4], %17 {strides = array<i32>} : memref<576x36xbf16, #tpu.memory_space<vmem>>, vector<576x4xbf16>,
      %c2 = arith.constant 2 : index
      %c0_21 = arith.constant 0 : index
      %19 = vector.load %arg7[%c2, %c0_21] : memref<624x4xbf16, #tpu.memory_space<vmem>>, vector<576x4xbf16>
      %c0_22 = arith.constant 0 : index
      %c8 = arith.constant 8 : index
      %20 = vector.load %arg8[%c0_22, %c8] : memref<576x36xbf16, #tpu.memory_space<vmem>>, vector<576x4xbf16>
      tpu.vector_store %arg8[%c0_22, %c8], %19 {strides = array<i32>} : memref<576x36xbf16, #tpu.memory_space<vmem>>, vector<576x4xbf16>,
      %c16 = arith.constant 16 : index
      %c0_23 = arith.constant 0 : index
      %21 = vector.load %arg7[%c16, %c0_23] : memref<624x4xbf16, #tpu.memory_space<vmem>>, vector<576x4xbf16>
      %c0_24 = arith.constant 0 : index
      %c12 = arith.constant 12 : index
      %22 = vector.load %arg8[%c0_24, %c12] : memref<576x36xbf16, #tpu.memory_space<vmem>>, vector<576x4xbf16>
      tpu.vector_store %arg8[%c0_24, %c12], %21 {strides = array<i32>} : memref<576x36xbf16, #tpu.memory_space<vmem>>, vector<576x4xbf16>,
      %c17 = arith.constant 17 : index
      %c0_25 = arith.constant 0 : index
      %23 = vector.load %arg7[%c17, %c0_25] : memref<624x4xbf16, #tpu.memory_space<vmem>>, vector<576x4xbf16>
      %c0_26 = arith.constant 0 : index
      %c16_27 = arith.constant 16 : index
      %24 = vector.load %arg8[%c0_26, %c16_27] : memref<576x36xbf16, #tpu.memory_space<vmem>>, vector<576x4xbf16>
      tpu.vector_store %arg8[%c0_26, %c16_27], %23 {strides = array<i32>} : memref<576x36xbf16, #tpu.memory_space<vmem>>, vector<576x4xbf16>,
      %c18 = arith.constant 18 : index
      %c0_28 = arith.constant 0 : index
      %25 = vector.load %arg7[%c18, %c0_28] : memref<624x4xbf16, #tpu.memory_space<vmem>>, vector<576x4xbf16>
      %c0_29 = arith.constant 0 : index
      %c20 = arith.constant 20 : index
      %26 = vector.load %arg8[%c0_29, %c20] : memref<576x36xbf16, #tpu.memory_space<vmem>>, vector<576x4xbf16>
      tpu.vector_store %arg8[%c0_29, %c20], %25 {strides = array<i32>} : memref<576x36xbf16, #tpu.memory_space<vmem>>, vector<576x4xbf16>,
      %c32 = arith.constant 32 : index
      %c0_30 = arith.constant 0 : index
      %27 = vector.load %arg7[%c32, %c0_30] : memref<624x4xbf16, #tpu.memory_space<vmem>>, vector<576x4xbf16>
      %c0_31 = arith.constant 0 : index
      %c24 = arith.constant 24 : index
      %28 = vector.load %arg8[%c0_31, %c24] : memref<576x36xbf16, #tpu.memory_space<vmem>>, vector<576x4xbf16>
      tpu.vector_store %arg8[%c0_31, %c24], %27 {strides = array<i32>} : memref<576x36xbf16, #tpu.memory_space<vmem>>, vector<576x4xbf16>,
      %c33 = arith.constant 33 : index
      %c0_32 = arith.constant 0 : index
      %29 = vector.load %arg7[%c33, %c0_32] : memref<624x4xbf16, #tpu.memory_space<vmem>>, vector<576x4xbf16>
      %c0_33 = arith.constant 0 : index
      %c28 = arith.constant 28 : index
      %30 = vector.load %arg8[%c0_33, %c28] : memref<576x36xbf16, #tpu.memory_space<vmem>>, vector<576x4xbf16>
      tpu.vector_store %arg8[%c0_33, %c28], %29 {strides = array<i32>} : memref<576x36xbf16, #tpu.memory_space<vmem>>, vector<576x4xbf16>,
      %c34 = arith.constant 34 : index
      %c0_34 = arith.constant 0 : index
      %31 = vector.load %arg7[%c34, %c0_34] : memref<624x4xbf16, #tpu.memory_space<vmem>>, vector<576x4xbf16>
      %c0_35 = arith.constant 0 : index
      %c32_36 = arith.constant 32 : index
      %32 = vector.load %arg8[%c0_35, %c32_36] : memref<576x36xbf16, #tpu.memory_space<vmem>>, vector<576x4xbf16>
      tpu.vector_store %arg8[%c0_35, %c32_36], %31 {strides = array<i32>} : memref<576x36xbf16, #tpu.memory_space<vmem>>, vector<576x4xbf16>,
    } else {
    }
    %c0 = arith.constant 0 : index
    %c0_1 = arith.constant 0 : index
    %3 = vector.load %arg8[%c0, %c0_1] : memref<576x36xbf16, #tpu.memory_space<vmem>>, vector<576x36xbf16>
    %c0_2 = arith.constant 0 : index
    %c0_3 = arith.constant 0 : index
    %4 = vector.load %arg4[%c0_2, %c0_3] : memref<36x128xbf16, #tpu.memory_space<vmem>>, vector<36x128xbf16>
    %cst = arith.constant dense<0.000000e+00> : vector<576x128xf32>
    %5 = tpu.matmul %3, %4, %cst {dimension_numbers = #tpu.dot_dimension_numbers<[1], [0], [0], [1], [0, 0, 1, 1], [], []>} : vector<576x36xbf16>, vector<36x128xbf16>, vector<576x128xf32> -> vector<576x128xf32>
    %c0_4 = arith.constant 0 : index
    %c0_5 = arith.constant 0 : index
    %6 = vector.load %arg5[%c0_4, %c0_5] : memref<1x128xf32, #tpu.memory_space<vmem>>, vector<1x128xf32>
    %7 = vector.broadcast %6 : vector<1x128xf32> to vector<576x128xf32>
    %8 = arith.addf %5, %7 : vector<576x128xf32>
    %9 = arith.truncf %8 : vector<576x128xf32> to vector<576x128xbf16>
    %c0_6 = arith.constant 0 : index
    %c0_7 = arith.constant 0 : index
    %10 = vector.load %arg6[%c0_6, %c0_7] : memref<576x128xbf16, #tpu.memory_space<vmem>>, vector<576x128xbf16>
    tpu.vector_store %arg6[%c0_6, %c0_7], %9 {strides = array<i32>} : memref<576x128xbf16, #tpu.memory_space<vmem>>, vector<576x128xbf16>,
    return
  }
  func.func @transform_0(%arg0: i32, %arg1: i32) -> (i32, i32) {
    %c0_i32 = arith.constant 0 : i32
    %c0_i32_0 = arith.constant 0 : i32
    return %arg0, %c0_i32 : i32, i32
  }
  func.func @transform_1(%arg0: i32, %arg1: i32) -> (i32, i32) {
    %c1_i32 = arith.constant 1 : i32
    %0 = arith.addi %arg0, %c1_i32 : i32
    %c12_i32 = arith.constant 12 : i32
    %1 = arith.muli %0, %c12_i32 : i32
    %c0_i32 = arith.constant 0 : i32
    %c0_i32_0 = arith.constant 0 : i32
    return %1, %c0_i32 : i32, i32
  }
  func.func @transform_2(%arg0: i32, %arg1: i32) -> (i32, i32) {
    %c0_i32 = arith.constant 0 : i32
    %c0_i32_0 = arith.constant 0 : i32
    return %c0_i32, %arg1 : i32, i32
  }
  func.func @transform_3(%arg0: i32, %arg1: i32) -> (i32, i32) {
    %c0_i32 = arith.constant 0 : i32
    %c0_i32_0 = arith.constant 0 : i32
    return %c0_i32, %arg1 : i32, i32
  }
  func.func @transform_4(%arg0: i32, %arg1: i32) -> (i32, i32) {
    %c0_i32 = arith.constant 0 : i32
    return %arg0, %arg1 : i32, i32
  }
}

</mosaic_0001>

<llo_original>
// kernel: tpu_custom_call.1
$region0: #{tpu_custom_call.1}
  #allocation0 [shape = 'u32[]', space=smem, size = 0x4, offset = 0x4, fixed_abs, tag = 'smem constant byte address 0x4 - core index']
  #allocation1 [shape = 'u32[144,128]{1,0:T(1,128)}', space=vmem, size = 0x12000, scoped, tag = 'internal scratch']
  #allocation2 [shape = 'bf16[624,4]{1,0:T(8,128)(2,1)}', space=vmem, size = 0x27000, scoped, tag = 'scratch operand']
  #allocation3 [shape = 'bf16[576,36]{1,0:T(8,128)(2,1)}', space=vmem, size = 0x24000, scoped, tag = 'scratch operand']
  %s0 = inlined_call_operand.vmem [shape: bf16[1152,4], index: 0, kind: input, shape index: {}]
  %s1 = inlined_call_operand.vmem [shape: bf16[1152,4], index: 1, kind: input, shape index: {}]
  %s2 = inlined_call_operand.vmem [shape: bf16[36,128], index: 2, kind: input, shape index: {}]
  %s3 = inlined_call_operand.vmem [shape: f32[1,128], index: 3, kind: input, shape index: {}]
  %s4 = inlined_call_operand.hbm [shape: bf16[576,128], index: 4, kind: output, shape index: {}]
  %s5 = sld [smem:[#allocation0]]
  $region30: #{tpu_custom_call.1} parent=0
    _
  %s7 = ssub.s32 1, %s5
  %s8 = scalar_select 0, %s7, %s5
  $region1: #{tpu_custom_call.1} parent=0
    #allocation4 [shape = 'u8[147456]{0}', space=vmem, size = 0x24000, scoped, tag = 'output window, operand 0, single buffered']
    #allocation5 [shape = 's32[1]{0}', space=sflag, size = 0x4, scoped, tag = 'scoped memory for tpu_custom_call.1']
    %9 = vsyncpa [#allocation5], 0
    // Predicated region
    $region2: #{tpu_custom_call.1} parent=1 // pred_check
      _
    $region3: #{tpu_custom_call.1} parent=1 // pred_check_branch
      %11 = sbr.rel (0) target = $region5
    $region4: #{tpu_custom_call.1} parent=1 // pred_region
      _
    $region5: #{tpu_custom_call.1} parent=1 // pred_fallthru
      _
    // Predicated region
    $region6: #{tpu_custom_call.1} parent=1 // pred_check
      _
    $region7: #{tpu_custom_call.1} parent=1 // pred_check_branch
      %13 = sbr.rel (0) target = $region9
    $region8: #{tpu_custom_call.1} parent=1 // pred_region
      %s14 = sadd.s32 0, 1
      %s15 = smul.u32 %s14, 12
      %s16 = smul.u32 6, %s15
      %p17 = scmp.lt.s32.totalorder %s16, 143
      %s18 = scalar_select %p17, %s16, 143
      %s19 = smul.addr %s18, 4
      %s20 = scalar_lea.vmem %s1, %s19
      %s21 = sadd.s32 0, 1
      %s22 = smul.u32 %s21, 12
      %s23 = smul.u32 6, %s22
    $region9: #{tpu_custom_call.1} parent=1 // pred_fallthru
      _
    // Predicated region
    $region10: #{tpu_custom_call.1} parent=1 // pred_check
      _
    $region11: #{tpu_custom_call.1} parent=1 // pred_check_branch
      %25 = sbr.rel (0) target = $region13
    $region12: #{tpu_custom_call.1} parent=1 // pred_region
      _
    $region13: #{tpu_custom_call.1} parent=1 // pred_fallthru
      _
    // Predicated region
    $region14: #{tpu_custom_call.1} parent=1 // pred_check
      _
    $region15: #{tpu_custom_call.1} parent=1 // pred_check_branch
      %27 = sbr.rel (0) target = $region17
    $region16: #{tpu_custom_call.1} parent=1 // pred_region
      _
    $region17: #{tpu_custom_call.1} parent=1 // pred_fallthru
      _
    %s28 = sadd.s32 0, 1
    %s29 = smul.u32 %s28, 12
    %s30 = smul.u32 6, %s29
    %p31 = scmp.lt.s32.totalorder %s30, 143
    %s32 = scalar_select %p31, %s30, 143
    %s33 = smul.addr %s32, 4
    %s34 = scalar_lea.vmem %s1, %s33
    %s35 = sadd.s32 0, 1
    %s36 = smul.u32 %s35, 12
    %s37 = smul.u32 6, %s36
    %p38 = scmp.lt.s32.totalorder %s37, 143
    %s39 = scalar_select %p38, %s37, 143
    %s40 = smul.addr %s39, 4
    %s41 = scalar_lea.vmem %s1, %s40
    %s42 = sadd.s32 0, 1
    %s43 = smul.u32 %s42, 12
    %s44 = smul.u32 6, %s43
    %p46 = scmp.eq.s32.totalorder 0, 0
    // Predicated region
    $region18: #{tpu_custom_call.1} parent=1 // pred_check
      %p47 = pneg %p46
    $region19: #{tpu_custom_call.1} parent=1 // pred_check_branch
      %49 = sbr.rel (%p47) target = $region21
    $region20: #{tpu_custom_call.1} parent=1 // pred_region
      %v50 = vld [vmem:[%s0] sm:$0xf]
      %v51 = vld [vmem:[%s0 + $0x4] sm:$0xf]
      %v52 = vld [vmem:[%s0 + $0x8] sm:$0xf]
      %v53 = vld [vmem:[%s0 + $0xc] sm:$0xf]
      %v54 = vld [vmem:[%s0 + $0x10] sm:$0xf]
      %v55 = vld [vmem:[%s0 + $0x14] sm:$0xf]
      %v56 = vld [vmem:[%s0 + $0x18] sm:$0xf]
      %v57 = vld [vmem:[%s0 + $0x1c] sm:$0xf]
      %v58 = vld [vmem:[%s0 + $0x20] sm:$0xf]
      %v59 = vld [vmem:[%s0 + $0x24] sm:$0xf]
      %v60 = vld [vmem:[%s0 + $0x28] sm:$0xf]
      %v61 = vld [vmem:[%s0 + $0x2c] sm:$0xf]
      %v62 = vld [vmem:[%s0 + $0x30] sm:$0xf]
      %v63 = vld [vmem:[%s0 + $0x34] sm:$0xf]
      %v64 = vld [vmem:[%s0 + $0x38] sm:$0xf]
      %v65 = vld [vmem:[%s0 + $0x3c] sm:$0xf]
      %v66 = vld [vmem:[%s0 + $0x40] sm:$0xf]
      %v67 = vld [vmem:[%s0 + $0x44] sm:$0xf]
      %v68 = vld [vmem:[%s0 + $0x48] sm:$0xf]
      %v69 = vld [vmem:[%s0 + $0x4c] sm:$0xf]
      %v70 = vld [vmem:[%s0 + $0x50] sm:$0xf]
      %v71 = vld [vmem:[%s0 + $0x54] sm:$0xf]
      %v72 = vld [vmem:[%s0 + $0x58] sm:$0xf]
      %v73 = vld [vmem:[%s0 + $0x5c] sm:$0xf]
      %v74 = vld [vmem:[%s0 + $0x60] sm:$0xf]
      %v75 = vld [vmem:[%s0 + $0x64] sm:$0xf]
      %v76 = vld [vmem:[%s0 + $0x68] sm:$0xf]
      %v77 = vld [vmem:[%s0 + $0x6c] sm:$0xf]
      %v78 = vld [vmem:[%s0 + $0x70] sm:$0xf]
      %v79 = vld [vmem:[%s0 + $0x74] sm:$0xf]
      %v80 = vld [vmem:[%s0 + $0x78] sm:$0xf]
      %v81 = vld [vmem:[%s0 + $0x7c] sm:$0xf]
      %v82 = vld [vmem:[%s0 + $0x80] sm:$0xf]
      %v83 = vld [vmem:[%s0 + $0x84] sm:$0xf]
      %v84 = vld [vmem:[%s0 + $0x88] sm:$0xf]
      %v85 = vld [vmem:[%s0 + $0x8c] sm:$0xf]
      %v86 = vld [vmem:[%s0 + $0x90] sm:$0xf]
      %v87 = vld [vmem:[%s0 + $0x94] sm:$0xf]
      %v88 = vld [vmem:[%s0 + $0x98] sm:$0xf]
      %v89 = vld [vmem:[%s0 + $0x9c] sm:$0xf]
      %v90 = vld [vmem:[%s0 + $0xa0] sm:$0xf]
      %v91 = vld [vmem:[%s0 + $0xa4] sm:$0xf]
      %v92 = vld [vmem:[%s0 + $0xa8] sm:$0xf]
      %v93 = vld [vmem:[%s0 + $0xac] sm:$0xf]
      %v94 = vld [vmem:[%s0 + $0xb0] sm:$0xf]
      %v95 = vld [vmem:[%s0 + $0xb4] sm:$0xf]
      %v96 = vld [vmem:[%s0 + $0xb8] sm:$0xf]
      %v97 = vld [vmem:[%s0 + $0xbc] sm:$0xf]
      %v98 = vld [vmem:[%s0 + $0xc0] sm:$0xf]
      %v99 = vld [vmem:[%s0 + $0xc4] sm:$0xf]
      %v100 = vld [vmem:[%s0 + $0xc8] sm:$0xf]
      %v101 = vld [vmem:[%s0 + $0xcc] sm:$0xf]
      %v102 = vld [vmem:[%s0 + $0xd0] sm:$0xf]
      %v103 = vld [vmem:[%s0 + $0xd4] sm:$0xf]
      %v104 = vld [vmem:[%s0 + $0xd8] sm:$0xf]
      %v105 = vld [vmem:[%s0 + $0xdc] sm:$0xf]
      %v106 = vld [vmem:[%s0 + $0xe0] sm:$0xf]
      %v107 = vld [vmem:[%s0 + $0xe4] sm:$0xf]
      %v108 = vld [vmem:[%s0 + $0xe8] sm:$0xf]
      %v109 = vld [vmem:[%s0 + $0xec] sm:$0xf]
      %v110 = vld [vmem:[%s0 + $0xf0] sm:$0xf]
      %v111 = vld [vmem:[%s0 + $0xf4] sm:$0xf]
      %v112 = vld [vmem:[%s0 + $0xf8] sm:$0xf]
      %v113 = vld [vmem:[%s0 + $0xfc] sm:$0xf]
      %v114 = vld [vmem:[%s0 + $0x100] sm:$0xf]
      %v115 = vld [vmem:[%s0 + $0x104] sm:$0xf]
      %v116 = vld [vmem:[%s0 + $0x108] sm:$0xf]
      %v117 = vld [vmem:[%s0 + $0x10c] sm:$0xf]
      %v118 = vld [vmem:[%s0 + $0x110] sm:$0xf]
      %v119 = vld [vmem:[%s0 + $0x114] sm:$0xf]
      %v120 = vld [vmem:[%s0 + $0x118] sm:$0xf]
      %v121 = vld [vmem:[%s0 + $0x11c] sm:$0xf]
      %vm122 = vcmask 27648
      %123 = vst.msk [vmem:[#allocation2] sm:$0xf] %vm122, %v50
      %124 = vst.msk [vmem:[#allocation2 + $0x4] sm:$0xf] %vm122, %v51
      %125 = vst.msk [vmem:[#allocation2 + $0x8] sm:$0xf] %vm122, %v52
      %126 = vst.msk [vmem:[#allocation2 + $0xc] sm:$0xf] %vm122, %v53
      %127 = vst.msk [vmem:[#allocation2 + $0x10] sm:$0xf] %vm122, %v54
      %128 = vst.msk [vmem:[#allocation2 + $0x14] sm:$0xf] %vm122, %v55
      %129 = vst.msk [vmem:[#allocation2 + $0x18] sm:$0xf] %vm122, %v56
      %130 = vst.msk [vmem:[#allocation2 + $0x1c] sm:$0xf] %vm122, %v57
      %131 = vst.msk [vmem:[#allocation2 + $0x20] sm:$0xf] %vm122, %v58
      %132 = vst.msk [vmem:[#allocation2 + $0x24] sm:$0xf] %vm122, %v59
      %133 = vst.msk [vmem:[#allocation2 + $0x28] sm:$0xf] %vm122, %v60
      %134 = vst.msk [vmem:[#allocation2 + $0x2c] sm:$0xf] %vm122, %v61
      %135 = vst.msk [vmem:[#allocation2 + $0x30] sm:$0xf] %vm122, %v62
      %136 = vst.msk [vmem:[#allocation2 + $0x34] sm:$0xf] %vm122, %v63
      %137 = vst.msk [vmem:[#allocation2 + $0x38] sm:$0xf] %vm122, %v64
      %138 = vst.msk [vmem:[#allocation2 + $0x3c] sm:$0xf] %vm122, %v65
      %139 = vst.msk [vmem:[#allocation2 + $0x40] sm:$0xf] %vm122, %v66
      %140 = vst.msk [vmem:[#allocation2 + $0x44] sm:$0xf] %vm122, %v67
      %141 = vst.msk [vmem:[#allocation2 + $0x48] sm:$0xf] %vm122, %v68
      %142 = vst.msk [vmem:[#allocation2 + $0x4c] sm:$0xf] %vm122, %v69
      %143 = vst.msk [vmem:[#allocation2 + $0x50] sm:$0xf] %vm122, %v70
      %144 = vst.msk [vmem:[#allocation2 + $0x54] sm:$0xf] %vm122, %v71
      %145 = vst.msk [vmem:[#allocation2 + $0x58] sm:$0xf] %vm122, %v72
      %146 = vst.msk [vmem:[#allocation2 + $0x5c] sm:$0xf] %vm122, %v73
      %147 = vst.msk [vmem:[#allocation2 + $0x60] sm:$0xf] %vm122, %v74
      %148 = vst.msk [vmem:[#allocation2 + $0x64] sm:$0xf] %vm122, %v75
      %149 = vst.msk [vmem:[#allocation2 + $0x68] sm:$0xf] %vm122, %v76
      %150 = vst.msk [vmem:[#allocation2 + $0x6c] sm:$0xf] %vm122, %v77
      %151 = vst.msk [vmem:[#allocation2 + $0x70] sm:$0xf] %vm122, %v78
      %152 = vst.msk [vmem:[#allocation2 + $0x74] sm:$0xf] %vm122, %v79
      %153 = vst.msk [vmem:[#allocation2 + $0x78] sm:$0xf] %vm122, %v80
      %154 = vst.msk [vmem:[#allocation2 + $0x7c] sm:$0xf] %vm122, %v81
      %155 = vst.msk [vmem:[#allocation2 + $0x80] sm:$0xf] %vm122, %v82
      %156 = vst.msk [vmem:[#allocation2 + $0x84] sm:$0xf] %vm122, %v83
      %157 = vst.msk [vmem:[#allocation2 + $0x88] sm:$0xf] %vm122, %v84
      %158 = vst.msk [vmem:[#allocation2 + $0x8c] sm:$0xf] %vm122, %v85
      %159 = vst.msk [vmem:[#allocation2 + $0x90] sm:$0xf] %vm122, %v86
      %160 = vst.msk [vmem:[#allocation2 + $0x94] sm:$0xf] %vm122, %v87
      %161 = vst.msk [vmem:[#allocation2 + $0x98] sm:$0xf] %vm122, %v88
      %162 = vst.msk [vmem:[#allocation2 + $0x9c] sm:$0xf] %vm122, %v89
      %163 = vst.msk [vmem:[#allocation2 + $0xa0] sm:$0xf] %vm122, %v90
      %164 = vst.msk [vmem:[#allocation2 + $0xa4] sm:$0xf] %vm122, %v91
      %165 = vst.msk [vmem:[#allocation2 + $0xa8] sm:$0xf] %vm122, %v92
      %166 = vst.msk [vmem:[#allocation2 + $0xac] sm:$0xf] %vm122, %v93
      %167 = vst.msk [vmem:[#allocation2 + $0xb0] sm:$0xf] %vm122, %v94
      %168 = vst.msk [vmem:[#allocation2 + $0xb4] sm:$0xf] %vm122, %v95
      %169 = vst.msk [vmem:[#allocation2 + $0xb8] sm:$0xf] %vm122, %v96
      %170 = vst.msk [vmem:[#allocation2 + $0xbc] sm:$0xf] %vm122, %v97
      %171 = vst.msk [vmem:[#allocation2 + $0xc0] sm:$0xf] %vm122, %v98
      %172 = vst.msk [vmem:[#allocation2 + $0xc4] sm:$0xf] %vm122, %v99
      %173 = vst.msk [vmem:[#allocation2 + $0xc8] sm:$0xf] %vm122, %v100
      %174 = vst.msk [vmem:[#allocation2 + $0xcc] sm:$0xf] %vm122, %v101
      %175 = vst.msk [vmem:[#allocation2 + $0xd0] sm:$0xf] %vm122, %v102
      %176 = vst.msk [vmem:[#allocation2 + $0xd4] sm:$0xf] %vm122, %v103
      %177 = vst.msk [vmem:[#allocation2 + $0xd8] sm:$0xf] %vm122, %v104
      %178 = vst.msk [vmem:[#allocation2 + $0xdc] sm:$0xf] %vm122, %v105
      %179 = vst.msk [vmem:[#allocation2 + $0xe0] sm:$0xf] %vm122, %v106
      %180 = vst.msk [vmem:[#allocation2 + $0xe4] sm:$0xf] %vm122, %v107
      %181 = vst.msk [vmem:[#allocation2 + $0xe8] sm:$0xf] %vm122, %v108
      %182 = vst.msk [vmem:[#allocation2 + $0xec] sm:$0xf] %vm122, %v109
      %183 = vst.msk [vmem:[#allocation2 + $0xf0] sm:$0xf] %vm122, %v110
      %184 = vst.msk [vmem:[#allocation2 + $0xf4] sm:$0xf] %vm122, %v111
      %185 = vst.msk [vmem:[#allocation2 + $0xf8] sm:$0xf] %vm122, %v112
      %186 = vst.msk [vmem:[#allocation2 + $0xfc] sm:$0xf] %vm122, %v113
      %187 = vst.msk [vmem:[#allocation2 + $0x100] sm:$0xf] %vm122, %v114
      %188 = vst.msk [vmem:[#allocation2 + $0x104] sm:$0xf] %vm122, %v115
      %189 = vst.msk [vmem:[#allocation2 + $0x108] sm:$0xf] %vm122, %v116
      %190 = vst.msk [vmem:[#allocation2 + $0x10c] sm:$0xf] %vm122, %v117
      %191 = vst.msk [vmem:[#allocation2 + $0x110] sm:$0xf] %vm122, %v118
      %192 = vst.msk [vmem:[#allocation2 + $0x114] sm:$0xf] %vm122, %v119
      %193 = vst.msk [vmem:[#allocation2 + $0x118] sm:$0xf] %vm122, %v120
      %194 = vst.msk [vmem:[#allocation2 + $0x11c] sm:$0xf] %vm122, %v121
      %v195 = vld [vmem:[%s41] sm:$0xf]
      %v196 = vld [vmem:[%s41 + $0x4] sm:$0xf]
      %v197 = vld [vmem:[%s41 + $0x8] sm:$0xf]
      %v198 = vld [vmem:[%s41 + $0xc] sm:$0xf]
      %v199 = vld [vmem:[%s41 + $0x10] sm:$0xf]
      %v200 = vld [vmem:[%s41 + $0x14] sm:$0xf]
      %201 = vst.msk [vmem:[#allocation2 + $0x120] sm:$0xf] %vm122, %v195
      %202 = vst.msk [vmem:[#allocation2 + $0x124] sm:$0xf] %vm122, %v196
      %203 = vst.msk [vmem:[#allocation2 + $0x128] sm:$0xf] %vm122, %v197
      %204 = vst.msk [vmem:[#allocation2 + $0x12c] sm:$0xf] %vm122, %v198
      %205 = vst.msk [vmem:[#allocation2 + $0x130] sm:$0xf] %vm122, %v199
      %206 = vst.msk [vmem:[#allocation2 + $0x134] sm:$0xf] %vm122, %v200
      %v207 = vld [vmem:[#allocation2] sm:$0xf]
      %v208 = vld [vmem:[#allocation2 + $0x4] sm:$0xf]
      %v209 = vld [vmem:[#allocation2 + $0x8] sm:$0xf]
      %v210 = vld [vmem:[#allocation2 + $0xc] sm:$0xf]
      %v211 = vld [vmem:[#allocation2 + $0x10] sm:$0xf]
      %v212 = vld [vmem:[#allocation2 + $0x14] sm:$0xf]
      %v213 = vld [vmem:[#allocation2 + $0x18] sm:$0xf]
      %v214 = vld [vmem:[#allocation2 + $0x1c] sm:$0xf]
      %v215 = vld [vmem:[#allocation2 + $0x20] sm:$0xf]
      %v216 = vld [vmem:[#allocation2 + $0x24] sm:$0xf]
      %v217 = vld [vmem:[#allocation2 + $0x28] sm:$0xf]
      %v218 = vld [vmem:[#allocation2 + $0x2c] sm:$0xf]
      %v219 = vld [vmem:[#allocation2 + $0x30] sm:$0xf]
      %v220 = vld [vmem:[#allocation2 + $0x34] sm:$0xf]
      %v221 = vld [vmem:[#allocation2 + $0x38] sm:$0xf]
      %v222 = vld [vmem:[#allocation2 + $0x3c] sm:$0xf]
      %v223 = vld [vmem:[#allocation2 + $0x40] sm:$0xf]
      %v224 = vld [vmem:[#allocation2 + $0x44] sm:$0xf]
      %v225 = vld [vmem:[#allocation2 + $0x48] sm:$0xf]
      %v226 = vld [vmem:[#allocation2 + $0x4c] sm:$0xf]
      %v227 = vld [vmem:[#allocation2 + $0x50] sm:$0xf]
      %v228 = vld [vmem:[#allocation2 + $0x54] sm:$0xf]
      %v229 = vld [vmem:[#allocation2 + $0x58] sm:$0xf]
      %v230 = vld [vmem:[#allocation2 + $0x5c] sm:$0xf]
      %v231 = vld [vmem:[#allocation2 + $0x60] sm:$0xf]
      %v232 = vld [vmem:[#allocation2 + $0x64] sm:$0xf]
      %v233 = vld [vmem:[#allocation2 + $0x68] sm:$0xf]
      %v234 = vld [vmem:[#allocation2 + $0x6c] sm:$0xf]
      %v235 = vld [vmem:[#allocation2 + $0x70] sm:$0xf]
      %v236 = vld [vmem:[#allocation2 + $0x74] sm:$0xf]
      %v237 = vld [vmem:[#allocation2 + $0x78] sm:$0xf]
      %v238 = vld [vmem:[#allocation2 + $0x7c] sm:$0xf]
      %v239 = vld [vmem:[#allocation2 + $0x80] sm:$0xf]
      %v240 = vld [vmem:[#allocation2 + $0x84] sm:$0xf]
      %v241 = vld [vmem:[#allocation2 + $0x88] sm:$0xf]
      %v242 = vld [vmem:[#allocation2 + $0x8c] sm:$0xf]
      %v243 = vld [vmem:[#allocation2 + $0x90] sm:$0xf]
      %v244 = vld [vmem:[#allocation2 + $0x94] sm:$0xf]
      %v245 = vld [vmem:[#allocation2 + $0x98] sm:$0xf]
      %v246 = vld [vmem:[#allocation2 + $0x9c] sm:$0xf]
      %v247 = vld [vmem:[#allocation2 + $0xa0] sm:$0xf]
      %v248 = vld [vmem:[#allocation2 + $0xa4] sm:$0xf]
      %v249 = vld [vmem:[#allocation2 + $0xa8] sm:$0xf]
      %v250 = vld [vmem:[#allocation2 + $0xac] sm:$0xf]
      %v251 = vld [vmem:[#allocation2 + $0xb0] sm:$0xf]
      %v252 = vld [vmem:[#allocation2 + $0xb4] sm:$0xf]
      %v253 = vld [vmem:[#allocation2 + $0xb8] sm:$0xf]
      %v254 = vld [vmem:[#allocation2 + $0xbc] sm:$0xf]
      %v255 = vld [vmem:[#allocation2 + $0xc0] sm:$0xf]
      %v256 = vld [vmem:[#allocation2 + $0xc4] sm:$0xf]
      %v257 = vld [vmem:[#allocation2 + $0xc8] sm:$0xf]
      %v258 = vld [vmem:[#allocation2 + $0xcc] sm:$0xf]
      %v259 = vld [vmem:[#allocation2 + $0xd0] sm:$0xf]
      %v260 = vld [vmem:[#allocation2 + $0xd4] sm:$0xf]
      %v261 = vld [vmem:[#allocation2 + $0xd8] sm:$0xf]
      %v262 = vld [vmem:[#allocation2 + $0xdc] sm:$0xf]
      %v263 = vld [vmem:[#allocation2 + $0xe0] sm:$0xf]
      %v264 = vld [vmem:[#allocation2 + $0xe4] sm:$0xf]
      %v265 = vld [vmem:[#allocation2 + $0xe8] sm:$0xf]
      %v266 = vld [vmem:[#allocation2 + $0xec] sm:$0xf]
      %v267 = vld [vmem:[#allocation2 + $0xf0] sm:$0xf]
      %v268 = vld [vmem:[#allocation2 + $0xf4] sm:$0xf]
      %v269 = vld [vmem:[#allocation2 + $0xf8] sm:$0xf]
      %v270 = vld [vmem:[#allocation2 + $0xfc] sm:$0xf]
      %v271 = vld [vmem:[#allocation2 + $0x100] sm:$0xf]
      %v272 = vld [vmem:[#allocation2 + $0x104] sm:$0xf]
      %v273 = vld [vmem:[#allocation2 + $0x108] sm:$0xf]
      %v274 = vld [vmem:[#allocation2 + $0x10c] sm:$0xf]
      %v275 = vld [vmem:[#allocation2 + $0x110] sm:$0xf]
      %v276 = vld [vmem:[#allocation2 + $0x114] sm:$0xf]
      %v277 = vld [vmem:[#allocation2 + $0x118] sm:$0xf]
      %v278 = vld [vmem:[#allocation2 + $0x11c] sm:$0xf]
      %279 = vst.msk [vmem:[#allocation3] sm:$0xf] %vm122, %v207
      %280 = vst.msk [vmem:[#allocation3 + $0x4] sm:$0xf] %vm122, %v208
      %281 = vst.msk [vmem:[#allocation3 + $0x8] sm:$0xf] %vm122, %v209
      %282 = vst.msk [vmem:[#allocation3 + $0xc] sm:$0xf] %vm122, %v210
      %283 = vst.msk [vmem:[#allocation3 + $0x10] sm:$0xf] %vm122, %v211
      %284 = vst.msk [vmem:[#allocation3 + $0x14] sm:$0xf] %vm122, %v212
      %285 = vst.msk [vmem:[#allocation3 + $0x18] sm:$0xf] %vm122, %v213
      %286 = vst.msk [vmem:[#allocation3 + $0x1c] sm:$0xf] %vm122, %v214
      %287 = vst.msk [vmem:[#allocation3 + $0x20] sm:$0xf] %vm122, %v215
      %288 = vst.msk [vmem:[#allocation3 + $0x24] sm:$0xf] %vm122, %v216
      %289 = vst.msk [vmem:[#allocation3 + $0x28] sm:$0xf] %vm122, %v217
      %290 = vst.msk [vmem:[#allocation3 + $0x2c] sm:$0xf] %vm122, %v218
      %291 = vst.msk [vmem:[#allocation3 + $0x30] sm:$0xf] %vm122, %v219
      %292 = vst.msk [vmem:[#allocation3 + $0x34] sm:$0xf] %vm122, %v220
      %293 = vst.msk [vmem:[#allocation3 + $0x38] sm:$0xf] %vm122, %v221
      %294 = vst.msk [vmem:[#allocation3 + $0x3c] sm:$0xf] %vm122, %v222
      %295 = vst.msk [vmem:[#allocation3 + $0x40] sm:$0xf] %vm122, %v223
      %296 = vst.msk [vmem:[#allocation3 + $0x44] sm:$0xf] %vm122, %v224
      %297 = vst.msk [vmem:[#allocation3 + $0x48] sm:$0xf] %vm122, %v225
      %298 = vst.msk [vmem:[#allocation3 + $0x4c] sm:$0xf] %vm122, %v226
      %299 = vst.msk [vmem:[#allocation3 + $0x50] sm:$0xf] %vm122, %v227
      %300 = vst.msk [vmem:[#allocation3 + $0x54] sm:$0xf] %vm122, %v228
      %301 = vst.msk [vmem:[#allocation3 + $0x58] sm:$0xf] %vm122, %v229
      %302 = vst.msk [vmem:[#allocation3 + $0x5c] sm:$0xf] %vm122, %v230
      %303 = vst.msk [vmem:[#allocation3 + $0x60] sm:$0xf] %vm122, %v231
      %304 = vst.msk [vmem:[#allocation3 + $0x64] sm:$0xf] %vm122, %v232
      %305 = vst.msk [vmem:[#allocation3 + $0x68] sm:$0xf] %vm122, %v233
      %306 = vst.msk [vmem:[#allocation3 + $0x6c] sm:$0xf] %vm122, %v234
      %307 = vst.msk [vmem:[#allocation3 + $0x70] sm:$0xf] %vm122, %v235
      %308 = vst.msk [vmem:[#allocation3 + $0x74] sm:$0xf] %vm122, %v236
      %309 = vst.msk [vmem:[#allocation3 + $0x78] sm:$0xf] %vm122, %v237
      %310 = vst.msk [vmem:[#allocation3 + $0x7c] sm:$0xf] %vm122, %v238
      %311 = vst.msk [vmem:[#allocation3 + $0x80] sm:$0xf] %vm122, %v239
      %312 = vst.msk [vmem:[#allocation3 + $0x84] sm:$0xf] %vm122, %v240
      %313 = vst.msk [vmem:[#allocation3 + $0x88] sm:$0xf] %vm122, %v241
      %314 = vst.msk [vmem:[#allocation3 + $0x8c] sm:$0xf] %vm122, %v242
      %315 = vst.msk [vmem:[#allocation3 + $0x90] sm:$0xf] %vm122, %v243
      %316 = vst.msk [vmem:[#allocation3 + $0x94] sm:$0xf] %vm122, %v244
      %317 = vst.msk [vmem:[#allocation3 + $0x98] sm:$0xf] %vm122, %v245
      %318 = vst.msk [vmem:[#allocation3 + $0x9c] sm:$0xf] %vm122, %v246
      %319 = vst.msk [vmem:[#allocation3 + $0xa0] sm:$0xf] %vm122, %v247
      %320 = vst.msk [vmem:[#allocation3 + $0xa4] sm:$0xf] %vm122, %v248
      %321 = vst.msk [vmem:[#allocation3 + $0xa8] sm:$0xf] %vm122, %v249
      %322 = vst.msk [vmem:[#allocation3 + $0xac] sm:$0xf] %vm122, %v250
      %323 = vst.msk [vmem:[#allocation3 + $0xb0] sm:$0xf] %vm122, %v251
      %324 = vst.msk [vmem:[#allocation3 + $0xb4] sm:$0xf] %vm122, %v252
      %325 = vst.msk [vmem:[#allocation3 + $0xb8] sm:$0xf] %vm122, %v253
      %326 = vst.msk [vmem:[#allocation3 + $0xbc] sm:$0xf] %vm122, %v254
      %327 = vst.msk [vmem:[#allocation3 + $0xc0] sm:$0xf] %vm122, %v255
      %328 = vst.msk [vmem:[#allocation3 + $0xc4] sm:$0xf] %vm122, %v256
      %329 = vst.msk [vmem:[#allocation3 + $0xc8] sm:$0xf] %vm122, %v257
      %330 = vst.msk [vmem:[#allocation3 + $0xcc] sm:$0xf] %vm122, %v258
      %331 = vst.msk [vmem:[#allocation3 + $0xd0] sm:$0xf] %vm122, %v259
      %332 = vst.msk [vmem:[#allocation3 + $0xd4] sm:$0xf] %vm122, %v260
      %333 = vst.msk [vmem:[#allocation3 + $0xd8] sm:$0xf] %vm122, %v261
      %334 = vst.msk [vmem:[#allocation3 + $0xdc] sm:$0xf] %vm122, %v262
      %335 = vst.msk [vmem:[#allocation3 + $0xe0] sm:$0xf] %vm122, %v263
      %336 = vst.msk [vmem:[#allocation3 + $0xe4] sm:$0xf] %vm122, %v264
      %337 = vst.msk [vmem:[#allocation3 + $0xe8] sm:$0xf] %vm122, %v265
      %338 = vst.msk [vmem:[#allocation3 + $0xec] sm:$0xf] %vm122, %v266
      %339 = vst.msk [vmem:[#allocation3 + $0xf0] sm:$0xf] %vm122, %v267
      %340 = vst.msk [vmem:[#allocation3 + $0xf4] sm:$0xf] %vm122, %v268
      %341 = vst.msk [vmem:[#allocation3 + $0xf8] sm:$0xf] %vm122, %v269
      %342 = vst.msk [vmem:[#allocation3 + $0xfc] sm:$0xf] %vm122, %v270
      %343 = vst.msk [vmem:[#allocation3 + $0x100] sm:$0xf] %vm122, %v271
      %344 = vst.msk [vmem:[#allocation3 + $0x104] sm:$0xf] %vm122, %v272
      %345 = vst.msk [vmem:[#allocation3 + $0x108] sm:$0xf] %vm122, %v273
      %346 = vst.msk [vmem:[#allocation3 + $0x10c] sm:$0xf] %vm122, %v274
      %347 = vst.msk [vmem:[#allocation3 + $0x110] sm:$0xf] %vm122, %v275
      %348 = vst.msk [vmem:[#allocation3 + $0x114] sm:$0xf] %vm122, %v276
      %349 = vst.msk [vmem:[#allocation3 + $0x118] sm:$0xf] %vm122, %v277
      %350 = vst.msk [vmem:[#allocation3 + $0x11c] sm:$0xf] %vm122, %v278
      %v351 = vld [vmem:[#allocation2] sm:$0xf]
      %v352 = vld [vmem:[#allocation2 + $0x4] sm:$0xf]
      %v353 = vld [vmem:[#allocation2 + $0x8] sm:$0xf]
      %v354 = vld [vmem:[#allocation2 + $0xc] sm:$0xf]
      %v355 = vld [vmem:[#allocation2 + $0x10] sm:$0xf]
      %v356 = vld [vmem:[#allocation2 + $0x14] sm:$0xf]
      %v357 = vld [vmem:[#allocation2 + $0x18] sm:$0xf]
      %v358 = vld [vmem:[#allocation2 + $0x1c] sm:$0xf]
      %v359 = vld [vmem:[#allocation2 + $0x20] sm:$0xf]
      %v360 = vld [vmem:[#allocation2 + $0x24] sm:$0xf]
      %v361 = vld [vmem:[#allocation2 + $0x28] sm:$0xf]
      %v362 = vld [vmem:[#allocation2 + $0x2c] sm:$0xf]
      %v363 = vld [vmem:[#allocation2 + $0x30] sm:$0xf]
      %v364 = vld [vmem:[#allocation2 + $0x34] sm:$0xf]
      %v365 = vld [vmem:[#allocation2 + $0x38] sm:$0xf]
      %v366 = vld [vmem:[#allocation2 + $0x3c] sm:$0xf]
      %v367 = vld [vmem:[#allocation2 + $0x40] sm:$0xf]
      %v368 = vld [vmem:[#allocation2 + $0x44] sm:$0xf]
      %v369 = vld [vmem:[#allocation2 + $0x48] sm:$0xf]
      %v370 = vld [vmem:[#allocation2 + $0x4c] sm:$0xf]
      %v371 = vld [vmem:[#allocation2 + $0x50] sm:$0xf]
      %v372 = vld [vmem:[#allocation2 + $0x54] sm:$0xf]
      %v373 = vld [vmem:[#allocation2 + $0x58] sm:$0xf]
      %v374 = vld [vmem:[#allocation2 + $0x5c] sm:$0xf]
      %v375 = vld [vmem:[#allocation2 + $0x60] sm:$0xf]
      %v376 = vld [vmem:[#allocation2 + $0x64] sm:$0xf]
      %v377 = vld [vmem:[#allocation2 + $0x68] sm:$0xf]
      %v378 = vld [vmem:[#allocation2 + $0x6c] sm:$0xf]
      %v379 = vld [vmem:[#allocation2 + $0x70] sm:$0xf]
      %v380 = vld [vmem:[#allocation2 + $0x74] sm:$0xf]
      %v381 = vld [vmem:[#allocation2 + $0x78] sm:$0xf]
      %v382 = vld [vmem:[#allocation2 + $0x7c] sm:$0xf]
      %v383 = vld [vmem:[#allocation2 + $0x80] sm:$0xf]
      %v384 = vld [vmem:[#allocation2 + $0x84] sm:$0xf]
      %v385 = vld [vmem:[#allocation2 + $0x88] sm:$0xf]
      %v386 = vld [vmem:[#allocation2 + $0x8c] sm:$0xf]
      %v387 = vld [vmem:[#allocation2 + $0x90] sm:$0xf]
      %v388 = vld [vmem:[#allocation2 + $0x94] sm:$0xf]
      %v389 = vld [vmem:[#allocation2 + $0x98] sm:$0xf]
      %v390 = vld [vmem:[#allocation2 + $0x9c] sm:$0xf]
      %v391 = vld [vmem:[#allocation2 + $0xa0] sm:$0xf]
      %v392 = vld [vmem:[#allocation2 + $0xa4] sm:$0xf]
      %v393 = vld [vmem:[#allocation2 + $0xa8] sm:$0xf]
      %v394 = vld [vmem:[#allocation2 + $0xac] sm:$0xf]
      %v395 = vld [vmem:[#allocation2 + $0xb0] sm:$0xf]
      %v396 = vld [vmem:[#allocation2 + $0xb4] sm:$0xf]
      %v397 = vld [vmem:[#allocation2 + $0xb8] sm:$0xf]
      %v398 = vld [vmem:[#allocation2 + $0xbc] sm:$0xf]
      %v399 = vld [vmem:[#allocation2 + $0xc0] sm:$0xf]
      %v400 = vld [vmem:[#allocation2 + $0xc4] sm:$0xf]
      %v401 = vld [vmem:[#allocation2 + $0xc8] sm:$0xf]
      %v402 = vld [vmem:[#allocation2 + $0xcc] sm:$0xf]
      %v403 = vld [vmem:[#allocation2 + $0xd0] sm:$0xf]
      %v404 = vld [vmem:[#allocation2 + $0xd4] sm:$0xf]
      %v405 = vld [vmem:[#allocation2 + $0xd8] sm:$0xf]
      %v406 = vld [vmem:[#allocation2 + $0xdc] sm:$0xf]
      %v407 = vld [vmem:[#allocation2 + $0xe0] sm:$0xf]
      %v408 = vld [vmem:[#allocation2 + $0xe4] sm:$0xf]
      %v409 = vld [vmem:[#allocation2 + $0xe8] sm:$0xf]
      %v410 = vld [vmem:[#allocation2 + $0xec] sm:$0xf]
      %v411 = vld [vmem:[#allocation2 + $0xf0] sm:$0xf]
      %v412 = vld [vmem:[#allocation2 + $0xf4] sm:$0xf]
      %v413 = vld [vmem:[#allocation2 + $0xf8] sm:$0xf]
      %v414 = vld [vmem:[#allocation2 + $0xfc] sm:$0xf]
      %v415 = vld [vmem:[#allocation2 + $0x100] sm:$0xf]
      %v416 = vld [vmem:[#allocation2 + $0x104] sm:$0xf]
      %v417 = vld [vmem:[#allocation2 + $0x108] sm:$0xf]
      %v418 = vld [vmem:[#allocation2 + $0x10c] sm:$0xf]
      %v419 = vld [vmem:[#allocation2 + $0x110] sm:$0xf]
      %v420 = vld [vmem:[#allocation2 + $0x114] sm:$0xf]
      %v421 = vld [vmem:[#allocation2 + $0x118] sm:$0xf]
      %v422 = vld [vmem:[#allocation2 + $0x11c] sm:$0xf]
      %v423 = vld [vmem:[#allocation2 + $0x120] sm:$0x1]
      %vm424 = vsmask.f32 3328
      %vm425 = vsmask.f32 7440
      %vm426 = vmor %vm424, %vm425
      %v428 = vshrl.u32 %v351, 16
      %v430 = vrot.slane %v428, 4
      %v431 = vshll.u32 %v351, 16
      %v433 = vrot.slane %v431, 5
      %v434 = vor.u32 %v430, %v433
      %v435 = vrot.slane %v434, 4
      %v437 = vshll.u32 %v352, 16
      %v439 = vrot.slane %v437, 5
      %v440 = vsel %vm426, %v435, %v439
      %v441 = vshrl.u32 %v352, 16
      %v443 = vrot.slane %v441, 4
      %v444 = vor.u32 %v443, %v439
      %v445 = vrot.slane %v444, 4
      %v447 = vshll.u32 %v353, 16
      %v449 = vrot.slane %v447, 5
      %v450 = vsel %vm426, %v445, %v449
      %v451 = vshrl.u32 %v353, 16
      %v453 = vrot.slane %v451, 4
      %v454 = vor.u32 %v453, %v449
      %v455 = vrot.slane %v454, 4
      %v457 = vshll.u32 %v354, 16
      %v459 = vrot.slane %v457, 5
      %v460 = vsel %vm426, %v455, %v459
      %v461 = vshrl.u32 %v354, 16
      %v463 = vrot.slane %v461, 4
      %v464 = vor.u32 %v463, %v459
      %v465 = vrot.slane %v464, 4
      %v467 = vshll.u32 %v355, 16
      %v469 = vrot.slane %v467, 5
      %v470 = vsel %vm426, %v465, %v469
      %v471 = vshrl.u32 %v355, 16
      %v473 = vrot.slane %v471, 4
      %v474 = vor.u32 %v473, %v469
      %v475 = vrot.slane %v474, 4
      %v477 = vshll.u32 %v356, 16
      %v479 = vrot.slane %v477, 5
      %v480 = vsel %vm426, %v475, %v479
      %v481 = vshrl.u32 %v356, 16
      %v483 = vrot.slane %v481, 4
      %v484 = vor.u32 %v483, %v479
      %v485 = vrot.slane %v484, 4
      %v487 = vshll.u32 %v357, 16
      %v489 = vrot.slane %v487, 5
      %v490 = vsel %vm426, %v485, %v489
      %v491 = vshrl.u32 %v357, 16
      %v493 = vrot.slane %v491, 4
      %v494 = vor.u32 %v493, %v489
      %v495 = vrot.slane %v494, 4
      %v497 = vshll.u32 %v358, 16
      %v499 = vrot.slane %v497, 5
      %v500 = vsel %vm426, %v495, %v499
      %v501 = vshrl.u32 %v358, 16
      %v503 = vrot.slane %v501, 4
      %v504 = vor.u32 %v503, %v499
      %v505 = vrot.slane %v504, 4
      %v507 = vshll.u32 %v359, 16
      %v509 = vrot.slane %v507, 5
      %v510 = vsel %vm426, %v505, %v509
      %v511 = vshrl.u32 %v359, 16
      %v513 = vrot.slane %v511, 4
      %v514 = vor.u32 %v513, %v509
      %v515 = vrot.slane %v514, 4
      %v517 = vshll.u32 %v360, 16
      %v519 = vrot.slane %v517, 5
      %v520 = vsel %vm426, %v515, %v519
      %v521 = vshrl.u32 %v360, 16
      %v523 = vrot.slane %v521, 4
      %v524 = vor.u32 %v523, %v519
      %v525 = vrot.slane %v524, 4
      %v527 = vshll.u32 %v361, 16
      %v529 = vrot.slane %v527, 5
      %v530 = vsel %vm426, %v525, %v529
      %v531 = vshrl.u32 %v361, 16
      %v533 = vrot.slane %v531, 4
      %v534 = vor.u32 %v533, %v529
      %v535 = vrot.slane %v534, 4
      %v537 = vshll.u32 %v362, 16
      %v539 = vrot.slane %v537, 5
      %v540 = vsel %vm426, %v535, %v539
      %v541 = vshrl.u32 %v362, 16
      %v543 = vrot.slane %v541, 4
      %v544 = vor.u32 %v543, %v539
      %v545 = vrot.slane %v544, 4
      %v547 = vshll.u32 %v363, 16
      %v549 = vrot.slane %v547, 5
      %v550 = vsel %vm426, %v545, %v549
      %v551 = vshrl.u32 %v363, 16
      %v553 = vrot.slane %v551, 4
      %v554 = vor.u32 %v553, %v549
      %v555 = vrot.slane %v554, 4
      %v557 = vshll.u32 %v364, 16
      %v559 = vrot.slane %v557, 5
      %v560 = vsel %vm426, %v555, %v559
      %v561 = vshrl.u32 %v364, 16
      %v563 = vrot.slane %v561, 4
      %v564 = vor.u32 %v563, %v559
      %v565 = vrot.slane %v564, 4
      %v567 = vshll.u32 %v365, 16
      %v569 = vrot.slane %v567, 5
      %v570 = vsel %vm426, %v565, %v569
      %v571 = vshrl.u32 %v365, 16
      %v573 = vrot.slane %v571, 4
      %v574 = vor.u32 %v573, %v569
      %v575 = vrot.slane %v574, 4
      %v577 = vshll.u32 %v366, 16
      %v579 = vrot.slane %v577, 5
      %v580 = vsel %vm426, %v575, %v579
      %v581 = vshrl.u32 %v366, 16
      %v583 = vrot.slane %v581, 4
      %v584 = vor.u32 %v583, %v579
      %v585 = vrot.slane %v584, 4
      %v587 = vshll.u32 %v367, 16
      %v589 = vrot.slane %v587, 5
      %v590 = vsel %vm426, %v585, %v589
      %v591 = vshrl.u32 %v367, 16
      %v593 = vrot.slane %v591, 4
      %v594 = vor.u32 %v593, %v589
      %v595 = vrot.slane %v594, 4
      %v597 = vshll.u32 %v368, 16
      %v599 = vrot.slane %v597, 5
      %v600 = vsel %vm426, %v595, %v599
      %v601 = vshrl.u32 %v368, 16
      %v603 = vrot.slane %v601, 4
      %v604 = vor.u32 %v603, %v599
      %v605 = vrot.slane %v604, 4
      %v607 = vshll.u32 %v369, 16
      %v609 = vrot.slane %v607, 5
      %v610 = vsel %vm426, %v605, %v609
      %v611 = vshrl.u32 %v369, 16
      %v613 = vrot.slane %v611, 4
      %v614 = vor.u32 %v613, %v609
      %v615 = vrot.slane %v614, 4
      %v617 = vshll.u32 %v370, 16
      %v619 = vrot.slane %v617, 5
      %v620 = vsel %vm426, %v615, %v619
      %v621 = vshrl.u32 %v370, 16
      %v623 = vrot.slane %v621, 4
      %v624 = vor.u32 %v623, %v619
      %v625 = vrot.slane %v624, 4
      %v627 = vshll.u32 %v371, 16
      %v629 = vrot.slane %v627, 5
      %v630 = vsel %vm426, %v625, %v629
      %v631 = vshrl.u32 %v371, 16
      %v633 = vrot.slane %v631, 4
      %v634 = vor.u32 %v633, %v629
      %v635 = vrot.slane %v634, 4
      %v637 = vshll.u32 %v372, 16
      %v639 = vrot.slane %v637, 5
      %v640 = vsel %vm426, %v635, %v639
      %v641 = vshrl.u32 %v372, 16
      %v643 = vrot.slane %v641, 4
      %v644 = vor.u32 %v643, %v639
      %v645 = vrot.slane %v644, 4
      %v647 = vshll.u32 %v373, 16
      %v649 = vrot.slane %v647, 5
      %v650 = vsel %vm426, %v645, %v649
      %v651 = vshrl.u32 %v373, 16
      %v653 = vrot.slane %v651, 4
      %v654 = vor.u32 %v653, %v649
      %v655 = vrot.slane %v654, 4
      %v657 = vshll.u32 %v374, 16
      %v659 = vrot.slane %v657, 5
      %v660 = vsel %vm426, %v655, %v659
      %v661 = vshrl.u32 %v374, 16
      %v663 = vrot.slane %v661, 4
      %v664 = vor.u32 %v663, %v659
      %v665 = vrot.slane %v664, 4
      %v667 = vshll.u32 %v375, 16
      %v669 = vrot.slane %v667, 5
      %v670 = vsel %vm426, %v665, %v669
      %v671 = vshrl.u32 %v375, 16
      %v673 = vrot.slane %v671, 4
      %v674 = vor.u32 %v673, %v669
      %v675 = vrot.slane %v674, 4
      %v677 = vshll.u32 %v376, 16
      %v679 = vrot.slane %v677, 5
      %v680 = vsel %vm426, %v675, %v679
      %v681 = vshrl.u32 %v376, 16
      %v683 = vrot.slane %v681, 4
      %v684 = vor.u32 %v683, %v679
      %v685 = vrot.slane %v684, 4
      %v687 = vshll.u32 %v377, 16
      %v689 = vrot.slane %v687, 5
      %v690 = vsel %vm426, %v685, %v689
      %v691 = vshrl.u32 %v377, 16
      %v693 = vrot.slane %v691, 4
      %v694 = vor.u32 %v693, %v689
      %v695 = vrot.slane %v694, 4
      %v697 = vshll.u32 %v378, 16
      %v699 = vrot.slane %v697, 5
      %v700 = vsel %vm426, %v695, %v699
      %v701 = vshrl.u32 %v378, 16
      %v703 = vrot.slane %v701, 4
      %v704 = vor.u32 %v703, %v699
      %v705 = vrot.slane %v704, 4
      %v707 = vshll.u32 %v379, 16
      %v709 = vrot.slane %v707, 5
      %v710 = vsel %vm426, %v705, %v709
      %v711 = vshrl.u32 %v379, 16
      %v713 = vrot.slane %v711, 4
      %v714 = vor.u32 %v713, %v709
      %v715 = vrot.slane %v714, 4
      %v717 = vshll.u32 %v380, 16
      %v719 = vrot.slane %v717, 5
      %v720 = vsel %vm426, %v715, %v719
      %v721 = vshrl.u32 %v380, 16
      %v723 = vrot.slane %v721, 4
      %v724 = vor.u32 %v723, %v719
      %v725 = vrot.slane %v724, 4
      %v727 = vshll.u32 %v381, 16
      %v729 = vrot.slane %v727, 5
      %v730 = vsel %vm426, %v725, %v729
      %v731 = vshrl.u32 %v381, 16
      %v733 = vrot.slane %v731, 4
      %v734 = vor.u32 %v733, %v729
      %v735 = vrot.slane %v734, 4
      %v737 = vshll.u32 %v382, 16
      %v739 = vrot.slane %v737, 5
      %v740 = vsel %vm426, %v735, %v739
      %v741 = vshrl.u32 %v382, 16
      %v743 = vrot.slane %v741, 4
      %v744 = vor.u32 %v743, %v739
      %v745 = vrot.slane %v744, 4
      %v747 = vshll.u32 %v383, 16
      %v749 = vrot.slane %v747, 5
      %v750 = vsel %vm426, %v745, %v749
      %v751 = vshrl.u32 %v383, 16
      %v753 = vrot.slane %v751, 4
      %v754 = vor.u32 %v753, %v749
      %v755 = vrot.slane %v754, 4
      %v757 = vshll.u32 %v384, 16
      %v759 = vrot.slane %v757, 5
      %v760 = vsel %vm426, %v755, %v759
      %v761 = vshrl.u32 %v384, 16
      %v763 = vrot.slane %v761, 4
      %v764 = vor.u32 %v763, %v759
      %v765 = vrot.slane %v764, 4
      %v767 = vshll.u32 %v385, 16
      %v769 = vrot.slane %v767, 5
      %v770 = vsel %vm426, %v765, %v769
      %v771 = vshrl.u32 %v385, 16
      %v773 = vrot.slane %v771, 4
      %v774 = vor.u32 %v773, %v769
      %v775 = vrot.slane %v774, 4
      %v777 = vshll.u32 %v386, 16
      %v779 = vrot.slane %v777, 5
      %v780 = vsel %vm426, %v775, %v779
      %v781 = vshrl.u32 %v386, 16
      %v783 = vrot.slane %v781, 4
      %v784 = vor.u32 %v783, %v779
      %v785 = vrot.slane %v784, 4
      %v787 = vshll.u32 %v387, 16
      %v789 = vrot.slane %v787, 5
      %v790 = vsel %vm426, %v785, %v789
      %v791 = vshrl.u32 %v387, 16
      %v793 = vrot.slane %v791, 4
      %v794 = vor.u32 %v793, %v789
      %v795 = vrot.slane %v794, 4
      %v797 = vshll.u32 %v388, 16
      %v799 = vrot.slane %v797, 5
      %v800 = vsel %vm426, %v795, %v799
      %v801 = vshrl.u32 %v388, 16
      %v803 = vrot.slane %v801, 4
      %v804 = vor.u32 %v803, %v799
      %v805 = vrot.slane %v804, 4
      %v807 = vshll.u32 %v389, 16
      %v809 = vrot.slane %v807, 5
      %v810 = vsel %vm426, %v805, %v809
      %v811 = vshrl.u32 %v389, 16
      %v813 = vrot.slane %v811, 4
      %v814 = vor.u32 %v813, %v809
      %v815 = vrot.slane %v814, 4
      %v817 = vshll.u32 %v390, 16
      %v819 = vrot.slane %v817, 5
      %v820 = vsel %vm426, %v815, %v819
      %v821 = vshrl.u32 %v390, 16
      %v823 = vrot.slane %v821, 4
      %v824 = vor.u32 %v823, %v819
      %v825 = vrot.slane %v824, 4
      %v827 = vshll.u32 %v391, 16
      %v829 = vrot.slane %v827, 5
      %v830 = vsel %vm426, %v825, %v829
      %v831 = vshrl.u32 %v391, 16
      %v833 = vrot.slane %v831, 4
      %v834 = vor.u32 %v833, %v829
      %v835 = vrot.slane %v834, 4
      %v837 = vshll.u32 %v392, 16
      %v839 = vrot.slane %v837, 5
      %v840 = vsel %vm426, %v835, %v839
      %v841 = vshrl.u32 %v392, 16
      %v843 = vrot.slane %v841, 4
      %v844 = vor.u32 %v843, %v839
      %v845 = vrot.slane %v844, 4
      %v847 = vshll.u32 %v393, 16
      %v849 = vrot.slane %v847, 5
      %v850 = vsel %vm426, %v845, %v849
      %v851 = vshrl.u32 %v393, 16
      %v853 = vrot.slane %v851, 4
      %v854 = vor.u32 %v853, %v849
      %v855 = vrot.slane %v854, 4
      %v857 = vshll.u32 %v394, 16
      %v859 = vrot.slane %v857, 5
      %v860 = vsel %vm426, %v855, %v859
      %v861 = vshrl.u32 %v394, 16
      %v863 = vrot.slane %v861, 4
      %v864 = vor.u32 %v863, %v859
      %v865 = vrot.slane %v864, 4
      %v867 = vshll.u32 %v395, 16
      %v869 = vrot.slane %v867, 5
      %v870 = vsel %vm426, %v865, %v869
      %v871 = vshrl.u32 %v395, 16
      %v873 = vrot.slane %v871, 4
      %v874 = vor.u32 %v873, %v869
      %v875 = vrot.slane %v874, 4
      %v877 = vshll.u32 %v396, 16
      %v879 = vrot.slane %v877, 5
      %v880 = vsel %vm426, %v875, %v879
      %v881 = vshrl.u32 %v396, 16
      %v883 = vrot.slane %v881, 4
      %v884 = vor.u32 %v883, %v879
      %v885 = vrot.slane %v884, 4
      %v887 = vshll.u32 %v397, 16
      %v889 = vrot.slane %v887, 5
      %v890 = vsel %vm426, %v885, %v889
      %v891 = vshrl.u32 %v397, 16
      %v893 = vrot.slane %v891, 4
      %v894 = vor.u32 %v893, %v889
      %v895 = vrot.slane %v894, 4
      %v897 = vshll.u32 %v398, 16
      %v899 = vrot.slane %v897, 5
      %v900 = vsel %vm426, %v895, %v899
      %v901 = vshrl.u32 %v398, 16
      %v903 = vrot.slane %v901, 4
      %v904 = vor.u32 %v903, %v899
      %v905 = vrot.slane %v904, 4
      %v907 = vshll.u32 %v399, 16
      %v909 = vrot.slane %v907, 5
      %v910 = vsel %vm426, %v905, %v909
      %v911 = vshrl.u32 %v399, 16
      %v913 = vrot.slane %v911, 4
      %v914 = vor.u32 %v913, %v909
      %v915 = vrot.slane %v914, 4
      %v917 = vshll.u32 %v400, 16
      %v919 = vrot.slane %v917, 5
      %v920 = vsel %vm426, %v915, %v919
      %v921 = vshrl.u32 %v400, 16
      %v923 = vrot.slane %v921, 4
      %v924 = vor.u32 %v923, %v919
      %v925 = vrot.slane %v924, 4
      %v927 = vshll.u32 %v401, 16
      %v929 = vrot.slane %v927, 5
      %v930 = vsel %vm426, %v925, %v929
      %v931 = vshrl.u32 %v401, 16
      %v933 = vrot.slane %v931, 4
      %v934 = vor.u32 %v933, %v929
      %v935 = vrot.slane %v934, 4
      %v937 = vshll.u32 %v402, 16
      %v939 = vrot.slane %v937, 5
      %v940 = vsel %vm426, %v935, %v939
      %v941 = vshrl.u32 %v402, 16
      %v943 = vrot.slane %v941, 4
      %v944 = vor.u32 %v943, %v939
      %v945 = vrot.slane %v944, 4
      %v947 = vshll.u32 %v403, 16
      %v949 = vrot.slane %v947, 5
      %v950 = vsel %vm426, %v945, %v949
      %v951 = vshrl.u32 %v403, 16
      %v953 = vrot.slane %v951, 4
      %v954 = vor.u32 %v953, %v949
      %v955 = vrot.slane %v954, 4
      %v957 = vshll.u32 %v404, 16
      %v959 = vrot.slane %v957, 5
      %v960 = vsel %vm426, %v955, %v959
      %v961 = vshrl.u32 %v404, 16
      %v963 = vrot.slane %v961, 4
      %v964 = vor.u32 %v963, %v959
      %v965 = vrot.slane %v964, 4
      %v967 = vshll.u32 %v405, 16
      %v969 = vrot.slane %v967, 5
      %v970 = vsel %vm426, %v965, %v969
      %v971 = vshrl.u32 %v405, 16
      %v973 = vrot.slane %v971, 4
      %v974 = vor.u32 %v973, %v969
      %v975 = vrot.slane %v974, 4
      %v977 = vshll.u32 %v406, 16
      %v979 = vrot.slane %v977, 5
      %v980 = vsel %vm426, %v975, %v979
      %v981 = vshrl.u32 %v406, 16
      %v983 = vrot.slane %v981, 4
      %v984 = vor.u32 %v983, %v979
      %v985 = vrot.slane %v984, 4
      %v987 = vshll.u32 %v407, 16
      %v989 = vrot.slane %v987, 5
      %v990 = vsel %vm426, %v985, %v989
      %v991 = vshrl.u32 %v407, 16
      %v993 = vrot.slane %v991, 4
      %v994 = vor.u32 %v993, %v989
      %v995 = vrot.slane %v994, 4
      %v997 = vshll.u32 %v408, 16
      %v999 = vrot.slane %v997, 5
      %v1000 = vsel %vm426, %v995, %v999
      %v1001 = vshrl.u32 %v408, 16
      %v1003 = vrot.slane %v1001, 4
      %v1004 = vor.u32 %v1003, %v999
      %v1005 = vrot.slane %v1004, 4
      %v1007 = vshll.u32 %v409, 16
      %v1009 = vrot.slane %v1007, 5
      %v1010 = vsel %vm426, %v1005, %v1009
      %v1011 = vshrl.u32 %v409, 16
      %v1013 = vrot.slane %v1011, 4
      %v1014 = vor.u32 %v1013, %v1009
      %v1015 = vrot.slane %v1014, 4
      %v1017 = vshll.u32 %v410, 16
      %v1019 = vrot.slane %v1017, 5
      %v1020 = vsel %vm426, %v1015, %v1019
      %v1021 = vshrl.u32 %v410, 16
      %v1023 = vrot.slane %v1021, 4
      %v1024 = vor.u32 %v1023, %v1019
      %v1025 = vrot.slane %v1024, 4
      %v1027 = vshll.u32 %v411, 16
      %v1029 = vrot.slane %v1027, 5
      %v1030 = vsel %vm426, %v1025, %v1029
      %v1031 = vshrl.u32 %v411, 16
      %v1033 = vrot.slane %v1031, 4
      %v1034 = vor.u32 %v1033, %v1029
      %v1035 = vrot.slane %v1034, 4
      %v1037 = vshll.u32 %v412, 16
      %v1039 = vrot.slane %v1037, 5
      %v1040 = vsel %vm426, %v1035, %v1039
      %v1041 = vshrl.u32 %v412, 16
      %v1043 = vrot.slane %v1041, 4
      %v1044 = vor.u32 %v1043, %v1039
      %v1045 = vrot.slane %v1044, 4
      %v1047 = vshll.u32 %v413, 16
      %v1049 = vrot.slane %v1047, 5
      %v1050 = vsel %vm426, %v1045, %v1049
      %v1051 = vshrl.u32 %v413, 16
      %v1053 = vrot.slane %v1051, 4
      %v1054 = vor.u32 %v1053, %v1049
      %v1055 = vrot.slane %v1054, 4
      %v1057 = vshll.u32 %v414, 16
      %v1059 = vrot.slane %v1057, 5
      %v1060 = vsel %vm426, %v1055, %v1059
      %v1061 = vshrl.u32 %v414, 16
      %v1063 = vrot.slane %v1061, 4
      %v1064 = vor.u32 %v1063, %v1059
      %v1065 = vrot.slane %v1064, 4
      %v1067 = vshll.u32 %v415, 16
      %v1069 = vrot.slane %v1067, 5
      %v1070 = vsel %vm426, %v1065, %v1069
      %v1071 = vshrl.u32 %v415, 16
      %v1073 = vrot.slane %v1071, 4
      %v1074 = vor.u32 %v1073, %v1069
      %v1075 = vrot.slane %v1074, 4
      %v1077 = vshll.u32 %v416, 16
      %v1079 = vrot.slane %v1077, 5
      %v1080 = vsel %vm426, %v1075, %v1079
      %v1081 = vshrl.u32 %v416, 16
      %v1083 = vrot.slane %v1081, 4
      %v1084 = vor.u32 %v1083, %v1079
      %v1085 = vrot.slane %v1084, 4
      %v1087 = vshll.u32 %v417, 16
      %v1089 = vrot.slane %v1087, 5
      %v1090 = vsel %vm426, %v1085, %v1089
      %v1091 = vshrl.u32 %v417, 16
      %v1093 = vrot.slane %v1091, 4
      %v1094 = vor.u32 %v1093, %v1089
      %v1095 = vrot.slane %v1094, 4
      %v1097 = vshll.u32 %v418, 16
      %v1099 = vrot.slane %v1097, 5
      %v1100 = vsel %vm426, %v1095, %v1099
      %v1101 = vshrl.u32 %v418, 16
      %v1103 = vrot.slane %v1101, 4
      %v1104 = vor.u32 %v1103, %v1099
      %v1105 = vrot.slane %v1104, 4
      %v1107 = vshll.u32 %v419, 16
      %v1109 = vrot.slane %v1107, 5
      %v1110 = vsel %vm426, %v1105, %v1109
      %v1111 = vshrl.u32 %v419, 16
      %v1113 = vrot.slane %v1111, 4
      %v1114 = vor.u32 %v1113, %v1109
      %v1115 = vrot.slane %v1114, 4
      %v1117 = vshll.u32 %v420, 16
      %v1119 = vrot.slane %v1117, 5
      %v1120 = vsel %vm426, %v1115, %v1119
      %v1121 = vshrl.u32 %v420, 16
      %v1123 = vrot.slane %v1121, 4
      %v1124 = vor.u32 %v1123, %v1119
      %v1125 = vrot.slane %v1124, 4
      %v1127 = vshll.u32 %v421, 16
      %v1129 = vrot.slane %v1127, 5
      %v1130 = vsel %vm426, %v1125, %v1129
      %v1131 = vshrl.u32 %v421, 16
      %v1133 = vrot.slane %v1131, 4
      %v1134 = vor.u32 %v1133, %v1129
      %v1135 = vrot.slane %v1134, 4
      %v1137 = vshll.u32 %v422, 16
      %v1139 = vrot.slane %v1137, 5
      %v1140 = vsel %vm426, %v1135, %v1139
      %v1141 = vshrl.u32 %v422, 16
      %v1143 = vrot.slane %v1141, 4
      %v1144 = vor.u32 %v1143, %v1139
      %v1145 = vrot.slane %v1144, 4
      %v1147 = vshll.u32 %v423, 16
      %v1149 = vrot.slane %v1147, 5
      %v1150 = vsel %vm426, %v1145, %v1149
      %1151 = vrot.lane.b32.xlu0 %v440, 4
      %v1152 = vpop.permute.xlu0 %1151
      %1153 = vrot.lane.b32.xlu0 %v450, 4
      %v1154 = vpop.permute.xlu0 %1153
      %1155 = vrot.lane.b32.xlu0 %v460, 4
      %v1156 = vpop.permute.xlu0 %1155
      %1157 = vrot.lane.b32.xlu0 %v470, 4
      %v1158 = vpop.permute.xlu0 %1157
      %1159 = vrot.lane.b32.xlu0 %v480, 4
      %v1160 = vpop.permute.xlu0 %1159
      %1161 = vrot.lane.b32.xlu0 %v490, 4
      %v1162 = vpop.permute.xlu0 %1161
      %1163 = vrot.lane.b32.xlu0 %v500, 4
      %v1164 = vpop.permute.xlu0 %1163
      %1165 = vrot.lane.b32.xlu0 %v510, 4
      %v1166 = vpop.permute.xlu0 %1165
      %1167 = vrot.lane.b32.xlu0 %v520, 4
      %v1168 = vpop.permute.xlu0 %1167
      %1169 = vrot.lane.b32.xlu0 %v530, 4
      %v1170 = vpop.permute.xlu0 %1169
      %1171 = vrot.lane.b32.xlu0 %v540, 4
      %v1172 = vpop.permute.xlu0 %1171
      %1173 = vrot.lane.b32.xlu0 %v550, 4
      %v1174 = vpop.permute.xlu0 %1173
      %1175 = vrot.lane.b32.xlu0 %v560, 4
      %v1176 = vpop.permute.xlu0 %1175
      %1177 = vrot.lane.b32.xlu0 %v570, 4
      %v1178 = vpop.permute.xlu0 %1177
      %1179 = vrot.lane.b32.xlu0 %v580, 4
      %v1180 = vpop.permute.xlu0 %1179
      %1181 = vrot.lane.b32.xlu0 %v590, 4
      %v1182 = vpop.permute.xlu0 %1181
      %1183 = vrot.lane.b32.xlu0 %v600, 4
      %v1184 = vpop.permute.xlu0 %1183
      %1185 = vrot.lane.b32.xlu0 %v610, 4
      %v1186 = vpop.permute.xlu0 %1185
      %1187 = vrot.lane.b32.xlu0 %v620, 4
      %v1188 = vpop.permute.xlu0 %1187
      %1189 = vrot.lane.b32.xlu0 %v630, 4
      %v1190 = vpop.permute.xlu0 %1189
      %1191 = vrot.lane.b32.xlu0 %v640, 4
      %v1192 = vpop.permute.xlu0 %1191
      %1193 = vrot.lane.b32.xlu0 %v650, 4
      %v1194 = vpop.permute.xlu0 %1193
      %1195 = vrot.lane.b32.xlu0 %v660, 4
      %v1196 = vpop.permute.xlu0 %1195
      %1197 = vrot.lane.b32.xlu0 %v670, 4
      %v1198 = vpop.permute.xlu0 %1197
      %1199 = vrot.lane.b32.xlu0 %v680, 4
      %v1200 = vpop.permute.xlu0 %1199
      %1201 = vrot.lane.b32.xlu0 %v690, 4
      %v1202 = vpop.permute.xlu0 %1201
      %1203 = vrot.lane.b32.xlu0 %v700, 4
      %v1204 = vpop.permute.xlu0 %1203
      %1205 = vrot.lane.b32.xlu0 %v710, 4
      %v1206 = vpop.permute.xlu0 %1205
      %1207 = vrot.lane.b32.xlu0 %v720, 4
      %v1208 = vpop.permute.xlu0 %1207
      %1209 = vrot.lane.b32.xlu0 %v730, 4
      %v1210 = vpop.permute.xlu0 %1209
      %1211 = vrot.lane.b32.xlu0 %v740, 4
      %v1212 = vpop.permute.xlu0 %1211
      %1213 = vrot.lane.b32.xlu0 %v750, 4
      %v1214 = vpop.permute.xlu0 %1213
      %1215 = vrot.lane.b32.xlu0 %v760, 4
      %v1216 = vpop.permute.xlu0 %1215
      %1217 = vrot.lane.b32.xlu0 %v770, 4
      %v1218 = vpop.permute.xlu0 %1217
      %1219 = vrot.lane.b32.xlu0 %v780, 4
      %v1220 = vpop.permute.xlu0 %1219
      %1221 = vrot.lane.b32.xlu0 %v790, 4
      %v1222 = vpop.permute.xlu0 %1221
      %1223 = vrot.lane.b32.xlu0 %v800, 4
      %v1224 = vpop.permute.xlu0 %1223
      %1225 = vrot.lane.b32.xlu0 %v810, 4
      %v1226 = vpop.permute.xlu0 %1225
      %1227 = vrot.lane.b32.xlu0 %v820, 4
      %v1228 = vpop.permute.xlu0 %1227
      %1229 = vrot.lane.b32.xlu0 %v830, 4
      %v1230 = vpop.permute.xlu0 %1229
      %1231 = vrot.lane.b32.xlu0 %v840, 4
      %v1232 = vpop.permute.xlu0 %1231
      %1233 = vrot.lane.b32.xlu0 %v850, 4
      %v1234 = vpop.permute.xlu0 %1233
      %1235 = vrot.lane.b32.xlu0 %v860, 4
      %v1236 = vpop.permute.xlu0 %1235
      %1237 = vrot.lane.b32.xlu0 %v870, 4
      %v1238 = vpop.permute.xlu0 %1237
      %1239 = vrot.lane.b32.xlu0 %v880, 4
      %v1240 = vpop.permute.xlu0 %1239
      %1241 = vrot.lane.b32.xlu0 %v890, 4
      %v1242 = vpop.permute.xlu0 %1241
      %1243 = vrot.lane.b32.xlu0 %v900, 4
      %v1244 = vpop.permute.xlu0 %1243
      %1245 = vrot.lane.b32.xlu0 %v910, 4
      %v1246 = vpop.permute.xlu0 %1245
      %1247 = vrot.lane.b32.xlu0 %v920, 4
      %v1248 = vpop.permute.xlu0 %1247
      %1249 = vrot.lane.b32.xlu0 %v930, 4
      %v1250 = vpop.permute.xlu0 %1249
      %1251 = vrot.lane.b32.xlu0 %v940, 4
      %v1252 = vpop.permute.xlu0 %1251
      %1253 = vrot.lane.b32.xlu0 %v950, 4
      %v1254 = vpop.permute.xlu0 %1253
      %1255 = vrot.lane.b32.xlu0 %v960, 4
      %v1256 = vpop.permute.xlu0 %1255
      %1257 = vrot.lane.b32.xlu0 %v970, 4
      %v1258 = vpop.permute.xlu0 %1257
      %1259 = vrot.lane.b32.xlu0 %v980, 4
      %v1260 = vpop.permute.xlu0 %1259
      %1261 = vrot.lane.b32.xlu0 %v990, 4
      %v1262 = vpop.permute.xlu0 %1261
      %1263 = vrot.lane.b32.xlu0 %v1000, 4
      %v1264 = vpop.permute.xlu0 %1263
      %1265 = vrot.lane.b32.xlu0 %v1010, 4
      %v1266 = vpop.permute.xlu0 %1265
      %1267 = vrot.lane.b32.xlu0 %v1020, 4
      %v1268 = vpop.permute.xlu0 %1267
      %1269 = vrot.lane.b32.xlu0 %v1030, 4
      %v1270 = vpop.permute.xlu0 %1269
      %1271 = vrot.lane.b32.xlu0 %v1040, 4
      %v1272 = vpop.permute.xlu0 %1271
      %1273 = vrot.lane.b32.xlu0 %v1050, 4
      %v1274 = vpop.permute.xlu0 %1273
      %1275 = vrot.lane.b32.xlu0 %v1060, 4
      %v1276 = vpop.permute.xlu0 %1275
      %1277 = vrot.lane.b32.xlu0 %v1070, 4
      %v1278 = vpop.permute.xlu0 %1277
      %1279 = vrot.lane.b32.xlu0 %v1080, 4
      %v1280 = vpop.permute.xlu0 %1279
      %1281 = vrot.lane.b32.xlu0 %v1090, 4
      %v1282 = vpop.permute.xlu0 %1281
      %1283 = vrot.lane.b32.xlu0 %v1100, 4
      %v1284 = vpop.permute.xlu0 %1283
      %1285 = vrot.lane.b32.xlu0 %v1110, 4
      %v1286 = vpop.permute.xlu0 %1285
      %1287 = vrot.lane.b32.xlu0 %v1120, 4
      %v1288 = vpop.permute.xlu0 %1287
      %1289 = vrot.lane.b32.xlu0 %v1130, 4
      %v1290 = vpop.permute.xlu0 %1289
      %1291 = vrot.lane.b32.xlu0 %v1140, 4
      %v1292 = vpop.permute.xlu0 %1291
      %1293 = vrot.lane.b32.xlu0 %v1150, 4
      %v1294 = vpop.permute.xlu0 %1293
      %vm1367 = vcmask 60448
      %1368 = vst.msk [vmem:[#allocation3] sm:$0xf] %vm1367, %v1152
      %1369 = vst.msk [vmem:[#allocation3 + $0x4] sm:$0xf] %vm1367, %v1154
      %1370 = vst.msk [vmem:[#allocation3 + $0x8] sm:$0xf] %vm1367, %v1156
      %1371 = vst.msk [vmem:[#allocation3 + $0xc] sm:$0xf] %vm1367, %v1158
      %1372 = vst.msk [vmem:[#allocation3 + $0x10] sm:$0xf] %vm1367, %v1160
      %1373 = vst.msk [vmem:[#allocation3 + $0x14] sm:$0xf] %vm1367, %v1162
      %1374 = vst.msk [vmem:[#allocation3 + $0x18] sm:$0xf] %vm1367, %v1164
      %1375 = vst.msk [vmem:[#allocation3 + $0x1c] sm:$0xf] %vm1367, %v1166
      %1376 = vst.msk [vmem:[#allocation3 + $0x20] sm:$0xf] %vm1367, %v1168
      %1377 = vst.msk [vmem:[#allocation3 + $0x24] sm:$0xf] %vm1367, %v1170
      %1378 = vst.msk [vmem:[#allocation3 + $0x28] sm:$0xf] %vm1367, %v1172
      %1379 = vst.msk [vmem:[#allocation3 + $0x2c] sm:$0xf] %vm1367, %v1174
      %1380 = vst.msk [vmem:[#allocation3 + $0x30] sm:$0xf] %vm1367, %v1176
      %1381 = vst.msk [vmem:[#allocation3 + $0x34] sm:$0xf] %vm1367, %v1178
      %1382 = vst.msk [vmem:[#allocation3 + $0x38] sm:$0xf] %vm1367, %v1180
      %1383 = vst.msk [vmem:[#allocation3 + $0x3c] sm:$0xf] %vm1367, %v1182
      %1384 = vst.msk [vmem:[#allocation3 + $0x40] sm:$0xf] %vm1367, %v1184
      %1385 = vst.msk [vmem:[#allocation3 + $0x44] sm:$0xf] %vm1367, %v1186
      %1386 = vst.msk [vmem:[#allocation3 + $0x48] sm:$0xf] %vm1367, %v1188
      %1387 = vst.msk [vmem:[#allocation3 + $0x4c] sm:$0xf] %vm1367, %v1190
      %1388 = vst.msk [vmem:[#allocation3 + $0x50] sm:$0xf] %vm1367, %v1192
      %1389 = vst.msk [vmem:[#allocation3 + $0x54] sm:$0xf] %vm1367, %v1194
      %1390 = vst.msk [vmem:[#allocation3 + $0x58] sm:$0xf] %vm1367, %v1196
      %1391 = vst.msk [vmem:[#allocation3 + $0x5c] sm:$0xf] %vm1367, %v1198
      %1392 = vst.msk [vmem:[#allocation3 + $0x60] sm:$0xf] %vm1367, %v1200
      %1393 = vst.msk [vmem:[#allocation3 + $0x64] sm:$0xf] %vm1367, %v1202
      %1394 = vst.msk [vmem:[#allocation3 + $0x68] sm:$0xf] %vm1367, %v1204
      %1395 = vst.msk [vmem:[#allocation3 + $0x6c] sm:$0xf] %vm1367, %v1206
      %1396 = vst.msk [vmem:[#allocation3 + $0x70] sm:$0xf] %vm1367, %v1208
      %1397 = vst.msk [vmem:[#allocation3 + $0x74] sm:$0xf] %vm1367, %v1210
      %1398 = vst.msk [vmem:[#allocation3 + $0x78] sm:$0xf] %vm1367, %v1212
      %1399 = vst.msk [vmem:[#allocation3 + $0x7c] sm:$0xf] %vm1367, %v1214
      %1400 = vst.msk [vmem:[#allocation3 + $0x80] sm:$0xf] %vm1367, %v1216
      %1401 = vst.msk [vmem:[#allocation3 + $0x84] sm:$0xf] %vm1367, %v1218
      %1402 = vst.msk [vmem:[#allocation3 + $0x88] sm:$0xf] %vm1367, %v1220
      %1403 = vst.msk [vmem:[#allocation3 + $0x8c] sm:$0xf] %vm1367, %v1222
      %1404 = vst.msk [vmem:[#allocation3 + $0x90] sm:$0xf] %vm1367, %v1224
      %1405 = vst.msk [vmem:[#allocation3 + $0x94] sm:$0xf] %vm1367, %v1226
      %1406 = vst.msk [vmem:[#allocation3 + $0x98] sm:$0xf] %vm1367, %v1228
      %1407 = vst.msk [vmem:[#allocation3 + $0x9c] sm:$0xf] %vm1367, %v1230
      %1408 = vst.msk [vmem:[#allocation3 + $0xa0] sm:$0xf] %vm1367, %v1232
      %1409 = vst.msk [vmem:[#allocation3 + $0xa4] sm:$0xf] %vm1367, %v1234
      %1410 = vst.msk [vmem:[#allocation3 + $0xa8] sm:$0xf] %vm1367, %v1236
      %1411 = vst.msk [vmem:[#allocation3 + $0xac] sm:$0xf] %vm1367, %v1238
      %1412 = vst.msk [vmem:[#allocation3 + $0xb0] sm:$0xf] %vm1367, %v1240
      %1413 = vst.msk [vmem:[#allocation3 + $0xb4] sm:$0xf] %vm1367, %v1242
      %1414 = vst.msk [vmem:[#allocation3 + $0xb8] sm:$0xf] %vm1367, %v1244
      %1415 = vst.msk [vmem:[#allocation3 + $0xbc] sm:$0xf] %vm1367, %v1246
      %1416 = vst.msk [vmem:[#allocation3 + $0xc0] sm:$0xf] %vm1367, %v1248
      %1417 = vst.msk [vmem:[#allocation3 + $0xc4] sm:$0xf] %vm1367, %v1250
      %1418 = vst.msk [vmem:[#allocation3 + $0xc8] sm:$0xf] %vm1367, %v1252
      %1419 = vst.msk [vmem:[#allocation3 + $0xcc] sm:$0xf] %vm1367, %v1254
      %1420 = vst.msk [vmem:[#allocation3 + $0xd0] sm:$0xf] %vm1367, %v1256
      %1421 = vst.msk [vmem:[#allocation3 + $0xd4] sm:$0xf] %vm1367, %v1258
      %1422 = vst.msk [vmem:[#allocation3 + $0xd8] sm:$0xf] %vm1367, %v1260
      %1423 = vst.msk [vmem:[#allocation3 + $0xdc] sm:$0xf] %vm1367, %v1262
      %1424 = vst.msk [vmem:[#allocation3 + $0xe0] sm:$0xf] %vm1367, %v1264
      %1425 = vst.msk [vmem:[#allocation3 + $0xe4] sm:$0xf] %vm1367, %v1266
      %1426 = vst.msk [vmem:[#allocation3 + $0xe8] sm:$0xf] %vm1367, %v1268
      %1427 = vst.msk [vmem:[#allocation3 + $0xec] sm:$0xf] %vm1367, %v1270
      %1428 = vst.msk [vmem:[#allocation3 + $0xf0] sm:$0xf] %vm1367, %v1272
      %1429 = vst.msk [vmem:[#allocation3 + $0xf4] sm:$0xf] %vm1367, %v1274
      %1430 = vst.msk [vmem:[#allocation3 + $0xf8] sm:$0xf] %vm1367, %v1276
      %1431 = vst.msk [vmem:[#allocation3 + $0xfc] sm:$0xf] %vm1367, %v1278
      %1432 = vst.msk [vmem:[#allocation3 + $0x100] sm:$0xf] %vm1367, %v1280
      %1433 = vst.msk [vmem:[#allocation3 + $0x104] sm:$0xf] %vm1367, %v1282
      %1434 = vst.msk [vmem:[#allocation3 + $0x108] sm:$0xf] %vm1367, %v1284
      %1435 = vst.msk [vmem:[#allocation3 + $0x10c] sm:$0xf] %vm1367, %v1286
      %1436 = vst.msk [vmem:[#allocation3 + $0x110] sm:$0xf] %vm1367, %v1288
      %1437 = vst.msk [vmem:[#allocation3 + $0x114] sm:$0xf] %vm1367, %v1290
      %1438 = vst.msk [vmem:[#allocation3 + $0x118] sm:$0xf] %vm1367, %v1292
      %1439 = vst.msk [vmem:[#allocation3 + $0x11c] sm:$0xf] %vm1367, %v1294
      %v1440 = vld [vmem:[#allocation2] sm:$0xe]
      %v1441 = vld [vmem:[#allocation2 + $0x4] sm:$0xf]
      %v1442 = vld [vmem:[#allocation2 + $0x8] sm:$0xf]
      %v1443 = vld [vmem:[#allocation2 + $0xc] sm:$0xf]
      %v1444 = vld [vmem:[#allocation2 + $0x10] sm:$0xf]
      %v1445 = vld [vmem:[#allocation2 + $0x14] sm:$0xf]
      %v1446 = vld [vmem:[#allocation2 + $0x18] sm:$0xf]
      %v1447 = vld [vmem:[#allocation2 + $0x1c] sm:$0xf]
      %v1448 = vld [vmem:[#allocation2 + $0x20] sm:$0xf]
      %v1449 = vld [vmem:[#allocation2 + $0x24] sm:$0xf]
      %v1450 = vld [vmem:[#allocation2 + $0x28] sm:$0xf]
      %v1451 = vld [vmem:[#allocation2 + $0x2c] sm:$0xf]
      %v1452 = vld [vmem:[#allocation2 + $0x30] sm:$0xf]
      %v1453 = vld [vmem:[#allocation2 + $0x34] sm:$0xf]
      %v1454 = vld [vmem:[#allocation2 + $0x38] sm:$0xf]
      %v1455 = vld [vmem:[#allocation2 + $0x3c] sm:$0xf]
      %v1456 = vld [vmem:[#allocation2 + $0x40] sm:$0xf]
      %v1457 = vld [vmem:[#allocation2 + $0x44] sm:$0xf]
      %v1458 = vld [vmem:[#allocation2 + $0x48] sm:$0xf]
      %v1459 = vld [vmem:[#allocation2 + $0x4c] sm:$0xf]
      %v1460 = vld [vmem:[#allocation2 + $0x50] sm:$0xf]
      %v1461 = vld [vmem:[#allocation2 + $0x54] sm:$0xf]
      %v1462 = vld [vmem:[#allocation2 + $0x58] sm:$0xf]
      %v1463 = vld [vmem:[#allocation2 + $0x5c] sm:$0xf]
      %v1464 = vld [vmem:[#allocation2 + $0x60] sm:$0xf]
      %v1465 = vld [vmem:[#allocation2 + $0x64] sm:$0xf]
      %v1466 = vld [vmem:[#allocation2 + $0x68] sm:$0xf]
      %v1467 = vld [vmem:[#allocation2 + $0x6c] sm:$0xf]
      %v1468 = vld [vmem:[#allocation2 + $0x70] sm:$0xf]
      %v1469 = vld [vmem:[#allocation2 + $0x74] sm:$0xf]
      %v1470 = vld [vmem:[#allocation2 + $0x78] sm:$0xf]
      %v1471 = vld [vmem:[#allocation2 + $0x7c] sm:$0xf]
      %v1472 = vld [vmem:[#allocation2 + $0x80] sm:$0xf]
      %v1473 = vld [vmem:[#allocation2 + $0x84] sm:$0xf]
      %v1474 = vld [vmem:[#allocation2 + $0x88] sm:$0xf]
      %v1475 = vld [vmem:[#allocation2 + $0x8c] sm:$0xf]
      %v1476 = vld [vmem:[#allocation2 + $0x90] sm:$0xf]
      %v1477 = vld [vmem:[#allocation2 + $0x94] sm:$0xf]
      %v1478 = vld [vmem:[#allocation2 + $0x98] sm:$0xf]
      %v1479 = vld [vmem:[#allocation2 + $0x9c] sm:$0xf]
      %v1480 = vld [vmem:[#allocation2 + $0xa0] sm:$0xf]
      %v1481 = vld [vmem:[#allocation2 + $0xa4] sm:$0xf]
      %v1482 = vld [vmem:[#allocation2 + $0xa8] sm:$0xf]
      %v1483 = vld [vmem:[#allocation2 + $0xac] sm:$0xf]
      %v1484 = vld [vmem:[#allocation2 + $0xb0] sm:$0xf]
      %v1485 = vld [vmem:[#allocation2 + $0xb4] sm:$0xf]
      %v1486 = vld [vmem:[#allocation2 + $0xb8] sm:$0xf]
      %v1487 = vld [vmem:[#allocation2 + $0xbc] sm:$0xf]
      %v1488 = vld [vmem:[#allocation2 + $0xc0] sm:$0xf]
      %v1489 = vld [vmem:[#allocation2 + $0xc4] sm:$0xf]
      %v1490 = vld [vmem:[#allocation2 + $0xc8] sm:$0xf]
      %v1491 = vld [vmem:[#allocation2 + $0xcc] sm:$0xf]
      %v1492 = vld [vmem:[#allocation2 + $0xd0] sm:$0xf]
      %v1493 = vld [vmem:[#allocation2 + $0xd4] sm:$0xf]
      %v1494 = vld [vmem:[#allocation2 + $0xd8] sm:$0xf]
      %v1495 = vld [vmem:[#allocation2 + $0xdc] sm:$0xf]
      %v1496 = vld [vmem:[#allocation2 + $0xe0] sm:$0xf]
      %v1497 = vld [vmem:[#allocation2 + $0xe4] sm:$0xf]
      %v1498 = vld [vmem:[#allocation2 + $0xe8] sm:$0xf]
      %v1499 = vld [vmem:[#allocation2 + $0xec] sm:$0xf]
      %v1500 = vld [vmem:[#allocation2 + $0xf0] sm:$0xf]
      %v1501 = vld [vmem:[#allocation2 + $0xf4] sm:$0xf]
      %v1502 = vld [vmem:[#allocation2 + $0xf8] sm:$0xf]
      %v1503 = vld [vmem:[#allocation2 + $0xfc] sm:$0xf]
      %v1504 = vld [vmem:[#allocation2 + $0x100] sm:$0xf]
      %v1505 = vld [vmem:[#allocation2 + $0x104] sm:$0xf]
      %v1506 = vld [vmem:[#allocation2 + $0x108] sm:$0xf]
      %v1507 = vld [vmem:[#allocation2 + $0x10c] sm:$0xf]
      %v1508 = vld [vmem:[#allocation2 + $0x110] sm:$0xf]
      %v1509 = vld [vmem:[#allocation2 + $0x114] sm:$0xf]
      %v1510 = vld [vmem:[#allocation2 + $0x118] sm:$0xf]
      %v1511 = vld [vmem:[#allocation2 + $0x11c] sm:$0xf]
      %v1512 = vld [vmem:[#allocation2 + $0x120] sm:$0x1]
      %vm1586 = vcmask 1042432
      %vm1587 = vcmask 1046532
      %vm1588 = vmor %vm1586, %vm1587
      %v1589 = vrot.slane %v1440, 5
      %v1590 = vrot.slane %v1589, 4
      %v1591 = vrot.slane %v1441, 5
      %v1592 = vsel %vm1588, %v1590, %v1591
      %v1593 = vrot.slane %v1591, 4
      %v1594 = vrot.slane %v1442, 5
      %v1595 = vsel %vm1588, %v1593, %v1594
      %v1596 = vrot.slane %v1594, 4
      %v1597 = vrot.slane %v1443, 5
      %v1598 = vsel %vm1588, %v1596, %v1597
      %v1599 = vrot.slane %v1597, 4
      %v1600 = vrot.slane %v1444, 5
      %v1601 = vsel %vm1588, %v1599, %v1600
      %v1602 = vrot.slane %v1600, 4
      %v1603 = vrot.slane %v1445, 5
      %v1604 = vsel %vm1588, %v1602, %v1603
      %v1605 = vrot.slane %v1603, 4
      %v1606 = vrot.slane %v1446, 5
      %v1607 = vsel %vm1588, %v1605, %v1606
      %v1608 = vrot.slane %v1606, 4
      %v1609 = vrot.slane %v1447, 5
      %v1610 = vsel %vm1588, %v1608, %v1609
      %v1611 = vrot.slane %v1609, 4
      %v1612 = vrot.slane %v1448, 5
      %v1613 = vsel %vm1588, %v1611, %v1612
      %v1614 = vrot.slane %v1612, 4
      %v1615 = vrot.slane %v1449, 5
      %v1616 = vsel %vm1588, %v1614, %v1615
      %v1617 = vrot.slane %v1615, 4
      %v1618 = vrot.slane %v1450, 5
      %v1619 = vsel %vm1588, %v1617, %v1618
      %v1620 = vrot.slane %v1618, 4
      %v1621 = vrot.slane %v1451, 5
      %v1622 = vsel %vm1588, %v1620, %v1621
      %v1623 = vrot.slane %v1621, 4
      %v1624 = vrot.slane %v1452, 5
      %v1625 = vsel %vm1588, %v1623, %v1624
      %v1626 = vrot.slane %v1624, 4
      %v1627 = vrot.slane %v1453, 5
      %v1628 = vsel %vm1588, %v1626, %v1627
      %v1629 = vrot.slane %v1627, 4
      %v1630 = vrot.slane %v1454, 5
      %v1631 = vsel %vm1588, %v1629, %v1630
      %v1632 = vrot.slane %v1630, 4
      %v1633 = vrot.slane %v1455, 5
      %v1634 = vsel %vm1588, %v1632, %v1633
      %v1635 = vrot.slane %v1633, 4
      %v1636 = vrot.slane %v1456, 5
      %v1637 = vsel %vm1588, %v1635, %v1636
      %v1638 = vrot.slane %v1636, 4
      %v1639 = vrot.slane %v1457, 5
      %v1640 = vsel %vm1588, %v1638, %v1639
      %v1641 = vrot.slane %v1639, 4
      %v1642 = vrot.slane %v1458, 5
      %v1643 = vsel %vm1588, %v1641, %v1642
      %v1644 = vrot.slane %v1642, 4
      %v1645 = vrot.slane %v1459, 5
      %v1646 = vsel %vm1588, %v1644, %v1645
      %v1647 = vrot.slane %v1645, 4
      %v1648 = vrot.slane %v1460, 5
      %v1649 = vsel %vm1588, %v1647, %v1648
      %v1650 = vrot.slane %v1648, 4
      %v1651 = vrot.slane %v1461, 5
      %v1652 = vsel %vm1588, %v1650, %v1651
      %v1653 = vrot.slane %v1651, 4
      %v1654 = vrot.slane %v1462, 5
      %v1655 = vsel %vm1588, %v1653, %v1654
      %v1656 = vrot.slane %v1654, 4
      %v1657 = vrot.slane %v1463, 5
      %v1658 = vsel %vm1588, %v1656, %v1657
      %v1659 = vrot.slane %v1657, 4
      %v1660 = vrot.slane %v1464, 5
      %v1661 = vsel %vm1588, %v1659, %v1660
      %v1662 = vrot.slane %v1660, 4
      %v1663 = vrot.slane %v1465, 5
      %v1664 = vsel %vm1588, %v1662, %v1663
      %v1665 = vrot.slane %v1663, 4
      %v1666 = vrot.slane %v1466, 5
      %v1667 = vsel %vm1588, %v1665, %v1666
      %v1668 = vrot.slane %v1666, 4
      %v1669 = vrot.slane %v1467, 5
      %v1670 = vsel %vm1588, %v1668, %v1669
      %v1671 = vrot.slane %v1669, 4
      %v1672 = vrot.slane %v1468, 5
      %v1673 = vsel %vm1588, %v1671, %v1672
      %v1674 = vrot.slane %v1672, 4
      %v1675 = vrot.slane %v1469, 5
      %v1676 = vsel %vm1588, %v1674, %v1675
      %v1677 = vrot.slane %v1675, 4
      %v1678 = vrot.slane %v1470, 5
      %v1679 = vsel %vm1588, %v1677, %v1678
      %v1680 = vrot.slane %v1678, 4
      %v1681 = vrot.slane %v1471, 5
      %v1682 = vsel %vm1588, %v1680, %v1681
      %v1683 = vrot.slane %v1681, 4
      %v1684 = vrot.slane %v1472, 5
      %v1685 = vsel %vm1588, %v1683, %v1684
      %v1686 = vrot.slane %v1684, 4
      %v1687 = vrot.slane %v1473, 5
      %v1688 = vsel %vm1588, %v1686, %v1687
      %v1689 = vrot.slane %v1687, 4
      %v1690 = vrot.slane %v1474, 5
      %v1691 = vsel %vm1588, %v1689, %v1690
      %v1692 = vrot.slane %v1690, 4
      %v1693 = vrot.slane %v1475, 5
      %v1694 = vsel %vm1588, %v1692, %v1693
      %v1695 = vrot.slane %v1693, 4
      %v1696 = vrot.slane %v1476, 5
      %v1697 = vsel %vm1588, %v1695, %v1696
      %v1698 = vrot.slane %v1696, 4
      %v1699 = vrot.slane %v1477, 5
      %v1700 = vsel %vm1588, %v1698, %v1699
      %v1701 = vrot.slane %v1699, 4
      %v1702 = vrot.slane %v1478, 5
      %v1703 = vsel %vm1588, %v1701, %v1702
      %v1704 = vrot.slane %v1702, 4
      %v1705 = vrot.slane %v1479, 5
      %v1706 = vsel %vm1588, %v1704, %v1705
      %v1707 = vrot.slane %v1705, 4
      %v1708 = vrot.slane %v1480, 5
      %v1709 = vsel %vm1588, %v1707, %v1708
      %v1710 = vrot.slane %v1708, 4
      %v1711 = vrot.slane %v1481, 5
      %v1712 = vsel %vm1588, %v1710, %v1711
      %v1713 = vrot.slane %v1711, 4
      %v1714 = vrot.slane %v1482, 5
      %v1715 = vsel %vm1588, %v1713, %v1714
      %v1716 = vrot.slane %v1714, 4
      %v1717 = vrot.slane %v1483, 5
      %v1718 = vsel %vm1588, %v1716, %v1717
      %v1719 = vrot.slane %v1717, 4
      %v1720 = vrot.slane %v1484, 5
      %v1721 = vsel %vm1588, %v1719, %v1720
      %v1722 = vrot.slane %v1720, 4
      %v1723 = vrot.slane %v1485, 5
      %v1724 = vsel %vm1588, %v1722, %v1723
      %v1725 = vrot.slane %v1723, 4
      %v1726 = vrot.slane %v1486, 5
      %v1727 = vsel %vm1588, %v1725, %v1726
      %v1728 = vrot.slane %v1726, 4
      %v1729 = vrot.slane %v1487, 5
      %v1730 = vsel %vm1588, %v1728, %v1729
      %v1731 = vrot.slane %v1729, 4
      %v1732 = vrot.slane %v1488, 5
      %v1733 = vsel %vm1588, %v1731, %v1732
      %v1734 = vrot.slane %v1732, 4
      %v1735 = vrot.slane %v1489, 5
      %v1736 = vsel %vm1588, %v1734, %v1735
      %v1737 = vrot.slane %v1735, 4
      %v1738 = vrot.slane %v1490, 5
      %v1739 = vsel %vm1588, %v1737, %v1738
      %v1740 = vrot.slane %v1738, 4
      %v1741 = vrot.slane %v1491, 5
      %v1742 = vsel %vm1588, %v1740, %v1741
      %v1743 = vrot.slane %v1741, 4
      %v1744 = vrot.slane %v1492, 5
      %v1745 = vsel %vm1588, %v1743, %v1744
      %v1746 = vrot.slane %v1744, 4
      %v1747 = vrot.slane %v1493, 5
      %v1748 = vsel %vm1588, %v1746, %v1747
      %v1749 = vrot.slane %v1747, 4
      %v1750 = vrot.slane %v1494, 5
      %v1751 = vsel %vm1588, %v1749, %v1750
      %v1752 = vrot.slane %v1750, 4
      %v1753 = vrot.slane %v1495, 5
      %v1754 = vsel %vm1588, %v1752, %v1753
      %v1755 = vrot.slane %v1753, 4
      %v1756 = vrot.slane %v1496, 5
      %v1757 = vsel %vm1588, %v1755, %v1756
      %v1758 = vrot.slane %v1756, 4
      %v1759 = vrot.slane %v1497, 5
      %v1760 = vsel %vm1588, %v1758, %v1759
      %v1761 = vrot.slane %v1759, 4
      %v1762 = vrot.slane %v1498, 5
      %v1763 = vsel %vm1588, %v1761, %v1762
      %v1764 = vrot.slane %v1762, 4
      %v1765 = vrot.slane %v1499, 5
      %v1766 = vsel %vm1588, %v1764, %v1765
      %v1767 = vrot.slane %v1765, 4
      %v1768 = vrot.slane %v1500, 5
      %v1769 = vsel %vm1588, %v1767, %v1768
      %v1770 = vrot.slane %v1768, 4
      %v1771 = vrot.slane %v1501, 5
      %v1772 = vsel %vm1588, %v1770, %v1771
      %v1773 = vrot.slane %v1771, 4
      %v1774 = vrot.slane %v1502, 5
      %v1775 = vsel %vm1588, %v1773, %v1774
      %v1776 = vrot.slane %v1774, 4
      %v1777 = vrot.slane %v1503, 5
      %v1778 = vsel %vm1588, %v1776, %v1777
      %v1779 = vrot.slane %v1777, 4
      %v1780 = vrot.slane %v1504, 5
      %v1781 = vsel %vm1588, %v1779, %v1780
      %v1782 = vrot.slane %v1780, 4
      %v1783 = vrot.slane %v1505, 5
      %v1784 = vsel %vm1588, %v1782, %v1783
      %v1785 = vrot.slane %v1783, 4
      %v1786 = vrot.slane %v1506, 5
      %v1787 = vsel %vm1588, %v1785, %v1786
      %v1788 = vrot.slane %v1786, 4
      %v1789 = vrot.slane %v1507, 5
      %v1790 = vsel %vm1588, %v1788, %v1789
      %v1791 = vrot.slane %v1789, 4
      %v1792 = vrot.slane %v1508, 5
      %v1793 = vsel %vm1588, %v1791, %v1792
      %v1794 = vrot.slane %v1792, 4
      %v1795 = vrot.slane %v1509, 5
      %v1796 = vsel %vm1588, %v1794, %v1795
      %v1797 = vrot.slane %v1795, 4
      %v1798 = vrot.slane %v1510, 5
      %v1799 = vsel %vm1588, %v1797, %v1798
      %v1800 = vrot.slane %v1798, 4
      %v1801 = vrot.slane %v1511, 5
      %v1802 = vsel %vm1588, %v1800, %v1801
      %v1803 = vrot.slane %v1801, 4
      %v1804 = vrot.slane %v1512, 5
      %v1805 = vsel %vm1588, %v1803, %v1804
      %1806 = vrot.lane.b32.xlu0 %v1592, 8
      %v1807 = vpop.permute.xlu0 %1806
      %1808 = vrot.lane.b32.xlu0 %v1595, 8
      %v1809 = vpop.permute.xlu0 %1808
      %1810 = vrot.lane.b32.xlu0 %v1598, 8
      %v1811 = vpop.permute.xlu0 %1810
      %1812 = vrot.lane.b32.xlu0 %v1601, 8
      %v1813 = vpop.permute.xlu0 %1812
      %1814 = vrot.lane.b32.xlu0 %v1604, 8
      %v1815 = vpop.permute.xlu0 %1814
      %1816 = vrot.lane.b32.xlu0 %v1607, 8
      %v1817 = vpop.permute.xlu0 %1816
      %1818 = vrot.lane.b32.xlu0 %v1610, 8
      %v1819 = vpop.permute.xlu0 %1818
      %1820 = vrot.lane.b32.xlu0 %v1613, 8
      %v1821 = vpop.permute.xlu0 %1820
      %1822 = vrot.lane.b32.xlu0 %v1616, 8
      %v1823 = vpop.permute.xlu0 %1822
      %1824 = vrot.lane.b32.xlu0 %v1619, 8
      %v1825 = vpop.permute.xlu0 %1824
      %1826 = vrot.lane.b32.xlu0 %v1622, 8
      %v1827 = vpop.permute.xlu0 %1826
      %1828 = vrot.lane.b32.xlu0 %v1625, 8
      %v1829 = vpop.permute.xlu0 %1828
      %1830 = vrot.lane.b32.xlu0 %v1628, 8
      %v1831 = vpop.permute.xlu0 %1830
      %1832 = vrot.lane.b32.xlu0 %v1631, 8
      %v1833 = vpop.permute.xlu0 %1832
      %1834 = vrot.lane.b32.xlu0 %v1634, 8
      %v1835 = vpop.permute.xlu0 %1834
      %1836 = vrot.lane.b32.xlu0 %v1637, 8
      %v1837 = vpop.permute.xlu0 %1836
      %1838 = vrot.lane.b32.xlu0 %v1640, 8
      %v1839 = vpop.permute.xlu0 %1838
      %1840 = vrot.lane.b32.xlu0 %v1643, 8
      %v1841 = vpop.permute.xlu0 %1840
      %1842 = vrot.lane.b32.xlu0 %v1646, 8
      %v1843 = vpop.permute.xlu0 %1842
      %1844 = vrot.lane.b32.xlu0 %v1649, 8
      %v1845 = vpop.permute.xlu0 %1844
      %1846 = vrot.lane.b32.xlu0 %v1652, 8
      %v1847 = vpop.permute.xlu0 %1846
      %1848 = vrot.lane.b32.xlu0 %v1655, 8
      %v1849 = vpop.permute.xlu0 %1848
      %1850 = vrot.lane.b32.xlu0 %v1658, 8
      %v1851 = vpop.permute.xlu0 %1850
      %1852 = vrot.lane.b32.xlu0 %v1661, 8
      %v1853 = vpop.permute.xlu0 %1852
      %1854 = vrot.lane.b32.xlu0 %v1664, 8
      %v1855 = vpop.permute.xlu0 %1854
      %1856 = vrot.lane.b32.xlu0 %v1667, 8
      %v1857 = vpop.permute.xlu0 %1856
      %1858 = vrot.lane.b32.xlu0 %v1670, 8
      %v1859 = vpop.permute.xlu0 %1858
      %1860 = vrot.lane.b32.xlu0 %v1673, 8
      %v1861 = vpop.permute.xlu0 %1860
      %1862 = vrot.lane.b32.xlu0 %v1676, 8
      %v1863 = vpop.permute.xlu0 %1862
      %1864 = vrot.lane.b32.xlu0 %v1679, 8
      %v1865 = vpop.permute.xlu0 %1864
      %1866 = vrot.lane.b32.xlu0 %v1682, 8
      %v1867 = vpop.permute.xlu0 %1866
      %1868 = vrot.lane.b32.xlu0 %v1685, 8
      %v1869 = vpop.permute.xlu0 %1868
      %1870 = vrot.lane.b32.xlu0 %v1688, 8
      %v1871 = vpop.permute.xlu0 %1870
      %1872 = vrot.lane.b32.xlu0 %v1691, 8
      %v1873 = vpop.permute.xlu0 %1872
      %1874 = vrot.lane.b32.xlu0 %v1694, 8
      %v1875 = vpop.permute.xlu0 %1874
      %1876 = vrot.lane.b32.xlu0 %v1697, 8
      %v1877 = vpop.permute.xlu0 %1876
      %1878 = vrot.lane.b32.xlu0 %v1700, 8
      %v1879 = vpop.permute.xlu0 %1878
      %1880 = vrot.lane.b32.xlu0 %v1703, 8
      %v1881 = vpop.permute.xlu0 %1880
      %1882 = vrot.lane.b32.xlu0 %v1706, 8
      %v1883 = vpop.permute.xlu0 %1882
      %1884 = vrot.lane.b32.xlu0 %v1709, 8
      %v1885 = vpop.permute.xlu0 %1884
      %1886 = vrot.lane.b32.xlu0 %v1712, 8
      %v1887 = vpop.permute.xlu0 %1886
      %1888 = vrot.lane.b32.xlu0 %v1715, 8
      %v1889 = vpop.permute.xlu0 %1888
      %1890 = vrot.lane.b32.xlu0 %v1718, 8
      %v1891 = vpop.permute.xlu0 %1890
      %1892 = vrot.lane.b32.xlu0 %v1721, 8
      %v1893 = vpop.permute.xlu0 %1892
      %1894 = vrot.lane.b32.xlu0 %v1724, 8
      %v1895 = vpop.permute.xlu0 %1894
      %1896 = vrot.lane.b32.xlu0 %v1727, 8
      %v1897 = vpop.permute.xlu0 %1896
      %1898 = vrot.lane.b32.xlu0 %v1730, 8
      %v1899 = vpop.permute.xlu0 %1898
      %1900 = vrot.lane.b32.xlu0 %v1733, 8
      %v1901 = vpop.permute.xlu0 %1900
      %1902 = vrot.lane.b32.xlu0 %v1736, 8
      %v1903 = vpop.permute.xlu0 %1902
      %1904 = vrot.lane.b32.xlu0 %v1739, 8
      %v1905 = vpop.permute.xlu0 %1904
      %1906 = vrot.lane.b32.xlu0 %v1742, 8
      %v1907 = vpop.permute.xlu0 %1906
      %1908 = vrot.lane.b32.xlu0 %v1745, 8
      %v1909 = vpop.permute.xlu0 %1908
      %1910 = vrot.lane.b32.xlu0 %v1748, 8
      %v1911 = vpop.permute.xlu0 %1910
      %1912 = vrot.lane.b32.xlu0 %v1751, 8
      %v1913 = vpop.permute.xlu0 %1912
      %1914 = vrot.lane.b32.xlu0 %v1754, 8
      %v1915 = vpop.permute.xlu0 %1914
      %1916 = vrot.lane.b32.xlu0 %v1757, 8
      %v1917 = vpop.permute.xlu0 %1916
      %1918 = vrot.lane.b32.xlu0 %v1760, 8
      %v1919 = vpop.permute.xlu0 %1918
      %1920 = vrot.lane.b32.xlu0 %v1763, 8
      %v1921 = vpop.permute.xlu0 %1920
      %1922 = vrot.lane.b32.xlu0 %v1766, 8
      %v1923 = vpop.permute.xlu0 %1922
      %1924 = vrot.lane.b32.xlu0 %v1769, 8
      %v1925 = vpop.permute.xlu0 %1924
      %1926 = vrot.lane.b32.xlu0 %v1772, 8
      %v1927 = vpop.permute.xlu0 %1926
      %1928 = vrot.lane.b32.xlu0 %v1775, 8
      %v1929 = vpop.permute.xlu0 %1928
      %1930 = vrot.lane.b32.xlu0 %v1778, 8
      %v1931 = vpop.permute.xlu0 %1930
      %1932 = vrot.lane.b32.xlu0 %v1781, 8
      %v1933 = vpop.permute.xlu0 %1932
      %1934 = vrot.lane.b32.xlu0 %v1784, 8
      %v1935 = vpop.permute.xlu0 %1934
      %1936 = vrot.lane.b32.xlu0 %v1787, 8
      %v1937 = vpop.permute.xlu0 %1936
      %1938 = vrot.lane.b32.xlu0 %v1790, 8
      %v1939 = vpop.permute.xlu0 %1938
      %1940 = vrot.lane.b32.xlu0 %v1793, 8
      %v1941 = vpop.permute.xlu0 %1940
      %1942 = vrot.lane.b32.xlu0 %v1796, 8
      %v1943 = vpop.permute.xlu0 %1942
      %1944 = vrot.lane.b32.xlu0 %v1799, 8
      %v1945 = vpop.permute.xlu0 %1944
      %1946 = vrot.lane.b32.xlu0 %v1802, 8
      %v1947 = vpop.permute.xlu0 %1946
      %1948 = vrot.lane.b32.xlu0 %v1805, 8
      %v1949 = vpop.permute.xlu0 %1948
      %vm2022 = vcmask 93248
      %2023 = vst.msk [vmem:[#allocation3] sm:$0xf] %vm2022, %v1807
      %2024 = vst.msk [vmem:[#allocation3 + $0x4] sm:$0xf] %vm2022, %v1809
      %2025 = vst.msk [vmem:[#allocation3 + $0x8] sm:$0xf] %vm2022, %v1811
      %2026 = vst.msk [vmem:[#allocation3 + $0xc] sm:$0xf] %vm2022, %v1813
      %2027 = vst.msk [vmem:[#allocation3 + $0x10] sm:$0xf] %vm2022, %v1815
      %2028 = vst.msk [vmem:[#allocation3 + $0x14] sm:$0xf] %vm2022, %v1817
      %2029 = vst.msk [vmem:[#allocation3 + $0x18] sm:$0xf] %vm2022, %v1819
      %2030 = vst.msk [vmem:[#allocation3 + $0x1c] sm:$0xf] %vm2022, %v1821
      %2031 = vst.msk [vmem:[#allocation3 + $0x20] sm:$0xf] %vm2022, %v1823
      %2032 = vst.msk [vmem:[#allocation3 + $0x24] sm:$0xf] %vm2022, %v1825
      %2033 = vst.msk [vmem:[#allocation3 + $0x28] sm:$0xf] %vm2022, %v1827
      %2034 = vst.msk [vmem:[#allocation3 + $0x2c] sm:$0xf] %vm2022, %v1829
      %2035 = vst.msk [vmem:[#allocation3 + $0x30] sm:$0xf] %vm2022, %v1831
      %2036 = vst.msk [vmem:[#allocation3 + $0x34] sm:$0xf] %vm2022, %v1833
      %2037 = vst.msk [vmem:[#allocation3 + $0x38] sm:$0xf] %vm2022, %v1835
      %2038 = vst.msk [vmem:[#allocation3 + $0x3c] sm:$0xf] %vm2022, %v1837
      %2039 = vst.msk [vmem:[#allocation3 + $0x40] sm:$0xf] %vm2022, %v1839
      %2040 = vst.msk [vmem:[#allocation3 + $0x44] sm:$0xf] %vm2022, %v1841
      %2041 = vst.msk [vmem:[#allocation3 + $0x48] sm:$0xf] %vm2022, %v1843
      %2042 = vst.msk [vmem:[#allocation3 + $0x4c] sm:$0xf] %vm2022, %v1845
      %2043 = vst.msk [vmem:[#allocation3 + $0x50] sm:$0xf] %vm2022, %v1847
      %2044 = vst.msk [vmem:[#allocation3 + $0x54] sm:$0xf] %vm2022, %v1849
      %2045 = vst.msk [vmem:[#allocation3 + $0x58] sm:$0xf] %vm2022, %v1851
      %2046 = vst.msk [vmem:[#allocation3 + $0x5c] sm:$0xf] %vm2022, %v1853
      %2047 = vst.msk [vmem:[#allocation3 + $0x60] sm:$0xf] %vm2022, %v1855
      %2048 = vst.msk [vmem:[#allocation3 + $0x64] sm:$0xf] %vm2022, %v1857
      %2049 = vst.msk [vmem:[#allocation3 + $0x68] sm:$0xf] %vm2022, %v1859
      %2050 = vst.msk [vmem:[#allocation3 + $0x6c] sm:$0xf] %vm2022, %v1861
      %2051 = vst.msk [vmem:[#allocation3 + $0x70] sm:$0xf] %vm2022, %v1863
      %2052 = vst.msk [vmem:[#allocation3 + $0x74] sm:$0xf] %vm2022, %v1865
      %2053 = vst.msk [vmem:[#allocation3 + $0x78] sm:$0xf] %vm2022, %v1867
      %2054 = vst.msk [vmem:[#allocation3 + $0x7c] sm:$0xf] %vm2022, %v1869
      %2055 = vst.msk [vmem:[#allocation3 + $0x80] sm:$0xf] %vm2022, %v1871
      %2056 = vst.msk [vmem:[#allocation3 + $0x84] sm:$0xf] %vm2022, %v1873
      %2057 = vst.msk [vmem:[#allocation3 + $0x88] sm:$0xf] %vm2022, %v1875
      %2058 = vst.msk [vmem:[#allocation3 + $0x8c] sm:$0xf] %vm2022, %v1877
      %2059 = vst.msk [vmem:[#allocation3 + $0x90] sm:$0xf] %vm2022, %v1879
      %2060 = vst.msk [vmem:[#allocation3 + $0x94] sm:$0xf] %vm2022, %v1881
      %2061 = vst.msk [vmem:[#allocation3 + $0x98] sm:$0xf] %vm2022, %v1883
      %2062 = vst.msk [vmem:[#allocation3 + $0x9c] sm:$0xf] %vm2022, %v1885
      %2063 = vst.msk [vmem:[#allocation3 + $0xa0] sm:$0xf] %vm2022, %v1887
      %2064 = vst.msk [vmem:[#allocation3 + $0xa4] sm:$0xf] %vm2022, %v1889
      %2065 = vst.msk [vmem:[#allocation3 + $0xa8] sm:$0xf] %vm2022, %v1891
      %2066 = vst.msk [vmem:[#allocation3 + $0xac] sm:$0xf] %vm2022, %v1893
      %2067 = vst.msk [vmem:[#allocation3 + $0xb0] sm:$0xf] %vm2022, %v1895
      %2068 = vst.msk [vmem:[#allocation3 + $0xb4] sm:$0xf] %vm2022, %v1897
      %2069 = vst.msk [vmem:[#allocation3 + $0xb8] sm:$0xf] %vm2022, %v1899
      %2070 = vst.msk [vmem:[#allocation3 + $0xbc] sm:$0xf] %vm2022, %v1901
      %2071 = vst.msk [vmem:[#allocation3 + $0xc0] sm:$0xf] %vm2022, %v1903
      %2072 = vst.msk [vmem:[#allocation3 + $0xc4] sm:$0xf] %vm2022, %v1905
      %2073 = vst.msk [vmem:[#allocation3 + $0xc8] sm:$0xf] %vm2022, %v1907
      %2074 = vst.msk [vmem:[#allocation3 + $0xcc] sm:$0xf] %vm2022, %v1909
      %2075 = vst.msk [vmem:[#allocation3 + $0xd0] sm:$0xf] %vm2022, %v1911
      %2076 = vst.msk [vmem:[#allocation3 + $0xd4] sm:$0xf] %vm2022, %v1913
      %2077 = vst.msk [vmem:[#allocation3 + $0xd8] sm:$0xf] %vm2022, %v1915
      %2078 = vst.msk [vmem:[#allocation3 + $0xdc] sm:$0xf] %vm2022, %v1917
      %2079 = vst.msk [vmem:[#allocation3 + $0xe0] sm:$0xf] %vm2022, %v1919
      %2080 = vst.msk [vmem:[#allocation3 + $0xe4] sm:$0xf] %vm2022, %v1921
      %2081 = vst.msk [vmem:[#allocation3 + $0xe8] sm:$0xf] %vm2022, %v1923
      %2082 = vst.msk [vmem:[#allocation3 + $0xec] sm:$0xf] %vm2022, %v1925
      %2083 = vst.msk [vmem:[#allocation3 + $0xf0] sm:$0xf] %vm2022, %v1927
      %2084 = vst.msk [vmem:[#allocation3 + $0xf4] sm:$0xf] %vm2022, %v1929
      %2085 = vst.msk [vmem:[#allocation3 + $0xf8] sm:$0xf] %vm2022, %v1931
      %2086 = vst.msk [vmem:[#allocation3 + $0xfc] sm:$0xf] %vm2022, %v1933
      %2087 = vst.msk [vmem:[#allocation3 + $0x100] sm:$0xf] %vm2022, %v1935
      %2088 = vst.msk [vmem:[#allocation3 + $0x104] sm:$0xf] %vm2022, %v1937
      %2089 = vst.msk [vmem:[#allocation3 + $0x108] sm:$0xf] %vm2022, %v1939
      %2090 = vst.msk [vmem:[#allocation3 + $0x10c] sm:$0xf] %vm2022, %v1941
      %2091 = vst.msk [vmem:[#allocation3 + $0x110] sm:$0xf] %vm2022, %v1943
      %2092 = vst.msk [vmem:[#allocation3 + $0x114] sm:$0xf] %vm2022, %v1945
      %2093 = vst.msk [vmem:[#allocation3 + $0x118] sm:$0xf] %vm2022, %v1947
      %2094 = vst.msk [vmem:[#allocation3 + $0x11c] sm:$0xf] %vm2022, %v1949
      %v2095 = vld [vmem:[#allocation2 + $0x8] sm:$0xf]
      %v2096 = vld [vmem:[#allocation2 + $0xc] sm:$0xf]
      %v2097 = vld [vmem:[#allocation2 + $0x10] sm:$0xf]
      %v2098 = vld [vmem:[#allocation2 + $0x14] sm:$0xf]
      %v2099 = vld [vmem:[#allocation2 + $0x18] sm:$0xf]
      %v2100 = vld [vmem:[#allocation2 + $0x1c] sm:$0xf]
      %v2101 = vld [vmem:[#allocation2 + $0x20] sm:$0xf]
      %v2102 = vld [vmem:[#allocation2 + $0x24] sm:$0xf]
      %v2103 = vld [vmem:[#allocation2 + $0x28] sm:$0xf]
      %v2104 = vld [vmem:[#allocation2 + $0x2c] sm:$0xf]
      %v2105 = vld [vmem:[#allocation2 + $0x30] sm:$0xf]
      %v2106 = vld [vmem:[#allocation2 + $0x34] sm:$0xf]
      %v2107 = vld [vmem:[#allocation2 + $0x38] sm:$0xf]
      %v2108 = vld [vmem:[#allocation2 + $0x3c] sm:$0xf]
      %v2109 = vld [vmem:[#allocation2 + $0x40] sm:$0xf]
      %v2110 = vld [vmem:[#allocation2 + $0x44] sm:$0xf]
      %v2111 = vld [vmem:[#allocation2 + $0x48] sm:$0xf]
      %v2112 = vld [vmem:[#allocation2 + $0x4c] sm:$0xf]
      %v2113 = vld [vmem:[#allocation2 + $0x50] sm:$0xf]
      %v2114 = vld [vmem:[#allocation2 + $0x54] sm:$0xf]
      %v2115 = vld [vmem:[#allocation2 + $0x58] sm:$0xf]
      %v2116 = vld [vmem:[#allocation2 + $0x5c] sm:$0xf]
      %v2117 = vld [vmem:[#allocation2 + $0x60] sm:$0xf]
      %v2118 = vld [vmem:[#allocation2 + $0x64] sm:$0xf]
      %v2119 = vld [vmem:[#allocation2 + $0x68] sm:$0xf]
      %v2120 = vld [vmem:[#allocation2 + $0x6c] sm:$0xf]
      %v2121 = vld [vmem:[#allocation2 + $0x70] sm:$0xf]
      %v2122 = vld [vmem:[#allocation2 + $0x74] sm:$0xf]
      %v2123 = vld [vmem:[#allocation2 + $0x78] sm:$0xf]
      %v2124 = vld [vmem:[#allocation2 + $0x7c] sm:$0xf]
      %v2125 = vld [vmem:[#allocation2 + $0x80] sm:$0xf]
      %v2126 = vld [vmem:[#allocation2 + $0x84] sm:$0xf]
      %v2127 = vld [vmem:[#allocation2 + $0x88] sm:$0xf]
      %v2128 = vld [vmem:[#allocation2 + $0x8c] sm:$0xf]
      %v2129 = vld [vmem:[#allocation2 + $0x90] sm:$0xf]
      %v2130 = vld [vmem:[#allocation2 + $0x94] sm:$0xf]
      %v2131 = vld [vmem:[#allocation2 + $0x98] sm:$0xf]
      %v2132 = vld [vmem:[#allocation2 + $0x9c] sm:$0xf]
      %v2133 = vld [vmem:[#allocation2 + $0xa0] sm:$0xf]
      %v2134 = vld [vmem:[#allocation2 + $0xa4] sm:$0xf]
      %v2135 = vld [vmem:[#allocation2 + $0xa8] sm:$0xf]
      %v2136 = vld [vmem:[#allocation2 + $0xac] sm:$0xf]
      %v2137 = vld [vmem:[#allocation2 + $0xb0] sm:$0xf]
      %v2138 = vld [vmem:[#allocation2 + $0xb4] sm:$0xf]
      %v2139 = vld [vmem:[#allocation2 + $0xb8] sm:$0xf]
      %v2140 = vld [vmem:[#allocation2 + $0xbc] sm:$0xf]
      %v2141 = vld [vmem:[#allocation2 + $0xc0] sm:$0xf]
      %v2142 = vld [vmem:[#allocation2 + $0xc4] sm:$0xf]
      %v2143 = vld [vmem:[#allocation2 + $0xc8] sm:$0xf]
      %v2144 = vld [vmem:[#allocation2 + $0xcc] sm:$0xf]
      %v2145 = vld [vmem:[#allocation2 + $0xd0] sm:$0xf]
      %v2146 = vld [vmem:[#allocation2 + $0xd4] sm:$0xf]
      %v2147 = vld [vmem:[#allocation2 + $0xd8] sm:$0xf]
      %v2148 = vld [vmem:[#allocation2 + $0xdc] sm:$0xf]
      %v2149 = vld [vmem:[#allocation2 + $0xe0] sm:$0xf]
      %v2150 = vld [vmem:[#allocation2 + $0xe4] sm:$0xf]
      %v2151 = vld [vmem:[#allocation2 + $0xe8] sm:$0xf]
      %v2152 = vld [vmem:[#allocation2 + $0xec] sm:$0xf]
      %v2153 = vld [vmem:[#allocation2 + $0xf0] sm:$0xf]
      %v2154 = vld [vmem:[#allocation2 + $0xf4] sm:$0xf]
      %v2155 = vld [vmem:[#allocation2 + $0xf8] sm:$0xf]
      %v2156 = vld [vmem:[#allocation2 + $0xfc] sm:$0xf]
      %v2157 = vld [vmem:[#allocation2 + $0x100] sm:$0xf]
      %v2158 = vld [vmem:[#allocation2 + $0x104] sm:$0xf]
      %v2159 = vld [vmem:[#allocation2 + $0x108] sm:$0xf]
      %v2160 = vld [vmem:[#allocation2 + $0x10c] sm:$0xf]
      %v2161 = vld [vmem:[#allocation2 + $0x110] sm:$0xf]
      %v2162 = vld [vmem:[#allocation2 + $0x114] sm:$0xf]
      %v2163 = vld [vmem:[#allocation2 + $0x118] sm:$0xf]
      %v2164 = vld [vmem:[#allocation2 + $0x11c] sm:$0xf]
      %v2165 = vld [vmem:[#allocation2 + $0x120] sm:$0xf]
      %v2166 = vld [vmem:[#allocation2 + $0x124] sm:$0xf]
      %2239 = vrot.lane.b32.xlu0 %v2095, 12
      %v2240 = vpop.permute.xlu0 %2239
      %2241 = vrot.lane.b32.xlu0 %v2096, 12
      %v2242 = vpop.permute.xlu0 %2241
      %2243 = vrot.lane.b32.xlu0 %v2097, 12
      %v2244 = vpop.permute.xlu0 %2243
      %2245 = vrot.lane.b32.xlu0 %v2098, 12
      %v2246 = vpop.permute.xlu0 %2245
      %2247 = vrot.lane.b32.xlu0 %v2099, 12
      %v2248 = vpop.permute.xlu0 %2247
      %2249 = vrot.lane.b32.xlu0 %v2100, 12
      %v2250 = vpop.permute.xlu0 %2249
      %2251 = vrot.lane.b32.xlu0 %v2101, 12
      %v2252 = vpop.permute.xlu0 %2251
      %2253 = vrot.lane.b32.xlu0 %v2102, 12
      %v2254 = vpop.permute.xlu0 %2253
      %2255 = vrot.lane.b32.xlu0 %v2103, 12
      %v2256 = vpop.permute.xlu0 %2255
      %2257 = vrot.lane.b32.xlu0 %v2104, 12
      %v2258 = vpop.permute.xlu0 %2257
      %2259 = vrot.lane.b32.xlu0 %v2105, 12
      %v2260 = vpop.permute.xlu0 %2259
      %2261 = vrot.lane.b32.xlu0 %v2106, 12
      %v2262 = vpop.permute.xlu0 %2261
      %2263 = vrot.lane.b32.xlu0 %v2107, 12
      %v2264 = vpop.permute.xlu0 %2263
      %2265 = vrot.lane.b32.xlu0 %v2108, 12
      %v2266 = vpop.permute.xlu0 %2265
      %2267 = vrot.lane.b32.xlu0 %v2109, 12
      %v2268 = vpop.permute.xlu0 %2267
      %2269 = vrot.lane.b32.xlu0 %v2110, 12
      %v2270 = vpop.permute.xlu0 %2269
      %2271 = vrot.lane.b32.xlu0 %v2111, 12
      %v2272 = vpop.permute.xlu0 %2271
      %2273 = vrot.lane.b32.xlu0 %v2112, 12
      %v2274 = vpop.permute.xlu0 %2273
      %2275 = vrot.lane.b32.xlu0 %v2113, 12
      %v2276 = vpop.permute.xlu0 %2275
      %2277 = vrot.lane.b32.xlu0 %v2114, 12
      %v2278 = vpop.permute.xlu0 %2277
      %2279 = vrot.lane.b32.xlu0 %v2115, 12
      %v2280 = vpop.permute.xlu0 %2279
      %2281 = vrot.lane.b32.xlu0 %v2116, 12
      %v2282 = vpop.permute.xlu0 %2281
      %2283 = vrot.lane.b32.xlu0 %v2117, 12
      %v2284 = vpop.permute.xlu0 %2283
      %2285 = vrot.lane.b32.xlu0 %v2118, 12
      %v2286 = vpop.permute.xlu0 %2285
      %2287 = vrot.lane.b32.xlu0 %v2119, 12
      %v2288 = vpop.permute.xlu0 %2287
      %2289 = vrot.lane.b32.xlu0 %v2120, 12
      %v2290 = vpop.permute.xlu0 %2289
      %2291 = vrot.lane.b32.xlu0 %v2121, 12
      %v2292 = vpop.permute.xlu0 %2291
      %2293 = vrot.lane.b32.xlu0 %v2122, 12
      %v2294 = vpop.permute.xlu0 %2293
      %2295 = vrot.lane.b32.xlu0 %v2123, 12
      %v2296 = vpop.permute.xlu0 %2295
      %2297 = vrot.lane.b32.xlu0 %v2124, 12
      %v2298 = vpop.permute.xlu0 %2297
      %2299 = vrot.lane.b32.xlu0 %v2125, 12
      %v2300 = vpop.permute.xlu0 %2299
      %2301 = vrot.lane.b32.xlu0 %v2126, 12
      %v2302 = vpop.permute.xlu0 %2301
      %2303 = vrot.lane.b32.xlu0 %v2127, 12
      %v2304 = vpop.permute.xlu0 %2303
      %2305 = vrot.lane.b32.xlu0 %v2128, 12
      %v2306 = vpop.permute.xlu0 %2305
      %2307 = vrot.lane.b32.xlu0 %v2129, 12
      %v2308 = vpop.permute.xlu0 %2307
      %2309 = vrot.lane.b32.xlu0 %v2130, 12
      %v2310 = vpop.permute.xlu0 %2309
      %2311 = vrot.lane.b32.xlu0 %v2131, 12
      %v2312 = vpop.permute.xlu0 %2311
      %2313 = vrot.lane.b32.xlu0 %v2132, 12
      %v2314 = vpop.permute.xlu0 %2313
      %2315 = vrot.lane.b32.xlu0 %v2133, 12
      %v2316 = vpop.permute.xlu0 %2315
      %2317 = vrot.lane.b32.xlu0 %v2134, 12
      %v2318 = vpop.permute.xlu0 %2317
      %2319 = vrot.lane.b32.xlu0 %v2135, 12
      %v2320 = vpop.permute.xlu0 %2319
      %2321 = vrot.lane.b32.xlu0 %v2136, 12
      %v2322 = vpop.permute.xlu0 %2321
      %2323 = vrot.lane.b32.xlu0 %v2137, 12
      %v2324 = vpop.permute.xlu0 %2323
      %2325 = vrot.lane.b32.xlu0 %v2138, 12
      %v2326 = vpop.permute.xlu0 %2325
      %2327 = vrot.lane.b32.xlu0 %v2139, 12
      %v2328 = vpop.permute.xlu0 %2327
      %2329 = vrot.lane.b32.xlu0 %v2140, 12
      %v2330 = vpop.permute.xlu0 %2329
      %2331 = vrot.lane.b32.xlu0 %v2141, 12
      %v2332 = vpop.permute.xlu0 %2331
      %2333 = vrot.lane.b32.xlu0 %v2142, 12
      %v2334 = vpop.permute.xlu0 %2333
      %2335 = vrot.lane.b32.xlu0 %v2143, 12
      %v2336 = vpop.permute.xlu0 %2335
      %2337 = vrot.lane.b32.xlu0 %v2144, 12
      %v2338 = vpop.permute.xlu0 %2337
      %2339 = vrot.lane.b32.xlu0 %v2145, 12
      %v2340 = vpop.permute.xlu0 %2339
      %2341 = vrot.lane.b32.xlu0 %v2146, 12
      %v2342 = vpop.permute.xlu0 %2341
      %2343 = vrot.lane.b32.xlu0 %v2147, 12
      %v2344 = vpop.permute.xlu0 %2343
      %2345 = vrot.lane.b32.xlu0 %v2148, 12
      %v2346 = vpop.permute.xlu0 %2345
      %2347 = vrot.lane.b32.xlu0 %v2149, 12
      %v2348 = vpop.permute.xlu0 %2347
      %2349 = vrot.lane.b32.xlu0 %v2150, 12
      %v2350 = vpop.permute.xlu0 %2349
      %2351 = vrot.lane.b32.xlu0 %v2151, 12
      %v2352 = vpop.permute.xlu0 %2351
      %2353 = vrot.lane.b32.xlu0 %v2152, 12
      %v2354 = vpop.permute.xlu0 %2353
      %2355 = vrot.lane.b32.xlu0 %v2153, 12
      %v2356 = vpop.permute.xlu0 %2355
      %2357 = vrot.lane.b32.xlu0 %v2154, 12
      %v2358 = vpop.permute.xlu0 %2357
      %2359 = vrot.lane.b32.xlu0 %v2155, 12
      %v2360 = vpop.permute.xlu0 %2359
      %2361 = vrot.lane.b32.xlu0 %v2156, 12
      %v2362 = vpop.permute.xlu0 %2361
      %2363 = vrot.lane.b32.xlu0 %v2157, 12
      %v2364 = vpop.permute.xlu0 %2363
      %2365 = vrot.lane.b32.xlu0 %v2158, 12
      %v2366 = vpop.permute.xlu0 %2365
      %2367 = vrot.lane.b32.xlu0 %v2159, 12
      %v2368 = vpop.permute.xlu0 %2367
      %2369 = vrot.lane.b32.xlu0 %v2160, 12
      %v2370 = vpop.permute.xlu0 %2369
      %2371 = vrot.lane.b32.xlu0 %v2161, 12
      %v2372 = vpop.permute.xlu0 %2371
      %2373 = vrot.lane.b32.xlu0 %v2162, 12
      %v2374 = vpop.permute.xlu0 %2373
      %2375 = vrot.lane.b32.xlu0 %v2163, 12
      %v2376 = vpop.permute.xlu0 %2375
      %2377 = vrot.lane.b32.xlu0 %v2164, 12
      %v2378 = vpop.permute.xlu0 %2377
      %2379 = vrot.lane.b32.xlu0 %v2165, 12
      %v2380 = vpop.permute.xlu0 %2379
      %2381 = vrot.lane.b32.xlu0 %v2166, 12
      %v2382 = vpop.permute.xlu0 %2381
      %vm2455 = vcmask 126048
      %2456 = vst.msk [vmem:[#allocation3] sm:$0xf] %vm2455, %v2240
      %2457 = vst.msk [vmem:[#allocation3 + $0x4] sm:$0xf] %vm2455, %v2242
      %2458 = vst.msk [vmem:[#allocation3 + $0x8] sm:$0xf] %vm2455, %v2244
      %2459 = vst.msk [vmem:[#allocation3 + $0xc] sm:$0xf] %vm2455, %v2246
      %2460 = vst.msk [vmem:[#allocation3 + $0x10] sm:$0xf] %vm2455, %v2248
      %2461 = vst.msk [vmem:[#allocation3 + $0x14] sm:$0xf] %vm2455, %v2250
      %2462 = vst.msk [vmem:[#allocation3 + $0x18] sm:$0xf] %vm2455, %v2252
      %2463 = vst.msk [vmem:[#allocation3 + $0x1c] sm:$0xf] %vm2455, %v2254
      %2464 = vst.msk [vmem:[#allocation3 + $0x20] sm:$0xf] %vm2455, %v2256
      %2465 = vst.msk [vmem:[#allocation3 + $0x24] sm:$0xf] %vm2455, %v2258
      %2466 = vst.msk [vmem:[#allocation3 + $0x28] sm:$0xf] %vm2455, %v2260
      %2467 = vst.msk [vmem:[#allocation3 + $0x2c] sm:$0xf] %vm2455, %v2262
      %2468 = vst.msk [vmem:[#allocation3 + $0x30] sm:$0xf] %vm2455, %v2264
      %2469 = vst.msk [vmem:[#allocation3 + $0x34] sm:$0xf] %vm2455, %v2266
      %2470 = vst.msk [vmem:[#allocation3 + $0x38] sm:$0xf] %vm2455, %v2268
      %2471 = vst.msk [vmem:[#allocation3 + $0x3c] sm:$0xf] %vm2455, %v2270
      %2472 = vst.msk [vmem:[#allocation3 + $0x40] sm:$0xf] %vm2455, %v2272
      %2473 = vst.msk [vmem:[#allocation3 + $0x44] sm:$0xf] %vm2455, %v2274
      %2474 = vst.msk [vmem:[#allocation3 + $0x48] sm:$0xf] %vm2455, %v2276
      %2475 = vst.msk [vmem:[#allocation3 + $0x4c] sm:$0xf] %vm2455, %v2278
      %2476 = vst.msk [vmem:[#allocation3 + $0x50] sm:$0xf] %vm2455, %v2280
      %2477 = vst.msk [vmem:[#allocation3 + $0x54] sm:$0xf] %vm2455, %v2282
      %2478 = vst.msk [vmem:[#allocation3 + $0x58] sm:$0xf] %vm2455, %v2284
      %2479 = vst.msk [vmem:[#allocation3 + $0x5c] sm:$0xf] %vm2455, %v2286
      %2480 = vst.msk [vmem:[#allocation3 + $0x60] sm:$0xf] %vm2455, %v2288
      %2481 = vst.msk [vmem:[#allocation3 + $0x64] sm:$0xf] %vm2455, %v2290
      %2482 = vst.msk [vmem:[#allocation3 + $0x68] sm:$0xf] %vm2455, %v2292
      %2483 = vst.msk [vmem:[#allocation3 + $0x6c] sm:$0xf] %vm2455, %v2294
      %2484 = vst.msk [vmem:[#allocation3 + $0x70] sm:$0xf] %vm2455, %v2296
      %2485 = vst.msk [vmem:[#allocation3 + $0x74] sm:$0xf] %vm2455, %v2298
      %2486 = vst.msk [vmem:[#allocation3 + $0x78] sm:$0xf] %vm2455, %v2300
      %2487 = vst.msk [vmem:[#allocation3 + $0x7c] sm:$0xf] %vm2455, %v2302
      %2488 = vst.msk [vmem:[#allocation3 + $0x80] sm:$0xf] %vm2455, %v2304
      %2489 = vst.msk [vmem:[#allocation3 + $0x84] sm:$0xf] %vm2455, %v2306
      %2490 = vst.msk [vmem:[#allocation3 + $0x88] sm:$0xf] %vm2455, %v2308
      %2491 = vst.msk [vmem:[#allocation3 + $0x8c] sm:$0xf] %vm2455, %v2310
      %2492 = vst.msk [vmem:[#allocation3 + $0x90] sm:$0xf] %vm2455, %v2312
      %2493 = vst.msk [vmem:[#allocation3 + $0x94] sm:$0xf] %vm2455, %v2314
      %2494 = vst.msk [vmem:[#allocation3 + $0x98] sm:$0xf] %vm2455, %v2316
      %2495 = vst.msk [vmem:[#allocation3 + $0x9c] sm:$0xf] %vm2455, %v2318
      %2496 = vst.msk [vmem:[#allocation3 + $0xa0] sm:$0xf] %vm2455, %v2320
      %2497 = vst.msk [vmem:[#allocation3 + $0xa4] sm:$0xf] %vm2455, %v2322
      %2498 = vst.msk [vmem:[#allocation3 + $0xa8] sm:$0xf] %vm2455, %v2324
      %2499 = vst.msk [vmem:[#allocation3 + $0xac] sm:$0xf] %vm2455, %v2326
      %2500 = vst.msk [vmem:[#allocation3 + $0xb0] sm:$0xf] %vm2455, %v2328
      %2501 = vst.msk [vmem:[#allocation3 + $0xb4] sm:$0xf] %vm2455, %v2330
      %2502 = vst.msk [vmem:[#allocation3 + $0xb8] sm:$0xf] %vm2455, %v2332
      %2503 = vst.msk [vmem:[#allocation3 + $0xbc] sm:$0xf] %vm2455, %v2334
      %2504 = vst.msk [vmem:[#allocation3 + $0xc0] sm:$0xf] %vm2455, %v2336
      %2505 = vst.msk [vmem:[#allocation3 + $0xc4] sm:$0xf] %vm2455, %v2338
      %2506 = vst.msk [vmem:[#allocation3 + $0xc8] sm:$0xf] %vm2455, %v2340
      %2507 = vst.msk [vmem:[#allocation3 + $0xcc] sm:$0xf] %vm2455, %v2342
      %2508 = vst.msk [vmem:[#allocation3 + $0xd0] sm:$0xf] %vm2455, %v2344
      %2509 = vst.msk [vmem:[#allocation3 + $0xd4] sm:$0xf] %vm2455, %v2346
      %2510 = vst.msk [vmem:[#allocation3 + $0xd8] sm:$0xf] %vm2455, %v2348
      %2511 = vst.msk [vmem:[#allocation3 + $0xdc] sm:$0xf] %vm2455, %v2350
      %2512 = vst.msk [vmem:[#allocation3 + $0xe0] sm:$0xf] %vm2455, %v2352
      %2513 = vst.msk [vmem:[#allocation3 + $0xe4] sm:$0xf] %vm2455, %v2354
      %2514 = vst.msk [vmem:[#allocation3 + $0xe8] sm:$0xf] %vm2455, %v2356
      %2515 = vst.msk [vmem:[#allocation3 + $0xec] sm:$0xf] %vm2455, %v2358
      %2516 = vst.msk [vmem:[#allocation3 + $0xf0] sm:$0xf] %vm2455, %v2360
      %2517 = vst.msk [vmem:[#allocation3 + $0xf4] sm:$0xf] %vm2455, %v2362
      %2518 = vst.msk [vmem:[#allocation3 + $0xf8] sm:$0xf] %vm2455, %v2364
      %2519 = vst.msk [vmem:[#allocation3 + $0xfc] sm:$0xf] %vm2455, %v2366
      %2520 = vst.msk [vmem:[#allocation3 + $0x100] sm:$0xf] %vm2455, %v2368
      %2521 = vst.msk [vmem:[#allocation3 + $0x104] sm:$0xf] %vm2455, %v2370
      %2522 = vst.msk [vmem:[#allocation3 + $0x108] sm:$0xf] %vm2455, %v2372
      %2523 = vst.msk [vmem:[#allocation3 + $0x10c] sm:$0xf] %vm2455, %v2374
      %2524 = vst.msk [vmem:[#allocation3 + $0x110] sm:$0xf] %vm2455, %v2376
      %2525 = vst.msk [vmem:[#allocation3 + $0x114] sm:$0xf] %vm2455, %v2378
      %2526 = vst.msk [vmem:[#allocation3 + $0x118] sm:$0xf] %vm2455, %v2380
      %2527 = vst.msk [vmem:[#allocation3 + $0x11c] sm:$0xf] %vm2455, %v2382
      %v2528 = vld [vmem:[#allocation2 + $0x8] sm:$0xf]
      %v2529 = vld [vmem:[#allocation2 + $0xc] sm:$0xf]
      %v2530 = vld [vmem:[#allocation2 + $0x10] sm:$0xf]
      %v2531 = vld [vmem:[#allocation2 + $0x14] sm:$0xf]
      %v2532 = vld [vmem:[#allocation2 + $0x18] sm:$0xf]
      %v2533 = vld [vmem:[#allocation2 + $0x1c] sm:$0xf]
      %v2534 = vld [vmem:[#allocation2 + $0x20] sm:$0xf]
      %v2535 = vld [vmem:[#allocation2 + $0x24] sm:$0xf]
      %v2536 = vld [vmem:[#allocation2 + $0x28] sm:$0xf]
      %v2537 = vld [vmem:[#allocation2 + $0x2c] sm:$0xf]
      %v2538 = vld [vmem:[#allocation2 + $0x30] sm:$0xf]
      %v2539 = vld [vmem:[#allocation2 + $0x34] sm:$0xf]
      %v2540 = vld [vmem:[#allocation2 + $0x38] sm:$0xf]
      %v2541 = vld [vmem:[#allocation2 + $0x3c] sm:$0xf]
      %v2542 = vld [vmem:[#allocation2 + $0x40] sm:$0xf]
      %v2543 = vld [vmem:[#allocation2 + $0x44] sm:$0xf]
      %v2544 = vld [vmem:[#allocation2 + $0x48] sm:$0xf]
      %v2545 = vld [vmem:[#allocation2 + $0x4c] sm:$0xf]
      %v2546 = vld [vmem:[#allocation2 + $0x50] sm:$0xf]
      %v2547 = vld [vmem:[#allocation2 + $0x54] sm:$0xf]
      %v2548 = vld [vmem:[#allocation2 + $0x58] sm:$0xf]
      %v2549 = vld [vmem:[#allocation2 + $0x5c] sm:$0xf]
      %v2550 = vld [vmem:[#allocation2 + $0x60] sm:$0xf]
      %v2551 = vld [vmem:[#allocation2 + $0x64] sm:$0xf]
      %v2552 = vld [vmem:[#allocation2 + $0x68] sm:$0xf]
      %v2553 = vld [vmem:[#allocation2 + $0x6c] sm:$0xf]
      %v2554 = vld [vmem:[#allocation2 + $0x70] sm:$0xf]
      %v2555 = vld [vmem:[#allocation2 + $0x74] sm:$0xf]
      %v2556 = vld [vmem:[#allocation2 + $0x78] sm:$0xf]
      %v2557 = vld [vmem:[#allocation2 + $0x7c] sm:$0xf]
      %v2558 = vld [vmem:[#allocation2 + $0x80] sm:$0xf]
      %v2559 = vld [vmem:[#allocation2 + $0x84] sm:$0xf]
      %v2560 = vld [vmem:[#allocation2 + $0x88] sm:$0xf]
      %v2561 = vld [vmem:[#allocation2 + $0x8c] sm:$0xf]
      %v2562 = vld [vmem:[#allocation2 + $0x90] sm:$0xf]
      %v2563 = vld [vmem:[#allocation2 + $0x94] sm:$0xf]
      %v2564 = vld [vmem:[#allocation2 + $0x98] sm:$0xf]
      %v2565 = vld [vmem:[#allocation2 + $0x9c] sm:$0xf]
      %v2566 = vld [vmem:[#allocation2 + $0xa0] sm:$0xf]
      %v2567 = vld [vmem:[#allocation2 + $0xa4] sm:$0xf]
      %v2568 = vld [vmem:[#allocation2 + $0xa8] sm:$0xf]
      %v2569 = vld [vmem:[#allocation2 + $0xac] sm:$0xf]
      %v2570 = vld [vmem:[#allocation2 + $0xb0] sm:$0xf]
      %v2571 = vld [vmem:[#allocation2 + $0xb4] sm:$0xf]
      %v2572 = vld [vmem:[#allocation2 + $0xb8] sm:$0xf]
      %v2573 = vld [vmem:[#allocation2 + $0xbc] sm:$0xf]
      %v2574 = vld [vmem:[#allocation2 + $0xc0] sm:$0xf]
      %v2575 = vld [vmem:[#allocation2 + $0xc4] sm:$0xf]
      %v2576 = vld [vmem:[#allocation2 + $0xc8] sm:$0xf]
      %v2577 = vld [vmem:[#allocation2 + $0xcc] sm:$0xf]
      %v2578 = vld [vmem:[#allocation2 + $0xd0] sm:$0xf]
      %v2579 = vld [vmem:[#allocation2 + $0xd4] sm:$0xf]
      %v2580 = vld [vmem:[#allocation2 + $0xd8] sm:$0xf]
      %v2581 = vld [vmem:[#allocation2 + $0xdc] sm:$0xf]
      %v2582 = vld [vmem:[#allocation2 + $0xe0] sm:$0xf]
      %v2583 = vld [vmem:[#allocation2 + $0xe4] sm:$0xf]
      %v2584 = vld [vmem:[#allocation2 + $0xe8] sm:$0xf]
      %v2585 = vld [vmem:[#allocation2 + $0xec] sm:$0xf]
      %v2586 = vld [vmem:[#allocation2 + $0xf0] sm:$0xf]
      %v2587 = vld [vmem:[#allocation2 + $0xf4] sm:$0xf]
      %v2588 = vld [vmem:[#allocation2 + $0xf8] sm:$0xf]
      %v2589 = vld [vmem:[#allocation2 + $0xfc] sm:$0xf]
      %v2590 = vld [vmem:[#allocation2 + $0x100] sm:$0xf]
      %v2591 = vld [vmem:[#allocation2 + $0x104] sm:$0xf]
      %v2592 = vld [vmem:[#allocation2 + $0x108] sm:$0xf]
      %v2593 = vld [vmem:[#allocation2 + $0x10c] sm:$0xf]
      %v2594 = vld [vmem:[#allocation2 + $0x110] sm:$0xf]
      %v2595 = vld [vmem:[#allocation2 + $0x114] sm:$0xf]
      %v2596 = vld [vmem:[#allocation2 + $0x118] sm:$0xf]
      %v2597 = vld [vmem:[#allocation2 + $0x11c] sm:$0xf]
      %v2598 = vld [vmem:[#allocation2 + $0x120] sm:$0xf]
      %v2599 = vld [vmem:[#allocation2 + $0x124] sm:$0xf]
      %v2600 = vld [vmem:[#allocation2 + $0x128] sm:$0x1]
      %v2602 = vshrl.u32 %v2528, 16
      %v2604 = vrot.slane %v2602, 4
      %v2605 = vshll.u32 %v2528, 16
      %v2607 = vrot.slane %v2605, 5
      %v2608 = vor.u32 %v2604, %v2607
      %v2609 = vrot.slane %v2608, 4
      %v2611 = vshll.u32 %v2529, 16
      %v2613 = vrot.slane %v2611, 5
      %v2614 = vsel %vm426, %v2609, %v2613
      %v2615 = vshrl.u32 %v2529, 16
      %v2617 = vrot.slane %v2615, 4
      %v2618 = vor.u32 %v2617, %v2613
      %v2619 = vrot.slane %v2618, 4
      %v2621 = vshll.u32 %v2530, 16
      %v2623 = vrot.slane %v2621, 5
      %v2624 = vsel %vm426, %v2619, %v2623
      %v2625 = vshrl.u32 %v2530, 16
      %v2627 = vrot.slane %v2625, 4
      %v2628 = vor.u32 %v2627, %v2623
      %v2629 = vrot.slane %v2628, 4
      %v2631 = vshll.u32 %v2531, 16
      %v2633 = vrot.slane %v2631, 5
      %v2634 = vsel %vm426, %v2629, %v2633
      %v2635 = vshrl.u32 %v2531, 16
      %v2637 = vrot.slane %v2635, 4
      %v2638 = vor.u32 %v2637, %v2633
      %v2639 = vrot.slane %v2638, 4
      %v2641 = vshll.u32 %v2532, 16
      %v2643 = vrot.slane %v2641, 5
      %v2644 = vsel %vm426, %v2639, %v2643
      %v2645 = vshrl.u32 %v2532, 16
      %v2647 = vrot.slane %v2645, 4
      %v2648 = vor.u32 %v2647, %v2643
      %v2649 = vrot.slane %v2648, 4
      %v2651 = vshll.u32 %v2533, 16
      %v2653 = vrot.slane %v2651, 5
      %v2654 = vsel %vm426, %v2649, %v2653
      %v2655 = vshrl.u32 %v2533, 16
      %v2657 = vrot.slane %v2655, 4
      %v2658 = vor.u32 %v2657, %v2653
      %v2659 = vrot.slane %v2658, 4
      %v2661 = vshll.u32 %v2534, 16
      %v2663 = vrot.slane %v2661, 5
      %v2664 = vsel %vm426, %v2659, %v2663
      %v2665 = vshrl.u32 %v2534, 16
      %v2667 = vrot.slane %v2665, 4
      %v2668 = vor.u32 %v2667, %v2663
      %v2669 = vrot.slane %v2668, 4
      %v2671 = vshll.u32 %v2535, 16
      %v2673 = vrot.slane %v2671, 5
      %v2674 = vsel %vm426, %v2669, %v2673
      %v2675 = vshrl.u32 %v2535, 16
      %v2677 = vrot.slane %v2675, 4
      %v2678 = vor.u32 %v2677, %v2673
      %v2679 = vrot.slane %v2678, 4
      %v2681 = vshll.u32 %v2536, 16
      %v2683 = vrot.slane %v2681, 5
      %v2684 = vsel %vm426, %v2679, %v2683
      %v2685 = vshrl.u32 %v2536, 16
      %v2687 = vrot.slane %v2685, 4
      %v2688 = vor.u32 %v2687, %v2683
      %v2689 = vrot.slane %v2688, 4
      %v2691 = vshll.u32 %v2537, 16
      %v2693 = vrot.slane %v2691, 5
      %v2694 = vsel %vm426, %v2689, %v2693
      %v2695 = vshrl.u32 %v2537, 16
      %v2697 = vrot.slane %v2695, 4
      %v2698 = vor.u32 %v2697, %v2693
      %v2699 = vrot.slane %v2698, 4
      %v2701 = vshll.u32 %v2538, 16
      %v2703 = vrot.slane %v2701, 5
      %v2704 = vsel %vm426, %v2699, %v2703
      %v2705 = vshrl.u32 %v2538, 16
      %v2707 = vrot.slane %v2705, 4
      %v2708 = vor.u32 %v2707, %v2703
      %v2709 = vrot.slane %v2708, 4
      %v2711 = vshll.u32 %v2539, 16
      %v2713 = vrot.slane %v2711, 5
      %v2714 = vsel %vm426, %v2709, %v2713
      %v2715 = vshrl.u32 %v2539, 16
      %v2717 = vrot.slane %v2715, 4
      %v2718 = vor.u32 %v2717, %v2713
      %v2719 = vrot.slane %v2718, 4
      %v2721 = vshll.u32 %v2540, 16
      %v2723 = vrot.slane %v2721, 5
      %v2724 = vsel %vm426, %v2719, %v2723
      %v2725 = vshrl.u32 %v2540, 16
      %v2727 = vrot.slane %v2725, 4
      %v2728 = vor.u32 %v2727, %v2723
      %v2729 = vrot.slane %v2728, 4
      %v2731 = vshll.u32 %v2541, 16
      %v2733 = vrot.slane %v2731, 5
      %v2734 = vsel %vm426, %v2729, %v2733
      %v2735 = vshrl.u32 %v2541, 16
      %v2737 = vrot.slane %v2735, 4
      %v2738 = vor.u32 %v2737, %v2733
      %v2739 = vrot.slane %v2738, 4
      %v2741 = vshll.u32 %v2542, 16
      %v2743 = vrot.slane %v2741, 5
      %v2744 = vsel %vm426, %v2739, %v2743
      %v2745 = vshrl.u32 %v2542, 16
      %v2747 = vrot.slane %v2745, 4
      %v2748 = vor.u32 %v2747, %v2743
      %v2749 = vrot.slane %v2748, 4
      %v2751 = vshll.u32 %v2543, 16
      %v2753 = vrot.slane %v2751, 5
      %v2754 = vsel %vm426, %v2749, %v2753
      %v2755 = vshrl.u32 %v2543, 16
      %v2757 = vrot.slane %v2755, 4
      %v2758 = vor.u32 %v2757, %v2753
      %v2759 = vrot.slane %v2758, 4
      %v2761 = vshll.u32 %v2544, 16
      %v2763 = vrot.slane %v2761, 5
      %v2764 = vsel %vm426, %v2759, %v2763
      %v2765 = vshrl.u32 %v2544, 16
      %v2767 = vrot.slane %v2765, 4
      %v2768 = vor.u32 %v2767, %v2763
      %v2769 = vrot.slane %v2768, 4
      %v2771 = vshll.u32 %v2545, 16
      %v2773 = vrot.slane %v2771, 5
      %v2774 = vsel %vm426, %v2769, %v2773
      %v2775 = vshrl.u32 %v2545, 16
      %v2777 = vrot.slane %v2775, 4
      %v2778 = vor.u32 %v2777, %v2773
      %v2779 = vrot.slane %v2778, 4
      %v2781 = vshll.u32 %v2546, 16
      %v2783 = vrot.slane %v2781, 5
      %v2784 = vsel %vm426, %v2779, %v2783
      %v2785 = vshrl.u32 %v2546, 16
      %v2787 = vrot.slane %v2785, 4
      %v2788 = vor.u32 %v2787, %v2783
      %v2789 = vrot.slane %v2788, 4
      %v2791 = vshll.u32 %v2547, 16
      %v2793 = vrot.slane %v2791, 5
      %v2794 = vsel %vm426, %v2789, %v2793
      %v2795 = vshrl.u32 %v2547, 16
      %v2797 = vrot.slane %v2795, 4
      %v2798 = vor.u32 %v2797, %v2793
      %v2799 = vrot.slane %v2798, 4
      %v2801 = vshll.u32 %v2548, 16
      %v2803 = vrot.slane %v2801, 5
      %v2804 = vsel %vm426, %v2799, %v2803
      %v2805 = vshrl.u32 %v2548, 16
      %v2807 = vrot.slane %v2805, 4
      %v2808 = vor.u32 %v2807, %v2803
      %v2809 = vrot.slane %v2808, 4
      %v2811 = vshll.u32 %v2549, 16
      %v2813 = vrot.slane %v2811, 5
      %v2814 = vsel %vm426, %v2809, %v2813
      %v2815 = vshrl.u32 %v2549, 16
      %v2817 = vrot.slane %v2815, 4
      %v2818 = vor.u32 %v2817, %v2813
      %v2819 = vrot.slane %v2818, 4
      %v2821 = vshll.u32 %v2550, 16
      %v2823 = vrot.slane %v2821, 5
      %v2824 = vsel %vm426, %v2819, %v2823
      %v2825 = vshrl.u32 %v2550, 16
      %v2827 = vrot.slane %v2825, 4
      %v2828 = vor.u32 %v2827, %v2823
      %v2829 = vrot.slane %v2828, 4
      %v2831 = vshll.u32 %v2551, 16
      %v2833 = vrot.slane %v2831, 5
      %v2834 = vsel %vm426, %v2829, %v2833
      %v2835 = vshrl.u32 %v2551, 16
      %v2837 = vrot.slane %v2835, 4
      %v2838 = vor.u32 %v2837, %v2833
      %v2839 = vrot.slane %v2838, 4
      %v2841 = vshll.u32 %v2552, 16
      %v2843 = vrot.slane %v2841, 5
      %v2844 = vsel %vm426, %v2839, %v2843
      %v2845 = vshrl.u32 %v2552, 16
      %v2847 = vrot.slane %v2845, 4
      %v2848 = vor.u32 %v2847, %v2843
      %v2849 = vrot.slane %v2848, 4
      %v2851 = vshll.u32 %v2553, 16
      %v2853 = vrot.slane %v2851, 5
      %v2854 = vsel %vm426, %v2849, %v2853
      %v2855 = vshrl.u32 %v2553, 16
      %v2857 = vrot.slane %v2855, 4
      %v2858 = vor.u32 %v2857, %v2853
      %v2859 = vrot.slane %v2858, 4
      %v2861 = vshll.u32 %v2554, 16
      %v2863 = vrot.slane %v2861, 5
      %v2864 = vsel %vm426, %v2859, %v2863
      %v2865 = vshrl.u32 %v2554, 16
      %v2867 = vrot.slane %v2865, 4
      %v2868 = vor.u32 %v2867, %v2863
      %v2869 = vrot.slane %v2868, 4
      %v2871 = vshll.u32 %v2555, 16
      %v2873 = vrot.slane %v2871, 5
      %v2874 = vsel %vm426, %v2869, %v2873
      %v2875 = vshrl.u32 %v2555, 16
      %v2877 = vrot.slane %v2875, 4
      %v2878 = vor.u32 %v2877, %v2873
      %v2879 = vrot.slane %v2878, 4
      %v2881 = vshll.u32 %v2556, 16
      %v2883 = vrot.slane %v2881, 5
      %v2884 = vsel %vm426, %v2879, %v2883
      %v2885 = vshrl.u32 %v2556, 16
      %v2887 = vrot.slane %v2885, 4
      %v2888 = vor.u32 %v2887, %v2883
      %v2889 = vrot.slane %v2888, 4
      %v2891 = vshll.u32 %v2557, 16
      %v2893 = vrot.slane %v2891, 5
      %v2894 = vsel %vm426, %v2889, %v2893
      %v2895 = vshrl.u32 %v2557, 16
      %v2897 = vrot.slane %v2895, 4
      %v2898 = vor.u32 %v2897, %v2893
      %v2899 = vrot.slane %v2898, 4
      %v2901 = vshll.u32 %v2558, 16
      %v2903 = vrot.slane %v2901, 5
      %v2904 = vsel %vm426, %v2899, %v2903
      %v2905 = vshrl.u32 %v2558, 16
      %v2907 = vrot.slane %v2905, 4
      %v2908 = vor.u32 %v2907, %v2903
      %v2909 = vrot.slane %v2908, 4
      %v2911 = vshll.u32 %v2559, 16
      %v2913 = vrot.slane %v2911, 5
      %v2914 = vsel %vm426, %v2909, %v2913
      %v2915 = vshrl.u32 %v2559, 16
      %v2917 = vrot.slane %v2915, 4
      %v2918 = vor.u32 %v2917, %v2913
      %v2919 = vrot.slane %v2918, 4
      %v2921 = vshll.u32 %v2560, 16
      %v2923 = vrot.slane %v2921, 5
      %v2924 = vsel %vm426, %v2919, %v2923
      %v2925 = vshrl.u32 %v2560, 16
      %v2927 = vrot.slane %v2925, 4
      %v2928 = vor.u32 %v2927, %v2923
      %v2929 = vrot.slane %v2928, 4
      %v2931 = vshll.u32 %v2561, 16
      %v2933 = vrot.slane %v2931, 5
      %v2934 = vsel %vm426, %v2929, %v2933
      %v2935 = vshrl.u32 %v2561, 16
      %v2937 = vrot.slane %v2935, 4
      %v2938 = vor.u32 %v2937, %v2933
      %v2939 = vrot.slane %v2938, 4
      %v2941 = vshll.u32 %v2562, 16
      %v2943 = vrot.slane %v2941, 5
      %v2944 = vsel %vm426, %v2939, %v2943
      %v2945 = vshrl.u32 %v2562, 16
      %v2947 = vrot.slane %v2945, 4
      %v2948 = vor.u32 %v2947, %v2943
      %v2949 = vrot.slane %v2948, 4
      %v2951 = vshll.u32 %v2563, 16
      %v2953 = vrot.slane %v2951, 5
      %v2954 = vsel %vm426, %v2949, %v2953
      %v2955 = vshrl.u32 %v2563, 16
      %v2957 = vrot.slane %v2955, 4
      %v2958 = vor.u32 %v2957, %v2953
      %v2959 = vrot.slane %v2958, 4
      %v2961 = vshll.u32 %v2564, 16
      %v2963 = vrot.slane %v2961, 5
      %v2964 = vsel %vm426, %v2959, %v2963
      %v2965 = vshrl.u32 %v2564, 16
      %v2967 = vrot.slane %v2965, 4
      %v2968 = vor.u32 %v2967, %v2963
      %v2969 = vrot.slane %v2968, 4
      %v2971 = vshll.u32 %v2565, 16
      %v2973 = vrot.slane %v2971, 5
      %v2974 = vsel %vm426, %v2969, %v2973
      %v2975 = vshrl.u32 %v2565, 16
      %v2977 = vrot.slane %v2975, 4
      %v2978 = vor.u32 %v2977, %v2973
      %v2979 = vrot.slane %v2978, 4
      %v2981 = vshll.u32 %v2566, 16
      %v2983 = vrot.slane %v2981, 5
      %v2984 = vsel %vm426, %v2979, %v2983
      %v2985 = vshrl.u32 %v2566, 16
      %v2987 = vrot.slane %v2985, 4
      %v2988 = vor.u32 %v2987, %v2983
      %v2989 = vrot.slane %v2988, 4
      %v2991 = vshll.u32 %v2567, 16
      %v2993 = vrot.slane %v2991, 5
      %v2994 = vsel %vm426, %v2989, %v2993
      %v2995 = vshrl.u32 %v2567, 16
      %v2997 = vrot.slane %v2995, 4
      %v2998 = vor.u32 %v2997, %v2993
      %v2999 = vrot.slane %v2998, 4
      %v3001 = vshll.u32 %v2568, 16
      %v3003 = vrot.slane %v3001, 5
      %v3004 = vsel %vm426, %v2999, %v3003
      %v3005 = vshrl.u32 %v2568, 16
      %v3007 = vrot.slane %v3005, 4
      %v3008 = vor.u32 %v3007, %v3003
      %v3009 = vrot.slane %v3008, 4
      %v3011 = vshll.u32 %v2569, 16
      %v3013 = vrot.slane %v3011, 5
      %v3014 = vsel %vm426, %v3009, %v3013
      %v3015 = vshrl.u32 %v2569, 16
      %v3017 = vrot.slane %v3015, 4
      %v3018 = vor.u32 %v3017, %v3013
      %v3019 = vrot.slane %v3018, 4
      %v3021 = vshll.u32 %v2570, 16
      %v3023 = vrot.slane %v3021, 5
      %v3024 = vsel %vm426, %v3019, %v3023
      %v3025 = vshrl.u32 %v2570, 16
      %v3027 = vrot.slane %v3025, 4
      %v3028 = vor.u32 %v3027, %v3023
      %v3029 = vrot.slane %v3028, 4
      %v3031 = vshll.u32 %v2571, 16
      %v3033 = vrot.slane %v3031, 5
      %v3034 = vsel %vm426, %v3029, %v3033
      %v3035 = vshrl.u32 %v2571, 16
      %v3037 = vrot.slane %v3035, 4
      %v3038 = vor.u32 %v3037, %v3033
      %v3039 = vrot.slane %v3038, 4
      %v3041 = vshll.u32 %v2572, 16
      %v3043 = vrot.slane %v3041, 5
      %v3044 = vsel %vm426, %v3039, %v3043
      %v3045 = vshrl.u32 %v2572, 16
      %v3047 = vrot.slane %v3045, 4
      %v3048 = vor.u32 %v3047, %v3043
      %v3049 = vrot.slane %v3048, 4
      %v3051 = vshll.u32 %v2573, 16
      %v3053 = vrot.slane %v3051, 5
      %v3054 = vsel %vm426, %v3049, %v3053
      %v3055 = vshrl.u32 %v2573, 16
      %v3057 = vrot.slane %v3055, 4
      %v3058 = vor.u32 %v3057, %v3053
      %v3059 = vrot.slane %v3058, 4
      %v3061 = vshll.u32 %v2574, 16
      %v3063 = vrot.slane %v3061, 5
      %v3064 = vsel %vm426, %v3059, %v3063
      %v3065 = vshrl.u32 %v2574, 16
      %v3067 = vrot.slane %v3065, 4
      %v3068 = vor.u32 %v3067, %v3063
      %v3069 = vrot.slane %v3068, 4
      %v3071 = vshll.u32 %v2575, 16
      %v3073 = vrot.slane %v3071, 5
      %v3074 = vsel %vm426, %v3069, %v3073
      %v3075 = vshrl.u32 %v2575, 16
      %v3077 = vrot.slane %v3075, 4
      %v3078 = vor.u32 %v3077, %v3073
      %v3079 = vrot.slane %v3078, 4
      %v3081 = vshll.u32 %v2576, 16
      %v3083 = vrot.slane %v3081, 5
      %v3084 = vsel %vm426, %v3079, %v3083
      %v3085 = vshrl.u32 %v2576, 16
      %v3087 = vrot.slane %v3085, 4
      %v3088 = vor.u32 %v3087, %v3083
      %v3089 = vrot.slane %v3088, 4
      %v3091 = vshll.u32 %v2577, 16
      %v3093 = vrot.slane %v3091, 5
      %v3094 = vsel %vm426, %v3089, %v3093
      %v3095 = vshrl.u32 %v2577, 16
      %v3097 = vrot.slane %v3095, 4
      %v3098 = vor.u32 %v3097, %v3093
      %v3099 = vrot.slane %v3098, 4
      %v3101 = vshll.u32 %v2578, 16
      %v3103 = vrot.slane %v3101, 5
      %v3104 = vsel %vm426, %v3099, %v3103
      %v3105 = vshrl.u32 %v2578, 16
      %v3107 = vrot.slane %v3105, 4
      %v3108 = vor.u32 %v3107, %v3103
      %v3109 = vrot.slane %v3108, 4
      %v3111 = vshll.u32 %v2579, 16
      %v3113 = vrot.slane %v3111, 5
      %v3114 = vsel %vm426, %v3109, %v3113
      %v3115 = vshrl.u32 %v2579, 16
      %v3117 = vrot.slane %v3115, 4
      %v3118 = vor.u32 %v3117, %v3113
      %v3119 = vrot.slane %v3118, 4
      %v3121 = vshll.u32 %v2580, 16
      %v3123 = vrot.slane %v3121, 5
      %v3124 = vsel %vm426, %v3119, %v3123
      %v3125 = vshrl.u32 %v2580, 16
      %v3127 = vrot.slane %v3125, 4
      %v3128 = vor.u32 %v3127, %v3123
      %v3129 = vrot.slane %v3128, 4
      %v3131 = vshll.u32 %v2581, 16
      %v3133 = vrot.slane %v3131, 5
      %v3134 = vsel %vm426, %v3129, %v3133
      %v3135 = vshrl.u32 %v2581, 16
      %v3137 = vrot.slane %v3135, 4
      %v3138 = vor.u32 %v3137, %v3133
      %v3139 = vrot.slane %v3138, 4
      %v3141 = vshll.u32 %v2582, 16
      %v3143 = vrot.slane %v3141, 5
      %v3144 = vsel %vm426, %v3139, %v3143
      %v3145 = vshrl.u32 %v2582, 16
      %v3147 = vrot.slane %v3145, 4
      %v3148 = vor.u32 %v3147, %v3143
      %v3149 = vrot.slane %v3148, 4
      %v3151 = vshll.u32 %v2583, 16
      %v3153 = vrot.slane %v3151, 5
      %v3154 = vsel %vm426, %v3149, %v3153
      %v3155 = vshrl.u32 %v2583, 16
      %v3157 = vrot.slane %v3155, 4
      %v3158 = vor.u32 %v3157, %v3153
      %v3159 = vrot.slane %v3158, 4
      %v3161 = vshll.u32 %v2584, 16
      %v3163 = vrot.slane %v3161, 5
      %v3164 = vsel %vm426, %v3159, %v3163
      %v3165 = vshrl.u32 %v2584, 16
      %v3167 = vrot.slane %v3165, 4
      %v3168 = vor.u32 %v3167, %v3163
      %v3169 = vrot.slane %v3168, 4
      %v3171 = vshll.u32 %v2585, 16
      %v3173 = vrot.slane %v3171, 5
      %v3174 = vsel %vm426, %v3169, %v3173
      %v3175 = vshrl.u32 %v2585, 16
      %v3177 = vrot.slane %v3175, 4
      %v3178 = vor.u32 %v3177, %v3173
      %v3179 = vrot.slane %v3178, 4
      %v3181 = vshll.u32 %v2586, 16
      %v3183 = vrot.slane %v3181, 5
      %v3184 = vsel %vm426, %v3179, %v3183
      %v3185 = vshrl.u32 %v2586, 16
      %v3187 = vrot.slane %v3185, 4
      %v3188 = vor.u32 %v3187, %v3183
      %v3189 = vrot.slane %v3188, 4
      %v3191 = vshll.u32 %v2587, 16
      %v3193 = vrot.slane %v3191, 5
      %v3194 = vsel %vm426, %v3189, %v3193
      %v3195 = vshrl.u32 %v2587, 16
      %v3197 = vrot.slane %v3195, 4
      %v3198 = vor.u32 %v3197, %v3193
      %v3199 = vrot.slane %v3198, 4
      %v3201 = vshll.u32 %v2588, 16
      %v3203 = vrot.slane %v3201, 5
      %v3204 = vsel %vm426, %v3199, %v3203
      %v3205 = vshrl.u32 %v2588, 16
      %v3207 = vrot.slane %v3205, 4
      %v3208 = vor.u32 %v3207, %v3203
      %v3209 = vrot.slane %v3208, 4
      %v3211 = vshll.u32 %v2589, 16
      %v3213 = vrot.slane %v3211, 5
      %v3214 = vsel %vm426, %v3209, %v3213
      %v3215 = vshrl.u32 %v2589, 16
      %v3217 = vrot.slane %v3215, 4
      %v3218 = vor.u32 %v3217, %v3213
      %v3219 = vrot.slane %v3218, 4
      %v3221 = vshll.u32 %v2590, 16
      %v3223 = vrot.slane %v3221, 5
      %v3224 = vsel %vm426, %v3219, %v3223
      %v3225 = vshrl.u32 %v2590, 16
      %v3227 = vrot.slane %v3225, 4
      %v3228 = vor.u32 %v3227, %v3223
      %v3229 = vrot.slane %v3228, 4
      %v3231 = vshll.u32 %v2591, 16
      %v3233 = vrot.slane %v3231, 5
      %v3234 = vsel %vm426, %v3229, %v3233
      %v3235 = vshrl.u32 %v2591, 16
      %v3237 = vrot.slane %v3235, 4
      %v3238 = vor.u32 %v3237, %v3233
      %v3239 = vrot.slane %v3238, 4
      %v3241 = vshll.u32 %v2592, 16
      %v3243 = vrot.slane %v3241, 5
      %v3244 = vsel %vm426, %v3239, %v3243
      %v3245 = vshrl.u32 %v2592, 16
      %v3247 = vrot.slane %v3245, 4
      %v3248 = vor.u32 %v3247, %v3243
      %v3249 = vrot.slane %v3248, 4
      %v3251 = vshll.u32 %v2593, 16
      %v3253 = vrot.slane %v3251, 5
      %v3254 = vsel %vm426, %v3249, %v3253
      %v3255 = vshrl.u32 %v2593, 16
      %v3257 = vrot.slane %v3255, 4
      %v3258 = vor.u32 %v3257, %v3253
      %v3259 = vrot.slane %v3258, 4
      %v3261 = vshll.u32 %v2594, 16
      %v3263 = vrot.slane %v3261, 5
      %v3264 = vsel %vm426, %v3259, %v3263
      %v3265 = vshrl.u32 %v2594, 16
      %v3267 = vrot.slane %v3265, 4
      %v3268 = vor.u32 %v3267, %v3263
      %v3269 = vrot.slane %v3268, 4
      %v3271 = vshll.u32 %v2595, 16
      %v3273 = vrot.slane %v3271, 5
      %v3274 = vsel %vm426, %v3269, %v3273
      %v3275 = vshrl.u32 %v2595, 16
      %v3277 = vrot.slane %v3275, 4
      %v3278 = vor.u32 %v3277, %v3273
      %v3279 = vrot.slane %v3278, 4
      %v3281 = vshll.u32 %v2596, 16
      %v3283 = vrot.slane %v3281, 5
      %v3284 = vsel %vm426, %v3279, %v3283
      %v3285 = vshrl.u32 %v2596, 16
      %v3287 = vrot.slane %v3285, 4
      %v3288 = vor.u32 %v3287, %v3283
      %v3289 = vrot.slane %v3288, 4
      %v3291 = vshll.u32 %v2597, 16
      %v3293 = vrot.slane %v3291, 5
      %v3294 = vsel %vm426, %v3289, %v3293
      %v3295 = vshrl.u32 %v2597, 16
      %v3297 = vrot.slane %v3295, 4
      %v3298 = vor.u32 %v3297, %v3293
      %v3299 = vrot.slane %v3298, 4
      %v3301 = vshll.u32 %v2598, 16
      %v3303 = vrot.slane %v3301, 5
      %v3304 = vsel %vm426, %v3299, %v3303
      %v3305 = vshrl.u32 %v2598, 16
      %v3307 = vrot.slane %v3305, 4
      %v3308 = vor.u32 %v3307, %v3303
      %v3309 = vrot.slane %v3308, 4
      %v3311 = vshll.u32 %v2599, 16
      %v3313 = vrot.slane %v3311, 5
      %v3314 = vsel %vm426, %v3309, %v3313
      %v3315 = vshrl.u32 %v2599, 16
      %v3317 = vrot.slane %v3315, 4
      %v3318 = vor.u32 %v3317, %v3313
      %v3319 = vrot.slane %v3318, 4
      %v3321 = vshll.u32 %v2600, 16
      %v3323 = vrot.slane %v3321, 5
      %v3324 = vsel %vm426, %v3319, %v3323
      %3325 = vrot.lane.b32.xlu0 %v2614, 16
      %v3326 = vpop.permute.xlu0 %3325
      %3327 = vrot.lane.b32.xlu0 %v2624, 16
      %v3328 = vpop.permute.xlu0 %3327
      %3329 = vrot.lane.b32.xlu0 %v2634, 16
      %v3330 = vpop.permute.xlu0 %3329
      %3331 = vrot.lane.b32.xlu0 %v2644, 16
      %v3332 = vpop.permute.xlu0 %3331
      %3333 = vrot.lane.b32.xlu0 %v2654, 16
      %v3334 = vpop.permute.xlu0 %3333
      %3335 = vrot.lane.b32.xlu0 %v2664, 16
      %v3336 = vpop.permute.xlu0 %3335
      %3337 = vrot.lane.b32.xlu0 %v2674, 16
      %v3338 = vpop.permute.xlu0 %3337
      %3339 = vrot.lane.b32.xlu0 %v2684, 16
      %v3340 = vpop.permute.xlu0 %3339
      %3341 = vrot.lane.b32.xlu0 %v2694, 16
      %v3342 = vpop.permute.xlu0 %3341
      %3343 = vrot.lane.b32.xlu0 %v2704, 16
      %v3344 = vpop.permute.xlu0 %3343
      %3345 = vrot.lane.b32.xlu0 %v2714, 16
      %v3346 = vpop.permute.xlu0 %3345
      %3347 = vrot.lane.b32.xlu0 %v2724, 16
      %v3348 = vpop.permute.xlu0 %3347
      %3349 = vrot.lane.b32.xlu0 %v2734, 16
      %v3350 = vpop.permute.xlu0 %3349
      %3351 = vrot.lane.b32.xlu0 %v2744, 16
      %v3352 = vpop.permute.xlu0 %3351
      %3353 = vrot.lane.b32.xlu0 %v2754, 16
      %v3354 = vpop.permute.xlu0 %3353
      %3355 = vrot.lane.b32.xlu0 %v2764, 16
      %v3356 = vpop.permute.xlu0 %3355
      %3357 = vrot.lane.b32.xlu0 %v2774, 16
      %v3358 = vpop.permute.xlu0 %3357
      %3359 = vrot.lane.b32.xlu0 %v2784, 16
      %v3360 = vpop.permute.xlu0 %3359
      %3361 = vrot.lane.b32.xlu0 %v2794, 16
      %v3362 = vpop.permute.xlu0 %3361
      %3363 = vrot.lane.b32.xlu0 %v2804, 16
      %v3364 = vpop.permute.xlu0 %3363
      %3365 = vrot.lane.b32.xlu0 %v2814, 16
      %v3366 = vpop.permute.xlu0 %3365
      %3367 = vrot.lane.b32.xlu0 %v2824, 16
      %v3368 = vpop.permute.xlu0 %3367
      %3369 = vrot.lane.b32.xlu0 %v2834, 16
      %v3370 = vpop.permute.xlu0 %3369
      %3371 = vrot.lane.b32.xlu0 %v2844, 16
      %v3372 = vpop.permute.xlu0 %3371
      %3373 = vrot.lane.b32.xlu0 %v2854, 16
      %v3374 = vpop.permute.xlu0 %3373
      %3375 = vrot.lane.b32.xlu0 %v2864, 16
      %v3376 = vpop.permute.xlu0 %3375
      %3377 = vrot.lane.b32.xlu0 %v2874, 16
      %v3378 = vpop.permute.xlu0 %3377
      %3379 = vrot.lane.b32.xlu0 %v2884, 16
      %v3380 = vpop.permute.xlu0 %3379
      %3381 = vrot.lane.b32.xlu0 %v2894, 16
      %v3382 = vpop.permute.xlu0 %3381
      %3383 = vrot.lane.b32.xlu0 %v2904, 16
      %v3384 = vpop.permute.xlu0 %3383
      %3385 = vrot.lane.b32.xlu0 %v2914, 16
      %v3386 = vpop.permute.xlu0 %3385
      %3387 = vrot.lane.b32.xlu0 %v2924, 16
      %v3388 = vpop.permute.xlu0 %3387
      %3389 = vrot.lane.b32.xlu0 %v2934, 16
      %v3390 = vpop.permute.xlu0 %3389
      %3391 = vrot.lane.b32.xlu0 %v2944, 16
      %v3392 = vpop.permute.xlu0 %3391
      %3393 = vrot.lane.b32.xlu0 %v2954, 16
      %v3394 = vpop.permute.xlu0 %3393
      %3395 = vrot.lane.b32.xlu0 %v2964, 16
      %v3396 = vpop.permute.xlu0 %3395
      %3397 = vrot.lane.b32.xlu0 %v2974, 16
      %v3398 = vpop.permute.xlu0 %3397
      %3399 = vrot.lane.b32.xlu0 %v2984, 16
      %v3400 = vpop.permute.xlu0 %3399
      %3401 = vrot.lane.b32.xlu0 %v2994, 16
      %v3402 = vpop.permute.xlu0 %3401
      %3403 = vrot.lane.b32.xlu0 %v3004, 16
      %v3404 = vpop.permute.xlu0 %3403
      %3405 = vrot.lane.b32.xlu0 %v3014, 16
      %v3406 = vpop.permute.xlu0 %3405
      %3407 = vrot.lane.b32.xlu0 %v3024, 16
      %v3408 = vpop.permute.xlu0 %3407
      %3409 = vrot.lane.b32.xlu0 %v3034, 16
      %v3410 = vpop.permute.xlu0 %3409
      %3411 = vrot.lane.b32.xlu0 %v3044, 16
      %v3412 = vpop.permute.xlu0 %3411
      %3413 = vrot.lane.b32.xlu0 %v3054, 16
      %v3414 = vpop.permute.xlu0 %3413
      %3415 = vrot.lane.b32.xlu0 %v3064, 16
      %v3416 = vpop.permute.xlu0 %3415
      %3417 = vrot.lane.b32.xlu0 %v3074, 16
      %v3418 = vpop.permute.xlu0 %3417
      %3419 = vrot.lane.b32.xlu0 %v3084, 16
      %v3420 = vpop.permute.xlu0 %3419
      %3421 = vrot.lane.b32.xlu0 %v3094, 16
      %v3422 = vpop.permute.xlu0 %3421
      %3423 = vrot.lane.b32.xlu0 %v3104, 16
      %v3424 = vpop.permute.xlu0 %3423
      %3425 = vrot.lane.b32.xlu0 %v3114, 16
      %v3426 = vpop.permute.xlu0 %3425
      %3427 = vrot.lane.b32.xlu0 %v3124, 16
      %v3428 = vpop.permute.xlu0 %3427
      %3429 = vrot.lane.b32.xlu0 %v3134, 16
      %v3430 = vpop.permute.xlu0 %3429
      %3431 = vrot.lane.b32.xlu0 %v3144, 16
      %v3432 = vpop.permute.xlu0 %3431
      %3433 = vrot.lane.b32.xlu0 %v3154, 16
      %v3434 = vpop.permute.xlu0 %3433
      %3435 = vrot.lane.b32.xlu0 %v3164, 16
      %v3436 = vpop.permute.xlu0 %3435
      %3437 = vrot.lane.b32.xlu0 %v3174, 16
      %v3438 = vpop.permute.xlu0 %3437
      %3439 = vrot.lane.b32.xlu0 %v3184, 16
      %v3440 = vpop.permute.xlu0 %3439
      %3441 = vrot.lane.b32.xlu0 %v3194, 16
      %v3442 = vpop.permute.xlu0 %3441
      %3443 = vrot.lane.b32.xlu0 %v3204, 16
      %v3444 = vpop.permute.xlu0 %3443
      %3445 = vrot.lane.b32.xlu0 %v3214, 16
      %v3446 = vpop.permute.xlu0 %3445
      %3447 = vrot.lane.b32.xlu0 %v3224, 16
      %v3448 = vpop.permute.xlu0 %3447
      %3449 = vrot.lane.b32.xlu0 %v3234, 16
      %v3450 = vpop.permute.xlu0 %3449
      %3451 = vrot.lane.b32.xlu0 %v3244, 16
      %v3452 = vpop.permute.xlu0 %3451
      %3453 = vrot.lane.b32.xlu0 %v3254, 16
      %v3454 = vpop.permute.xlu0 %3453
      %3455 = vrot.lane.b32.xlu0 %v3264, 16
      %v3456 = vpop.permute.xlu0 %3455
      %3457 = vrot.lane.b32.xlu0 %v3274, 16
      %v3458 = vpop.permute.xlu0 %3457
      %3459 = vrot.lane.b32.xlu0 %v3284, 16
      %v3460 = vpop.permute.xlu0 %3459
      %3461 = vrot.lane.b32.xlu0 %v3294, 16
      %v3462 = vpop.permute.xlu0 %3461
      %3463 = vrot.lane.b32.xlu0 %v3304, 16
      %v3464 = vpop.permute.xlu0 %3463
      %3465 = vrot.lane.b32.xlu0 %v3314, 16
      %v3466 = vpop.permute.xlu0 %3465
      %3467 = vrot.lane.b32.xlu0 %v3324, 16
      %v3468 = vpop.permute.xlu0 %3467
      %vm3541 = vcmask 158848
      %3542 = vst.msk [vmem:[#allocation3] sm:$0xf] %vm3541, %v3326
      %3543 = vst.msk [vmem:[#allocation3 + $0x4] sm:$0xf] %vm3541, %v3328
      %3544 = vst.msk [vmem:[#allocation3 + $0x8] sm:$0xf] %vm3541, %v3330
      %3545 = vst.msk [vmem:[#allocation3 + $0xc] sm:$0xf] %vm3541, %v3332
      %3546 = vst.msk [vmem:[#allocation3 + $0x10] sm:$0xf] %vm3541, %v3334
      %3547 = vst.msk [vmem:[#allocation3 + $0x14] sm:$0xf] %vm3541, %v3336
      %3548 = vst.msk [vmem:[#allocation3 + $0x18] sm:$0xf] %vm3541, %v3338
      %3549 = vst.msk [vmem:[#allocation3 + $0x1c] sm:$0xf] %vm3541, %v3340
      %3550 = vst.msk [vmem:[#allocation3 + $0x20] sm:$0xf] %vm3541, %v3342
      %3551 = vst.msk [vmem:[#allocation3 + $0x24] sm:$0xf] %vm3541, %v3344
      %3552 = vst.msk [vmem:[#allocation3 + $0x28] sm:$0xf] %vm3541, %v3346
      %3553 = vst.msk [vmem:[#allocation3 + $0x2c] sm:$0xf] %vm3541, %v3348
      %3554 = vst.msk [vmem:[#allocation3 + $0x30] sm:$0xf] %vm3541, %v3350
      %3555 = vst.msk [vmem:[#allocation3 + $0x34] sm:$0xf] %vm3541, %v3352
      %3556 = vst.msk [vmem:[#allocation3 + $0x38] sm:$0xf] %vm3541, %v3354
      %3557 = vst.msk [vmem:[#allocation3 + $0x3c] sm:$0xf] %vm3541, %v3356
      %3558 = vst.msk [vmem:[#allocation3 + $0x40] sm:$0xf] %vm3541, %v3358
      %3559 = vst.msk [vmem:[#allocation3 + $0x44] sm:$0xf] %vm3541, %v3360
      %3560 = vst.msk [vmem:[#allocation3 + $0x48] sm:$0xf] %vm3541, %v3362
      %3561 = vst.msk [vmem:[#allocation3 + $0x4c] sm:$0xf] %vm3541, %v3364
      %3562 = vst.msk [vmem:[#allocation3 + $0x50] sm:$0xf] %vm3541, %v3366
      %3563 = vst.msk [vmem:[#allocation3 + $0x54] sm:$0xf] %vm3541, %v3368
      %3564 = vst.msk [vmem:[#allocation3 + $0x58] sm:$0xf] %vm3541, %v3370
      %3565 = vst.msk [vmem:[#allocation3 + $0x5c] sm:$0xf] %vm3541, %v3372
      %3566 = vst.msk [vmem:[#allocation3 + $0x60] sm:$0xf] %vm3541, %v3374
      %3567 = vst.msk [vmem:[#allocation3 + $0x64] sm:$0xf] %vm3541, %v3376
      %3568 = vst.msk [vmem:[#allocation3 + $0x68] sm:$0xf] %vm3541, %v3378
      %3569 = vst.msk [vmem:[#allocation3 + $0x6c] sm:$0xf] %vm3541, %v3380
      %3570 = vst.msk [vmem:[#allocation3 + $0x70] sm:$0xf] %vm3541, %v3382
      %3571 = vst.msk [vmem:[#allocation3 + $0x74] sm:$0xf] %vm3541, %v3384
      %3572 = vst.msk [vmem:[#allocation3 + $0x78] sm:$0xf] %vm3541, %v3386
      %3573 = vst.msk [vmem:[#allocation3 + $0x7c] sm:$0xf] %vm3541, %v3388
      %3574 = vst.msk [vmem:[#allocation3 + $0x80] sm:$0xf] %vm3541, %v3390
      %3575 = vst.msk [vmem:[#allocation3 + $0x84] sm:$0xf] %vm3541, %v3392
      %3576 = vst.msk [vmem:[#allocation3 + $0x88] sm:$0xf] %vm3541, %v3394
      %3577 = vst.msk [vmem:[#allocation3 + $0x8c] sm:$0xf] %vm3541, %v3396
      %3578 = vst.msk [vmem:[#allocation3 + $0x90] sm:$0xf] %vm3541, %v3398
      %3579 = vst.msk [vmem:[#allocation3 + $0x94] sm:$0xf] %vm3541, %v3400
      %3580 = vst.msk [vmem:[#allocation3 + $0x98] sm:$0xf] %vm3541, %v3402
      %3581 = vst.msk [vmem:[#allocation3 + $0x9c] sm:$0xf] %vm3541, %v3404
      %3582 = vst.msk [vmem:[#allocation3 + $0xa0] sm:$0xf] %vm3541, %v3406
      %3583 = vst.msk [vmem:[#allocation3 + $0xa4] sm:$0xf] %vm3541, %v3408
      %3584 = vst.msk [vmem:[#allocation3 + $0xa8] sm:$0xf] %vm3541, %v3410
      %3585 = vst.msk [vmem:[#allocation3 + $0xac] sm:$0xf] %vm3541, %v3412
      %3586 = vst.msk [vmem:[#allocation3 + $0xb0] sm:$0xf] %vm3541, %v3414
      %3587 = vst.msk [vmem:[#allocation3 + $0xb4] sm:$0xf] %vm3541, %v3416
      %3588 = vst.msk [vmem:[#allocation3 + $0xb8] sm:$0xf] %vm3541, %v3418
      %3589 = vst.msk [vmem:[#allocation3 + $0xbc] sm:$0xf] %vm3541, %v3420
      %3590 = vst.msk [vmem:[#allocation3 + $0xc0] sm:$0xf] %vm3541, %v3422
      %3591 = vst.msk [vmem:[#allocation3 + $0xc4] sm:$0xf] %vm3541, %v3424
      %3592 = vst.msk [vmem:[#allocation3 + $0xc8] sm:$0xf] %vm3541, %v3426
      %3593 = vst.msk [vmem:[#allocation3 + $0xcc] sm:$0xf] %vm3541, %v3428
      %3594 = vst.msk [vmem:[#allocation3 + $0xd0] sm:$0xf] %vm3541, %v3430
      %3595 = vst.msk [vmem:[#allocation3 + $0xd4] sm:$0xf] %vm3541, %v3432
      %3596 = vst.msk [vmem:[#allocation3 + $0xd8] sm:$0xf] %vm3541, %v3434
      %3597 = vst.msk [vmem:[#allocation3 + $0xdc] sm:$0xf] %vm3541, %v3436
      %3598 = vst.msk [vmem:[#allocation3 + $0xe0] sm:$0xf] %vm3541, %v3438
      %3599 = vst.msk [vmem:[#allocation3 + $0xe4] sm:$0xf] %vm3541, %v3440
      %3600 = vst.msk [vmem:[#allocation3 + $0xe8] sm:$0xf] %vm3541, %v3442
      %3601 = vst.msk [vmem:[#allocation3 + $0xec] sm:$0xf] %vm3541, %v3444
      %3602 = vst.msk [vmem:[#allocation3 + $0xf0] sm:$0xf] %vm3541, %v3446
      %3603 = vst.msk [vmem:[#allocation3 + $0xf4] sm:$0xf] %vm3541, %v3448
      %3604 = vst.msk [vmem:[#allocation3 + $0xf8] sm:$0xf] %vm3541, %v3450
      %3605 = vst.msk [vmem:[#allocation3 + $0xfc] sm:$0xf] %vm3541, %v3452
      %3606 = vst.msk [vmem:[#allocation3 + $0x100] sm:$0xf] %vm3541, %v3454
      %3607 = vst.msk [vmem:[#allocation3 + $0x104] sm:$0xf] %vm3541, %v3456
      %3608 = vst.msk [vmem:[#allocation3 + $0x108] sm:$0xf] %vm3541, %v3458
      %3609 = vst.msk [vmem:[#allocation3 + $0x10c] sm:$0xf] %vm3541, %v3460
      %3610 = vst.msk [vmem:[#allocation3 + $0x110] sm:$0xf] %vm3541, %v3462
      %3611 = vst.msk [vmem:[#allocation3 + $0x114] sm:$0xf] %vm3541, %v3464
      %3612 = vst.msk [vmem:[#allocation3 + $0x118] sm:$0xf] %vm3541, %v3466
      %3613 = vst.msk [vmem:[#allocation3 + $0x11c] sm:$0xf] %vm3541, %v3468
      %v3614 = vld [vmem:[#allocation2 + $0x8] sm:$0xe]
      %v3615 = vld [vmem:[#allocation2 + $0xc] sm:$0xf]
      %v3616 = vld [vmem:[#allocation2 + $0x10] sm:$0xf]
      %v3617 = vld [vmem:[#allocation2 + $0x14] sm:$0xf]
      %v3618 = vld [vmem:[#allocation2 + $0x18] sm:$0xf]
      %v3619 = vld [vmem:[#allocation2 + $0x1c] sm:$0xf]
      %v3620 = vld [vmem:[#allocation2 + $0x20] sm:$0xf]
      %v3621 = vld [vmem:[#allocation2 + $0x24] sm:$0xf]
      %v3622 = vld [vmem:[#allocation2 + $0x28] sm:$0xf]
      %v3623 = vld [vmem:[#allocation2 + $0x2c] sm:$0xf]
      %v3624 = vld [vmem:[#allocation2 + $0x30] sm:$0xf]
      %v3625 = vld [vmem:[#allocation2 + $0x34] sm:$0xf]
      %v3626 = vld [vmem:[#allocation2 + $0x38] sm:$0xf]
      %v3627 = vld [vmem:[#allocation2 + $0x3c] sm:$0xf]
      %v3628 = vld [vmem:[#allocation2 + $0x40] sm:$0xf]
      %v3629 = vld [vmem:[#allocation2 + $0x44] sm:$0xf]
      %v3630 = vld [vmem:[#allocation2 + $0x48] sm:$0xf]
      %v3631 = vld [vmem:[#allocation2 + $0x4c] sm:$0xf]
      %v3632 = vld [vmem:[#allocation2 + $0x50] sm:$0xf]
      %v3633 = vld [vmem:[#allocation2 + $0x54] sm:$0xf]
      %v3634 = vld [vmem:[#allocation2 + $0x58] sm:$0xf]
      %v3635 = vld [vmem:[#allocation2 + $0x5c] sm:$0xf]
      %v3636 = vld [vmem:[#allocation2 + $0x60] sm:$0xf]
      %v3637 = vld [vmem:[#allocation2 + $0x64] sm:$0xf]
      %v3638 = vld [vmem:[#allocation2 + $0x68] sm:$0xf]
      %v3639 = vld [vmem:[#allocation2 + $0x6c] sm:$0xf]
      %v3640 = vld [vmem:[#allocation2 + $0x70] sm:$0xf]
      %v3641 = vld [vmem:[#allocation2 + $0x74] sm:$0xf]
      %v3642 = vld [vmem:[#allocation2 + $0x78] sm:$0xf]
      %v3643 = vld [vmem:[#allocation2 + $0x7c] sm:$0xf]
      %v3644 = vld [vmem:[#allocation2 + $0x80] sm:$0xf]
      %v3645 = vld [vmem:[#allocation2 + $0x84] sm:$0xf]
      %v3646 = vld [vmem:[#allocation2 + $0x88] sm:$0xf]
      %v3647 = vld [vmem:[#allocation2 + $0x8c] sm:$0xf]
      %v3648 = vld [vmem:[#allocation2 + $0x90] sm:$0xf]
      %v3649 = vld [vmem:[#allocation2 + $0x94] sm:$0xf]
      %v3650 = vld [vmem:[#allocation2 + $0x98] sm:$0xf]
      %v3651 = vld [vmem:[#allocation2 + $0x9c] sm:$0xf]
      %v3652 = vld [vmem:[#allocation2 + $0xa0] sm:$0xf]
      %v3653 = vld [vmem:[#allocation2 + $0xa4] sm:$0xf]
      %v3654 = vld [vmem:[#allocation2 + $0xa8] sm:$0xf]
      %v3655 = vld [vmem:[#allocation2 + $0xac] sm:$0xf]
      %v3656 = vld [vmem:[#allocation2 + $0xb0] sm:$0xf]
      %v3657 = vld [vmem:[#allocation2 + $0xb4] sm:$0xf]
      %v3658 = vld [vmem:[#allocation2 + $0xb8] sm:$0xf]
      %v3659 = vld [vmem:[#allocation2 + $0xbc] sm:$0xf]
      %v3660 = vld [vmem:[#allocation2 + $0xc0] sm:$0xf]
      %v3661 = vld [vmem:[#allocation2 + $0xc4] sm:$0xf]
      %v3662 = vld [vmem:[#allocation2 + $0xc8] sm:$0xf]
      %v3663 = vld [vmem:[#allocation2 + $0xcc] sm:$0xf]
      %v3664 = vld [vmem:[#allocation2 + $0xd0] sm:$0xf]
      %v3665 = vld [vmem:[#allocation2 + $0xd4] sm:$0xf]
      %v3666 = vld [vmem:[#allocation2 + $0xd8] sm:$0xf]
      %v3667 = vld [vmem:[#allocation2 + $0xdc] sm:$0xf]
      %v3668 = vld [vmem:[#allocation2 + $0xe0] sm:$0xf]
      %v3669 = vld [vmem:[#allocation2 + $0xe4] sm:$0xf]
      %v3670 = vld [vmem:[#allocation2 + $0xe8] sm:$0xf]
      %v3671 = vld [vmem:[#allocation2 + $0xec] sm:$0xf]
      %v3672 = vld [vmem:[#allocation2 + $0xf0] sm:$0xf]
      %v3673 = vld [vmem:[#allocation2 + $0xf4] sm:$0xf]
      %v3674 = vld [vmem:[#allocation2 + $0xf8] sm:$0xf]
      %v3675 = vld [vmem:[#allocation2 + $0xfc] sm:$0xf]
      %v3676 = vld [vmem:[#allocation2 + $0x100] sm:$0xf]
      %v3677 = vld [vmem:[#allocation2 + $0x104] sm:$0xf]
      %v3678 = vld [vmem:[#allocation2 + $0x108] sm:$0xf]
      %v3679 = vld [vmem:[#allocation2 + $0x10c] sm:$0xf]
      %v3680 = vld [vmem:[#allocation2 + $0x110] sm:$0xf]
      %v3681 = vld [vmem:[#allocation2 + $0x114] sm:$0xf]
      %v3682 = vld [vmem:[#allocation2 + $0x118] sm:$0xf]
      %v3683 = vld [vmem:[#allocation2 + $0x11c] sm:$0xf]
      %v3684 = vld [vmem:[#allocation2 + $0x120] sm:$0xf]
      %v3685 = vld [vmem:[#allocation2 + $0x124] sm:$0xf]
      %v3686 = vld [vmem:[#allocation2 + $0x128] sm:$0x1]
      %v3760 = vrot.slane %v3614, 5
      %v3761 = vrot.slane %v3760, 4
      %v3762 = vrot.slane %v3615, 5
      %v3763 = vsel %vm1588, %v3761, %v3762
      %v3764 = vrot.slane %v3762, 4
      %v3765 = vrot.slane %v3616, 5
      %v3766 = vsel %vm1588, %v3764, %v3765
      %v3767 = vrot.slane %v3765, 4
      %v3768 = vrot.slane %v3617, 5
      %v3769 = vsel %vm1588, %v3767, %v3768
      %v3770 = vrot.slane %v3768, 4
      %v3771 = vrot.slane %v3618, 5
      %v3772 = vsel %vm1588, %v3770, %v3771
      %v3773 = vrot.slane %v3771, 4
      %v3774 = vrot.slane %v3619, 5
      %v3775 = vsel %vm1588, %v3773, %v3774
      %v3776 = vrot.slane %v3774, 4
      %v3777 = vrot.slane %v3620, 5
      %v3778 = vsel %vm1588, %v3776, %v3777
      %v3779 = vrot.slane %v3777, 4
      %v3780 = vrot.slane %v3621, 5
      %v3781 = vsel %vm1588, %v3779, %v3780
      %v3782 = vrot.slane %v3780, 4
      %v3783 = vrot.slane %v3622, 5
      %v3784 = vsel %vm1588, %v3782, %v3783
      %v3785 = vrot.slane %v3783, 4
      %v3786 = vrot.slane %v3623, 5
      %v3787 = vsel %vm1588, %v3785, %v3786
      %v3788 = vrot.slane %v3786, 4
      %v3789 = vrot.slane %v3624, 5
      %v3790 = vsel %vm1588, %v3788, %v3789
      %v3791 = vrot.slane %v3789, 4
      %v3792 = vrot.slane %v3625, 5
      %v3793 = vsel %vm1588, %v3791, %v3792
      %v3794 = vrot.slane %v3792, 4
      %v3795 = vrot.slane %v3626, 5
      %v3796 = vsel %vm1588, %v3794, %v3795
      %v3797 = vrot.slane %v3795, 4
      %v3798 = vrot.slane %v3627, 5
      %v3799 = vsel %vm1588, %v3797, %v3798
      %v3800 = vrot.slane %v3798, 4
      %v3801 = vrot.slane %v3628, 5
      %v3802 = vsel %vm1588, %v3800, %v3801
      %v3803 = vrot.slane %v3801, 4
      %v3804 = vrot.slane %v3629, 5
      %v3805 = vsel %vm1588, %v3803, %v3804
      %v3806 = vrot.slane %v3804, 4
      %v3807 = vrot.slane %v3630, 5
      %v3808 = vsel %vm1588, %v3806, %v3807
      %v3809 = vrot.slane %v3807, 4
      %v3810 = vrot.slane %v3631, 5
      %v3811 = vsel %vm1588, %v3809, %v3810
      %v3812 = vrot.slane %v3810, 4
      %v3813 = vrot.slane %v3632, 5
      %v3814 = vsel %vm1588, %v3812, %v3813
      %v3815 = vrot.slane %v3813, 4
      %v3816 = vrot.slane %v3633, 5
      %v3817 = vsel %vm1588, %v3815, %v3816
      %v3818 = vrot.slane %v3816, 4
      %v3819 = vrot.slane %v3634, 5
      %v3820 = vsel %vm1588, %v3818, %v3819
      %v3821 = vrot.slane %v3819, 4
      %v3822 = vrot.slane %v3635, 5
      %v3823 = vsel %vm1588, %v3821, %v3822
      %v3824 = vrot.slane %v3822, 4
      %v3825 = vrot.slane %v3636, 5
      %v3826 = vsel %vm1588, %v3824, %v3825
      %v3827 = vrot.slane %v3825, 4
      %v3828 = vrot.slane %v3637, 5
      %v3829 = vsel %vm1588, %v3827, %v3828
      %v3830 = vrot.slane %v3828, 4
      %v3831 = vrot.slane %v3638, 5
      %v3832 = vsel %vm1588, %v3830, %v3831
      %v3833 = vrot.slane %v3831, 4
      %v3834 = vrot.slane %v3639, 5
      %v3835 = vsel %vm1588, %v3833, %v3834
      %v3836 = vrot.slane %v3834, 4
      %v3837 = vrot.slane %v3640, 5
      %v3838 = vsel %vm1588, %v3836, %v3837
      %v3839 = vrot.slane %v3837, 4
      %v3840 = vrot.slane %v3641, 5
      %v3841 = vsel %vm1588, %v3839, %v3840
      %v3842 = vrot.slane %v3840, 4
      %v3843 = vrot.slane %v3642, 5
      %v3844 = vsel %vm1588, %v3842, %v3843
      %v3845 = vrot.slane %v3843, 4
      %v3846 = vrot.slane %v3643, 5
      %v3847 = vsel %vm1588, %v3845, %v3846
      %v3848 = vrot.slane %v3846, 4
      %v3849 = vrot.slane %v3644, 5
      %v3850 = vsel %vm1588, %v3848, %v3849
      %v3851 = vrot.slane %v3849, 4
      %v3852 = vrot.slane %v3645, 5
      %v3853 = vsel %vm1588, %v3851, %v3852
      %v3854 = vrot.slane %v3852, 4
      %v3855 = vrot.slane %v3646, 5
      %v3856 = vsel %vm1588, %v3854, %v3855
      %v3857 = vrot.slane %v3855, 4
      %v3858 = vrot.slane %v3647, 5
      %v3859 = vsel %vm1588, %v3857, %v3858
      %v3860 = vrot.slane %v3858, 4
      %v3861 = vrot.slane %v3648, 5
      %v3862 = vsel %vm1588, %v3860, %v3861
      %v3863 = vrot.slane %v3861, 4
      %v3864 = vrot.slane %v3649, 5
      %v3865 = vsel %vm1588, %v3863, %v3864
      %v3866 = vrot.slane %v3864, 4
      %v3867 = vrot.slane %v3650, 5
      %v3868 = vsel %vm1588, %v3866, %v3867
      %v3869 = vrot.slane %v3867, 4
      %v3870 = vrot.slane %v3651, 5
      %v3871 = vsel %vm1588, %v3869, %v3870
      %v3872 = vrot.slane %v3870, 4
      %v3873 = vrot.slane %v3652, 5
      %v3874 = vsel %vm1588, %v3872, %v3873
      %v3875 = vrot.slane %v3873, 4
      %v3876 = vrot.slane %v3653, 5
      %v3877 = vsel %vm1588, %v3875, %v3876
      %v3878 = vrot.slane %v3876, 4
      %v3879 = vrot.slane %v3654, 5
      %v3880 = vsel %vm1588, %v3878, %v3879
      %v3881 = vrot.slane %v3879, 4
      %v3882 = vrot.slane %v3655, 5
      %v3883 = vsel %vm1588, %v3881, %v3882
      %v3884 = vrot.slane %v3882, 4
      %v3885 = vrot.slane %v3656, 5
      %v3886 = vsel %vm1588, %v3884, %v3885
      %v3887 = vrot.slane %v3885, 4
      %v3888 = vrot.slane %v3657, 5
      %v3889 = vsel %vm1588, %v3887, %v3888
      %v3890 = vrot.slane %v3888, 4
      %v3891 = vrot.slane %v3658, 5
      %v3892 = vsel %vm1588, %v3890, %v3891
      %v3893 = vrot.slane %v3891, 4
      %v3894 = vrot.slane %v3659, 5
      %v3895 = vsel %vm1588, %v3893, %v3894
      %v3896 = vrot.slane %v3894, 4
      %v3897 = vrot.slane %v3660, 5
      %v3898 = vsel %vm1588, %v3896, %v3897
      %v3899 = vrot.slane %v3897, 4
      %v3900 = vrot.slane %v3661, 5
      %v3901 = vsel %vm1588, %v3899, %v3900
      %v3902 = vrot.slane %v3900, 4
      %v3903 = vrot.slane %v3662, 5
      %v3904 = vsel %vm1588, %v3902, %v3903
      %v3905 = vrot.slane %v3903, 4
      %v3906 = vrot.slane %v3663, 5
      %v3907 = vsel %vm1588, %v3905, %v3906
      %v3908 = vrot.slane %v3906, 4
      %v3909 = vrot.slane %v3664, 5
      %v3910 = vsel %vm1588, %v3908, %v3909
      %v3911 = vrot.slane %v3909, 4
      %v3912 = vrot.slane %v3665, 5
      %v3913 = vsel %vm1588, %v3911, %v3912
      %v3914 = vrot.slane %v3912, 4
      %v3915 = vrot.slane %v3666, 5
      %v3916 = vsel %vm1588, %v3914, %v3915
      %v3917 = vrot.slane %v3915, 4
      %v3918 = vrot.slane %v3667, 5
      %v3919 = vsel %vm1588, %v3917, %v3918
      %v3920 = vrot.slane %v3918, 4
      %v3921 = vrot.slane %v3668, 5
      %v3922 = vsel %vm1588, %v3920, %v3921
      %v3923 = vrot.slane %v3921, 4
      %v3924 = vrot.slane %v3669, 5
      %v3925 = vsel %vm1588, %v3923, %v3924
      %v3926 = vrot.slane %v3924, 4
      %v3927 = vrot.slane %v3670, 5
      %v3928 = vsel %vm1588, %v3926, %v3927
      %v3929 = vrot.slane %v3927, 4
      %v3930 = vrot.slane %v3671, 5
      %v3931 = vsel %vm1588, %v3929, %v3930
      %v3932 = vrot.slane %v3930, 4
      %v3933 = vrot.slane %v3672, 5
      %v3934 = vsel %vm1588, %v3932, %v3933
      %v3935 = vrot.slane %v3933, 4
      %v3936 = vrot.slane %v3673, 5
      %v3937 = vsel %vm1588, %v3935, %v3936
      %v3938 = vrot.slane %v3936, 4
      %v3939 = vrot.slane %v3674, 5
      %v3940 = vsel %vm1588, %v3938, %v3939
      %v3941 = vrot.slane %v3939, 4
      %v3942 = vrot.slane %v3675, 5
      %v3943 = vsel %vm1588, %v3941, %v3942
      %v3944 = vrot.slane %v3942, 4
      %v3945 = vrot.slane %v3676, 5
      %v3946 = vsel %vm1588, %v3944, %v3945
      %v3947 = vrot.slane %v3945, 4
      %v3948 = vrot.slane %v3677, 5
      %v3949 = vsel %vm1588, %v3947, %v3948
      %v3950 = vrot.slane %v3948, 4
      %v3951 = vrot.slane %v3678, 5
      %v3952 = vsel %vm1588, %v3950, %v3951
      %v3953 = vrot.slane %v3951, 4
      %v3954 = vrot.slane %v3679, 5
      %v3955 = vsel %vm1588, %v3953, %v3954
      %v3956 = vrot.slane %v3954, 4
      %v3957 = vrot.slane %v3680, 5
      %v3958 = vsel %vm1588, %v3956, %v3957
      %v3959 = vrot.slane %v3957, 4
      %v3960 = vrot.slane %v3681, 5
      %v3961 = vsel %vm1588, %v3959, %v3960
      %v3962 = vrot.slane %v3960, 4
      %v3963 = vrot.slane %v3682, 5
      %v3964 = vsel %vm1588, %v3962, %v3963
      %v3965 = vrot.slane %v3963, 4
      %v3966 = vrot.slane %v3683, 5
      %v3967 = vsel %vm1588, %v3965, %v3966
      %v3968 = vrot.slane %v3966, 4
      %v3969 = vrot.slane %v3684, 5
      %v3970 = vsel %vm1588, %v3968, %v3969
      %v3971 = vrot.slane %v3969, 4
      %v3972 = vrot.slane %v3685, 5
      %v3973 = vsel %vm1588, %v3971, %v3972
      %v3974 = vrot.slane %v3972, 4
      %v3975 = vrot.slane %v3686, 5
      %v3976 = vsel %vm1588, %v3974, %v3975
      %3977 = vrot.lane.b32.xlu0 %v3763, 20
      %v3978 = vpop.permute.xlu0 %3977
      %3979 = vrot.lane.b32.xlu0 %v3766, 20
      %v3980 = vpop.permute.xlu0 %3979
      %3981 = vrot.lane.b32.xlu0 %v3769, 20
      %v3982 = vpop.permute.xlu0 %3981
      %3983 = vrot.lane.b32.xlu0 %v3772, 20
      %v3984 = vpop.permute.xlu0 %3983
      %3985 = vrot.lane.b32.xlu0 %v3775, 20
      %v3986 = vpop.permute.xlu0 %3985
      %3987 = vrot.lane.b32.xlu0 %v3778, 20
      %v3988 = vpop.permute.xlu0 %3987
      %3989 = vrot.lane.b32.xlu0 %v3781, 20
      %v3990 = vpop.permute.xlu0 %3989
      %3991 = vrot.lane.b32.xlu0 %v3784, 20
      %v3992 = vpop.permute.xlu0 %3991
      %3993 = vrot.lane.b32.xlu0 %v3787, 20
      %v3994 = vpop.permute.xlu0 %3993
      %3995 = vrot.lane.b32.xlu0 %v3790, 20
      %v3996 = vpop.permute.xlu0 %3995
      %3997 = vrot.lane.b32.xlu0 %v3793, 20
      %v3998 = vpop.permute.xlu0 %3997
      %3999 = vrot.lane.b32.xlu0 %v3796, 20
      %v4000 = vpop.permute.xlu0 %3999
      %4001 = vrot.lane.b32.xlu0 %v3799, 20
      %v4002 = vpop.permute.xlu0 %4001
      %4003 = vrot.lane.b32.xlu0 %v3802, 20
      %v4004 = vpop.permute.xlu0 %4003
      %4005 = vrot.lane.b32.xlu0 %v3805, 20
      %v4006 = vpop.permute.xlu0 %4005
      %4007 = vrot.lane.b32.xlu0 %v3808, 20
      %v4008 = vpop.permute.xlu0 %4007
      %4009 = vrot.lane.b32.xlu0 %v3811, 20
      %v4010 = vpop.permute.xlu0 %4009
      %4011 = vrot.lane.b32.xlu0 %v3814, 20
      %v4012 = vpop.permute.xlu0 %4011
      %4013 = vrot.lane.b32.xlu0 %v3817, 20
      %v4014 = vpop.permute.xlu0 %4013
      %4015 = vrot.lane.b32.xlu0 %v3820, 20
      %v4016 = vpop.permute.xlu0 %4015
      %4017 = vrot.lane.b32.xlu0 %v3823, 20
      %v4018 = vpop.permute.xlu0 %4017
      %4019 = vrot.lane.b32.xlu0 %v3826, 20
      %v4020 = vpop.permute.xlu0 %4019
      %4021 = vrot.lane.b32.xlu0 %v3829, 20
      %v4022 = vpop.permute.xlu0 %4021
      %4023 = vrot.lane.b32.xlu0 %v3832, 20
      %v4024 = vpop.permute.xlu0 %4023
      %4025 = vrot.lane.b32.xlu0 %v3835, 20
      %v4026 = vpop.permute.xlu0 %4025
      %4027 = vrot.lane.b32.xlu0 %v3838, 20
      %v4028 = vpop.permute.xlu0 %4027
      %4029 = vrot.lane.b32.xlu0 %v3841, 20
      %v4030 = vpop.permute.xlu0 %4029
      %4031 = vrot.lane.b32.xlu0 %v3844, 20
      %v4032 = vpop.permute.xlu0 %4031
      %4033 = vrot.lane.b32.xlu0 %v3847, 20
      %v4034 = vpop.permute.xlu0 %4033
      %4035 = vrot.lane.b32.xlu0 %v3850, 20
      %v4036 = vpop.permute.xlu0 %4035
      %4037 = vrot.lane.b32.xlu0 %v3853, 20
      %v4038 = vpop.permute.xlu0 %4037
      %4039 = vrot.lane.b32.xlu0 %v3856, 20
      %v4040 = vpop.permute.xlu0 %4039
      %4041 = vrot.lane.b32.xlu0 %v3859, 20
      %v4042 = vpop.permute.xlu0 %4041
      %4043 = vrot.lane.b32.xlu0 %v3862, 20
      %v4044 = vpop.permute.xlu0 %4043
      %4045 = vrot.lane.b32.xlu0 %v3865, 20
      %v4046 = vpop.permute.xlu0 %4045
      %4047 = vrot.lane.b32.xlu0 %v3868, 20
      %v4048 = vpop.permute.xlu0 %4047
      %4049 = vrot.lane.b32.xlu0 %v3871, 20
      %v4050 = vpop.permute.xlu0 %4049
      %4051 = vrot.lane.b32.xlu0 %v3874, 20
      %v4052 = vpop.permute.xlu0 %4051
      %4053 = vrot.lane.b32.xlu0 %v3877, 20
      %v4054 = vpop.permute.xlu0 %4053
      %4055 = vrot.lane.b32.xlu0 %v3880, 20
      %v4056 = vpop.permute.xlu0 %4055
      %4057 = vrot.lane.b32.xlu0 %v3883, 20
      %v4058 = vpop.permute.xlu0 %4057
      %4059 = vrot.lane.b32.xlu0 %v3886, 20
      %v4060 = vpop.permute.xlu0 %4059
      %4061 = vrot.lane.b32.xlu0 %v3889, 20
      %v4062 = vpop.permute.xlu0 %4061
      %4063 = vrot.lane.b32.xlu0 %v3892, 20
      %v4064 = vpop.permute.xlu0 %4063
      %4065 = vrot.lane.b32.xlu0 %v3895, 20
      %v4066 = vpop.permute.xlu0 %4065
      %4067 = vrot.lane.b32.xlu0 %v3898, 20
      %v4068 = vpop.permute.xlu0 %4067
      %4069 = vrot.lane.b32.xlu0 %v3901, 20
      %v4070 = vpop.permute.xlu0 %4069
      %4071 = vrot.lane.b32.xlu0 %v3904, 20
      %v4072 = vpop.permute.xlu0 %4071
      %4073 = vrot.lane.b32.xlu0 %v3907, 20
      %v4074 = vpop.permute.xlu0 %4073
      %4075 = vrot.lane.b32.xlu0 %v3910, 20
      %v4076 = vpop.permute.xlu0 %4075
      %4077 = vrot.lane.b32.xlu0 %v3913, 20
      %v4078 = vpop.permute.xlu0 %4077
      %4079 = vrot.lane.b32.xlu0 %v3916, 20
      %v4080 = vpop.permute.xlu0 %4079
      %4081 = vrot.lane.b32.xlu0 %v3919, 20
      %v4082 = vpop.permute.xlu0 %4081
      %4083 = vrot.lane.b32.xlu0 %v3922, 20
      %v4084 = vpop.permute.xlu0 %4083
      %4085 = vrot.lane.b32.xlu0 %v3925, 20
      %v4086 = vpop.permute.xlu0 %4085
      %4087 = vrot.lane.b32.xlu0 %v3928, 20
      %v4088 = vpop.permute.xlu0 %4087
      %4089 = vrot.lane.b32.xlu0 %v3931, 20
      %v4090 = vpop.permute.xlu0 %4089
      %4091 = vrot.lane.b32.xlu0 %v3934, 20
      %v4092 = vpop.permute.xlu0 %4091
      %4093 = vrot.lane.b32.xlu0 %v3937, 20
      %v4094 = vpop.permute.xlu0 %4093
      %4095 = vrot.lane.b32.xlu0 %v3940, 20
      %v4096 = vpop.permute.xlu0 %4095
      %4097 = vrot.lane.b32.xlu0 %v3943, 20
      %v4098 = vpop.permute.xlu0 %4097
      %4099 = vrot.lane.b32.xlu0 %v3946, 20
      %v4100 = vpop.permute.xlu0 %4099
      %4101 = vrot.lane.b32.xlu0 %v3949, 20
      %v4102 = vpop.permute.xlu0 %4101
      %4103 = vrot.lane.b32.xlu0 %v3952, 20
      %v4104 = vpop.permute.xlu0 %4103
      %4105 = vrot.lane.b32.xlu0 %v3955, 20
      %v4106 = vpop.permute.xlu0 %4105
      %4107 = vrot.lane.b32.xlu0 %v3958, 20
      %v4108 = vpop.permute.xlu0 %4107
      %4109 = vrot.lane.b32.xlu0 %v3961, 20
      %v4110 = vpop.permute.xlu0 %4109
      %4111 = vrot.lane.b32.xlu0 %v3964, 20
      %v4112 = vpop.permute.xlu0 %4111
      %4113 = vrot.lane.b32.xlu0 %v3967, 20
      %v4114 = vpop.permute.xlu0 %4113
      %4115 = vrot.lane.b32.xlu0 %v3970, 20
      %v4116 = vpop.permute.xlu0 %4115
      %4117 = vrot.lane.b32.xlu0 %v3973, 20
      %v4118 = vpop.permute.xlu0 %4117
      %4119 = vrot.lane.b32.xlu0 %v3976, 20
      %v4120 = vpop.permute.xlu0 %4119
      %vm4193 = vcmask 191648
      %4194 = vst.msk [vmem:[#allocation3] sm:$0xf] %vm4193, %v3978
      %4195 = vst.msk [vmem:[#allocation3 + $0x4] sm:$0xf] %vm4193, %v3980
      %4196 = vst.msk [vmem:[#allocation3 + $0x8] sm:$0xf] %vm4193, %v3982
      %4197 = vst.msk [vmem:[#allocation3 + $0xc] sm:$0xf] %vm4193, %v3984
      %4198 = vst.msk [vmem:[#allocation3 + $0x10] sm:$0xf] %vm4193, %v3986
      %4199 = vst.msk [vmem:[#allocation3 + $0x14] sm:$0xf] %vm4193, %v3988
      %4200 = vst.msk [vmem:[#allocation3 + $0x18] sm:$0xf] %vm4193, %v3990
      %4201 = vst.msk [vmem:[#allocation3 + $0x1c] sm:$0xf] %vm4193, %v3992
      %4202 = vst.msk [vmem:[#allocation3 + $0x20] sm:$0xf] %vm4193, %v3994
      %4203 = vst.msk [vmem:[#allocation3 + $0x24] sm:$0xf] %vm4193, %v3996
      %4204 = vst.msk [vmem:[#allocation3 + $0x28] sm:$0xf] %vm4193, %v3998
      %4205 = vst.msk [vmem:[#allocation3 + $0x2c] sm:$0xf] %vm4193, %v4000
      %4206 = vst.msk [vmem:[#allocation3 + $0x30] sm:$0xf] %vm4193, %v4002
      %4207 = vst.msk [vmem:[#allocation3 + $0x34] sm:$0xf] %vm4193, %v4004
      %4208 = vst.msk [vmem:[#allocation3 + $0x38] sm:$0xf] %vm4193, %v4006
      %4209 = vst.msk [vmem:[#allocation3 + $0x3c] sm:$0xf] %vm4193, %v4008
      %4210 = vst.msk [vmem:[#allocation3 + $0x40] sm:$0xf] %vm4193, %v4010
      %4211 = vst.msk [vmem:[#allocation3 + $0x44] sm:$0xf] %vm4193, %v4012
      %4212 = vst.msk [vmem:[#allocation3 + $0x48] sm:$0xf] %vm4193, %v4014
      %4213 = vst.msk [vmem:[#allocation3 + $0x4c] sm:$0xf] %vm4193, %v4016
      %4214 = vst.msk [vmem:[#allocation3 + $0x50] sm:$0xf] %vm4193, %v4018
      %4215 = vst.msk [vmem:[#allocation3 + $0x54] sm:$0xf] %vm4193, %v4020
      %4216 = vst.msk [vmem:[#allocation3 + $0x58] sm:$0xf] %vm4193, %v4022
      %4217 = vst.msk [vmem:[#allocation3 + $0x5c] sm:$0xf] %vm4193, %v4024
      %4218 = vst.msk [vmem:[#allocation3 + $0x60] sm:$0xf] %vm4193, %v4026
      %4219 = vst.msk [vmem:[#allocation3 + $0x64] sm:$0xf] %vm4193, %v4028
      %4220 = vst.msk [vmem:[#allocation3 + $0x68] sm:$0xf] %vm4193, %v4030
      %4221 = vst.msk [vmem:[#allocation3 + $0x6c] sm:$0xf] %vm4193, %v4032
      %4222 = vst.msk [vmem:[#allocation3 + $0x70] sm:$0xf] %vm4193, %v4034
      %4223 = vst.msk [vmem:[#allocation3 + $0x74] sm:$0xf] %vm4193, %v4036
      %4224 = vst.msk [vmem:[#allocation3 + $0x78] sm:$0xf] %vm4193, %v4038
      %4225 = vst.msk [vmem:[#allocation3 + $0x7c] sm:$0xf] %vm4193, %v4040
      %4226 = vst.msk [vmem:[#allocation3 + $0x80] sm:$0xf] %vm4193, %v4042
      %4227 = vst.msk [vmem:[#allocation3 + $0x84] sm:$0xf] %vm4193, %v4044
      %4228 = vst.msk [vmem:[#allocation3 + $0x88] sm:$0xf] %vm4193, %v4046
      %4229 = vst.msk [vmem:[#allocation3 + $0x8c] sm:$0xf] %vm4193, %v4048
      %4230 = vst.msk [vmem:[#allocation3 + $0x90] sm:$0xf] %vm4193, %v4050
      %4231 = vst.msk [vmem:[#allocation3 + $0x94] sm:$0xf] %vm4193, %v4052
      %4232 = vst.msk [vmem:[#allocation3 + $0x98] sm:$0xf] %vm4193, %v4054
      %4233 = vst.msk [vmem:[#allocation3 + $0x9c] sm:$0xf] %vm4193, %v4056
      %4234 = vst.msk [vmem:[#allocation3 + $0xa0] sm:$0xf] %vm4193, %v4058
      %4235 = vst.msk [vmem:[#allocation3 + $0xa4] sm:$0xf] %vm4193, %v4060
      %4236 = vst.msk [vmem:[#allocation3 + $0xa8] sm:$0xf] %vm4193, %v4062
      %4237 = vst.msk [vmem:[#allocation3 + $0xac] sm:$0xf] %vm4193, %v4064
      %4238 = vst.msk [vmem:[#allocation3 + $0xb0] sm:$0xf] %vm4193, %v4066
      %4239 = vst.msk [vmem:[#allocation3 + $0xb4] sm:$0xf] %vm4193, %v4068
      %4240 = vst.msk [vmem:[#allocation3 + $0xb8] sm:$0xf] %vm4193, %v4070
      %4241 = vst.msk [vmem:[#allocation3 + $0xbc] sm:$0xf] %vm4193, %v4072
      %4242 = vst.msk [vmem:[#allocation3 + $0xc0] sm:$0xf] %vm4193, %v4074
      %4243 = vst.msk [vmem:[#allocation3 + $0xc4] sm:$0xf] %vm4193, %v4076
      %4244 = vst.msk [vmem:[#allocation3 + $0xc8] sm:$0xf] %vm4193, %v4078
      %4245 = vst.msk [vmem:[#allocation3 + $0xcc] sm:$0xf] %vm4193, %v4080
      %4246 = vst.msk [vmem:[#allocation3 + $0xd0] sm:$0xf] %vm4193, %v4082
      %4247 = vst.msk [vmem:[#allocation3 + $0xd4] sm:$0xf] %vm4193, %v4084
      %4248 = vst.msk [vmem:[#allocation3 + $0xd8] sm:$0xf] %vm4193, %v4086
      %4249 = vst.msk [vmem:[#allocation3 + $0xdc] sm:$0xf] %vm4193, %v4088
      %4250 = vst.msk [vmem:[#allocation3 + $0xe0] sm:$0xf] %vm4193, %v4090
      %4251 = vst.msk [vmem:[#allocation3 + $0xe4] sm:$0xf] %vm4193, %v4092
      %4252 = vst.msk [vmem:[#allocation3 + $0xe8] sm:$0xf] %vm4193, %v4094
      %4253 = vst.msk [vmem:[#allocation3 + $0xec] sm:$0xf] %vm4193, %v4096
      %4254 = vst.msk [vmem:[#allocation3 + $0xf0] sm:$0xf] %vm4193, %v4098
      %4255 = vst.msk [vmem:[#allocation3 + $0xf4] sm:$0xf] %vm4193, %v4100
      %4256 = vst.msk [vmem:[#allocation3 + $0xf8] sm:$0xf] %vm4193, %v4102
      %4257 = vst.msk [vmem:[#allocation3 + $0xfc] sm:$0xf] %vm4193, %v4104
      %4258 = vst.msk [vmem:[#allocation3 + $0x100] sm:$0xf] %vm4193, %v4106
      %4259 = vst.msk [vmem:[#allocation3 + $0x104] sm:$0xf] %vm4193, %v4108
      %4260 = vst.msk [vmem:[#allocation3 + $0x108] sm:$0xf] %vm4193, %v4110
      %4261 = vst.msk [vmem:[#allocation3 + $0x10c] sm:$0xf] %vm4193, %v4112
      %4262 = vst.msk [vmem:[#allocation3 + $0x110] sm:$0xf] %vm4193, %v4114
      %4263 = vst.msk [vmem:[#allocation3 + $0x114] sm:$0xf] %vm4193, %v4116
      %4264 = vst.msk [vmem:[#allocation3 + $0x118] sm:$0xf] %vm4193, %v4118
      %4265 = vst.msk [vmem:[#allocation3 + $0x11c] sm:$0xf] %vm4193, %v4120
      %v4266 = vld [vmem:[#allocation2 + $0x10] sm:$0xf]
      %v4267 = vld [vmem:[#allocation2 + $0x14] sm:$0xf]
      %v4268 = vld [vmem:[#allocation2 + $0x18] sm:$0xf]
      %v4269 = vld [vmem:[#allocation2 + $0x1c] sm:$0xf]
      %v4270 = vld [vmem:[#allocation2 + $0x20] sm:$0xf]
      %v4271 = vld [vmem:[#allocation2 + $0x24] sm:$0xf]
      %v4272 = vld [vmem:[#allocation2 + $0x28] sm:$0xf]
      %v4273 = vld [vmem:[#allocation2 + $0x2c] sm:$0xf]
      %v4274 = vld [vmem:[#allocation2 + $0x30] sm:$0xf]
      %v4275 = vld [vmem:[#allocation2 + $0x34] sm:$0xf]
      %v4276 = vld [vmem:[#allocation2 + $0x38] sm:$0xf]
      %v4277 = vld [vmem:[#allocation2 + $0x3c] sm:$0xf]
      %v4278 = vld [vmem:[#allocation2 + $0x40] sm:$0xf]
      %v4279 = vld [vmem:[#allocation2 + $0x44] sm:$0xf]
      %v4280 = vld [vmem:[#allocation2 + $0x48] sm:$0xf]
      %v4281 = vld [vmem:[#allocation2 + $0x4c] sm:$0xf]
      %v4282 = vld [vmem:[#allocation2 + $0x50] sm:$0xf]
      %v4283 = vld [vmem:[#allocation2 + $0x54] sm:$0xf]
      %v4284 = vld [vmem:[#allocation2 + $0x58] sm:$0xf]
      %v4285 = vld [vmem:[#allocation2 + $0x5c] sm:$0xf]
      %v4286 = vld [vmem:[#allocation2 + $0x60] sm:$0xf]
      %v4287 = vld [vmem:[#allocation2 + $0x64] sm:$0xf]
      %v4288 = vld [vmem:[#allocation2 + $0x68] sm:$0xf]
      %v4289 = vld [vmem:[#allocation2 + $0x6c] sm:$0xf]
      %v4290 = vld [vmem:[#allocation2 + $0x70] sm:$0xf]
      %v4291 = vld [vmem:[#allocation2 + $0x74] sm:$0xf]
      %v4292 = vld [vmem:[#allocation2 + $0x78] sm:$0xf]
      %v4293 = vld [vmem:[#allocation2 + $0x7c] sm:$0xf]
      %v4294 = vld [vmem:[#allocation2 + $0x80] sm:$0xf]
      %v4295 = vld [vmem:[#allocation2 + $0x84] sm:$0xf]
      %v4296 = vld [vmem:[#allocation2 + $0x88] sm:$0xf]
      %v4297 = vld [vmem:[#allocation2 + $0x8c] sm:$0xf]
      %v4298 = vld [vmem:[#allocation2 + $0x90] sm:$0xf]
      %v4299 = vld [vmem:[#allocation2 + $0x94] sm:$0xf]
      %v4300 = vld [vmem:[#allocation2 + $0x98] sm:$0xf]
      %v4301 = vld [vmem:[#allocation2 + $0x9c] sm:$0xf]
      %v4302 = vld [vmem:[#allocation2 + $0xa0] sm:$0xf]
      %v4303 = vld [vmem:[#allocation2 + $0xa4] sm:$0xf]
      %v4304 = vld [vmem:[#allocation2 + $0xa8] sm:$0xf]
      %v4305 = vld [vmem:[#allocation2 + $0xac] sm:$0xf]
      %v4306 = vld [vmem:[#allocation2 + $0xb0] sm:$0xf]
      %v4307 = vld [vmem:[#allocation2 + $0xb4] sm:$0xf]
      %v4308 = vld [vmem:[#allocation2 + $0xb8] sm:$0xf]
      %v4309 = vld [vmem:[#allocation2 + $0xbc] sm:$0xf]
      %v4310 = vld [vmem:[#allocation2 + $0xc0] sm:$0xf]
      %v4311 = vld [vmem:[#allocation2 + $0xc4] sm:$0xf]
      %v4312 = vld [vmem:[#allocation2 + $0xc8] sm:$0xf]
      %v4313 = vld [vmem:[#allocation2 + $0xcc] sm:$0xf]
      %v4314 = vld [vmem:[#allocation2 + $0xd0] sm:$0xf]
      %v4315 = vld [vmem:[#allocation2 + $0xd4] sm:$0xf]
      %v4316 = vld [vmem:[#allocation2 + $0xd8] sm:$0xf]
      %v4317 = vld [vmem:[#allocation2 + $0xdc] sm:$0xf]
      %v4318 = vld [vmem:[#allocation2 + $0xe0] sm:$0xf]
      %v4319 = vld [vmem:[#allocation2 + $0xe4] sm:$0xf]
      %v4320 = vld [vmem:[#allocation2 + $0xe8] sm:$0xf]
      %v4321 = vld [vmem:[#allocation2 + $0xec] sm:$0xf]
      %v4322 = vld [vmem:[#allocation2 + $0xf0] sm:$0xf]
      %v4323 = vld [vmem:[#allocation2 + $0xf4] sm:$0xf]
      %v4324 = vld [vmem:[#allocation2 + $0xf8] sm:$0xf]
      %v4325 = vld [vmem:[#allocation2 + $0xfc] sm:$0xf]
      %v4326 = vld [vmem:[#allocation2 + $0x100] sm:$0xf]
      %v4327 = vld [vmem:[#allocation2 + $0x104] sm:$0xf]
      %v4328 = vld [vmem:[#allocation2 + $0x108] sm:$0xf]
      %v4329 = vld [vmem:[#allocation2 + $0x10c] sm:$0xf]
      %v4330 = vld [vmem:[#allocation2 + $0x110] sm:$0xf]
      %v4331 = vld [vmem:[#allocation2 + $0x114] sm:$0xf]
      %v4332 = vld [vmem:[#allocation2 + $0x118] sm:$0xf]
      %v4333 = vld [vmem:[#allocation2 + $0x11c] sm:$0xf]
      %v4334 = vld [vmem:[#allocation2 + $0x120] sm:$0xf]
      %v4335 = vld [vmem:[#allocation2 + $0x124] sm:$0xf]
      %v4336 = vld [vmem:[#allocation2 + $0x128] sm:$0xf]
      %v4337 = vld [vmem:[#allocation2 + $0x12c] sm:$0xf]
      %4410 = vrot.lane.b32.xlu0 %v4266, 24
      %v4411 = vpop.permute.xlu0 %4410
      %4412 = vrot.lane.b32.xlu0 %v4267, 24
      %v4413 = vpop.permute.xlu0 %4412
      %4414 = vrot.lane.b32.xlu0 %v4268, 24
      %v4415 = vpop.permute.xlu0 %4414
      %4416 = vrot.lane.b32.xlu0 %v4269, 24
      %v4417 = vpop.permute.xlu0 %4416
      %4418 = vrot.lane.b32.xlu0 %v4270, 24
      %v4419 = vpop.permute.xlu0 %4418
      %4420 = vrot.lane.b32.xlu0 %v4271, 24
      %v4421 = vpop.permute.xlu0 %4420
      %4422 = vrot.lane.b32.xlu0 %v4272, 24
      %v4423 = vpop.permute.xlu0 %4422
      %4424 = vrot.lane.b32.xlu0 %v4273, 24
      %v4425 = vpop.permute.xlu0 %4424
      %4426 = vrot.lane.b32.xlu0 %v4274, 24
      %v4427 = vpop.permute.xlu0 %4426
      %4428 = vrot.lane.b32.xlu0 %v4275, 24
      %v4429 = vpop.permute.xlu0 %4428
      %4430 = vrot.lane.b32.xlu0 %v4276, 24
      %v4431 = vpop.permute.xlu0 %4430
      %4432 = vrot.lane.b32.xlu0 %v4277, 24
      %v4433 = vpop.permute.xlu0 %4432
      %4434 = vrot.lane.b32.xlu0 %v4278, 24
      %v4435 = vpop.permute.xlu0 %4434
      %4436 = vrot.lane.b32.xlu0 %v4279, 24
      %v4437 = vpop.permute.xlu0 %4436
      %4438 = vrot.lane.b32.xlu0 %v4280, 24
      %v4439 = vpop.permute.xlu0 %4438
      %4440 = vrot.lane.b32.xlu0 %v4281, 24
      %v4441 = vpop.permute.xlu0 %4440
      %4442 = vrot.lane.b32.xlu0 %v4282, 24
      %v4443 = vpop.permute.xlu0 %4442
      %4444 = vrot.lane.b32.xlu0 %v4283, 24
      %v4445 = vpop.permute.xlu0 %4444
      %4446 = vrot.lane.b32.xlu0 %v4284, 24
      %v4447 = vpop.permute.xlu0 %4446
      %4448 = vrot.lane.b32.xlu0 %v4285, 24
      %v4449 = vpop.permute.xlu0 %4448
      %4450 = vrot.lane.b32.xlu0 %v4286, 24
      %v4451 = vpop.permute.xlu0 %4450
      %4452 = vrot.lane.b32.xlu0 %v4287, 24
      %v4453 = vpop.permute.xlu0 %4452
      %4454 = vrot.lane.b32.xlu0 %v4288, 24
      %v4455 = vpop.permute.xlu0 %4454
      %4456 = vrot.lane.b32.xlu0 %v4289, 24
      %v4457 = vpop.permute.xlu0 %4456
      %4458 = vrot.lane.b32.xlu0 %v4290, 24
      %v4459 = vpop.permute.xlu0 %4458
      %4460 = vrot.lane.b32.xlu0 %v4291, 24
      %v4461 = vpop.permute.xlu0 %4460
      %4462 = vrot.lane.b32.xlu0 %v4292, 24
      %v4463 = vpop.permute.xlu0 %4462
      %4464 = vrot.lane.b32.xlu0 %v4293, 24
      %v4465 = vpop.permute.xlu0 %4464
      %4466 = vrot.lane.b32.xlu0 %v4294, 24
      %v4467 = vpop.permute.xlu0 %4466
      %4468 = vrot.lane.b32.xlu0 %v4295, 24
      %v4469 = vpop.permute.xlu0 %4468
      %4470 = vrot.lane.b32.xlu0 %v4296, 24
      %v4471 = vpop.permute.xlu0 %4470
      %4472 = vrot.lane.b32.xlu0 %v4297, 24
      %v4473 = vpop.permute.xlu0 %4472
      %4474 = vrot.lane.b32.xlu0 %v4298, 24
      %v4475 = vpop.permute.xlu0 %4474
      %4476 = vrot.lane.b32.xlu0 %v4299, 24
      %v4477 = vpop.permute.xlu0 %4476
      %4478 = vrot.lane.b32.xlu0 %v4300, 24
      %v4479 = vpop.permute.xlu0 %4478
      %4480 = vrot.lane.b32.xlu0 %v4301, 24
      %v4481 = vpop.permute.xlu0 %4480
      %4482 = vrot.lane.b32.xlu0 %v4302, 24
      %v4483 = vpop.permute.xlu0 %4482
      %4484 = vrot.lane.b32.xlu0 %v4303, 24
      %v4485 = vpop.permute.xlu0 %4484
      %4486 = vrot.lane.b32.xlu0 %v4304, 24
      %v4487 = vpop.permute.xlu0 %4486
      %4488 = vrot.lane.b32.xlu0 %v4305, 24
      %v4489 = vpop.permute.xlu0 %4488
      %4490 = vrot.lane.b32.xlu0 %v4306, 24
      %v4491 = vpop.permute.xlu0 %4490
      %4492 = vrot.lane.b32.xlu0 %v4307, 24
      %v4493 = vpop.permute.xlu0 %4492
      %4494 = vrot.lane.b32.xlu0 %v4308, 24
      %v4495 = vpop.permute.xlu0 %4494
      %4496 = vrot.lane.b32.xlu0 %v4309, 24
      %v4497 = vpop.permute.xlu0 %4496
      %4498 = vrot.lane.b32.xlu0 %v4310, 24
      %v4499 = vpop.permute.xlu0 %4498
      %4500 = vrot.lane.b32.xlu0 %v4311, 24
      %v4501 = vpop.permute.xlu0 %4500
      %4502 = vrot.lane.b32.xlu0 %v4312, 24
      %v4503 = vpop.permute.xlu0 %4502
      %4504 = vrot.lane.b32.xlu0 %v4313, 24
      %v4505 = vpop.permute.xlu0 %4504
      %4506 = vrot.lane.b32.xlu0 %v4314, 24
      %v4507 = vpop.permute.xlu0 %4506
      %4508 = vrot.lane.b32.xlu0 %v4315, 24
      %v4509 = vpop.permute.xlu0 %4508
      %4510 = vrot.lane.b32.xlu0 %v4316, 24
      %v4511 = vpop.permute.xlu0 %4510
      %4512 = vrot.lane.b32.xlu0 %v4317, 24
      %v4513 = vpop.permute.xlu0 %4512
      %4514 = vrot.lane.b32.xlu0 %v4318, 24
      %v4515 = vpop.permute.xlu0 %4514
      %4516 = vrot.lane.b32.xlu0 %v4319, 24
      %v4517 = vpop.permute.xlu0 %4516
      %4518 = vrot.lane.b32.xlu0 %v4320, 24
      %v4519 = vpop.permute.xlu0 %4518
      %4520 = vrot.lane.b32.xlu0 %v4321, 24
      %v4521 = vpop.permute.xlu0 %4520
      %4522 = vrot.lane.b32.xlu0 %v4322, 24
      %v4523 = vpop.permute.xlu0 %4522
      %4524 = vrot.lane.b32.xlu0 %v4323, 24
      %v4525 = vpop.permute.xlu0 %4524
      %4526 = vrot.lane.b32.xlu0 %v4324, 24
      %v4527 = vpop.permute.xlu0 %4526
      %4528 = vrot.lane.b32.xlu0 %v4325, 24
      %v4529 = vpop.permute.xlu0 %4528
      %4530 = vrot.lane.b32.xlu0 %v4326, 24
      %v4531 = vpop.permute.xlu0 %4530
      %4532 = vrot.lane.b32.xlu0 %v4327, 24
      %v4533 = vpop.permute.xlu0 %4532
      %4534 = vrot.lane.b32.xlu0 %v4328, 24
      %v4535 = vpop.permute.xlu0 %4534
      %4536 = vrot.lane.b32.xlu0 %v4329, 24
      %v4537 = vpop.permute.xlu0 %4536
      %4538 = vrot.lane.b32.xlu0 %v4330, 24
      %v4539 = vpop.permute.xlu0 %4538
      %4540 = vrot.lane.b32.xlu0 %v4331, 24
      %v4541 = vpop.permute.xlu0 %4540
      %4542 = vrot.lane.b32.xlu0 %v4332, 24
      %v4543 = vpop.permute.xlu0 %4542
      %4544 = vrot.lane.b32.xlu0 %v4333, 24
      %v4545 = vpop.permute.xlu0 %4544
      %4546 = vrot.lane.b32.xlu0 %v4334, 24
      %v4547 = vpop.permute.xlu0 %4546
      %4548 = vrot.lane.b32.xlu0 %v4335, 24
      %v4549 = vpop.permute.xlu0 %4548
      %4550 = vrot.lane.b32.xlu0 %v4336, 24
      %v4551 = vpop.permute.xlu0 %4550
      %4552 = vrot.lane.b32.xlu0 %v4337, 24
      %v4553 = vpop.permute.xlu0 %4552
      %vm4626 = vcmask 224448
      %4627 = vst.msk [vmem:[#allocation3] sm:$0xf] %vm4626, %v4411
      %4628 = vst.msk [vmem:[#allocation3 + $0x4] sm:$0xf] %vm4626, %v4413
      %4629 = vst.msk [vmem:[#allocation3 + $0x8] sm:$0xf] %vm4626, %v4415
      %4630 = vst.msk [vmem:[#allocation3 + $0xc] sm:$0xf] %vm4626, %v4417
      %4631 = vst.msk [vmem:[#allocation3 + $0x10] sm:$0xf] %vm4626, %v4419
      %4632 = vst.msk [vmem:[#allocation3 + $0x14] sm:$0xf] %vm4626, %v4421
      %4633 = vst.msk [vmem:[#allocation3 + $0x18] sm:$0xf] %vm4626, %v4423
      %4634 = vst.msk [vmem:[#allocation3 + $0x1c] sm:$0xf] %vm4626, %v4425
      %4635 = vst.msk [vmem:[#allocation3 + $0x20] sm:$0xf] %vm4626, %v4427
      %4636 = vst.msk [vmem:[#allocation3 + $0x24] sm:$0xf] %vm4626, %v4429
      %4637 = vst.msk [vmem:[#allocation3 + $0x28] sm:$0xf] %vm4626, %v4431
      %4638 = vst.msk [vmem:[#allocation3 + $0x2c] sm:$0xf] %vm4626, %v4433
      %4639 = vst.msk [vmem:[#allocation3 + $0x30] sm:$0xf] %vm4626, %v4435
      %4640 = vst.msk [vmem:[#allocation3 + $0x34] sm:$0xf] %vm4626, %v4437
      %4641 = vst.msk [vmem:[#allocation3 + $0x38] sm:$0xf] %vm4626, %v4439
      %4642 = vst.msk [vmem:[#allocation3 + $0x3c] sm:$0xf] %vm4626, %v4441
      %4643 = vst.msk [vmem:[#allocation3 + $0x40] sm:$0xf] %vm4626, %v4443
      %4644 = vst.msk [vmem:[#allocation3 + $0x44] sm:$0xf] %vm4626, %v4445
      %4645 = vst.msk [vmem:[#allocation3 + $0x48] sm:$0xf] %vm4626, %v4447
      %4646 = vst.msk [vmem:[#allocation3 + $0x4c] sm:$0xf] %vm4626, %v4449
      %4647 = vst.msk [vmem:[#allocation3 + $0x50] sm:$0xf] %vm4626, %v4451
      %4648 = vst.msk [vmem:[#allocation3 + $0x54] sm:$0xf] %vm4626, %v4453
      %4649 = vst.msk [vmem:[#allocation3 + $0x58] sm:$0xf] %vm4626, %v4455
      %4650 = vst.msk [vmem:[#allocation3 + $0x5c] sm:$0xf] %vm4626, %v4457
      %4651 = vst.msk [vmem:[#allocation3 + $0x60] sm:$0xf] %vm4626, %v4459
      %4652 = vst.msk [vmem:[#allocation3 + $0x64] sm:$0xf] %vm4626, %v4461
      %4653 = vst.msk [vmem:[#allocation3 + $0x68] sm:$0xf] %vm4626, %v4463
      %4654 = vst.msk [vmem:[#allocation3 + $0x6c] sm:$0xf] %vm4626, %v4465
      %4655 = vst.msk [vmem:[#allocation3 + $0x70] sm:$0xf] %vm4626, %v4467
      %4656 = vst.msk [vmem:[#allocation3 + $0x74] sm:$0xf] %vm4626, %v4469
      %4657 = vst.msk [vmem:[#allocation3 + $0x78] sm:$0xf] %vm4626, %v4471
      %4658 = vst.msk [vmem:[#allocation3 + $0x7c] sm:$0xf] %vm4626, %v4473
      %4659 = vst.msk [vmem:[#allocation3 + $0x80] sm:$0xf] %vm4626, %v4475
      %4660 = vst.msk [vmem:[#allocation3 + $0x84] sm:$0xf] %vm4626, %v4477
      %4661 = vst.msk [vmem:[#allocation3 + $0x88] sm:$0xf] %vm4626, %v4479
      %4662 = vst.msk [vmem:[#allocation3 + $0x8c] sm:$0xf] %vm4626, %v4481
      %4663 = vst.msk [vmem:[#allocation3 + $0x90] sm:$0xf] %vm4626, %v4483
      %4664 = vst.msk [vmem:[#allocation3 + $0x94] sm:$0xf] %vm4626, %v4485
      %4665 = vst.msk [vmem:[#allocation3 + $0x98] sm:$0xf] %vm4626, %v4487
      %4666 = vst.msk [vmem:[#allocation3 + $0x9c] sm:$0xf] %vm4626, %v4489
      %4667 = vst.msk [vmem:[#allocation3 + $0xa0] sm:$0xf] %vm4626, %v4491
      %4668 = vst.msk [vmem:[#allocation3 + $0xa4] sm:$0xf] %vm4626, %v4493
      %4669 = vst.msk [vmem:[#allocation3 + $0xa8] sm:$0xf] %vm4626, %v4495
      %4670 = vst.msk [vmem:[#allocation3 + $0xac] sm:$0xf] %vm4626, %v4497
      %4671 = vst.msk [vmem:[#allocation3 + $0xb0] sm:$0xf] %vm4626, %v4499
      %4672 = vst.msk [vmem:[#allocation3 + $0xb4] sm:$0xf] %vm4626, %v4501
      %4673 = vst.msk [vmem:[#allocation3 + $0xb8] sm:$0xf] %vm4626, %v4503
      %4674 = vst.msk [vmem:[#allocation3 + $0xbc] sm:$0xf] %vm4626, %v4505
      %4675 = vst.msk [vmem:[#allocation3 + $0xc0] sm:$0xf] %vm4626, %v4507
      %4676 = vst.msk [vmem:[#allocation3 + $0xc4] sm:$0xf] %vm4626, %v4509
      %4677 = vst.msk [vmem:[#allocation3 + $0xc8] sm:$0xf] %vm4626, %v4511
      %4678 = vst.msk [vmem:[#allocation3 + $0xcc] sm:$0xf] %vm4626, %v4513
      %4679 = vst.msk [vmem:[#allocation3 + $0xd0] sm:$0xf] %vm4626, %v4515
      %4680 = vst.msk [vmem:[#allocation3 + $0xd4] sm:$0xf] %vm4626, %v4517
      %4681 = vst.msk [vmem:[#allocation3 + $0xd8] sm:$0xf] %vm4626, %v4519
      %4682 = vst.msk [vmem:[#allocation3 + $0xdc] sm:$0xf] %vm4626, %v4521
      %4683 = vst.msk [vmem:[#allocation3 + $0xe0] sm:$0xf] %vm4626, %v4523
      %4684 = vst.msk [vmem:[#allocation3 + $0xe4] sm:$0xf] %vm4626, %v4525
      %4685 = vst.msk [vmem:[#allocation3 + $0xe8] sm:$0xf] %vm4626, %v4527
      %4686 = vst.msk [vmem:[#allocation3 + $0xec] sm:$0xf] %vm4626, %v4529
      %4687 = vst.msk [vmem:[#allocation3 + $0xf0] sm:$0xf] %vm4626, %v4531
      %4688 = vst.msk [vmem:[#allocation3 + $0xf4] sm:$0xf] %vm4626, %v4533
      %4689 = vst.msk [vmem:[#allocation3 + $0xf8] sm:$0xf] %vm4626, %v4535
      %4690 = vst.msk [vmem:[#allocation3 + $0xfc] sm:$0xf] %vm4626, %v4537
      %4691 = vst.msk [vmem:[#allocation3 + $0x100] sm:$0xf] %vm4626, %v4539
      %4692 = vst.msk [vmem:[#allocation3 + $0x104] sm:$0xf] %vm4626, %v4541
      %4693 = vst.msk [vmem:[#allocation3 + $0x108] sm:$0xf] %vm4626, %v4543
      %4694 = vst.msk [vmem:[#allocation3 + $0x10c] sm:$0xf] %vm4626, %v4545
      %4695 = vst.msk [vmem:[#allocation3 + $0x110] sm:$0xf] %vm4626, %v4547
      %4696 = vst.msk [vmem:[#allocation3 + $0x114] sm:$0xf] %vm4626, %v4549
      %4697 = vst.msk [vmem:[#allocation3 + $0x118] sm:$0xf] %vm4626, %v4551
      %4698 = vst.msk [vmem:[#allocation3 + $0x11c] sm:$0xf] %vm4626, %v4553
      %v4699 = vld [vmem:[#allocation2 + $0x10] sm:$0xf]
      %v4700 = vld [vmem:[#allocation2 + $0x14] sm:$0xf]
      %v4701 = vld [vmem:[#allocation2 + $0x18] sm:$0xf]
      %v4702 = vld [vmem:[#allocation2 + $0x1c] sm:$0xf]
      %v4703 = vld [vmem:[#allocation2 + $0x20] sm:$0xf]
      %v4704 = vld [vmem:[#allocation2 + $0x24] sm:$0xf]
      %v4705 = vld [vmem:[#allocation2 + $0x28] sm:$0xf]
      %v4706 = vld [vmem:[#allocation2 + $0x2c] sm:$0xf]
      %v4707 = vld [vmem:[#allocation2 + $0x30] sm:$0xf]
      %v4708 = vld [vmem:[#allocation2 + $0x34] sm:$0xf]
      %v4709 = vld [vmem:[#allocation2 + $0x38] sm:$0xf]
      %v4710 = vld [vmem:[#allocation2 + $0x3c] sm:$0xf]
      %v4711 = vld [vmem:[#allocation2 + $0x40] sm:$0xf]
      %v4712 = vld [vmem:[#allocation2 + $0x44] sm:$0xf]
      %v4713 = vld [vmem:[#allocation2 + $0x48] sm:$0xf]
      %v4714 = vld [vmem:[#allocation2 + $0x4c] sm:$0xf]
      %v4715 = vld [vmem:[#allocation2 + $0x50] sm:$0xf]
      %v4716 = vld [vmem:[#allocation2 + $0x54] sm:$0xf]
      %v4717 = vld [vmem:[#allocation2 + $0x58] sm:$0xf]
      %v4718 = vld [vmem:[#allocation2 + $0x5c] sm:$0xf]
      %v4719 = vld [vmem:[#allocation2 + $0x60] sm:$0xf]
      %v4720 = vld [vmem:[#allocation2 + $0x64] sm:$0xf]
      %v4721 = vld [vmem:[#allocation2 + $0x68] sm:$0xf]
      %v4722 = vld [vmem:[#allocation2 + $0x6c] sm:$0xf]
      %v4723 = vld [vmem:[#allocation2 + $0x70] sm:$0xf]
      %v4724 = vld [vmem:[#allocation2 + $0x74] sm:$0xf]
      %v4725 = vld [vmem:[#allocation2 + $0x78] sm:$0xf]
      %v4726 = vld [vmem:[#allocation2 + $0x7c] sm:$0xf]
      %v4727 = vld [vmem:[#allocation2 + $0x80] sm:$0xf]
      %v4728 = vld [vmem:[#allocation2 + $0x84] sm:$0xf]
      %v4729 = vld [vmem:[#allocation2 + $0x88] sm:$0xf]
      %v4730 = vld [vmem:[#allocation2 + $0x8c] sm:$0xf]
      %v4731 = vld [vmem:[#allocation2 + $0x90] sm:$0xf]
      %v4732 = vld [vmem:[#allocation2 + $0x94] sm:$0xf]
      %v4733 = vld [vmem:[#allocation2 + $0x98] sm:$0xf]
      %v4734 = vld [vmem:[#allocation2 + $0x9c] sm:$0xf]
      %v4735 = vld [vmem:[#allocation2 + $0xa0] sm:$0xf]
      %v4736 = vld [vmem:[#allocation2 + $0xa4] sm:$0xf]
      %v4737 = vld [vmem:[#allocation2 + $0xa8] sm:$0xf]
      %v4738 = vld [vmem:[#allocation2 + $0xac] sm:$0xf]
      %v4739 = vld [vmem:[#allocation2 + $0xb0] sm:$0xf]
      %v4740 = vld [vmem:[#allocation2 + $0xb4] sm:$0xf]
      %v4741 = vld [vmem:[#allocation2 + $0xb8] sm:$0xf]
      %v4742 = vld [vmem:[#allocation2 + $0xbc] sm:$0xf]
      %v4743 = vld [vmem:[#allocation2 + $0xc0] sm:$0xf]
      %v4744 = vld [vmem:[#allocation2 + $0xc4] sm:$0xf]
      %v4745 = vld [vmem:[#allocation2 + $0xc8] sm:$0xf]
      %v4746 = vld [vmem:[#allocation2 + $0xcc] sm:$0xf]
      %v4747 = vld [vmem:[#allocation2 + $0xd0] sm:$0xf]
      %v4748 = vld [vmem:[#allocation2 + $0xd4] sm:$0xf]
      %v4749 = vld [vmem:[#allocation2 + $0xd8] sm:$0xf]
      %v4750 = vld [vmem:[#allocation2 + $0xdc] sm:$0xf]
      %v4751 = vld [vmem:[#allocation2 + $0xe0] sm:$0xf]
      %v4752 = vld [vmem:[#allocation2 + $0xe4] sm:$0xf]
      %v4753 = vld [vmem:[#allocation2 + $0xe8] sm:$0xf]
      %v4754 = vld [vmem:[#allocation2 + $0xec] sm:$0xf]
      %v4755 = vld [vmem:[#allocation2 + $0xf0] sm:$0xf]
      %v4756 = vld [vmem:[#allocation2 + $0xf4] sm:$0xf]
      %v4757 = vld [vmem:[#allocation2 + $0xf8] sm:$0xf]
      %v4758 = vld [vmem:[#allocation2 + $0xfc] sm:$0xf]
      %v4759 = vld [vmem:[#allocation2 + $0x100] sm:$0xf]
      %v4760 = vld [vmem:[#allocation2 + $0x104] sm:$0xf]
      %v4761 = vld [vmem:[#allocation2 + $0x108] sm:$0xf]
      %v4762 = vld [vmem:[#allocation2 + $0x10c] sm:$0xf]
      %v4763 = vld [vmem:[#allocation2 + $0x110] sm:$0xf]
      %v4764 = vld [vmem:[#allocation2 + $0x114] sm:$0xf]
      %v4765 = vld [vmem:[#allocation2 + $0x118] sm:$0xf]
      %v4766 = vld [vmem:[#allocation2 + $0x11c] sm:$0xf]
      %v4767 = vld [vmem:[#allocation2 + $0x120] sm:$0xf]
      %v4768 = vld [vmem:[#allocation2 + $0x124] sm:$0xf]
      %v4769 = vld [vmem:[#allocation2 + $0x128] sm:$0xf]
      %v4770 = vld [vmem:[#allocation2 + $0x12c] sm:$0xf]
      %v4771 = vld [vmem:[#allocation2 + $0x130] sm:$0x1]
      %v4773 = vshrl.u32 %v4699, 16
      %v4775 = vrot.slane %v4773, 4
      %v4776 = vshll.u32 %v4699, 16
      %v4778 = vrot.slane %v4776, 5
      %v4779 = vor.u32 %v4775, %v4778
      %v4780 = vrot.slane %v4779, 4
      %v4782 = vshll.u32 %v4700, 16
      %v4784 = vrot.slane %v4782, 5
      %v4785 = vsel %vm426, %v4780, %v4784
      %v4786 = vshrl.u32 %v4700, 16
      %v4788 = vrot.slane %v4786, 4
      %v4789 = vor.u32 %v4788, %v4784
      %v4790 = vrot.slane %v4789, 4
      %v4792 = vshll.u32 %v4701, 16
      %v4794 = vrot.slane %v4792, 5
      %v4795 = vsel %vm426, %v4790, %v4794
      %v4796 = vshrl.u32 %v4701, 16
      %v4798 = vrot.slane %v4796, 4
      %v4799 = vor.u32 %v4798, %v4794
      %v4800 = vrot.slane %v4799, 4
      %v4802 = vshll.u32 %v4702, 16
      %v4804 = vrot.slane %v4802, 5
      %v4805 = vsel %vm426, %v4800, %v4804
      %v4806 = vshrl.u32 %v4702, 16
      %v4808 = vrot.slane %v4806, 4
      %v4809 = vor.u32 %v4808, %v4804
      %v4810 = vrot.slane %v4809, 4
      %v4812 = vshll.u32 %v4703, 16
      %v4814 = vrot.slane %v4812, 5
      %v4815 = vsel %vm426, %v4810, %v4814
      %v4816 = vshrl.u32 %v4703, 16
      %v4818 = vrot.slane %v4816, 4
      %v4819 = vor.u32 %v4818, %v4814
      %v4820 = vrot.slane %v4819, 4
      %v4822 = vshll.u32 %v4704, 16
      %v4824 = vrot.slane %v4822, 5
      %v4825 = vsel %vm426, %v4820, %v4824
      %v4826 = vshrl.u32 %v4704, 16
      %v4828 = vrot.slane %v4826, 4
      %v4829 = vor.u32 %v4828, %v4824
      %v4830 = vrot.slane %v4829, 4
      %v4832 = vshll.u32 %v4705, 16
      %v4834 = vrot.slane %v4832, 5
      %v4835 = vsel %vm426, %v4830, %v4834
      %v4836 = vshrl.u32 %v4705, 16
      %v4838 = vrot.slane %v4836, 4
      %v4839 = vor.u32 %v4838, %v4834
      %v4840 = vrot.slane %v4839, 4
      %v4842 = vshll.u32 %v4706, 16
      %v4844 = vrot.slane %v4842, 5
      %v4845 = vsel %vm426, %v4840, %v4844
      %v4846 = vshrl.u32 %v4706, 16
      %v4848 = vrot.slane %v4846, 4
      %v4849 = vor.u32 %v4848, %v4844
      %v4850 = vrot.slane %v4849, 4
      %v4852 = vshll.u32 %v4707, 16
      %v4854 = vrot.slane %v4852, 5
      %v4855 = vsel %vm426, %v4850, %v4854
      %v4856 = vshrl.u32 %v4707, 16
      %v4858 = vrot.slane %v4856, 4
      %v4859 = vor.u32 %v4858, %v4854
      %v4860 = vrot.slane %v4859, 4
      %v4862 = vshll.u32 %v4708, 16
      %v4864 = vrot.slane %v4862, 5
      %v4865 = vsel %vm426, %v4860, %v4864
      %v4866 = vshrl.u32 %v4708, 16
      %v4868 = vrot.slane %v4866, 4
      %v4869 = vor.u32 %v4868, %v4864
      %v4870 = vrot.slane %v4869, 4
      %v4872 = vshll.u32 %v4709, 16
      %v4874 = vrot.slane %v4872, 5
      %v4875 = vsel %vm426, %v4870, %v4874
      %v4876 = vshrl.u32 %v4709, 16
      %v4878 = vrot.slane %v4876, 4
      %v4879 = vor.u32 %v4878, %v4874
      %v4880 = vrot.slane %v4879, 4
      %v4882 = vshll.u32 %v4710, 16
      %v4884 = vrot.slane %v4882, 5
      %v4885 = vsel %vm426, %v4880, %v4884
      %v4886 = vshrl.u32 %v4710, 16
      %v4888 = vrot.slane %v4886, 4
      %v4889 = vor.u32 %v4888, %v4884
      %v4890 = vrot.slane %v4889, 4
      %v4892 = vshll.u32 %v4711, 16
      %v4894 = vrot.slane %v4892, 5
      %v4895 = vsel %vm426, %v4890, %v4894
      %v4896 = vshrl.u32 %v4711, 16
      %v4898 = vrot.slane %v4896, 4
      %v4899 = vor.u32 %v4898, %v4894
      %v4900 = vrot.slane %v4899, 4
      %v4902 = vshll.u32 %v4712, 16
      %v4904 = vrot.slane %v4902, 5
      %v4905 = vsel %vm426, %v4900, %v4904
      %v4906 = vshrl.u32 %v4712, 16
      %v4908 = vrot.slane %v4906, 4
      %v4909 = vor.u32 %v4908, %v4904
      %v4910 = vrot.slane %v4909, 4
      %v4912 = vshll.u32 %v4713, 16
      %v4914 = vrot.slane %v4912, 5
      %v4915 = vsel %vm426, %v4910, %v4914
      %v4916 = vshrl.u32 %v4713, 16
      %v4918 = vrot.slane %v4916, 4
      %v4919 = vor.u32 %v4918, %v4914
      %v4920 = vrot.slane %v4919, 4
      %v4922 = vshll.u32 %v4714, 16
      %v4924 = vrot.slane %v4922, 5
      %v4925 = vsel %vm426, %v4920, %v4924
      %v4926 = vshrl.u32 %v4714, 16
      %v4928 = vrot.slane %v4926, 4
      %v4929 = vor.u32 %v4928, %v4924
      %v4930 = vrot.slane %v4929, 4
      %v4932 = vshll.u32 %v4715, 16
      %v4934 = vrot.slane %v4932, 5
      %v4935 = vsel %vm426, %v4930, %v4934
      %v4936 = vshrl.u32 %v4715, 16
      %v4938 = vrot.slane %v4936, 4
      %v4939 = vor.u32 %v4938, %v4934
      %v4940 = vrot.slane %v4939, 4
      %v4942 = vshll.u32 %v4716, 16
      %v4944 = vrot.slane %v4942, 5
      %v4945 = vsel %vm426, %v4940, %v4944
      %v4946 = vshrl.u32 %v4716, 16
      %v4948 = vrot.slane %v4946, 4
      %v4949 = vor.u32 %v4948, %v4944
      %v4950 = vrot.slane %v4949, 4
      %v4952 = vshll.u32 %v4717, 16
      %v4954 = vrot.slane %v4952, 5
      %v4955 = vsel %vm426, %v4950, %v4954
      %v4956 = vshrl.u32 %v4717, 16
      %v4958 = vrot.slane %v4956, 4
      %v4959 = vor.u32 %v4958, %v4954
      %v4960 = vrot.slane %v4959, 4
      %v4962 = vshll.u32 %v4718, 16
      %v4964 = vrot.slane %v4962, 5
      %v4965 = vsel %vm426, %v4960, %v4964
      %v4966 = vshrl.u32 %v4718, 16
      %v4968 = vrot.slane %v4966, 4
      %v4969 = vor.u32 %v4968, %v4964
      %v4970 = vrot.slane %v4969, 4
      %v4972 = vshll.u32 %v4719, 16
      %v4974 = vrot.slane %v4972, 5
      %v4975 = vsel %vm426, %v4970, %v4974
      %v4976 = vshrl.u32 %v4719, 16
      %v4978 = vrot.slane %v4976, 4
      %v4979 = vor.u32 %v4978, %v4974
      %v4980 = vrot.slane %v4979, 4
      %v4982 = vshll.u32 %v4720, 16
      %v4984 = vrot.slane %v4982, 5
      %v4985 = vsel %vm426, %v4980, %v4984
      %v4986 = vshrl.u32 %v4720, 16
      %v4988 = vrot.slane %v4986, 4
      %v4989 = vor.u32 %v4988, %v4984
      %v4990 = vrot.slane %v4989, 4
      %v4992 = vshll.u32 %v4721, 16
      %v4994 = vrot.slane %v4992, 5
      %v4995 = vsel %vm426, %v4990, %v4994
      %v4996 = vshrl.u32 %v4721, 16
      %v4998 = vrot.slane %v4996, 4
      %v4999 = vor.u32 %v4998, %v4994
      %v5000 = vrot.slane %v4999, 4
      %v5002 = vshll.u32 %v4722, 16
      %v5004 = vrot.slane %v5002, 5
      %v5005 = vsel %vm426, %v5000, %v5004
      %v5006 = vshrl.u32 %v4722, 16
      %v5008 = vrot.slane %v5006, 4
      %v5009 = vor.u32 %v5008, %v5004
      %v5010 = vrot.slane %v5009, 4
      %v5012 = vshll.u32 %v4723, 16
      %v5014 = vrot.slane %v5012, 5
      %v5015 = vsel %vm426, %v5010, %v5014
      %v5016 = vshrl.u32 %v4723, 16
      %v5018 = vrot.slane %v5016, 4
      %v5019 = vor.u32 %v5018, %v5014
      %v5020 = vrot.slane %v5019, 4
      %v5022 = vshll.u32 %v4724, 16
      %v5024 = vrot.slane %v5022, 5
      %v5025 = vsel %vm426, %v5020, %v5024
      %v5026 = vshrl.u32 %v4724, 16
      %v5028 = vrot.slane %v5026, 4
      %v5029 = vor.u32 %v5028, %v5024
      %v5030 = vrot.slane %v5029, 4
      %v5032 = vshll.u32 %v4725, 16
      %v5034 = vrot.slane %v5032, 5
      %v5035 = vsel %vm426, %v5030, %v5034
      %v5036 = vshrl.u32 %v4725, 16
      %v5038 = vrot.slane %v5036, 4
      %v5039 = vor.u32 %v5038, %v5034
      %v5040 = vrot.slane %v5039, 4
      %v5042 = vshll.u32 %v4726, 16
      %v5044 = vrot.slane %v5042, 5
      %v5045 = vsel %vm426, %v5040, %v5044
      %v5046 = vshrl.u32 %v4726, 16
      %v5048 = vrot.slane %v5046, 4
      %v5049 = vor.u32 %v5048, %v5044
      %v5050 = vrot.slane %v5049, 4
      %v5052 = vshll.u32 %v4727, 16
      %v5054 = vrot.slane %v5052, 5
      %v5055 = vsel %vm426, %v5050, %v5054
      %v5056 = vshrl.u32 %v4727, 16
      %v5058 = vrot.slane %v5056, 4
      %v5059 = vor.u32 %v5058, %v5054
      %v5060 = vrot.slane %v5059, 4
      %v5062 = vshll.u32 %v4728, 16
      %v5064 = vrot.slane %v5062, 5
      %v5065 = vsel %vm426, %v5060, %v5064
      %v5066 = vshrl.u32 %v4728, 16
      %v5068 = vrot.slane %v5066, 4
      %v5069 = vor.u32 %v5068, %v5064
      %v5070 = vrot.slane %v5069, 4
      %v5072 = vshll.u32 %v4729, 16
      %v5074 = vrot.slane %v5072, 5
      %v5075 = vsel %vm426, %v5070, %v5074
      %v5076 = vshrl.u32 %v4729, 16
      %v5078 = vrot.slane %v5076, 4
      %v5079 = vor.u32 %v5078, %v5074
      %v5080 = vrot.slane %v5079, 4
      %v5082 = vshll.u32 %v4730, 16
      %v5084 = vrot.slane %v5082, 5
      %v5085 = vsel %vm426, %v5080, %v5084
      %v5086 = vshrl.u32 %v4730, 16
      %v5088 = vrot.slane %v5086, 4
      %v5089 = vor.u32 %v5088, %v5084
      %v5090 = vrot.slane %v5089, 4
      %v5092 = vshll.u32 %v4731, 16
      %v5094 = vrot.slane %v5092, 5
      %v5095 = vsel %vm426, %v5090, %v5094
      %v5096 = vshrl.u32 %v4731, 16
      %v5098 = vrot.slane %v5096, 4
      %v5099 = vor.u32 %v5098, %v5094
      %v5100 = vrot.slane %v5099, 4
      %v5102 = vshll.u32 %v4732, 16
      %v5104 = vrot.slane %v5102, 5
      %v5105 = vsel %vm426, %v5100, %v5104
      %v5106 = vshrl.u32 %v4732, 16
      %v5108 = vrot.slane %v5106, 4
      %v5109 = vor.u32 %v5108, %v5104
      %v5110 = vrot.slane %v5109, 4
      %v5112 = vshll.u32 %v4733, 16
      %v5114 = vrot.slane %v5112, 5
      %v5115 = vsel %vm426, %v5110, %v5114
      %v5116 = vshrl.u32 %v4733, 16
      %v5118 = vrot.slane %v5116, 4
      %v5119 = vor.u32 %v5118, %v5114
      %v5120 = vrot.slane %v5119, 4
      %v5122 = vshll.u32 %v4734, 16
      %v5124 = vrot.slane %v5122, 5
      %v5125 = vsel %vm426, %v5120, %v5124
      %v5126 = vshrl.u32 %v4734, 16
      %v5128 = vrot.slane %v5126, 4
      %v5129 = vor.u32 %v5128, %v5124
      %v5130 = vrot.slane %v5129, 4
      %v5132 = vshll.u32 %v4735, 16
      %v5134 = vrot.slane %v5132, 5
      %v5135 = vsel %vm426, %v5130, %v5134
      %v5136 = vshrl.u32 %v4735, 16
      %v5138 = vrot.slane %v5136, 4
      %v5139 = vor.u32 %v5138, %v5134
      %v5140 = vrot.slane %v5139, 4
      %v5142 = vshll.u32 %v4736, 16
      %v5144 = vrot.slane %v5142, 5
      %v5145 = vsel %vm426, %v5140, %v5144
      %v5146 = vshrl.u32 %v4736, 16
      %v5148 = vrot.slane %v5146, 4
      %v5149 = vor.u32 %v5148, %v5144
      %v5150 = vrot.slane %v5149, 4
      %v5152 = vshll.u32 %v4737, 16
      %v5154 = vrot.slane %v5152, 5
      %v5155 = vsel %vm426, %v5150, %v5154
      %v5156 = vshrl.u32 %v4737, 16
      %v5158 = vrot.slane %v5156, 4
      %v5159 = vor.u32 %v5158, %v5154
      %v5160 = vrot.slane %v5159, 4
      %v5162 = vshll.u32 %v4738, 16
      %v5164 = vrot.slane %v5162, 5
      %v5165 = vsel %vm426, %v5160, %v5164
      %v5166 = vshrl.u32 %v4738, 16
      %v5168 = vrot.slane %v5166, 4
      %v5169 = vor.u32 %v5168, %v5164
      %v5170 = vrot.slane %v5169, 4
      %v5172 = vshll.u32 %v4739, 16
      %v5174 = vrot.slane %v5172, 5
      %v5175 = vsel %vm426, %v5170, %v5174
      %v5176 = vshrl.u32 %v4739, 16
      %v5178 = vrot.slane %v5176, 4
      %v5179 = vor.u32 %v5178, %v5174
      %v5180 = vrot.slane %v5179, 4
      %v5182 = vshll.u32 %v4740, 16
      %v5184 = vrot.slane %v5182, 5
      %v5185 = vsel %vm426, %v5180, %v5184
      %v5186 = vshrl.u32 %v4740, 16
      %v5188 = vrot.slane %v5186, 4
      %v5189 = vor.u32 %v5188, %v5184
      %v5190 = vrot.slane %v5189, 4
      %v5192 = vshll.u32 %v4741, 16
      %v5194 = vrot.slane %v5192, 5
      %v5195 = vsel %vm426, %v5190, %v5194
      %v5196 = vshrl.u32 %v4741, 16
      %v5198 = vrot.slane %v5196, 4
      %v5199 = vor.u32 %v5198, %v5194
      %v5200 = vrot.slane %v5199, 4
      %v5202 = vshll.u32 %v4742, 16
      %v5204 = vrot.slane %v5202, 5
      %v5205 = vsel %vm426, %v5200, %v5204
      %v5206 = vshrl.u32 %v4742, 16
      %v5208 = vrot.slane %v5206, 4
      %v5209 = vor.u32 %v5208, %v5204
      %v5210 = vrot.slane %v5209, 4
      %v5212 = vshll.u32 %v4743, 16
      %v5214 = vrot.slane %v5212, 5
      %v5215 = vsel %vm426, %v5210, %v5214
      %v5216 = vshrl.u32 %v4743, 16
      %v5218 = vrot.slane %v5216, 4
      %v5219 = vor.u32 %v5218, %v5214
      %v5220 = vrot.slane %v5219, 4
      %v5222 = vshll.u32 %v4744, 16
      %v5224 = vrot.slane %v5222, 5
      %v5225 = vsel %vm426, %v5220, %v5224
      %v5226 = vshrl.u32 %v4744, 16
      %v5228 = vrot.slane %v5226, 4
      %v5229 = vor.u32 %v5228, %v5224
      %v5230 = vrot.slane %v5229, 4
      %v5232 = vshll.u32 %v4745, 16
      %v5234 = vrot.slane %v5232, 5
      %v5235 = vsel %vm426, %v5230, %v5234
      %v5236 = vshrl.u32 %v4745, 16
      %v5238 = vrot.slane %v5236, 4
      %v5239 = vor.u32 %v5238, %v5234
      %v5240 = vrot.slane %v5239, 4
      %v5242 = vshll.u32 %v4746, 16
      %v5244 = vrot.slane %v5242, 5
      %v5245 = vsel %vm426, %v5240, %v5244
      %v5246 = vshrl.u32 %v4746, 16
      %v5248 = vrot.slane %v5246, 4
      %v5249 = vor.u32 %v5248, %v5244
      %v5250 = vrot.slane %v5249, 4
      %v5252 = vshll.u32 %v4747, 16
      %v5254 = vrot.slane %v5252, 5
      %v5255 = vsel %vm426, %v5250, %v5254
      %v5256 = vshrl.u32 %v4747, 16
      %v5258 = vrot.slane %v5256, 4
      %v5259 = vor.u32 %v5258, %v5254
      %v5260 = vrot.slane %v5259, 4
      %v5262 = vshll.u32 %v4748, 16
      %v5264 = vrot.slane %v5262, 5
      %v5265 = vsel %vm426, %v5260, %v5264
      %v5266 = vshrl.u32 %v4748, 16
      %v5268 = vrot.slane %v5266, 4
      %v5269 = vor.u32 %v5268, %v5264
      %v5270 = vrot.slane %v5269, 4
      %v5272 = vshll.u32 %v4749, 16
      %v5274 = vrot.slane %v5272, 5
      %v5275 = vsel %vm426, %v5270, %v5274
      %v5276 = vshrl.u32 %v4749, 16
      %v5278 = vrot.slane %v5276, 4
      %v5279 = vor.u32 %v5278, %v5274
      %v5280 = vrot.slane %v5279, 4
      %v5282 = vshll.u32 %v4750, 16
      %v5284 = vrot.slane %v5282, 5
      %v5285 = vsel %vm426, %v5280, %v5284
      %v5286 = vshrl.u32 %v4750, 16
      %v5288 = vrot.slane %v5286, 4
      %v5289 = vor.u32 %v5288, %v5284
      %v5290 = vrot.slane %v5289, 4
      %v5292 = vshll.u32 %v4751, 16
      %v5294 = vrot.slane %v5292, 5
      %v5295 = vsel %vm426, %v5290, %v5294
      %v5296 = vshrl.u32 %v4751, 16
      %v5298 = vrot.slane %v5296, 4
      %v5299 = vor.u32 %v5298, %v5294
      %v5300 = vrot.slane %v5299, 4
      %v5302 = vshll.u32 %v4752, 16
      %v5304 = vrot.slane %v5302, 5
      %v5305 = vsel %vm426, %v5300, %v5304
      %v5306 = vshrl.u32 %v4752, 16
      %v5308 = vrot.slane %v5306, 4
      %v5309 = vor.u32 %v5308, %v5304
      %v5310 = vrot.slane %v5309, 4
      %v5312 = vshll.u32 %v4753, 16
      %v5314 = vrot.slane %v5312, 5
      %v5315 = vsel %vm426, %v5310, %v5314
      %v5316 = vshrl.u32 %v4753, 16
      %v5318 = vrot.slane %v5316, 4
      %v5319 = vor.u32 %v5318, %v5314
      %v5320 = vrot.slane %v5319, 4
      %v5322 = vshll.u32 %v4754, 16
      %v5324 = vrot.slane %v5322, 5
      %v5325 = vsel %vm426, %v5320, %v5324
      %v5326 = vshrl.u32 %v4754, 16
      %v5328 = vrot.slane %v5326, 4
      %v5329 = vor.u32 %v5328, %v5324
      %v5330 = vrot.slane %v5329, 4
      %v5332 = vshll.u32 %v4755, 16
      %v5334 = vrot.slane %v5332, 5
      %v5335 = vsel %vm426, %v5330, %v5334
      %v5336 = vshrl.u32 %v4755, 16
      %v5338 = vrot.slane %v5336, 4
      %v5339 = vor.u32 %v5338, %v5334
      %v5340 = vrot.slane %v5339, 4
      %v5342 = vshll.u32 %v4756, 16
      %v5344 = vrot.slane %v5342, 5
      %v5345 = vsel %vm426, %v5340, %v5344
      %v5346 = vshrl.u32 %v4756, 16
      %v5348 = vrot.slane %v5346, 4
      %v5349 = vor.u32 %v5348, %v5344
      %v5350 = vrot.slane %v5349, 4
      %v5352 = vshll.u32 %v4757, 16
      %v5354 = vrot.slane %v5352, 5
      %v5355 = vsel %vm426, %v5350, %v5354
      %v5356 = vshrl.u32 %v4757, 16
      %v5358 = vrot.slane %v5356, 4
      %v5359 = vor.u32 %v5358, %v5354
      %v5360 = vrot.slane %v5359, 4
      %v5362 = vshll.u32 %v4758, 16
      %v5364 = vrot.slane %v5362, 5
      %v5365 = vsel %vm426, %v5360, %v5364
      %v5366 = vshrl.u32 %v4758, 16
      %v5368 = vrot.slane %v5366, 4
      %v5369 = vor.u32 %v5368, %v5364
      %v5370 = vrot.slane %v5369, 4
      %v5372 = vshll.u32 %v4759, 16
      %v5374 = vrot.slane %v5372, 5
      %v5375 = vsel %vm426, %v5370, %v5374
      %v5376 = vshrl.u32 %v4759, 16
      %v5378 = vrot.slane %v5376, 4
      %v5379 = vor.u32 %v5378, %v5374
      %v5380 = vrot.slane %v5379, 4
      %v5382 = vshll.u32 %v4760, 16
      %v5384 = vrot.slane %v5382, 5
      %v5385 = vsel %vm426, %v5380, %v5384
      %v5386 = vshrl.u32 %v4760, 16
      %v5388 = vrot.slane %v5386, 4
      %v5389 = vor.u32 %v5388, %v5384
      %v5390 = vrot.slane %v5389, 4
      %v5392 = vshll.u32 %v4761, 16
      %v5394 = vrot.slane %v5392, 5
      %v5395 = vsel %vm426, %v5390, %v5394
      %v5396 = vshrl.u32 %v4761, 16
      %v5398 = vrot.slane %v5396, 4
      %v5399 = vor.u32 %v5398, %v5394
      %v5400 = vrot.slane %v5399, 4
      %v5402 = vshll.u32 %v4762, 16
      %v5404 = vrot.slane %v5402, 5
      %v5405 = vsel %vm426, %v5400, %v5404
      %v5406 = vshrl.u32 %v4762, 16
      %v5408 = vrot.slane %v5406, 4
      %v5409 = vor.u32 %v5408, %v5404
      %v5410 = vrot.slane %v5409, 4
      %v5412 = vshll.u32 %v4763, 16
      %v5414 = vrot.slane %v5412, 5
      %v5415 = vsel %vm426, %v5410, %v5414
      %v5416 = vshrl.u32 %v4763, 16
      %v5418 = vrot.slane %v5416, 4
      %v5419 = vor.u32 %v5418, %v5414
      %v5420 = vrot.slane %v5419, 4
      %v5422 = vshll.u32 %v4764, 16
      %v5424 = vrot.slane %v5422, 5
      %v5425 = vsel %vm426, %v5420, %v5424
      %v5426 = vshrl.u32 %v4764, 16
      %v5428 = vrot.slane %v5426, 4
      %v5429 = vor.u32 %v5428, %v5424
      %v5430 = vrot.slane %v5429, 4
      %v5432 = vshll.u32 %v4765, 16
      %v5434 = vrot.slane %v5432, 5
      %v5435 = vsel %vm426, %v5430, %v5434
      %v5436 = vshrl.u32 %v4765, 16
      %v5438 = vrot.slane %v5436, 4
      %v5439 = vor.u32 %v5438, %v5434
      %v5440 = vrot.slane %v5439, 4
      %v5442 = vshll.u32 %v4766, 16
      %v5444 = vrot.slane %v5442, 5
      %v5445 = vsel %vm426, %v5440, %v5444
      %v5446 = vshrl.u32 %v4766, 16
      %v5448 = vrot.slane %v5446, 4
      %v5449 = vor.u32 %v5448, %v5444
      %v5450 = vrot.slane %v5449, 4
      %v5452 = vshll.u32 %v4767, 16
      %v5454 = vrot.slane %v5452, 5
      %v5455 = vsel %vm426, %v5450, %v5454
      %v5456 = vshrl.u32 %v4767, 16
      %v5458 = vrot.slane %v5456, 4
      %v5459 = vor.u32 %v5458, %v5454
      %v5460 = vrot.slane %v5459, 4
      %v5462 = vshll.u32 %v4768, 16
      %v5464 = vrot.slane %v5462, 5
      %v5465 = vsel %vm426, %v5460, %v5464
      %v5466 = vshrl.u32 %v4768, 16
      %v5468 = vrot.slane %v5466, 4
      %v5469 = vor.u32 %v5468, %v5464
      %v5470 = vrot.slane %v5469, 4
      %v5472 = vshll.u32 %v4769, 16
      %v5474 = vrot.slane %v5472, 5
      %v5475 = vsel %vm426, %v5470, %v5474
      %v5476 = vshrl.u32 %v4769, 16
      %v5478 = vrot.slane %v5476, 4
      %v5479 = vor.u32 %v5478, %v5474
      %v5480 = vrot.slane %v5479, 4
      %v5482 = vshll.u32 %v4770, 16
      %v5484 = vrot.slane %v5482, 5
      %v5485 = vsel %vm426, %v5480, %v5484
      %v5486 = vshrl.u32 %v4770, 16
      %v5488 = vrot.slane %v5486, 4
      %v5489 = vor.u32 %v5488, %v5484
      %v5490 = vrot.slane %v5489, 4
      %v5492 = vshll.u32 %v4771, 16
      %v5494 = vrot.slane %v5492, 5
      %v5495 = vsel %vm426, %v5490, %v5494
      %5496 = vrot.lane.b32.xlu0 %v4785, 28
      %v5497 = vpop.permute.xlu0 %5496
      %5498 = vrot.lane.b32.xlu0 %v4795, 28
      %v5499 = vpop.permute.xlu0 %5498
      %5500 = vrot.lane.b32.xlu0 %v4805, 28
      %v5501 = vpop.permute.xlu0 %5500
      %5502 = vrot.lane.b32.xlu0 %v4815, 28
      %v5503 = vpop.permute.xlu0 %5502
      %5504 = vrot.lane.b32.xlu0 %v4825, 28
      %v5505 = vpop.permute.xlu0 %5504
      %5506 = vrot.lane.b32.xlu0 %v4835, 28
      %v5507 = vpop.permute.xlu0 %5506
      %5508 = vrot.lane.b32.xlu0 %v4845, 28
      %v5509 = vpop.permute.xlu0 %5508
      %5510 = vrot.lane.b32.xlu0 %v4855, 28
      %v5511 = vpop.permute.xlu0 %5510
      %5512 = vrot.lane.b32.xlu0 %v4865, 28
      %v5513 = vpop.permute.xlu0 %5512
      %5514 = vrot.lane.b32.xlu0 %v4875, 28
      %v5515 = vpop.permute.xlu0 %5514
      %5516 = vrot.lane.b32.xlu0 %v4885, 28
      %v5517 = vpop.permute.xlu0 %5516
      %5518 = vrot.lane.b32.xlu0 %v4895, 28
      %v5519 = vpop.permute.xlu0 %5518
      %5520 = vrot.lane.b32.xlu0 %v4905, 28
      %v5521 = vpop.permute.xlu0 %5520
      %5522 = vrot.lane.b32.xlu0 %v4915, 28
      %v5523 = vpop.permute.xlu0 %5522
      %5524 = vrot.lane.b32.xlu0 %v4925, 28
      %v5525 = vpop.permute.xlu0 %5524
      %5526 = vrot.lane.b32.xlu0 %v4935, 28
      %v5527 = vpop.permute.xlu0 %5526
      %5528 = vrot.lane.b32.xlu0 %v4945, 28
      %v5529 = vpop.permute.xlu0 %5528
      %5530 = vrot.lane.b32.xlu0 %v4955, 28
      %v5531 = vpop.permute.xlu0 %5530
      %5532 = vrot.lane.b32.xlu0 %v4965, 28
      %v5533 = vpop.permute.xlu0 %5532
      %5534 = vrot.lane.b32.xlu0 %v4975, 28
      %v5535 = vpop.permute.xlu0 %5534
      %5536 = vrot.lane.b32.xlu0 %v4985, 28
      %v5537 = vpop.permute.xlu0 %5536
      %5538 = vrot.lane.b32.xlu0 %v4995, 28
      %v5539 = vpop.permute.xlu0 %5538
      %5540 = vrot.lane.b32.xlu0 %v5005, 28
      %v5541 = vpop.permute.xlu0 %5540
      %5542 = vrot.lane.b32.xlu0 %v5015, 28
      %v5543 = vpop.permute.xlu0 %5542
      %5544 = vrot.lane.b32.xlu0 %v5025, 28
      %v5545 = vpop.permute.xlu0 %5544
      %5546 = vrot.lane.b32.xlu0 %v5035, 28
      %v5547 = vpop.permute.xlu0 %5546
      %5548 = vrot.lane.b32.xlu0 %v5045, 28
      %v5549 = vpop.permute.xlu0 %5548
      %5550 = vrot.lane.b32.xlu0 %v5055, 28
      %v5551 = vpop.permute.xlu0 %5550
      %5552 = vrot.lane.b32.xlu0 %v5065, 28
      %v5553 = vpop.permute.xlu0 %5552
      %5554 = vrot.lane.b32.xlu0 %v5075, 28
      %v5555 = vpop.permute.xlu0 %5554
      %5556 = vrot.lane.b32.xlu0 %v5085, 28
      %v5557 = vpop.permute.xlu0 %5556
      %5558 = vrot.lane.b32.xlu0 %v5095, 28
      %v5559 = vpop.permute.xlu0 %5558
      %5560 = vrot.lane.b32.xlu0 %v5105, 28
      %v5561 = vpop.permute.xlu0 %5560
      %5562 = vrot.lane.b32.xlu0 %v5115, 28
      %v5563 = vpop.permute.xlu0 %5562
      %5564 = vrot.lane.b32.xlu0 %v5125, 28
      %v5565 = vpop.permute.xlu0 %5564
      %5566 = vrot.lane.b32.xlu0 %v5135, 28
      %v5567 = vpop.permute.xlu0 %5566
      %5568 = vrot.lane.b32.xlu0 %v5145, 28
      %v5569 = vpop.permute.xlu0 %5568
      %5570 = vrot.lane.b32.xlu0 %v5155, 28
      %v5571 = vpop.permute.xlu0 %5570
      %5572 = vrot.lane.b32.xlu0 %v5165, 28
      %v5573 = vpop.permute.xlu0 %5572
      %5574 = vrot.lane.b32.xlu0 %v5175, 28
      %v5575 = vpop.permute.xlu0 %5574
      %5576 = vrot.lane.b32.xlu0 %v5185, 28
      %v5577 = vpop.permute.xlu0 %5576
      %5578 = vrot.lane.b32.xlu0 %v5195, 28
      %v5579 = vpop.permute.xlu0 %5578
      %5580 = vrot.lane.b32.xlu0 %v5205, 28
      %v5581 = vpop.permute.xlu0 %5580
      %5582 = vrot.lane.b32.xlu0 %v5215, 28
      %v5583 = vpop.permute.xlu0 %5582
      %5584 = vrot.lane.b32.xlu0 %v5225, 28
      %v5585 = vpop.permute.xlu0 %5584
      %5586 = vrot.lane.b32.xlu0 %v5235, 28
      %v5587 = vpop.permute.xlu0 %5586
      %5588 = vrot.lane.b32.xlu0 %v5245, 28
      %v5589 = vpop.permute.xlu0 %5588
      %5590 = vrot.lane.b32.xlu0 %v5255, 28
      %v5591 = vpop.permute.xlu0 %5590
      %5592 = vrot.lane.b32.xlu0 %v5265, 28
      %v5593 = vpop.permute.xlu0 %5592
      %5594 = vrot.lane.b32.xlu0 %v5275, 28
      %v5595 = vpop.permute.xlu0 %5594
      %5596 = vrot.lane.b32.xlu0 %v5285, 28
      %v5597 = vpop.permute.xlu0 %5596
      %5598 = vrot.lane.b32.xlu0 %v5295, 28
      %v5599 = vpop.permute.xlu0 %5598
      %5600 = vrot.lane.b32.xlu0 %v5305, 28
      %v5601 = vpop.permute.xlu0 %5600
      %5602 = vrot.lane.b32.xlu0 %v5315, 28
      %v5603 = vpop.permute.xlu0 %5602
      %5604 = vrot.lane.b32.xlu0 %v5325, 28
      %v5605 = vpop.permute.xlu0 %5604
      %5606 = vrot.lane.b32.xlu0 %v5335, 28
      %v5607 = vpop.permute.xlu0 %5606
      %5608 = vrot.lane.b32.xlu0 %v5345, 28
      %v5609 = vpop.permute.xlu0 %5608
      %5610 = vrot.lane.b32.xlu0 %v5355, 28
      %v5611 = vpop.permute.xlu0 %5610
      %5612 = vrot.lane.b32.xlu0 %v5365, 28
      %v5613 = vpop.permute.xlu0 %5612
      %5614 = vrot.lane.b32.xlu0 %v5375, 28
      %v5615 = vpop.permute.xlu0 %5614
      %5616 = vrot.lane.b32.xlu0 %v5385, 28
      %v5617 = vpop.permute.xlu0 %5616
      %5618 = vrot.lane.b32.xlu0 %v5395, 28
      %v5619 = vpop.permute.xlu0 %5618
      %5620 = vrot.lane.b32.xlu0 %v5405, 28
      %v5621 = vpop.permute.xlu0 %5620
      %5622 = vrot.lane.b32.xlu0 %v5415, 28
      %v5623 = vpop.permute.xlu0 %5622
      %5624 = vrot.lane.b32.xlu0 %v5425, 28
      %v5625 = vpop.permute.xlu0 %5624
      %5626 = vrot.lane.b32.xlu0 %v5435, 28
      %v5627 = vpop.permute.xlu0 %5626
      %5628 = vrot.lane.b32.xlu0 %v5445, 28
      %v5629 = vpop.permute.xlu0 %5628
      %5630 = vrot.lane.b32.xlu0 %v5455, 28
      %v5631 = vpop.permute.xlu0 %5630
      %5632 = vrot.lane.b32.xlu0 %v5465, 28
      %v5633 = vpop.permute.xlu0 %5632
      %5634 = vrot.lane.b32.xlu0 %v5475, 28
      %v5635 = vpop.permute.xlu0 %5634
      %5636 = vrot.lane.b32.xlu0 %v5485, 28
      %v5637 = vpop.permute.xlu0 %5636
      %5638 = vrot.lane.b32.xlu0 %v5495, 28
      %v5639 = vpop.permute.xlu0 %5638
      %vm5712 = vcmask 257248
      %5713 = vst.msk [vmem:[#allocation3] sm:$0xf] %vm5712, %v5497
      %5714 = vst.msk [vmem:[#allocation3 + $0x4] sm:$0xf] %vm5712, %v5499
      %5715 = vst.msk [vmem:[#allocation3 + $0x8] sm:$0xf] %vm5712, %v5501
      %5716 = vst.msk [vmem:[#allocation3 + $0xc] sm:$0xf] %vm5712, %v5503
      %5717 = vst.msk [vmem:[#allocation3 + $0x10] sm:$0xf] %vm5712, %v5505
      %5718 = vst.msk [vmem:[#allocation3 + $0x14] sm:$0xf] %vm5712, %v5507
      %5719 = vst.msk [vmem:[#allocation3 + $0x18] sm:$0xf] %vm5712, %v5509
      %5720 = vst.msk [vmem:[#allocation3 + $0x1c] sm:$0xf] %vm5712, %v5511
      %5721 = vst.msk [vmem:[#allocation3 + $0x20] sm:$0xf] %vm5712, %v5513
      %5722 = vst.msk [vmem:[#allocation3 + $0x24] sm:$0xf] %vm5712, %v5515
      %5723 = vst.msk [vmem:[#allocation3 + $0x28] sm:$0xf] %vm5712, %v5517
      %5724 = vst.msk [vmem:[#allocation3 + $0x2c] sm:$0xf] %vm5712, %v5519
      %5725 = vst.msk [vmem:[#allocation3 + $0x30] sm:$0xf] %vm5712, %v5521
      %5726 = vst.msk [vmem:[#allocation3 + $0x34] sm:$0xf] %vm5712, %v5523
      %5727 = vst.msk [vmem:[#allocation3 + $0x38] sm:$0xf] %vm5712, %v5525
      %5728 = vst.msk [vmem:[#allocation3 + $0x3c] sm:$0xf] %vm5712, %v5527
      %5729 = vst.msk [vmem:[#allocation3 + $0x40] sm:$0xf] %vm5712, %v5529
      %5730 = vst.msk [vmem:[#allocation3 + $0x44] sm:$0xf] %vm5712, %v5531
      %5731 = vst.msk [vmem:[#allocation3 + $0x48] sm:$0xf] %vm5712, %v5533
      %5732 = vst.msk [vmem:[#allocation3 + $0x4c] sm:$0xf] %vm5712, %v5535
      %5733 = vst.msk [vmem:[#allocation3 + $0x50] sm:$0xf] %vm5712, %v5537
      %5734 = vst.msk [vmem:[#allocation3 + $0x54] sm:$0xf] %vm5712, %v5539
      %5735 = vst.msk [vmem:[#allocation3 + $0x58] sm:$0xf] %vm5712, %v5541
      %5736 = vst.msk [vmem:[#allocation3 + $0x5c] sm:$0xf] %vm5712, %v5543
      %5737 = vst.msk [vmem:[#allocation3 + $0x60] sm:$0xf] %vm5712, %v5545
      %5738 = vst.msk [vmem:[#allocation3 + $0x64] sm:$0xf] %vm5712, %v5547
      %5739 = vst.msk [vmem:[#allocation3 + $0x68] sm:$0xf] %vm5712, %v5549
      %5740 = vst.msk [vmem:[#allocation3 + $0x6c] sm:$0xf] %vm5712, %v5551
      %5741 = vst.msk [vmem:[#allocation3 + $0x70] sm:$0xf] %vm5712, %v5553
      %5742 = vst.msk [vmem:[#allocation3 + $0x74] sm:$0xf] %vm5712, %v5555
      %5743 = vst.msk [vmem:[#allocation3 + $0x78] sm:$0xf] %vm5712, %v5557
      %5744 = vst.msk [vmem:[#allocation3 + $0x7c] sm:$0xf] %vm5712, %v5559
      %5745 = vst.msk [vmem:[#allocation3 + $0x80] sm:$0xf] %vm5712, %v5561
      %5746 = vst.msk [vmem:[#allocation3 + $0x84] sm:$0xf] %vm5712, %v5563
      %5747 = vst.msk [vmem:[#allocation3 + $0x88] sm:$0xf] %vm5712, %v5565
      %5748 = vst.msk [vmem:[#allocation3 + $0x8c] sm:$0xf] %vm5712, %v5567
      %5749 = vst.msk [vmem:[#allocation3 + $0x90] sm:$0xf] %vm5712, %v5569
      %5750 = vst.msk [vmem:[#allocation3 + $0x94] sm:$0xf] %vm5712, %v5571
      %5751 = vst.msk [vmem:[#allocation3 + $0x98] sm:$0xf] %vm5712, %v5573
      %5752 = vst.msk [vmem:[#allocation3 + $0x9c] sm:$0xf] %vm5712, %v5575
      %5753 = vst.msk [vmem:[#allocation3 + $0xa0] sm:$0xf] %vm5712, %v5577
      %5754 = vst.msk [vmem:[#allocation3 + $0xa4] sm:$0xf] %vm5712, %v5579
      %5755 = vst.msk [vmem:[#allocation3 + $0xa8] sm:$0xf] %vm5712, %v5581
      %5756 = vst.msk [vmem:[#allocation3 + $0xac] sm:$0xf] %vm5712, %v5583
      %5757 = vst.msk [vmem:[#allocation3 + $0xb0] sm:$0xf] %vm5712, %v5585
      %5758 = vst.msk [vmem:[#allocation3 + $0xb4] sm:$0xf] %vm5712, %v5587
      %5759 = vst.msk [vmem:[#allocation3 + $0xb8] sm:$0xf] %vm5712, %v5589
      %5760 = vst.msk [vmem:[#allocation3 + $0xbc] sm:$0xf] %vm5712, %v5591
      %5761 = vst.msk [vmem:[#allocation3 + $0xc0] sm:$0xf] %vm5712, %v5593
      %5762 = vst.msk [vmem:[#allocation3 + $0xc4] sm:$0xf] %vm5712, %v5595
      %5763 = vst.msk [vmem:[#allocation3 + $0xc8] sm:$0xf] %vm5712, %v5597
      %5764 = vst.msk [vmem:[#allocation3 + $0xcc] sm:$0xf] %vm5712, %v5599
      %5765 = vst.msk [vmem:[#allocation3 + $0xd0] sm:$0xf] %vm5712, %v5601
      %5766 = vst.msk [vmem:[#allocation3 + $0xd4] sm:$0xf] %vm5712, %v5603
      %5767 = vst.msk [vmem:[#allocation3 + $0xd8] sm:$0xf] %vm5712, %v5605
      %5768 = vst.msk [vmem:[#allocation3 + $0xdc] sm:$0xf] %vm5712, %v5607
      %5769 = vst.msk [vmem:[#allocation3 + $0xe0] sm:$0xf] %vm5712, %v5609
      %5770 = vst.msk [vmem:[#allocation3 + $0xe4] sm:$0xf] %vm5712, %v5611
      %5771 = vst.msk [vmem:[#allocation3 + $0xe8] sm:$0xf] %vm5712, %v5613
      %5772 = vst.msk [vmem:[#allocation3 + $0xec] sm:$0xf] %vm5712, %v5615
      %5773 = vst.msk [vmem:[#allocation3 + $0xf0] sm:$0xf] %vm5712, %v5617
      %5774 = vst.msk [vmem:[#allocation3 + $0xf4] sm:$0xf] %vm5712, %v5619
      %5775 = vst.msk [vmem:[#allocation3 + $0xf8] sm:$0xf] %vm5712, %v5621
      %5776 = vst.msk [vmem:[#allocation3 + $0xfc] sm:$0xf] %vm5712, %v5623
      %5777 = vst.msk [vmem:[#allocation3 + $0x100] sm:$0xf] %vm5712, %v5625
      %5778 = vst.msk [vmem:[#allocation3 + $0x104] sm:$0xf] %vm5712, %v5627
      %5779 = vst.msk [vmem:[#allocation3 + $0x108] sm:$0xf] %vm5712, %v5629
      %5780 = vst.msk [vmem:[#allocation3 + $0x10c] sm:$0xf] %vm5712, %v5631
      %5781 = vst.msk [vmem:[#allocation3 + $0x110] sm:$0xf] %vm5712, %v5633
      %5782 = vst.msk [vmem:[#allocation3 + $0x114] sm:$0xf] %vm5712, %v5635
      %5783 = vst.msk [vmem:[#allocation3 + $0x118] sm:$0xf] %vm5712, %v5637
      %5784 = vst.msk [vmem:[#allocation3 + $0x11c] sm:$0xf] %vm5712, %v5639
      %v5785 = vld [vmem:[#allocation2 + $0x10] sm:$0xe]
      %v5786 = vld [vmem:[#allocation2 + $0x14] sm:$0xf]
      %v5787 = vld [vmem:[#allocation2 + $0x18] sm:$0xf]
      %v5788 = vld [vmem:[#allocation2 + $0x1c] sm:$0xf]
      %v5789 = vld [vmem:[#allocation2 + $0x20] sm:$0xf]
      %v5790 = vld [vmem:[#allocation2 + $0x24] sm:$0xf]
      %v5791 = vld [vmem:[#allocation2 + $0x28] sm:$0xf]
      %v5792 = vld [vmem:[#allocation2 + $0x2c] sm:$0xf]
      %v5793 = vld [vmem:[#allocation2 + $0x30] sm:$0xf]
      %v5794 = vld [vmem:[#allocation2 + $0x34] sm:$0xf]
      %v5795 = vld [vmem:[#allocation2 + $0x38] sm:$0xf]
      %v5796 = vld [vmem:[#allocation2 + $0x3c] sm:$0xf]
      %v5797 = vld [vmem:[#allocation2 + $0x40] sm:$0xf]
      %v5798 = vld [vmem:[#allocation2 + $0x44] sm:$0xf]
      %v5799 = vld [vmem:[#allocation2 + $0x48] sm:$0xf]
      %v5800 = vld [vmem:[#allocation2 + $0x4c] sm:$0xf]
      %v5801 = vld [vmem:[#allocation2 + $0x50] sm:$0xf]
      %v5802 = vld [vmem:[#allocation2 + $0x54] sm:$0xf]
      %v5803 = vld [vmem:[#allocation2 + $0x58] sm:$0xf]
      %v5804 = vld [vmem:[#allocation2 + $0x5c] sm:$0xf]
      %v5805 = vld [vmem:[#allocation2 + $0x60] sm:$0xf]
      %v5806 = vld [vmem:[#allocation2 + $0x64] sm:$0xf]
      %v5807 = vld [vmem:[#allocation2 + $0x68] sm:$0xf]
      %v5808 = vld [vmem:[#allocation2 + $0x6c] sm:$0xf]
      %v5809 = vld [vmem:[#allocation2 + $0x70] sm:$0xf]
      %v5810 = vld [vmem:[#allocation2 + $0x74] sm:$0xf]
      %v5811 = vld [vmem:[#allocation2 + $0x78] sm:$0xf]
      %v5812 = vld [vmem:[#allocation2 + $0x7c] sm:$0xf]
      %v5813 = vld [vmem:[#allocation2 + $0x80] sm:$0xf]
      %v5814 = vld [vmem:[#allocation2 + $0x84] sm:$0xf]
      %v5815 = vld [vmem:[#allocation2 + $0x88] sm:$0xf]
      %v5816 = vld [vmem:[#allocation2 + $0x8c] sm:$0xf]
      %v5817 = vld [vmem:[#allocation2 + $0x90] sm:$0xf]
      %v5818 = vld [vmem:[#allocation2 + $0x94] sm:$0xf]
      %v5819 = vld [vmem:[#allocation2 + $0x98] sm:$0xf]
      %v5820 = vld [vmem:[#allocation2 + $0x9c] sm:$0xf]
      %v5821 = vld [vmem:[#allocation2 + $0xa0] sm:$0xf]
      %v5822 = vld [vmem:[#allocation2 + $0xa4] sm:$0xf]
      %v5823 = vld [vmem:[#allocation2 + $0xa8] sm:$0xf]
      %v5824 = vld [vmem:[#allocation2 + $0xac] sm:$0xf]
      %v5825 = vld [vmem:[#allocation2 + $0xb0] sm:$0xf]
      %v5826 = vld [vmem:[#allocation2 + $0xb4] sm:$0xf]
      %v5827 = vld [vmem:[#allocation2 + $0xb8] sm:$0xf]
      %v5828 = vld [vmem:[#allocation2 + $0xbc] sm:$0xf]
      %v5829 = vld [vmem:[#allocation2 + $0xc0] sm:$0xf]
      %v5830 = vld [vmem:[#allocation2 + $0xc4] sm:$0xf]
      %v5831 = vld [vmem:[#allocation2 + $0xc8] sm:$0xf]
      %v5832 = vld [vmem:[#allocation2 + $0xcc] sm:$0xf]
      %v5833 = vld [vmem:[#allocation2 + $0xd0] sm:$0xf]
      %v5834 = vld [vmem:[#allocation2 + $0xd4] sm:$0xf]
      %v5835 = vld [vmem:[#allocation2 + $0xd8] sm:$0xf]
      %v5836 = vld [vmem:[#allocation2 + $0xdc] sm:$0xf]
      %v5837 = vld [vmem:[#allocation2 + $0xe0] sm:$0xf]
      %v5838 = vld [vmem:[#allocation2 + $0xe4] sm:$0xf]
      %v5839 = vld [vmem:[#allocation2 + $0xe8] sm:$0xf]
      %v5840 = vld [vmem:[#allocation2 + $0xec] sm:$0xf]
      %v5841 = vld [vmem:[#allocation2 + $0xf0] sm:$0xf]
      %v5842 = vld [vmem:[#allocation2 + $0xf4] sm:$0xf]
      %v5843 = vld [vmem:[#allocation2 + $0xf8] sm:$0xf]
      %v5844 = vld [vmem:[#allocation2 + $0xfc] sm:$0xf]
      %v5845 = vld [vmem:[#allocation2 + $0x100] sm:$0xf]
      %v5846 = vld [vmem:[#allocation2 + $0x104] sm:$0xf]
      %v5847 = vld [vmem:[#allocation2 + $0x108] sm:$0xf]
      %v5848 = vld [vmem:[#allocation2 + $0x10c] sm:$0xf]
      %v5849 = vld [vmem:[#allocation2 + $0x110] sm:$0xf]
      %v5850 = vld [vmem:[#allocation2 + $0x114] sm:$0xf]
      %v5851 = vld [vmem:[#allocation2 + $0x118] sm:$0xf]
      %v5852 = vld [vmem:[#allocation2 + $0x11c] sm:$0xf]
      %v5853 = vld [vmem:[#allocation2 + $0x120] sm:$0xf]
      %v5854 = vld [vmem:[#allocation2 + $0x124] sm:$0xf]
      %v5855 = vld [vmem:[#allocation2 + $0x128] sm:$0xf]
      %v5856 = vld [vmem:[#allocation2 + $0x12c] sm:$0xf]
      %v5857 = vld [vmem:[#allocation2 + $0x130] sm:$0x1]
      %v5931 = vrot.slane %v5785, 5
      %v5932 = vrot.slane %v5931, 4
      %v5933 = vrot.slane %v5786, 5
      %v5934 = vsel %vm1588, %v5932, %v5933
      %v5935 = vrot.slane %v5933, 4
      %v5936 = vrot.slane %v5787, 5
      %v5937 = vsel %vm1588, %v5935, %v5936
      %v5938 = vrot.slane %v5936, 4
      %v5939 = vrot.slane %v5788, 5
      %v5940 = vsel %vm1588, %v5938, %v5939
      %v5941 = vrot.slane %v5939, 4
      %v5942 = vrot.slane %v5789, 5
      %v5943 = vsel %vm1588, %v5941, %v5942
      %v5944 = vrot.slane %v5942, 4
      %v5945 = vrot.slane %v5790, 5
      %v5946 = vsel %vm1588, %v5944, %v5945
      %v5947 = vrot.slane %v5945, 4
      %v5948 = vrot.slane %v5791, 5
      %v5949 = vsel %vm1588, %v5947, %v5948
      %v5950 = vrot.slane %v5948, 4
      %v5951 = vrot.slane %v5792, 5
      %v5952 = vsel %vm1588, %v5950, %v5951
      %v5953 = vrot.slane %v5951, 4
      %v5954 = vrot.slane %v5793, 5
      %v5955 = vsel %vm1588, %v5953, %v5954
      %v5956 = vrot.slane %v5954, 4
      %v5957 = vrot.slane %v5794, 5
      %v5958 = vsel %vm1588, %v5956, %v5957
      %v5959 = vrot.slane %v5957, 4
      %v5960 = vrot.slane %v5795, 5
      %v5961 = vsel %vm1588, %v5959, %v5960
      %v5962 = vrot.slane %v5960, 4
      %v5963 = vrot.slane %v5796, 5
      %v5964 = vsel %vm1588, %v5962, %v5963
      %v5965 = vrot.slane %v5963, 4
      %v5966 = vrot.slane %v5797, 5
      %v5967 = vsel %vm1588, %v5965, %v5966
      %v5968 = vrot.slane %v5966, 4
      %v5969 = vrot.slane %v5798, 5
      %v5970 = vsel %vm1588, %v5968, %v5969
      %v5971 = vrot.slane %v5969, 4
      %v5972 = vrot.slane %v5799, 5
      %v5973 = vsel %vm1588, %v5971, %v5972
      %v5974 = vrot.slane %v5972, 4
      %v5975 = vrot.slane %v5800, 5
      %v5976 = vsel %vm1588, %v5974, %v5975
      %v5977 = vrot.slane %v5975, 4
      %v5978 = vrot.slane %v5801, 5
      %v5979 = vsel %vm1588, %v5977, %v5978
      %v5980 = vrot.slane %v5978, 4
      %v5981 = vrot.slane %v5802, 5
      %v5982 = vsel %vm1588, %v5980, %v5981
      %v5983 = vrot.slane %v5981, 4
      %v5984 = vrot.slane %v5803, 5
      %v5985 = vsel %vm1588, %v5983, %v5984
      %v5986 = vrot.slane %v5984, 4
      %v5987 = vrot.slane %v5804, 5
      %v5988 = vsel %vm1588, %v5986, %v5987
      %v5989 = vrot.slane %v5987, 4
      %v5990 = vrot.slane %v5805, 5
      %v5991 = vsel %vm1588, %v5989, %v5990
      %v5992 = vrot.slane %v5990, 4
      %v5993 = vrot.slane %v5806, 5
      %v5994 = vsel %vm1588, %v5992, %v5993
      %v5995 = vrot.slane %v5993, 4
      %v5996 = vrot.slane %v5807, 5
      %v5997 = vsel %vm1588, %v5995, %v5996
      %v5998 = vrot.slane %v5996, 4
      %v5999 = vrot.slane %v5808, 5
      %v6000 = vsel %vm1588, %v5998, %v5999
      %v6001 = vrot.slane %v5999, 4
      %v6002 = vrot.slane %v5809, 5
      %v6003 = vsel %vm1588, %v6001, %v6002
      %v6004 = vrot.slane %v6002, 4
      %v6005 = vrot.slane %v5810, 5
      %v6006 = vsel %vm1588, %v6004, %v6005
      %v6007 = vrot.slane %v6005, 4
      %v6008 = vrot.slane %v5811, 5
      %v6009 = vsel %vm1588, %v6007, %v6008
      %v6010 = vrot.slane %v6008, 4
      %v6011 = vrot.slane %v5812, 5
      %v6012 = vsel %vm1588, %v6010, %v6011
      %v6013 = vrot.slane %v6011, 4
      %v6014 = vrot.slane %v5813, 5
      %v6015 = vsel %vm1588, %v6013, %v6014
      %v6016 = vrot.slane %v6014, 4
      %v6017 = vrot.slane %v5814, 5
      %v6018 = vsel %vm1588, %v6016, %v6017
      %v6019 = vrot.slane %v6017, 4
      %v6020 = vrot.slane %v5815, 5
      %v6021 = vsel %vm1588, %v6019, %v6020
      %v6022 = vrot.slane %v6020, 4
      %v6023 = vrot.slane %v5816, 5
      %v6024 = vsel %vm1588, %v6022, %v6023
      %v6025 = vrot.slane %v6023, 4
      %v6026 = vrot.slane %v5817, 5
      %v6027 = vsel %vm1588, %v6025, %v6026
      %v6028 = vrot.slane %v6026, 4
      %v6029 = vrot.slane %v5818, 5
      %v6030 = vsel %vm1588, %v6028, %v6029
      %v6031 = vrot.slane %v6029, 4
      %v6032 = vrot.slane %v5819, 5
      %v6033 = vsel %vm1588, %v6031, %v6032
      %v6034 = vrot.slane %v6032, 4
      %v6035 = vrot.slane %v5820, 5
      %v6036 = vsel %vm1588, %v6034, %v6035
      %v6037 = vrot.slane %v6035, 4
      %v6038 = vrot.slane %v5821, 5
      %v6039 = vsel %vm1588, %v6037, %v6038
      %v6040 = vrot.slane %v6038, 4
      %v6041 = vrot.slane %v5822, 5
      %v6042 = vsel %vm1588, %v6040, %v6041
      %v6043 = vrot.slane %v6041, 4
      %v6044 = vrot.slane %v5823, 5
      %v6045 = vsel %vm1588, %v6043, %v6044
      %v6046 = vrot.slane %v6044, 4
      %v6047 = vrot.slane %v5824, 5
      %v6048 = vsel %vm1588, %v6046, %v6047
      %v6049 = vrot.slane %v6047, 4
      %v6050 = vrot.slane %v5825, 5
      %v6051 = vsel %vm1588, %v6049, %v6050
      %v6052 = vrot.slane %v6050, 4
      %v6053 = vrot.slane %v5826, 5
      %v6054 = vsel %vm1588, %v6052, %v6053
      %v6055 = vrot.slane %v6053, 4
      %v6056 = vrot.slane %v5827, 5
      %v6057 = vsel %vm1588, %v6055, %v6056
      %v6058 = vrot.slane %v6056, 4
      %v6059 = vrot.slane %v5828, 5
      %v6060 = vsel %vm1588, %v6058, %v6059
      %v6061 = vrot.slane %v6059, 4
      %v6062 = vrot.slane %v5829, 5
      %v6063 = vsel %vm1588, %v6061, %v6062
      %v6064 = vrot.slane %v6062, 4
      %v6065 = vrot.slane %v5830, 5
      %v6066 = vsel %vm1588, %v6064, %v6065
      %v6067 = vrot.slane %v6065, 4
      %v6068 = vrot.slane %v5831, 5
      %v6069 = vsel %vm1588, %v6067, %v6068
      %v6070 = vrot.slane %v6068, 4
      %v6071 = vrot.slane %v5832, 5
      %v6072 = vsel %vm1588, %v6070, %v6071
      %v6073 = vrot.slane %v6071, 4
      %v6074 = vrot.slane %v5833, 5
      %v6075 = vsel %vm1588, %v6073, %v6074
      %v6076 = vrot.slane %v6074, 4
      %v6077 = vrot.slane %v5834, 5
      %v6078 = vsel %vm1588, %v6076, %v6077
      %v6079 = vrot.slane %v6077, 4
      %v6080 = vrot.slane %v5835, 5
      %v6081 = vsel %vm1588, %v6079, %v6080
      %v6082 = vrot.slane %v6080, 4
      %v6083 = vrot.slane %v5836, 5
      %v6084 = vsel %vm1588, %v6082, %v6083
      %v6085 = vrot.slane %v6083, 4
      %v6086 = vrot.slane %v5837, 5
      %v6087 = vsel %vm1588, %v6085, %v6086
      %v6088 = vrot.slane %v6086, 4
      %v6089 = vrot.slane %v5838, 5
      %v6090 = vsel %vm1588, %v6088, %v6089
      %v6091 = vrot.slane %v6089, 4
      %v6092 = vrot.slane %v5839, 5
      %v6093 = vsel %vm1588, %v6091, %v6092
      %v6094 = vrot.slane %v6092, 4
      %v6095 = vrot.slane %v5840, 5
      %v6096 = vsel %vm1588, %v6094, %v6095
      %v6097 = vrot.slane %v6095, 4
      %v6098 = vrot.slane %v5841, 5
      %v6099 = vsel %vm1588, %v6097, %v6098
      %v6100 = vrot.slane %v6098, 4
      %v6101 = vrot.slane %v5842, 5
      %v6102 = vsel %vm1588, %v6100, %v6101
      %v6103 = vrot.slane %v6101, 4
      %v6104 = vrot.slane %v5843, 5
      %v6105 = vsel %vm1588, %v6103, %v6104
      %v6106 = vrot.slane %v6104, 4
      %v6107 = vrot.slane %v5844, 5
      %v6108 = vsel %vm1588, %v6106, %v6107
      %v6109 = vrot.slane %v6107, 4
      %v6110 = vrot.slane %v5845, 5
      %v6111 = vsel %vm1588, %v6109, %v6110
      %v6112 = vrot.slane %v6110, 4
      %v6113 = vrot.slane %v5846, 5
      %v6114 = vsel %vm1588, %v6112, %v6113
      %v6115 = vrot.slane %v6113, 4
      %v6116 = vrot.slane %v5847, 5
      %v6117 = vsel %vm1588, %v6115, %v6116
      %v6118 = vrot.slane %v6116, 4
      %v6119 = vrot.slane %v5848, 5
      %v6120 = vsel %vm1588, %v6118, %v6119
      %v6121 = vrot.slane %v6119, 4
      %v6122 = vrot.slane %v5849, 5
      %v6123 = vsel %vm1588, %v6121, %v6122
      %v6124 = vrot.slane %v6122, 4
      %v6125 = vrot.slane %v5850, 5
      %v6126 = vsel %vm1588, %v6124, %v6125
      %v6127 = vrot.slane %v6125, 4
      %v6128 = vrot.slane %v5851, 5
      %v6129 = vsel %vm1588, %v6127, %v6128
      %v6130 = vrot.slane %v6128, 4
      %v6131 = vrot.slane %v5852, 5
      %v6132 = vsel %vm1588, %v6130, %v6131
      %v6133 = vrot.slane %v6131, 4
      %v6134 = vrot.slane %v5853, 5
      %v6135 = vsel %vm1588, %v6133, %v6134
      %v6136 = vrot.slane %v6134, 4
      %v6137 = vrot.slane %v5854, 5
      %v6138 = vsel %vm1588, %v6136, %v6137
      %v6139 = vrot.slane %v6137, 4
      %v6140 = vrot.slane %v5855, 5
      %v6141 = vsel %vm1588, %v6139, %v6140
      %v6142 = vrot.slane %v6140, 4
      %v6143 = vrot.slane %v5856, 5
      %v6144 = vsel %vm1588, %v6142, %v6143
      %v6145 = vrot.slane %v6143, 4
      %v6146 = vrot.slane %v5857, 5
      %v6147 = vsel %vm1588, %v6145, %v6146
      %6148 = vrot.lane.b32.xlu0 %v5934, 32
      %v6149 = vpop.permute.xlu0 %6148
      %6150 = vrot.lane.b32.xlu0 %v5937, 32
      %v6151 = vpop.permute.xlu0 %6150
      %6152 = vrot.lane.b32.xlu0 %v5940, 32
      %v6153 = vpop.permute.xlu0 %6152
      %6154 = vrot.lane.b32.xlu0 %v5943, 32
      %v6155 = vpop.permute.xlu0 %6154
      %6156 = vrot.lane.b32.xlu0 %v5946, 32
      %v6157 = vpop.permute.xlu0 %6156
      %6158 = vrot.lane.b32.xlu0 %v5949, 32
      %v6159 = vpop.permute.xlu0 %6158
      %6160 = vrot.lane.b32.xlu0 %v5952, 32
      %v6161 = vpop.permute.xlu0 %6160
      %6162 = vrot.lane.b32.xlu0 %v5955, 32
      %v6163 = vpop.permute.xlu0 %6162
      %6164 = vrot.lane.b32.xlu0 %v5958, 32
      %v6165 = vpop.permute.xlu0 %6164
      %6166 = vrot.lane.b32.xlu0 %v5961, 32
      %v6167 = vpop.permute.xlu0 %6166
      %6168 = vrot.lane.b32.xlu0 %v5964, 32
      %v6169 = vpop.permute.xlu0 %6168
      %6170 = vrot.lane.b32.xlu0 %v5967, 32
      %v6171 = vpop.permute.xlu0 %6170
      %6172 = vrot.lane.b32.xlu0 %v5970, 32
      %v6173 = vpop.permute.xlu0 %6172
      %6174 = vrot.lane.b32.xlu0 %v5973, 32
      %v6175 = vpop.permute.xlu0 %6174
      %6176 = vrot.lane.b32.xlu0 %v5976, 32
      %v6177 = vpop.permute.xlu0 %6176
      %6178 = vrot.lane.b32.xlu0 %v5979, 32
      %v6179 = vpop.permute.xlu0 %6178
      %6180 = vrot.lane.b32.xlu0 %v5982, 32
      %v6181 = vpop.permute.xlu0 %6180
      %6182 = vrot.lane.b32.xlu0 %v5985, 32
      %v6183 = vpop.permute.xlu0 %6182
      %6184 = vrot.lane.b32.xlu0 %v5988, 32
      %v6185 = vpop.permute.xlu0 %6184
      %6186 = vrot.lane.b32.xlu0 %v5991, 32
      %v6187 = vpop.permute.xlu0 %6186
      %6188 = vrot.lane.b32.xlu0 %v5994, 32
      %v6189 = vpop.permute.xlu0 %6188
      %6190 = vrot.lane.b32.xlu0 %v5997, 32
      %v6191 = vpop.permute.xlu0 %6190
      %6192 = vrot.lane.b32.xlu0 %v6000, 32
      %v6193 = vpop.permute.xlu0 %6192
      %6194 = vrot.lane.b32.xlu0 %v6003, 32
      %v6195 = vpop.permute.xlu0 %6194
      %6196 = vrot.lane.b32.xlu0 %v6006, 32
      %v6197 = vpop.permute.xlu0 %6196
      %6198 = vrot.lane.b32.xlu0 %v6009, 32
      %v6199 = vpop.permute.xlu0 %6198
      %6200 = vrot.lane.b32.xlu0 %v6012, 32
      %v6201 = vpop.permute.xlu0 %6200
      %6202 = vrot.lane.b32.xlu0 %v6015, 32
      %v6203 = vpop.permute.xlu0 %6202
      %6204 = vrot.lane.b32.xlu0 %v6018, 32
      %v6205 = vpop.permute.xlu0 %6204
      %6206 = vrot.lane.b32.xlu0 %v6021, 32
      %v6207 = vpop.permute.xlu0 %6206
      %6208 = vrot.lane.b32.xlu0 %v6024, 32
      %v6209 = vpop.permute.xlu0 %6208
      %6210 = vrot.lane.b32.xlu0 %v6027, 32
      %v6211 = vpop.permute.xlu0 %6210
      %6212 = vrot.lane.b32.xlu0 %v6030, 32
      %v6213 = vpop.permute.xlu0 %6212
      %6214 = vrot.lane.b32.xlu0 %v6033, 32
      %v6215 = vpop.permute.xlu0 %6214
      %6216 = vrot.lane.b32.xlu0 %v6036, 32
      %v6217 = vpop.permute.xlu0 %6216
      %6218 = vrot.lane.b32.xlu0 %v6039, 32
      %v6219 = vpop.permute.xlu0 %6218
      %6220 = vrot.lane.b32.xlu0 %v6042, 32
      %v6221 = vpop.permute.xlu0 %6220
      %6222 = vrot.lane.b32.xlu0 %v6045, 32
      %v6223 = vpop.permute.xlu0 %6222
      %6224 = vrot.lane.b32.xlu0 %v6048, 32
      %v6225 = vpop.permute.xlu0 %6224
      %6226 = vrot.lane.b32.xlu0 %v6051, 32
      %v6227 = vpop.permute.xlu0 %6226
      %6228 = vrot.lane.b32.xlu0 %v6054, 32
      %v6229 = vpop.permute.xlu0 %6228
      %6230 = vrot.lane.b32.xlu0 %v6057, 32
      %v6231 = vpop.permute.xlu0 %6230
      %6232 = vrot.lane.b32.xlu0 %v6060, 32
      %v6233 = vpop.permute.xlu0 %6232
      %6234 = vrot.lane.b32.xlu0 %v6063, 32
      %v6235 = vpop.permute.xlu0 %6234
      %6236 = vrot.lane.b32.xlu0 %v6066, 32
      %v6237 = vpop.permute.xlu0 %6236
      %6238 = vrot.lane.b32.xlu0 %v6069, 32
      %v6239 = vpop.permute.xlu0 %6238
      %6240 = vrot.lane.b32.xlu0 %v6072, 32
      %v6241 = vpop.permute.xlu0 %6240
      %6242 = vrot.lane.b32.xlu0 %v6075, 32
      %v6243 = vpop.permute.xlu0 %6242
      %6244 = vrot.lane.b32.xlu0 %v6078, 32
      %v6245 = vpop.permute.xlu0 %6244
      %6246 = vrot.lane.b32.xlu0 %v6081, 32
      %v6247 = vpop.permute.xlu0 %6246
      %6248 = vrot.lane.b32.xlu0 %v6084, 32
      %v6249 = vpop.permute.xlu0 %6248
      %6250 = vrot.lane.b32.xlu0 %v6087, 32
      %v6251 = vpop.permute.xlu0 %6250
      %6252 = vrot.lane.b32.xlu0 %v6090, 32
      %v6253 = vpop.permute.xlu0 %6252
      %6254 = vrot.lane.b32.xlu0 %v6093, 32
      %v6255 = vpop.permute.xlu0 %6254
      %6256 = vrot.lane.b32.xlu0 %v6096, 32
      %v6257 = vpop.permute.xlu0 %6256
      %6258 = vrot.lane.b32.xlu0 %v6099, 32
      %v6259 = vpop.permute.xlu0 %6258
      %6260 = vrot.lane.b32.xlu0 %v6102, 32
      %v6261 = vpop.permute.xlu0 %6260
      %6262 = vrot.lane.b32.xlu0 %v6105, 32
      %v6263 = vpop.permute.xlu0 %6262
      %6264 = vrot.lane.b32.xlu0 %v6108, 32
      %v6265 = vpop.permute.xlu0 %6264
      %6266 = vrot.lane.b32.xlu0 %v6111, 32
      %v6267 = vpop.permute.xlu0 %6266
      %6268 = vrot.lane.b32.xlu0 %v6114, 32
      %v6269 = vpop.permute.xlu0 %6268
      %6270 = vrot.lane.b32.xlu0 %v6117, 32
      %v6271 = vpop.permute.xlu0 %6270
      %6272 = vrot.lane.b32.xlu0 %v6120, 32
      %v6273 = vpop.permute.xlu0 %6272
      %6274 = vrot.lane.b32.xlu0 %v6123, 32
      %v6275 = vpop.permute.xlu0 %6274
      %6276 = vrot.lane.b32.xlu0 %v6126, 32
      %v6277 = vpop.permute.xlu0 %6276
      %6278 = vrot.lane.b32.xlu0 %v6129, 32
      %v6279 = vpop.permute.xlu0 %6278
      %6280 = vrot.lane.b32.xlu0 %v6132, 32
      %v6281 = vpop.permute.xlu0 %6280
      %6282 = vrot.lane.b32.xlu0 %v6135, 32
      %v6283 = vpop.permute.xlu0 %6282
      %6284 = vrot.lane.b32.xlu0 %v6138, 32
      %v6285 = vpop.permute.xlu0 %6284
      %6286 = vrot.lane.b32.xlu0 %v6141, 32
      %v6287 = vpop.permute.xlu0 %6286
      %6288 = vrot.lane.b32.xlu0 %v6144, 32
      %v6289 = vpop.permute.xlu0 %6288
      %6290 = vrot.lane.b32.xlu0 %v6147, 32
      %v6291 = vpop.permute.xlu0 %6290
      %vm6364 = vcmask 290048
      %6365 = vst.msk [vmem:[#allocation3] sm:$0xf] %vm6364, %v6149
      %6366 = vst.msk [vmem:[#allocation3 + $0x4] sm:$0xf] %vm6364, %v6151
      %6367 = vst.msk [vmem:[#allocation3 + $0x8] sm:$0xf] %vm6364, %v6153
      %6368 = vst.msk [vmem:[#allocation3 + $0xc] sm:$0xf] %vm6364, %v6155
      %6369 = vst.msk [vmem:[#allocation3 + $0x10] sm:$0xf] %vm6364, %v6157
      %6370 = vst.msk [vmem:[#allocation3 + $0x14] sm:$0xf] %vm6364, %v6159
      %6371 = vst.msk [vmem:[#allocation3 + $0x18] sm:$0xf] %vm6364, %v6161
      %6372 = vst.msk [vmem:[#allocation3 + $0x1c] sm:$0xf] %vm6364, %v6163
      %6373 = vst.msk [vmem:[#allocation3 + $0x20] sm:$0xf] %vm6364, %v6165
      %6374 = vst.msk [vmem:[#allocation3 + $0x24] sm:$0xf] %vm6364, %v6167
      %6375 = vst.msk [vmem:[#allocation3 + $0x28] sm:$0xf] %vm6364, %v6169
      %6376 = vst.msk [vmem:[#allocation3 + $0x2c] sm:$0xf] %vm6364, %v6171
      %6377 = vst.msk [vmem:[#allocation3 + $0x30] sm:$0xf] %vm6364, %v6173
      %6378 = vst.msk [vmem:[#allocation3 + $0x34] sm:$0xf] %vm6364, %v6175
      %6379 = vst.msk [vmem:[#allocation3 + $0x38] sm:$0xf] %vm6364, %v6177
      %6380 = vst.msk [vmem:[#allocation3 + $0x3c] sm:$0xf] %vm6364, %v6179
      %6381 = vst.msk [vmem:[#allocation3 + $0x40] sm:$0xf] %vm6364, %v6181
      %6382 = vst.msk [vmem:[#allocation3 + $0x44] sm:$0xf] %vm6364, %v6183
      %6383 = vst.msk [vmem:[#allocation3 + $0x48] sm:$0xf] %vm6364, %v6185
      %6384 = vst.msk [vmem:[#allocation3 + $0x4c] sm:$0xf] %vm6364, %v6187
      %6385 = vst.msk [vmem:[#allocation3 + $0x50] sm:$0xf] %vm6364, %v6189
      %6386 = vst.msk [vmem:[#allocation3 + $0x54] sm:$0xf] %vm6364, %v6191
      %6387 = vst.msk [vmem:[#allocation3 + $0x58] sm:$0xf] %vm6364, %v6193
      %6388 = vst.msk [vmem:[#allocation3 + $0x5c] sm:$0xf] %vm6364, %v6195
      %6389 = vst.msk [vmem:[#allocation3 + $0x60] sm:$0xf] %vm6364, %v6197
      %6390 = vst.msk [vmem:[#allocation3 + $0x64] sm:$0xf] %vm6364, %v6199
      %6391 = vst.msk [vmem:[#allocation3 + $0x68] sm:$0xf] %vm6364, %v6201
      %6392 = vst.msk [vmem:[#allocation3 + $0x6c] sm:$0xf] %vm6364, %v6203
      %6393 = vst.msk [vmem:[#allocation3 + $0x70] sm:$0xf] %vm6364, %v6205
      %6394 = vst.msk [vmem:[#allocation3 + $0x74] sm:$0xf] %vm6364, %v6207
      %6395 = vst.msk [vmem:[#allocation3 + $0x78] sm:$0xf] %vm6364, %v6209
      %6396 = vst.msk [vmem:[#allocation3 + $0x7c] sm:$0xf] %vm6364, %v6211
      %6397 = vst.msk [vmem:[#allocation3 + $0x80] sm:$0xf] %vm6364, %v6213
      %6398 = vst.msk [vmem:[#allocation3 + $0x84] sm:$0xf] %vm6364, %v6215
      %6399 = vst.msk [vmem:[#allocation3 + $0x88] sm:$0xf] %vm6364, %v6217
      %6400 = vst.msk [vmem:[#allocation3 + $0x8c] sm:$0xf] %vm6364, %v6219
      %6401 = vst.msk [vmem:[#allocation3 + $0x90] sm:$0xf] %vm6364, %v6221
      %6402 = vst.msk [vmem:[#allocation3 + $0x94] sm:$0xf] %vm6364, %v6223
      %6403 = vst.msk [vmem:[#allocation3 + $0x98] sm:$0xf] %vm6364, %v6225
      %6404 = vst.msk [vmem:[#allocation3 + $0x9c] sm:$0xf] %vm6364, %v6227
      %6405 = vst.msk [vmem:[#allocation3 + $0xa0] sm:$0xf] %vm6364, %v6229
      %6406 = vst.msk [vmem:[#allocation3 + $0xa4] sm:$0xf] %vm6364, %v6231
      %6407 = vst.msk [vmem:[#allocation3 + $0xa8] sm:$0xf] %vm6364, %v6233
      %6408 = vst.msk [vmem:[#allocation3 + $0xac] sm:$0xf] %vm6364, %v6235
      %6409 = vst.msk [vmem:[#allocation3 + $0xb0] sm:$0xf] %vm6364, %v6237
      %6410 = vst.msk [vmem:[#allocation3 + $0xb4] sm:$0xf] %vm6364, %v6239
      %6411 = vst.msk [vmem:[#allocation3 + $0xb8] sm:$0xf] %vm6364, %v6241
      %6412 = vst.msk [vmem:[#allocation3 + $0xbc] sm:$0xf] %vm6364, %v6243
      %6413 = vst.msk [vmem:[#allocation3 + $0xc0] sm:$0xf] %vm6364, %v6245
      %6414 = vst.msk [vmem:[#allocation3 + $0xc4] sm:$0xf] %vm6364, %v6247
      %6415 = vst.msk [vmem:[#allocation3 + $0xc8] sm:$0xf] %vm6364, %v6249
      %6416 = vst.msk [vmem:[#allocation3 + $0xcc] sm:$0xf] %vm6364, %v6251
      %6417 = vst.msk [vmem:[#allocation3 + $0xd0] sm:$0xf] %vm6364, %v6253
      %6418 = vst.msk [vmem:[#allocation3 + $0xd4] sm:$0xf] %vm6364, %v6255
      %6419 = vst.msk [vmem:[#allocation3 + $0xd8] sm:$0xf] %vm6364, %v6257
      %6420 = vst.msk [vmem:[#allocation3 + $0xdc] sm:$0xf] %vm6364, %v6259
      %6421 = vst.msk [vmem:[#allocation3 + $0xe0] sm:$0xf] %vm6364, %v6261
      %6422 = vst.msk [vmem:[#allocation3 + $0xe4] sm:$0xf] %vm6364, %v6263
      %6423 = vst.msk [vmem:[#allocation3 + $0xe8] sm:$0xf] %vm6364, %v6265
      %6424 = vst.msk [vmem:[#allocation3 + $0xec] sm:$0xf] %vm6364, %v6267
      %6425 = vst.msk [vmem:[#allocation3 + $0xf0] sm:$0xf] %vm6364, %v6269
      %6426 = vst.msk [vmem:[#allocation3 + $0xf4] sm:$0xf] %vm6364, %v6271
      %6427 = vst.msk [vmem:[#allocation3 + $0xf8] sm:$0xf] %vm6364, %v6273
      %6428 = vst.msk [vmem:[#allocation3 + $0xfc] sm:$0xf] %vm6364, %v6275
      %6429 = vst.msk [vmem:[#allocation3 + $0x100] sm:$0xf] %vm6364, %v6277
      %6430 = vst.msk [vmem:[#allocation3 + $0x104] sm:$0xf] %vm6364, %v6279
      %6431 = vst.msk [vmem:[#allocation3 + $0x108] sm:$0xf] %vm6364, %v6281
      %6432 = vst.msk [vmem:[#allocation3 + $0x10c] sm:$0xf] %vm6364, %v6283
      %6433 = vst.msk [vmem:[#allocation3 + $0x110] sm:$0xf] %vm6364, %v6285
      %6434 = vst.msk [vmem:[#allocation3 + $0x114] sm:$0xf] %vm6364, %v6287
      %6435 = vst.msk [vmem:[#allocation3 + $0x118] sm:$0xf] %vm6364, %v6289
      %6436 = vst.msk [vmem:[#allocation3 + $0x11c] sm:$0xf] %vm6364, %v6291
    $region21: #{tpu_custom_call.1} parent=1 // pred_fallthru
      _
    %v6437 = vld [vmem:[#allocation3] sm:$0xf]
    %v6438 = vld [vmem:[#allocation3 + $0x4] sm:$0xf]
    %v6439 = vld [vmem:[#allocation3 + $0x8] sm:$0xf]
    %v6440 = vld [vmem:[#allocation3 + $0xc] sm:$0xf]
    %v6441 = vld [vmem:[#allocation3 + $0x10] sm:$0xf]
    %v6442 = vld [vmem:[#allocation3 + $0x14] sm:$0xf]
    %v6443 = vld [vmem:[#allocation3 + $0x18] sm:$0xf]
    %v6444 = vld [vmem:[#allocation3 + $0x1c] sm:$0xf]
    %v6445 = vld [vmem:[#allocation3 + $0x20] sm:$0xf]
    %v6446 = vld [vmem:[#allocation3 + $0x24] sm:$0xf]
    %v6447 = vld [vmem:[#allocation3 + $0x28] sm:$0xf]
    %v6448 = vld [vmem:[#allocation3 + $0x2c] sm:$0xf]
    %v6449 = vld [vmem:[#allocation3 + $0x30] sm:$0xf]
    %v6450 = vld [vmem:[#allocation3 + $0x34] sm:$0xf]
    %v6451 = vld [vmem:[#allocation3 + $0x38] sm:$0xf]
    %v6452 = vld [vmem:[#allocation3 + $0x3c] sm:$0xf]
    %v6453 = vld [vmem:[#allocation3 + $0x40] sm:$0xf]
    %v6454 = vld [vmem:[#allocation3 + $0x44] sm:$0xf]
    %v6455 = vld [vmem:[#allocation3 + $0x48] sm:$0xf]
    %v6456 = vld [vmem:[#allocation3 + $0x4c] sm:$0xf]
    %v6457 = vld [vmem:[#allocation3 + $0x50] sm:$0xf]
    %v6458 = vld [vmem:[#allocation3 + $0x54] sm:$0xf]
    %v6459 = vld [vmem:[#allocation3 + $0x58] sm:$0xf]
    %v6460 = vld [vmem:[#allocation3 + $0x5c] sm:$0xf]
    %v6461 = vld [vmem:[#allocation3 + $0x60] sm:$0xf]
    %v6462 = vld [vmem:[#allocation3 + $0x64] sm:$0xf]
    %v6463 = vld [vmem:[#allocation3 + $0x68] sm:$0xf]
    %v6464 = vld [vmem:[#allocation3 + $0x6c] sm:$0xf]
    %v6465 = vld [vmem:[#allocation3 + $0x70] sm:$0xf]
    %v6466 = vld [vmem:[#allocation3 + $0x74] sm:$0xf]
    %v6467 = vld [vmem:[#allocation3 + $0x78] sm:$0xf]
    %v6468 = vld [vmem:[#allocation3 + $0x7c] sm:$0xf]
    %v6469 = vld [vmem:[#allocation3 + $0x80] sm:$0xf]
    %v6470 = vld [vmem:[#allocation3 + $0x84] sm:$0xf]
    %v6471 = vld [vmem:[#allocation3 + $0x88] sm:$0xf]
    %v6472 = vld [vmem:[#allocation3 + $0x8c] sm:$0xf]
    %v6473 = vld [vmem:[#allocation3 + $0x90] sm:$0xf]
    %v6474 = vld [vmem:[#allocation3 + $0x94] sm:$0xf]
    %v6475 = vld [vmem:[#allocation3 + $0x98] sm:$0xf]
    %v6476 = vld [vmem:[#allocation3 + $0x9c] sm:$0xf]
    %v6477 = vld [vmem:[#allocation3 + $0xa0] sm:$0xf]
    %v6478 = vld [vmem:[#allocation3 + $0xa4] sm:$0xf]
    %v6479 = vld [vmem:[#allocation3 + $0xa8] sm:$0xf]
    %v6480 = vld [vmem:[#allocation3 + $0xac] sm:$0xf]
    %v6481 = vld [vmem:[#allocation3 + $0xb0] sm:$0xf]
    %v6482 = vld [vmem:[#allocation3 + $0xb4] sm:$0xf]
    %v6483 = vld [vmem:[#allocation3 + $0xb8] sm:$0xf]
    %v6484 = vld [vmem:[#allocation3 + $0xbc] sm:$0xf]
    %v6485 = vld [vmem:[#allocation3 + $0xc0] sm:$0xf]
    %v6486 = vld [vmem:[#allocation3 + $0xc4] sm:$0xf]
    %v6487 = vld [vmem:[#allocation3 + $0xc8] sm:$0xf]
    %v6488 = vld [vmem:[#allocation3 + $0xcc] sm:$0xf]
    %v6489 = vld [vmem:[#allocation3 + $0xd0] sm:$0xf]
    %v6490 = vld [vmem:[#allocation3 + $0xd4] sm:$0xf]
    %v6491 = vld [vmem:[#allocation3 + $0xd8] sm:$0xf]
    %v6492 = vld [vmem:[#allocation3 + $0xdc] sm:$0xf]
    %v6493 = vld [vmem:[#allocation3 + $0xe0] sm:$0xf]
    %v6494 = vld [vmem:[#allocation3 + $0xe4] sm:$0xf]
    %v6495 = vld [vmem:[#allocation3 + $0xe8] sm:$0xf]
    %v6496 = vld [vmem:[#allocation3 + $0xec] sm:$0xf]
    %v6497 = vld [vmem:[#allocation3 + $0xf0] sm:$0xf]
    %v6498 = vld [vmem:[#allocation3 + $0xf4] sm:$0xf]
    %v6499 = vld [vmem:[#allocation3 + $0xf8] sm:$0xf]
    %v6500 = vld [vmem:[#allocation3 + $0xfc] sm:$0xf]
    %v6501 = vld [vmem:[#allocation3 + $0x100] sm:$0xf]
    %v6502 = vld [vmem:[#allocation3 + $0x104] sm:$0xf]
    %v6503 = vld [vmem:[#allocation3 + $0x108] sm:$0xf]
    %v6504 = vld [vmem:[#allocation3 + $0x10c] sm:$0xf]
    %v6505 = vld [vmem:[#allocation3 + $0x110] sm:$0xf]
    %v6506 = vld [vmem:[#allocation3 + $0x114] sm:$0xf]
    %v6507 = vld [vmem:[#allocation3 + $0x118] sm:$0xf]
    %v6508 = vld [vmem:[#allocation3 + $0x11c] sm:$0xf]
    %v6509 = vld [vmem:[%s2] sm:$0xf]
    %v6510 = vld [vmem:[%s2 + $0x4] sm:$0xf]
    %v6511 = vld [vmem:[%s2 + $0x8] sm:$0xf]
    %v6512 = vld [vmem:[%s2 + $0xc] sm:$0xf]
    %v6513 = vld [vmem:[%s2 + $0x10] sm:$0x3]
    %v6514 = vld [vmem:[%s3] sm:$0x1]
    %v6516 = vlaneseq
    %v6517 = vshrl.u32 %v6516, 7
    %v6518 = vsub.s32 0, %v6517
    %v6519 = vrot.slane %v6514, %v6518
    %v6593 = vunpack.c.l.b16 %v6437
    %v6594 = vunpack.c.l.b16 %v6438
    %v6595 = vunpack.c.l.b16 %v6439
    %v6596 = vunpack.c.l.b16 %v6440
    %v6597 = vunpack.c.l.b16 %v6441
    %v6598 = vunpack.c.l.b16 %v6442
    %v6599 = vunpack.c.l.b16 %v6443
    %v6600 = vunpack.c.l.b16 %v6444
    %v6601 = vunpack.c.l.b16 %v6445
    %v6602 = vunpack.c.l.b16 %v6446
    %v6603 = vunpack.c.l.b16 %v6447
    %v6604 = vunpack.c.l.b16 %v6448
    %v6605 = vunpack.c.l.b16 %v6449
    %v6606 = vunpack.c.l.b16 %v6450
    %v6607 = vunpack.c.l.b16 %v6451
    %v6608 = vunpack.c.l.b16 %v6452
    %v6609 = vunpack.c.l.b16 %v6453
    %v6610 = vunpack.c.l.b16 %v6454
    %v6611 = vunpack.c.l.b16 %v6455
    %v6612 = vunpack.c.l.b16 %v6456
    %v6613 = vunpack.c.l.b16 %v6457
    %v6614 = vunpack.c.l.b16 %v6458
    %v6615 = vunpack.c.l.b16 %v6459
    %v6616 = vunpack.c.l.b16 %v6460
    %v6617 = vunpack.c.l.b16 %v6461
    %v6618 = vunpack.c.l.b16 %v6462
    %v6619 = vunpack.c.l.b16 %v6463
    %v6620 = vunpack.c.l.b16 %v6464
    %v6621 = vunpack.c.l.b16 %v6465
    %v6622 = vunpack.c.l.b16 %v6466
    %v6623 = vunpack.c.l.b16 %v6467
    %v6624 = vunpack.c.l.b16 %v6468
    %v6625 = vunpack.c.l.b16 %v6469
    %v6626 = vunpack.c.l.b16 %v6470
    %v6627 = vunpack.c.l.b16 %v6471
    %v6628 = vunpack.c.l.b16 %v6472
    %v6629 = vunpack.c.l.b16 %v6473
    %v6630 = vunpack.c.l.b16 %v6474
    %v6631 = vunpack.c.l.b16 %v6475
    %v6632 = vunpack.c.l.b16 %v6476
    %v6633 = vunpack.c.l.b16 %v6477
    %v6634 = vunpack.c.l.b16 %v6478
    %v6635 = vunpack.c.l.b16 %v6479
    %v6636 = vunpack.c.l.b16 %v6480
    %v6637 = vunpack.c.l.b16 %v6481
    %v6638 = vunpack.c.l.b16 %v6482
    %v6639 = vunpack.c.l.b16 %v6483
    %v6640 = vunpack.c.l.b16 %v6484
    %v6641 = vunpack.c.l.b16 %v6485
    %v6642 = vunpack.c.l.b16 %v6486
    %v6643 = vunpack.c.l.b16 %v6487
    %v6644 = vunpack.c.l.b16 %v6488
    %v6645 = vunpack.c.l.b16 %v6489
    %v6646 = vunpack.c.l.b16 %v6490
    %v6647 = vunpack.c.l.b16 %v6491
    %v6648 = vunpack.c.l.b16 %v6492
    %v6649 = vunpack.c.l.b16 %v6493
    %v6650 = vunpack.c.l.b16 %v6494
    %v6651 = vunpack.c.l.b16 %v6495
    %v6652 = vunpack.c.l.b16 %v6496
    %v6653 = vunpack.c.l.b16 %v6497
    %v6654 = vunpack.c.l.b16 %v6498
    %v6655 = vunpack.c.l.b16 %v6499
    %v6656 = vunpack.c.l.b16 %v6500
    %v6657 = vunpack.c.l.b16 %v6501
    %v6658 = vunpack.c.l.b16 %v6502
    %v6659 = vunpack.c.l.b16 %v6503
    %v6660 = vunpack.c.l.b16 %v6504
    %v6661 = vunpack.c.l.b16 %v6505
    %v6662 = vunpack.c.l.b16 %v6506
    %v6663 = vunpack.c.l.b16 %v6507
    %v6664 = vunpack.c.l.b16 %v6508
    %v6665 = vpack.c.b16 %v6594, %v6593
    %v6666 = vpack.c.b16 %v6596, %v6595
    %v6667 = vpack.c.b16 %v6598, %v6597
    %v6668 = vpack.c.b16 %v6600, %v6599
    %v6669 = vpack.c.b16 %v6602, %v6601
    %v6670 = vpack.c.b16 %v6604, %v6603
    %v6671 = vpack.c.b16 %v6606, %v6605
    %v6672 = vpack.c.b16 %v6608, %v6607
    %v6673 = vpack.c.b16 %v6610, %v6609
    %v6674 = vpack.c.b16 %v6612, %v6611
    %v6675 = vpack.c.b16 %v6614, %v6613
    %v6676 = vpack.c.b16 %v6616, %v6615
    %v6677 = vpack.c.b16 %v6618, %v6617
    %v6678 = vpack.c.b16 %v6620, %v6619
    %v6679 = vpack.c.b16 %v6622, %v6621
    %v6680 = vpack.c.b16 %v6624, %v6623
    %v6681 = vpack.c.b16 %v6626, %v6625
    %v6682 = vpack.c.b16 %v6628, %v6627
    %v6683 = vpack.c.b16 %v6630, %v6629
    %v6684 = vpack.c.b16 %v6632, %v6631
    %v6685 = vpack.c.b16 %v6634, %v6633
    %v6686 = vpack.c.b16 %v6636, %v6635
    %v6687 = vpack.c.b16 %v6638, %v6637
    %v6688 = vpack.c.b16 %v6640, %v6639
    %v6689 = vpack.c.b16 %v6642, %v6641
    %v6690 = vpack.c.b16 %v6644, %v6643
    %v6691 = vpack.c.b16 %v6646, %v6645
    %v6692 = vpack.c.b16 %v6648, %v6647
    %v6693 = vpack.c.b16 %v6650, %v6649
    %v6694 = vpack.c.b16 %v6652, %v6651
    %v6695 = vpack.c.b16 %v6654, %v6653
    %v6696 = vpack.c.b16 %v6656, %v6655
    %v6697 = vpack.c.b16 %v6658, %v6657
    %v6698 = vpack.c.b16 %v6660, %v6659
    %v6699 = vpack.c.b16 %v6662, %v6661
    %v6700 = vpack.c.b16 %v6664, %v6663
    %v6706 = vunpack.c.l.b16 %v6509
    %v6707 = vunpack.c.l.b16 %v6510
    %v6708 = vunpack.c.l.b16 %v6511
    %v6709 = vunpack.c.l.b16 %v6512
    %v6710 = vunpack.c.l.b16 %v6513
    %v6711 = vpack.c.b16 %v6707, %v6706
    %v6712 = vpack.c.b16 %v6709, %v6708
    %v6713 = vpack.c.b16 %v6710, %v6710
    %vm6716 = vcmask 293888
    %v6718 = vsel %vm6716, %v6665, 0
    %v6721 = vsel %vm6716, %v6666, 0
    %v6724 = vsel %vm6716, %v6667, 0
    %v6727 = vsel %vm6716, %v6668, 0
    %v6730 = vsel %vm6716, %v6669, 0
    %v6733 = vsel %vm6716, %v6670, 0
    %v6736 = vsel %vm6716, %v6671, 0
    %v6739 = vsel %vm6716, %v6672, 0
    %v6742 = vsel %vm6716, %v6673, 0
    %v6745 = vsel %vm6716, %v6674, 0
    %v6748 = vsel %vm6716, %v6675, 0
    %v6751 = vsel %vm6716, %v6676, 0
    %v6754 = vsel %vm6716, %v6677, 0
    %v6757 = vsel %vm6716, %v6678, 0
    %v6760 = vsel %vm6716, %v6679, 0
    %v6763 = vsel %vm6716, %v6680, 0
    %v6766 = vsel %vm6716, %v6681, 0
    %v6769 = vsel %vm6716, %v6682, 0
    %v6772 = vsel %vm6716, %v6683, 0
    %v6775 = vsel %vm6716, %v6684, 0
    %v6778 = vsel %vm6716, %v6685, 0
    %v6781 = vsel %vm6716, %v6686, 0
    %v6784 = vsel %vm6716, %v6687, 0
    %v6787 = vsel %vm6716, %v6688, 0
    %v6790 = vsel %vm6716, %v6689, 0
    %v6793 = vsel %vm6716, %v6690, 0
    %v6796 = vsel %vm6716, %v6691, 0
    %v6799 = vsel %vm6716, %v6692, 0
    %v6802 = vsel %vm6716, %v6693, 0
    %v6805 = vsel %vm6716, %v6694, 0
    %v6808 = vsel %vm6716, %v6695, 0
    %v6811 = vsel %vm6716, %v6696, 0
    %v6814 = vsel %vm6716, %v6697, 0
    %v6817 = vsel %vm6716, %v6698, 0
    %v6820 = vsel %vm6716, %v6699, 0
    %v6823 = vsel %vm6716, %v6700, 0
    %vm6825 = vcmask 1041408
    %v6827 = vsel %vm6825, %v6713, 0
    %6829 = vmatprep.subr.bf16.mxu0 0
    %6830 = vmatpush1.bf16.msra.mxu0 0
    %6831 = vmatprep.subr.bf16.mxu0 0
    %6832 = vmatpush1.bf16.msra.mxu0 0
    %6833 = vmatprep.subr.bf16.mxu0 0
    %6834 = vmatpush1.bf16.msra.mxu0 0
    %6835 = vmatprep.subr.bf16.mxu0 0
    %6836 = vmatpush1.bf16.msra.mxu0 0
    %6837 = vmatprep.subr.bf16.mxu0 0
    %6838 = vmatpush1.bf16.msra.mxu0 0
    %6839 = vmatprep.subr.bf16.mxu0 0
    %6840 = vmatpush1.bf16.msra.mxu0 %v6827
    %6841 = vmatprep.subr.bf16.mxu0 0
    %6842 = vmatpush1.bf16.msra.mxu0 %v6712
    %6843 = vmatprep.subr.bf16.mxu0 0
    %6844 = vmatpush1.bf16.msra.mxu0 %v6711
    %6845 = vmatprep.subr.bf16.mxu0 0
    %6846 = vmatpush2.bf16.msra.mxu0 0
    %6847 = vmatprep.subr.bf16.mxu0 0
    %6848 = vmatpush2.bf16.msra.mxu0 0
    %6849 = vmatprep.subr.bf16.mxu0 0
    %6850 = vmatpush2.bf16.msra.mxu0 0
    %6851 = vmatprep.subr.bf16.mxu0 0
    %6852 = vmatpush2.bf16.msra.mxu0 0
    %6853 = vmatprep.subr.bf16.mxu0 0
    %6854 = vmatpush2.bf16.msra.mxu0 0
    %6855 = vmatprep.subr.bf16.mxu0 0
    %6856 = vmatpush2.bf16.msra.mxu0 0
    %6857 = vmatprep.subr.bf16.mxu0 0
    %6858 = vmatpush2.bf16.msra.mxu0 0
    %6859 = vmatprep.subr.bf16.mxu0 0
    %6860 = vmatpush2.bf16.msra.mxu0 0
    %6861 = vmatprep.mubr.bf16.mxu0 0
    %6862 = vmatmul.mubr.bf16.gmra.mxu0 %v6718
    %v6863 = vpop.f32.mrf.mxu0
    %v6864 = vadd.f32 %v6519, %v6863
    %v6865 = vpop.f32.mrf.mxu0
    %v6866 = vpop.f32.mrf.mxu0
    %v6867 = vadd.f32 %v6519, %v6866
    %v6868 = vpop.f32.mrf.mxu0
    %6869 = vmatprep.mubr.bf16.mxu0 0
    %6870 = vmatmul.mubr.bf16.gmra.mxu0 %v6721
    %v6871 = vpop.f32.mrf.mxu0
    %v6872 = vadd.f32 %v6519, %v6871
    %v6873 = vpop.f32.mrf.mxu0
    %v6874 = vpop.f32.mrf.mxu0
    %v6875 = vadd.f32 %v6519, %v6874
    %v6876 = vpop.f32.mrf.mxu0
    %6877 = vmatprep.mubr.bf16.mxu0 0
    %6878 = vmatmul.mubr.bf16.gmra.mxu0 %v6724
    %v6879 = vpop.f32.mrf.mxu0
    %v6880 = vadd.f32 %v6519, %v6879
    %v6881 = vpop.f32.mrf.mxu0
    %v6882 = vpop.f32.mrf.mxu0
    %v6883 = vadd.f32 %v6519, %v6882
    %v6884 = vpop.f32.mrf.mxu0
    %6885 = vmatprep.mubr.bf16.mxu0 0
    %6886 = vmatmul.mubr.bf16.gmra.mxu0 %v6727
    %v6887 = vpop.f32.mrf.mxu0
    %v6888 = vadd.f32 %v6519, %v6887
    %v6889 = vpop.f32.mrf.mxu0
    %v6890 = vpop.f32.mrf.mxu0
    %v6891 = vadd.f32 %v6519, %v6890
    %v6892 = vpop.f32.mrf.mxu0
    %6893 = vmatprep.mubr.bf16.mxu0 0
    %6894 = vmatmul.mubr.bf16.gmra.mxu0 %v6730
    %v6895 = vpop.f32.mrf.mxu0
    %v6896 = vadd.f32 %v6519, %v6895
    %v6897 = vpop.f32.mrf.mxu0
    %v6898 = vpop.f32.mrf.mxu0
    %v6899 = vadd.f32 %v6519, %v6898
    %v6900 = vpop.f32.mrf.mxu0
    %6901 = vmatprep.mubr.bf16.mxu0 0
    %6902 = vmatmul.mubr.bf16.gmra.mxu0 %v6733
    %v6903 = vpop.f32.mrf.mxu0
    %v6904 = vadd.f32 %v6519, %v6903
    %v6905 = vpop.f32.mrf.mxu0
    %v6906 = vpop.f32.mrf.mxu0
    %v6907 = vadd.f32 %v6519, %v6906
    %v6908 = vpop.f32.mrf.mxu0
    %6909 = vmatprep.mubr.bf16.mxu0 0
    %6910 = vmatmul.mubr.bf16.gmra.mxu0 %v6736
    %v6911 = vpop.f32.mrf.mxu0
    %v6912 = vadd.f32 %v6519, %v6911
    %v6913 = vpop.f32.mrf.mxu0
    %v6914 = vpop.f32.mrf.mxu0
    %v6915 = vadd.f32 %v6519, %v6914
    %v6916 = vpop.f32.mrf.mxu0
    %6917 = vmatprep.mubr.bf16.mxu0 0
    %6918 = vmatmul.mubr.bf16.gmra.mxu0 %v6739
    %v6919 = vpop.f32.mrf.mxu0
    %v6920 = vadd.f32 %v6519, %v6919
    %v6921 = vpop.f32.mrf.mxu0
    %v6922 = vpop.f32.mrf.mxu0
    %v6923 = vadd.f32 %v6519, %v6922
    %v6924 = vpop.f32.mrf.mxu0
    %6925 = vmatprep.mubr.bf16.mxu0 0
    %6926 = vmatmul.mubr.bf16.gmra.mxu0 %v6742
    %v6927 = vpop.f32.mrf.mxu0
    %v6928 = vadd.f32 %v6519, %v6927
    %v6929 = vpop.f32.mrf.mxu0
    %v6930 = vpop.f32.mrf.mxu0
    %v6931 = vadd.f32 %v6519, %v6930
    %v6932 = vpop.f32.mrf.mxu0
    %6933 = vmatprep.mubr.bf16.mxu0 0
    %6934 = vmatmul.mubr.bf16.gmra.mxu0 %v6745
    %v6935 = vpop.f32.mrf.mxu0
    %v6936 = vadd.f32 %v6519, %v6935
    %v6937 = vpop.f32.mrf.mxu0
    %v6938 = vpop.f32.mrf.mxu0
    %v6939 = vadd.f32 %v6519, %v6938
    %v6940 = vpop.f32.mrf.mxu0
    %6941 = vmatprep.mubr.bf16.mxu0 0
    %6942 = vmatmul.mubr.bf16.gmra.mxu0 %v6748
    %v6943 = vpop.f32.mrf.mxu0
    %v6944 = vadd.f32 %v6519, %v6943
    %v6945 = vpop.f32.mrf.mxu0
    %v6946 = vpop.f32.mrf.mxu0
    %v6947 = vadd.f32 %v6519, %v6946
    %v6948 = vpop.f32.mrf.mxu0
    %6949 = vmatprep.mubr.bf16.mxu0 0
    %6950 = vmatmul.mubr.bf16.gmra.mxu0 %v6751
    %v6951 = vpop.f32.mrf.mxu0
    %v6952 = vadd.f32 %v6519, %v6951
    %v6953 = vpop.f32.mrf.mxu0
    %v6954 = vpop.f32.mrf.mxu0
    %v6955 = vadd.f32 %v6519, %v6954
    %v6956 = vpop.f32.mrf.mxu0
    %6957 = vmatprep.mubr.bf16.mxu0 0
    %6958 = vmatmul.mubr.bf16.gmra.mxu0 %v6754
    %v6959 = vpop.f32.mrf.mxu0
    %v6960 = vadd.f32 %v6519, %v6959
    %v6961 = vpop.f32.mrf.mxu0
    %v6962 = vpop.f32.mrf.mxu0
    %v6963 = vadd.f32 %v6519, %v6962
    %v6964 = vpop.f32.mrf.mxu0
    %6965 = vmatprep.mubr.bf16.mxu0 0
    %6966 = vmatmul.mubr.bf16.gmra.mxu0 %v6757
    %v6967 = vpop.f32.mrf.mxu0
    %v6968 = vadd.f32 %v6519, %v6967
    %v6969 = vpop.f32.mrf.mxu0
    %v6970 = vpop.f32.mrf.mxu0
    %v6971 = vadd.f32 %v6519, %v6970
    %v6972 = vpop.f32.mrf.mxu0
    %6973 = vmatprep.mubr.bf16.mxu0 0
    %6974 = vmatmul.mubr.bf16.gmra.mxu0 %v6760
    %v6975 = vpop.f32.mrf.mxu0
    %v6976 = vadd.f32 %v6519, %v6975
    %v6977 = vpop.f32.mrf.mxu0
    %v6978 = vpop.f32.mrf.mxu0
    %v6979 = vadd.f32 %v6519, %v6978
    %v6980 = vpop.f32.mrf.mxu0
    %6981 = vmatprep.mubr.bf16.mxu0 0
    %6982 = vmatmul.mubr.bf16.gmra.mxu0 %v6763
    %v6983 = vpop.f32.mrf.mxu0
    %v6984 = vadd.f32 %v6519, %v6983
    %v6985 = vpop.f32.mrf.mxu0
    %v6986 = vpop.f32.mrf.mxu0
    %v6987 = vadd.f32 %v6519, %v6986
    %v6988 = vpop.f32.mrf.mxu0
    %6989 = vmatprep.mubr.bf16.mxu0 0
    %6990 = vmatmul.mubr.bf16.gmra.mxu0 %v6766
    %v6991 = vpop.f32.mrf.mxu0
    %v6992 = vadd.f32 %v6519, %v6991
    %v6993 = vpop.f32.mrf.mxu0
    %v6994 = vpop.f32.mrf.mxu0
    %v6995 = vadd.f32 %v6519, %v6994
    %v6996 = vpop.f32.mrf.mxu0
    %6997 = vmatprep.mubr.bf16.mxu0 0
    %6998 = vmatmul.mubr.bf16.gmra.mxu0 %v6769
    %v6999 = vpop.f32.mrf.mxu0
    %v7000 = vadd.f32 %v6519, %v6999
    %v7001 = vpop.f32.mrf.mxu0
    %v7002 = vpop.f32.mrf.mxu0
    %v7003 = vadd.f32 %v6519, %v7002
    %v7004 = vpop.f32.mrf.mxu0
    %7005 = vmatprep.mubr.bf16.mxu0 0
    %7006 = vmatmul.mubr.bf16.gmra.mxu0 %v6772
    %v7007 = vpop.f32.mrf.mxu0
    %v7008 = vadd.f32 %v6519, %v7007
    %v7009 = vpop.f32.mrf.mxu0
    %v7010 = vpop.f32.mrf.mxu0
    %v7011 = vadd.f32 %v6519, %v7010
    %v7012 = vpop.f32.mrf.mxu0
    %7013 = vmatprep.mubr.bf16.mxu0 0
    %7014 = vmatmul.mubr.bf16.gmra.mxu0 %v6775
    %v7015 = vpop.f32.mrf.mxu0
    %v7016 = vadd.f32 %v6519, %v7015
    %v7017 = vpop.f32.mrf.mxu0
    %v7018 = vpop.f32.mrf.mxu0
    %v7019 = vadd.f32 %v6519, %v7018
    %v7020 = vpop.f32.mrf.mxu0
    %7021 = vmatprep.mubr.bf16.mxu0 0
    %7022 = vmatmul.mubr.bf16.gmra.mxu0 %v6778
    %v7023 = vpop.f32.mrf.mxu0
    %v7024 = vadd.f32 %v6519, %v7023
    %v7025 = vpop.f32.mrf.mxu0
    %v7026 = vpop.f32.mrf.mxu0
    %v7027 = vadd.f32 %v6519, %v7026
    %v7028 = vpop.f32.mrf.mxu0
    %7029 = vmatprep.mubr.bf16.mxu0 0
    %7030 = vmatmul.mubr.bf16.gmra.mxu0 %v6781
    %v7031 = vpop.f32.mrf.mxu0
    %v7032 = vadd.f32 %v6519, %v7031
    %v7033 = vpop.f32.mrf.mxu0
    %v7034 = vpop.f32.mrf.mxu0
    %v7035 = vadd.f32 %v6519, %v7034
    %v7036 = vpop.f32.mrf.mxu0
    %7037 = vmatprep.mubr.bf16.mxu0 0
    %7038 = vmatmul.mubr.bf16.gmra.mxu0 %v6784
    %v7039 = vpop.f32.mrf.mxu0
    %v7040 = vadd.f32 %v6519, %v7039
    %v7041 = vpop.f32.mrf.mxu0
    %v7042 = vpop.f32.mrf.mxu0
    %v7043 = vadd.f32 %v6519, %v7042
    %v7044 = vpop.f32.mrf.mxu0
    %7045 = vmatprep.mubr.bf16.mxu0 0
    %7046 = vmatmul.mubr.bf16.gmra.mxu0 %v6787
    %v7047 = vpop.f32.mrf.mxu0
    %v7048 = vadd.f32 %v6519, %v7047
    %v7049 = vpop.f32.mrf.mxu0
    %v7050 = vpop.f32.mrf.mxu0
    %v7051 = vadd.f32 %v6519, %v7050
    %v7052 = vpop.f32.mrf.mxu0
    %7053 = vmatprep.mubr.bf16.mxu0 0
    %7054 = vmatmul.mubr.bf16.gmra.mxu0 %v6790
    %v7055 = vpop.f32.mrf.mxu0
    %v7056 = vadd.f32 %v6519, %v7055
    %v7057 = vpop.f32.mrf.mxu0
    %v7058 = vpop.f32.mrf.mxu0
    %v7059 = vadd.f32 %v6519, %v7058
    %v7060 = vpop.f32.mrf.mxu0
    %7061 = vmatprep.mubr.bf16.mxu0 0
    %7062 = vmatmul.mubr.bf16.gmra.mxu0 %v6793
    %v7063 = vpop.f32.mrf.mxu0
    %v7064 = vadd.f32 %v6519, %v7063
    %v7065 = vpop.f32.mrf.mxu0
    %v7066 = vpop.f32.mrf.mxu0
    %v7067 = vadd.f32 %v6519, %v7066
    %v7068 = vpop.f32.mrf.mxu0
    %7069 = vmatprep.mubr.bf16.mxu0 0
    %7070 = vmatmul.mubr.bf16.gmra.mxu0 %v6796
    %v7071 = vpop.f32.mrf.mxu0
    %v7072 = vadd.f32 %v6519, %v7071
    %v7073 = vpop.f32.mrf.mxu0
    %v7074 = vpop.f32.mrf.mxu0
    %v7075 = vadd.f32 %v6519, %v7074
    %v7076 = vpop.f32.mrf.mxu0
    %7077 = vmatprep.mubr.bf16.mxu0 0
    %7078 = vmatmul.mubr.bf16.gmra.mxu0 %v6799
    %v7079 = vpop.f32.mrf.mxu0
    %v7080 = vadd.f32 %v6519, %v7079
    %v7081 = vpop.f32.mrf.mxu0
    %v7082 = vpop.f32.mrf.mxu0
    %v7083 = vadd.f32 %v6519, %v7082
    %v7084 = vpop.f32.mrf.mxu0
    %7085 = vmatprep.mubr.bf16.mxu0 0
    %7086 = vmatmul.mubr.bf16.gmra.mxu0 %v6802
    %v7087 = vpop.f32.mrf.mxu0
    %v7088 = vadd.f32 %v6519, %v7087
    %v7089 = vpop.f32.mrf.mxu0
    %v7090 = vpop.f32.mrf.mxu0
    %v7091 = vadd.f32 %v6519, %v7090
    %v7092 = vpop.f32.mrf.mxu0
    %7093 = vmatprep.mubr.bf16.mxu0 0
    %7094 = vmatmul.mubr.bf16.gmra.mxu0 %v6805
    %v7095 = vpop.f32.mrf.mxu0
    %v7096 = vadd.f32 %v6519, %v7095
    %v7097 = vpop.f32.mrf.mxu0
    %v7098 = vpop.f32.mrf.mxu0
    %v7099 = vadd.f32 %v6519, %v7098
    %v7100 = vpop.f32.mrf.mxu0
    %7101 = vmatprep.mubr.bf16.mxu0 0
    %7102 = vmatmul.mubr.bf16.gmra.mxu0 %v6808
    %v7103 = vpop.f32.mrf.mxu0
    %v7104 = vadd.f32 %v6519, %v7103
    %v7105 = vpop.f32.mrf.mxu0
    %v7106 = vpop.f32.mrf.mxu0
    %v7107 = vadd.f32 %v6519, %v7106
    %v7108 = vpop.f32.mrf.mxu0
    %7109 = vmatprep.mubr.bf16.mxu0 0
    %7110 = vmatmul.mubr.bf16.gmra.mxu0 %v6811
    %v7111 = vpop.f32.mrf.mxu0
    %v7112 = vadd.f32 %v6519, %v7111
    %v7113 = vpop.f32.mrf.mxu0
    %v7114 = vpop.f32.mrf.mxu0
    %v7115 = vadd.f32 %v6519, %v7114
    %v7116 = vpop.f32.mrf.mxu0
    %7117 = vmatprep.mubr.bf16.mxu0 0
    %7118 = vmatmul.mubr.bf16.gmra.mxu0 %v6814
    %v7119 = vpop.f32.mrf.mxu0
    %v7120 = vadd.f32 %v6519, %v7119
    %v7121 = vpop.f32.mrf.mxu0
    %v7122 = vpop.f32.mrf.mxu0
    %v7123 = vadd.f32 %v6519, %v7122
    %v7124 = vpop.f32.mrf.mxu0
    %7125 = vmatprep.mubr.bf16.mxu0 0
    %7126 = vmatmul.mubr.bf16.gmra.mxu0 %v6817
    %v7127 = vpop.f32.mrf.mxu0
    %v7128 = vadd.f32 %v6519, %v7127
    %v7129 = vpop.f32.mrf.mxu0
    %v7130 = vpop.f32.mrf.mxu0
    %v7131 = vadd.f32 %v6519, %v7130
    %v7132 = vpop.f32.mrf.mxu0
    %7133 = vmatprep.mubr.bf16.mxu0 0
    %7134 = vmatmul.mubr.bf16.gmra.mxu0 %v6820
    %v7135 = vpop.f32.mrf.mxu0
    %v7136 = vadd.f32 %v6519, %v7135
    %v7137 = vpop.f32.mrf.mxu0
    %v7138 = vpop.f32.mrf.mxu0
    %v7139 = vadd.f32 %v6519, %v7138
    %v7140 = vpop.f32.mrf.mxu0
    %7141 = vmatprep.mubr.bf16.mxu0 0
    %7142 = vmatmul.mubr.bf16.gmra.mxu0 %v6823
    %v7143 = vpop.f32.mrf.mxu0
    %v7144 = vadd.f32 %v6519, %v7143
    %v7145 = vpop.f32.mrf.mxu0
    %v7146 = vpop.f32.mrf.mxu0
    %v7147 = vadd.f32 %v6519, %v7146
    %v7148 = vpop.f32.mrf.mxu0
    %7149 = vdwg.mxu0
    %v7150 = vpack.c.bf16 %v6867, %v6864
    %v7151 = vpack.c.bf16 %v6875, %v6872
    %v7152 = vpack.c.bf16 %v6883, %v6880
    %v7153 = vpack.c.bf16 %v6891, %v6888
    %v7154 = vpack.c.bf16 %v6899, %v6896
    %v7155 = vpack.c.bf16 %v6907, %v6904
    %v7156 = vpack.c.bf16 %v6915, %v6912
    %v7157 = vpack.c.bf16 %v6923, %v6920
    %v7158 = vpack.c.bf16 %v6931, %v6928
    %v7159 = vpack.c.bf16 %v6939, %v6936
    %v7160 = vpack.c.bf16 %v6947, %v6944
    %v7161 = vpack.c.bf16 %v6955, %v6952
    %v7162 = vpack.c.bf16 %v6963, %v6960
    %v7163 = vpack.c.bf16 %v6971, %v6968
    %v7164 = vpack.c.bf16 %v6979, %v6976
    %v7165 = vpack.c.bf16 %v6987, %v6984
    %v7166 = vpack.c.bf16 %v6995, %v6992
    %v7167 = vpack.c.bf16 %v7003, %v7000
    %v7168 = vpack.c.bf16 %v7011, %v7008
    %v7169 = vpack.c.bf16 %v7019, %v7016
    %v7170 = vpack.c.bf16 %v7027, %v7024
    %v7171 = vpack.c.bf16 %v7035, %v7032
    %v7172 = vpack.c.bf16 %v7043, %v7040
    %v7173 = vpack.c.bf16 %v7051, %v7048
    %v7174 = vpack.c.bf16 %v7059, %v7056
    %v7175 = vpack.c.bf16 %v7067, %v7064
    %v7176 = vpack.c.bf16 %v7075, %v7072
    %v7177 = vpack.c.bf16 %v7083, %v7080
    %v7178 = vpack.c.bf16 %v7091, %v7088
    %v7179 = vpack.c.bf16 %v7099, %v7096
    %v7180 = vpack.c.bf16 %v7107, %v7104
    %v7181 = vpack.c.bf16 %v7115, %v7112
    %v7182 = vpack.c.bf16 %v7123, %v7120
    %v7183 = vpack.c.bf16 %v7131, %v7128
    %v7184 = vpack.c.bf16 %v7139, %v7136
    %v7185 = vpack.c.bf16 %v7147, %v7144
    %v7222 = vunpack.c.l.b16 %v7150
    %v7223 = vunpack.c.h.b16 %v7150
    %v7224 = vunpack.c.l.b16 %v7151
    %v7225 = vunpack.c.h.b16 %v7151
    %v7226 = vunpack.c.l.b16 %v7152
    %v7227 = vunpack.c.h.b16 %v7152
    %v7228 = vunpack.c.l.b16 %v7153
    %v7229 = vunpack.c.h.b16 %v7153
    %v7230 = vunpack.c.l.b16 %v7154
    %v7231 = vunpack.c.h.b16 %v7154
    %v7232 = vunpack.c.l.b16 %v7155
    %v7233 = vunpack.c.h.b16 %v7155
    %v7234 = vunpack.c.l.b16 %v7156
    %v7235 = vunpack.c.h.b16 %v7156
    %v7236 = vunpack.c.l.b16 %v7157
    %v7237 = vunpack.c.h.b16 %v7157
    %v7238 = vunpack.c.l.b16 %v7158
    %v7239 = vunpack.c.h.b16 %v7158
    %v7240 = vunpack.c.l.b16 %v7159
    %v7241 = vunpack.c.h.b16 %v7159
    %v7242 = vunpack.c.l.b16 %v7160
    %v7243 = vunpack.c.h.b16 %v7160
    %v7244 = vunpack.c.l.b16 %v7161
    %v7245 = vunpack.c.h.b16 %v7161
    %v7246 = vunpack.c.l.b16 %v7162
    %v7247 = vunpack.c.h.b16 %v7162
    %v7248 = vunpack.c.l.b16 %v7163
    %v7249 = vunpack.c.h.b16 %v7163
    %v7250 = vunpack.c.l.b16 %v7164
    %v7251 = vunpack.c.h.b16 %v7164
    %v7252 = vunpack.c.l.b16 %v7165
    %v7253 = vunpack.c.h.b16 %v7165
    %v7254 = vunpack.c.l.b16 %v7166
    %v7255 = vunpack.c.h.b16 %v7166
    %v7256 = vunpack.c.l.b16 %v7167
    %v7257 = vunpack.c.h.b16 %v7167
    %v7258 = vunpack.c.l.b16 %v7168
    %v7259 = vunpack.c.h.b16 %v7168
    %v7260 = vunpack.c.l.b16 %v7169
    %v7261 = vunpack.c.h.b16 %v7169
    %v7262 = vunpack.c.l.b16 %v7170
    %v7263 = vunpack.c.h.b16 %v7170
    %v7264 = vunpack.c.l.b16 %v7171
    %v7265 = vunpack.c.h.b16 %v7171
    %v7266 = vunpack.c.l.b16 %v7172
    %v7267 = vunpack.c.h.b16 %v7172
    %v7268 = vunpack.c.l.b16 %v7173
    %v7269 = vunpack.c.h.b16 %v7173
    %v7270 = vunpack.c.l.b16 %v7174
    %v7271 = vunpack.c.h.b16 %v7174
    %v7272 = vunpack.c.l.b16 %v7175
    %v7273 = vunpack.c.h.b16 %v7175
    %v7274 = vunpack.c.l.b16 %v7176
    %v7275 = vunpack.c.h.b16 %v7176
    %v7276 = vunpack.c.l.b16 %v7177
    %v7277 = vunpack.c.h.b16 %v7177
    %v7278 = vunpack.c.l.b16 %v7178
    %v7279 = vunpack.c.h.b16 %v7178
    %v7280 = vunpack.c.l.b16 %v7179
    %v7281 = vunpack.c.h.b16 %v7179
    %v7282 = vunpack.c.l.b16 %v7180
    %v7283 = vunpack.c.h.b16 %v7180
    %v7284 = vunpack.c.l.b16 %v7181
    %v7285 = vunpack.c.h.b16 %v7181
    %v7286 = vunpack.c.l.b16 %v7182
    %v7287 = vunpack.c.h.b16 %v7182
    %v7288 = vunpack.c.l.b16 %v7183
    %v7289 = vunpack.c.h.b16 %v7183
    %v7290 = vunpack.c.l.b16 %v7184
    %v7291 = vunpack.c.h.b16 %v7184
    %v7292 = vunpack.c.l.b16 %v7185
    %v7293 = vunpack.c.h.b16 %v7185
    %v7294 = vpack.c.b16 %v7222, %v7222
    %v7295 = vpack.c.b16 %v7223, %v7223
    %v7296 = vpack.c.b16 %v7224, %v7224
    %v7297 = vpack.c.b16 %v7225, %v7225
    %v7298 = vpack.c.b16 %v7226, %v7226
    %v7299 = vpack.c.b16 %v7227, %v7227
    %v7300 = vpack.c.b16 %v7228, %v7228
    %v7301 = vpack.c.b16 %v7229, %v7229
    %v7302 = vpack.c.b16 %v7230, %v7230
    %v7303 = vpack.c.b16 %v7231, %v7231
    %v7304 = vpack.c.b16 %v7232, %v7232
    %v7305 = vpack.c.b16 %v7233, %v7233
    %v7306 = vpack.c.b16 %v7234, %v7234
    %v7307 = vpack.c.b16 %v7235, %v7235
    %v7308 = vpack.c.b16 %v7236, %v7236
    %v7309 = vpack.c.b16 %v7237, %v7237
    %v7310 = vpack.c.b16 %v7238, %v7238
    %v7311 = vpack.c.b16 %v7239, %v7239
    %v7312 = vpack.c.b16 %v7240, %v7240
    %v7313 = vpack.c.b16 %v7241, %v7241
    %v7314 = vpack.c.b16 %v7242, %v7242
    %v7315 = vpack.c.b16 %v7243, %v7243
    %v7316 = vpack.c.b16 %v7244, %v7244
    %v7317 = vpack.c.b16 %v7245, %v7245
    %v7318 = vpack.c.b16 %v7246, %v7246
    %v7319 = vpack.c.b16 %v7247, %v7247
    %v7320 = vpack.c.b16 %v7248, %v7248
    %v7321 = vpack.c.b16 %v7249, %v7249
    %v7322 = vpack.c.b16 %v7250, %v7250
    %v7323 = vpack.c.b16 %v7251, %v7251
    %v7324 = vpack.c.b16 %v7252, %v7252
    %v7325 = vpack.c.b16 %v7253, %v7253
    %v7326 = vpack.c.b16 %v7254, %v7254
    %v7327 = vpack.c.b16 %v7255, %v7255
    %v7328 = vpack.c.b16 %v7256, %v7256
    %v7329 = vpack.c.b16 %v7257, %v7257
    %v7330 = vpack.c.b16 %v7258, %v7258
    %v7331 = vpack.c.b16 %v7259, %v7259
    %v7332 = vpack.c.b16 %v7260, %v7260
    %v7333 = vpack.c.b16 %v7261, %v7261
    %v7334 = vpack.c.b16 %v7262, %v7262
    %v7335 = vpack.c.b16 %v7263, %v7263
    %v7336 = vpack.c.b16 %v7264, %v7264
    %v7337 = vpack.c.b16 %v7265, %v7265
    %v7338 = vpack.c.b16 %v7266, %v7266
    %v7339 = vpack.c.b16 %v7267, %v7267
    %v7340 = vpack.c.b16 %v7268, %v7268
    %v7341 = vpack.c.b16 %v7269, %v7269
    %v7342 = vpack.c.b16 %v7270, %v7270
    %v7343 = vpack.c.b16 %v7271, %v7271
    %v7344 = vpack.c.b16 %v7272, %v7272
    %v7345 = vpack.c.b16 %v7273, %v7273
    %v7346 = vpack.c.b16 %v7274, %v7274
    %v7347 = vpack.c.b16 %v7275, %v7275
    %v7348 = vpack.c.b16 %v7276, %v7276
    %v7349 = vpack.c.b16 %v7277, %v7277
    %v7350 = vpack.c.b16 %v7278, %v7278
    %v7351 = vpack.c.b16 %v7279, %v7279
    %v7352 = vpack.c.b16 %v7280, %v7280
    %v7353 = vpack.c.b16 %v7281, %v7281
    %v7354 = vpack.c.b16 %v7282, %v7282
    %v7355 = vpack.c.b16 %v7283, %v7283
    %v7356 = vpack.c.b16 %v7284, %v7284
    %v7357 = vpack.c.b16 %v7285, %v7285
    %v7358 = vpack.c.b16 %v7286, %v7286
    %v7359 = vpack.c.b16 %v7287, %v7287
    %v7360 = vpack.c.b16 %v7288, %v7288
    %v7361 = vpack.c.b16 %v7289, %v7289
    %v7362 = vpack.c.b16 %v7290, %v7290
    %v7363 = vpack.c.b16 %v7291, %v7291
    %v7364 = vpack.c.b16 %v7292, %v7292
    %v7365 = vpack.c.b16 %v7293, %v7293
    %7438 = vst [vmem:[#allocation4] sm:$0xf] %v7294
    %7439 = vst [vmem:[#allocation4 + $0x4] sm:$0xf] %v7295
    %7440 = vst [vmem:[#allocation4 + $0x8] sm:$0xf] %v7296
    %7441 = vst [vmem:[#allocation4 + $0xc] sm:$0xf] %v7297
    %7442 = vst [vmem:[#allocation4 + $0x10] sm:$0xf] %v7298
    %7443 = vst [vmem:[#allocation4 + $0x14] sm:$0xf] %v7299
    %7444 = vst [vmem:[#allocation4 + $0x18] sm:$0xf] %v7300
    %7445 = vst [vmem:[#allocation4 + $0x1c] sm:$0xf] %v7301
    %7446 = vst [vmem:[#allocation4 + $0x20] sm:$0xf] %v7302
    %7447 = vst [vmem:[#allocation4 + $0x24] sm:$0xf] %v7303
    %7448 = vst [vmem:[#allocation4 + $0x28] sm:$0xf] %v7304
    %7449 = vst [vmem:[#allocation4 + $0x2c] sm:$0xf] %v7305
    %7450 = vst [vmem:[#allocation4 + $0x30] sm:$0xf] %v7306
    %7451 = vst [vmem:[#allocation4 + $0x34] sm:$0xf] %v7307
    %7452 = vst [vmem:[#allocation4 + $0x38] sm:$0xf] %v7308
    %7453 = vst [vmem:[#allocation4 + $0x3c] sm:$0xf] %v7309
    %7454 = vst [vmem:[#allocation4 + $0x40] sm:$0xf] %v7310
    %7455 = vst [vmem:[#allocation4 + $0x44] sm:$0xf] %v7311
    %7456 = vst [vmem:[#allocation4 + $0x48] sm:$0xf] %v7312
    %7457 = vst [vmem:[#allocation4 + $0x4c] sm:$0xf] %v7313
    %7458 = vst [vmem:[#allocation4 + $0x50] sm:$0xf] %v7314
    %7459 = vst [vmem:[#allocation4 + $0x54] sm:$0xf] %v7315
    %7460 = vst [vmem:[#allocation4 + $0x58] sm:$0xf] %v7316
    %7461 = vst [vmem:[#allocation4 + $0x5c] sm:$0xf] %v7317
    %7462 = vst [vmem:[#allocation4 + $0x60] sm:$0xf] %v7318
    %7463 = vst [vmem:[#allocation4 + $0x64] sm:$0xf] %v7319
    %7464 = vst [vmem:[#allocation4 + $0x68] sm:$0xf] %v7320
    %7465 = vst [vmem:[#allocation4 + $0x6c] sm:$0xf] %v7321
    %7466 = vst [vmem:[#allocation4 + $0x70] sm:$0xf] %v7322
    %7467 = vst [vmem:[#allocation4 + $0x74] sm:$0xf] %v7323
    %7468 = vst [vmem:[#allocation4 + $0x78] sm:$0xf] %v7324
    %7469 = vst [vmem:[#allocation4 + $0x7c] sm:$0xf] %v7325
    %7470 = vst [vmem:[#allocation4 + $0x80] sm:$0xf] %v7326
    %7471 = vst [vmem:[#allocation4 + $0x84] sm:$0xf] %v7327
    %7472 = vst [vmem:[#allocation4 + $0x88] sm:$0xf] %v7328
    %7473 = vst [vmem:[#allocation4 + $0x8c] sm:$0xf] %v7329
    %7474 = vst [vmem:[#allocation4 + $0x90] sm:$0xf] %v7330
    %7475 = vst [vmem:[#allocation4 + $0x94] sm:$0xf] %v7331
    %7476 = vst [vmem:[#allocation4 + $0x98] sm:$0xf] %v7332
    %7477 = vst [vmem:[#allocation4 + $0x9c] sm:$0xf] %v7333
    %7478 = vst [vmem:[#allocation4 + $0xa0] sm:$0xf] %v7334
    %7479 = vst [vmem:[#allocation4 + $0xa4] sm:$0xf] %v7335
    %7480 = vst [vmem:[#allocation4 + $0xa8] sm:$0xf] %v7336
    %7481 = vst [vmem:[#allocation4 + $0xac] sm:$0xf] %v7337
    %7482 = vst [vmem:[#allocation4 + $0xb0] sm:$0xf] %v7338
    %7483 = vst [vmem:[#allocation4 + $0xb4] sm:$0xf] %v7339
    %7484 = vst [vmem:[#allocation4 + $0xb8] sm:$0xf] %v7340
    %7485 = vst [vmem:[#allocation4 + $0xbc] sm:$0xf] %v7341
    %7486 = vst [vmem:[#allocation4 + $0xc0] sm:$0xf] %v7342
    %7487 = vst [vmem:[#allocation4 + $0xc4] sm:$0xf] %v7343
    %7488 = vst [vmem:[#allocation4 + $0xc8] sm:$0xf] %v7344
    %7489 = vst [vmem:[#allocation4 + $0xcc] sm:$0xf] %v7345
    %7490 = vst [vmem:[#allocation4 + $0xd0] sm:$0xf] %v7346
    %7491 = vst [vmem:[#allocation4 + $0xd4] sm:$0xf] %v7347
    %7492 = vst [vmem:[#allocation4 + $0xd8] sm:$0xf] %v7348
    %7493 = vst [vmem:[#allocation4 + $0xdc] sm:$0xf] %v7349
    %7494 = vst [vmem:[#allocation4 + $0xe0] sm:$0xf] %v7350
    %7495 = vst [vmem:[#allocation4 + $0xe4] sm:$0xf] %v7351
    %7496 = vst [vmem:[#allocation4 + $0xe8] sm:$0xf] %v7352
    %7497 = vst [vmem:[#allocation4 + $0xec] sm:$0xf] %v7353
    %7498 = vst [vmem:[#allocation4 + $0xf0] sm:$0xf] %v7354
    %7499 = vst [vmem:[#allocation4 + $0xf4] sm:$0xf] %v7355
    %7500 = vst [vmem:[#allocation4 + $0xf8] sm:$0xf] %v7356
    %7501 = vst [vmem:[#allocation4 + $0xfc] sm:$0xf] %v7357
    %7502 = vst [vmem:[#allocation4 + $0x100] sm:$0xf] %v7358
    %7503 = vst [vmem:[#allocation4 + $0x104] sm:$0xf] %v7359
    %7504 = vst [vmem:[#allocation4 + $0x108] sm:$0xf] %v7360
    %7505 = vst [vmem:[#allocation4 + $0x10c] sm:$0xf] %v7361
    %7506 = vst [vmem:[#allocation4 + $0x110] sm:$0xf] %v7362
    %7507 = vst [vmem:[#allocation4 + $0x114] sm:$0xf] %v7363
    %7508 = vst [vmem:[#allocation4 + $0x118] sm:$0xf] %v7364
    %7509 = vst [vmem:[#allocation4 + $0x11c] sm:$0xf] %v7365
    // Predicated region
    $region22: #{tpu_custom_call.1} parent=1 // pred_check
      _
    $region23: #{tpu_custom_call.1} parent=1 // pred_check_branch
      %7511 = sbr.rel (0) target = $region25
    $region24: #{tpu_custom_call.1} parent=1 // pred_region
      %s7513 = ssub.s32 4608, 4608
      %7514 = vsyncadd [#allocation5], %s7513
      %s7515 = sshll.u32 [#allocation4], 4
      %s7516 = int_to_ptr.vmem [resolvable:$true] %s7515
      %7521 = dma.vmem_to_hbm [thread:$0]  %s7516, 4608, %s4, [#allocation5], 64, 64, 4
    $region25: #{tpu_custom_call.1} parent=1 // pred_fallthru
      _
    // Predicated region
    $region26: #{tpu_custom_call.1} parent=1 // pred_check
      _
    $region27: #{tpu_custom_call.1} parent=1 // pred_check_branch
      %7523 = sbr.rel (0) target = $region29
    $region28: #{tpu_custom_call.1} parent=1 // pred_region
      %7524 = dma.done [#allocation5], 4608
    $region29: #{tpu_custom_call.1} parent=1 // pred_fallthru
      _
    %7525 = vsyncpa [#allocation5], 1

</llo_original>
